<compile_context>
chip_gen: v5e
topology: v5e:2x2
jax: 0.10.0
libtpu: 0.0.40
codegen_flags: <defaults>
</compile_context>

<pallas_src>
import jax
import jax.numpy as jnp
from jax.experimental import pallas as pl
from jax.experimental.pallas import tpu as pltpu

D_MODEL = 32
N_HEAD = 4
DIM_FF = 64
NUM_ENC_LAYERS = 2
NUM_DEC_LAYERS = 2
EPS = 1e-5
NEG_INF = -1e9


# ------------------------------------------------------------- kernel helpers
def _ln_rows(x, w, b):
    """LayerNorm over the last dim of row-major (N, D) activations; w/b are (1, D)."""
    mu = jnp.mean(x, axis=-1, keepdims=True)
    var = jnp.mean((x - mu) ** 2, axis=-1, keepdims=True)
    return (x - mu) * jax.lax.rsqrt(var + EPS) * w + b


def _mha_rows(q_rows, k_rows, v_rows, nb, tq, tk, wqkv, bqkv, wo, bo, kbias, shared_qk):
    """Multi-head attention on row-major activations.

    q_rows: (nb*tq, D), k_rows/v_rows: (nb*tk, D)
    wqkv: (D, 3D) packed [q|k|v] (1/sqrt(dh) pre-folded into the q columns), bqkv: (1, 3D)
    wo: (D, D), bo: (1, D), kbias: None or (nb, 1, tk) additive key-padding bias.
    Returns (nb*tq, D).
    """
    D = q_rows.shape[-1]
    dh = D // N_HEAD

    if shared_qk:  # q and k share the same input -> one fused (D, 2D) projection
        qk = jnp.dot(q_rows, wqkv[:, : 2 * D],
                     preferred_element_type=jnp.float32) + bqkv[:, : 2 * D]
        q, k = qk[:, :D], qk[:, D: 2 * D]
    else:
        q = jnp.dot(q_rows, wqkv[:, :D],
                    preferred_element_type=jnp.float32) + bqkv[:, :D]
        k = jnp.dot(k_rows, wqkv[:, D: 2 * D],
                    preferred_element_type=jnp.float32) + bqkv[:, D: 2 * D]
    v = jnp.dot(v_rows, wqkv[:, 2 * D:],
                preferred_element_type=jnp.float32) + bqkv[:, 2 * D:]

    q3 = q.reshape(nb, tq, D)
    k3 = k.reshape(nb, tk, D)
    v3 = v.reshape(nb, tk, D)

    acc = None
    for h in range(N_HEAD):  # static unroll; concat eliminated by folding into out-proj
        sl = slice(h * dh, (h + 1) * dh)
        s = jnp.einsum('bqd,bkd->bqk', q3[:, :, sl], k3[:, :, sl],
                       preferred_element_type=jnp.float32)          # (nb, tq, tk)
        if kbias is not None:
            s = s + kbias
        s = s - jnp.max(s, axis=-1, keepdims=True)
        p = jnp.exp(s)
        p = p * pl.reciprocal(jnp.sum(p, axis=-1, keepdims=True), approx=True)
        o = jnp.einsum('bqk,bkd->bqd', p, v3[:, :, sl],
                       preferred_element_type=jnp.float32)          # (nb, tq, dh)
        contrib = jnp.dot(o.reshape(nb * tq, dh), wo[sl, :],
                          preferred_element_type=jnp.float32)       # (nb*tq, D)
        acc = contrib if acc is None else acc + contrib
    return acc + bo


# ------------------------------------------------------------------- kernel
def transformer_kernel(
    src_ref, pos_ref, qpos_ref, kbias_ref,
    enc_wqkv, enc_bqkv, enc_wo, enc_w1, enc_b1, enc_w2, enc_vd,
    dec_wqkv, dec_bqkv, dec_wo, dec_w1, dec_b1, dec_w2, dec_vd,
    fin_norm,
    hs_ref, mem_ref,
):
    nb, S, D = src_ref.shape
    T = qpos_ref.shape[0]
    Le = enc_wqkv.shape[0]
    Ld = dec_wqkv.shape[0]

    kbias = kbias_ref[...]                                   # (nb, 1, S)
    pos_rows = pos_ref[...].reshape(nb * S, D)               # (nb*S, D)
    qpos_rows = jnp.broadcast_to(qpos_ref[...][None, :, :],
                                 (nb, T, D)).reshape(nb * T, D)

    # ------------------------------- encoder -------------------------------
    x = src_ref[...].reshape(nb * S, D)
    for l in range(Le):                                      # static layer unroll
        vd = enc_vd[l]                                       # (6, D): bo,b2,n1w,n1b,n2w,n2b
        qk = x + pos_rows
        sa = _mha_rows(qk, qk, x, nb, S, S,
                       enc_wqkv[l], enc_bqkv[l], enc_wo[l], vd[0:1],
                       kbias, shared_qk=True)
        x = _ln_rows(x + sa, vd[2:3], vd[3:4])
        h = jnp.maximum(
            jnp.dot(x, enc_w1[l], preferred_element_type=jnp.float32) + enc_b1[l], 0.0)
        ff = jnp.dot(h, enc_w2[l], preferred_element_type=jnp.float32) + vd[1:2]
        x = _ln_rows(x + ff, vd[4:5], vd[5:6])
    mem_rows = x
    mem_ref[...] = mem_rows.reshape(nb, S, D)

    # ------------------------------- decoder -------------------------------
    fn = fin_norm[...]                                       # (2, D)
    t = jnp.zeros((nb * T, D), jnp.float32)                  # tgt = zeros_like(query_pos)
    for l in range(Ld):
        vd = dec_vd[l]   # (9, D): sa_bo,ca_bo,b2,n1w,n1b,n2w,n2b,n3w,n3b
        # self-attention: q = k = tgt + query_pos, v = tgt (no tgt key-padding mask)
        qk = t + qpos_rows
        sa = _mha_rows(qk, qk, t, nb, T, T,
                       dec_wqkv[l, 0], dec_bqkv[l, 0], dec_wo[l, 0], vd[0:1],
                       None, shared_qk=True)
        t = _ln_rows(t + sa, vd[3:4], vd[4:5])
        # cross-attention: q = tgt + query_pos, k = memory + pos, v = memory
        ca = _mha_rows(t + qpos_rows, mem_rows + pos_rows, mem_rows, nb, T, S,
                       dec_wqkv[l, 1], dec_bqkv[l, 1], dec_wo[l, 1], vd[1:2],
                       kbias, shared_qk=False)
        t = _ln_rows(t + ca, vd[5:6], vd[6:7])
        # FFN (relu)
        h = jnp.maximum(
            jnp.dot(t, dec_w1[l], preferred_element_type=jnp.float32) + dec_b1[l], 0.0)
        ff = jnp.dot(h, dec_w2[l], preferred_element_type=jnp.float32) + vd[2:3]
        t = _ln_rows(t + ff, vd[7:8], vd[8:9])
        # fused return_intermediate LayerNorm (was a separate pallas_call before)
        hs_ref[l] = _ln_rows(t, fn[0:1], fn[1:2]).reshape(nb, T, D)


# ------------------------------------------------------------------ wrapper
def _full_spec(p):
    nd = p.ndim
    return pl.BlockSpec(p.shape, lambda *args, nd=nd: (0,) * nd)


def _pick_batch_block(B):
    """Single-TC chips (v5e/v6e): one grid step for the whole batch.
       Multi-TC chips (v7x, v4/v5p megacore): keep a 2-way parallel batch grid."""
    try:
        kind = jax.devices()[0].device_kind.lower()
    except Exception:
        kind = ""
    single_tc = any(s in kind for s in ("v5e", "v6e", "lite"))
    if single_tc or B < 2 or (B % 2) != 0:
        return B
    return B // 2


def transformer_forward(src, mask, query_embed, pos_embed, packed_params,
                        return_intermediate=True, batch_block=None):
    """src/pos_embed: (B, C, H, W), mask: (B, H, W) bool, query_embed: (T, D=C).
       Returns (hs, memory_out): hs (Ld, B, T, D), memory_out (B, C, H, W)."""
    B, C, Hh, Ww = src.shape
    D = C
    S = Hh * Ww
    T = query_embed.shape[0]
    Ld = packed_params[7].shape[0]           # dec_wqkv: (Ld, 2, D, 3D)

    src_bf = jnp.transpose(src.reshape(B, C, S), (0, 2, 1))        # (B, S, D)
    pos_bf = jnp.transpose(pos_embed.reshape(B, C, S), (0, 2, 1))  # (B, S, D)
    kbias = jnp.where(mask.reshape(B, 1, S), NEG_INF, 0.0).astype(jnp.float32)

    Bb = _pick_batch_block(B) if batch_block is None else batch_block
    assert B % Bb == 0
    grid = (B // Bb,)

    data_specs = [
        pl.BlockSpec((Bb, S, D), lambda b: (b, 0, 0)),   # src
        pl.BlockSpec((Bb, S, D), lambda b: (b, 0, 0)),   # pos
        pl.BlockSpec((T, D), lambda b: (0, 0)),          # query_pos (shared across batch)
        pl.BlockSpec((Bb, 1, S), lambda b: (b, 0, 0)),   # key-padding bias
    ]

    hs, mem_bf = pl.pallas_call(
        transformer_kernel,
        out_shape=(jax.ShapeDtypeStruct((Ld, B, T, D), jnp.float32),
                   jax.ShapeDtypeStruct((B, S, D), jnp.float32)),
        grid=grid,
        in_specs=data_specs + [_full_spec(p) for p in packed_params],
        out_specs=(pl.BlockSpec((Ld, Bb, T, D), lambda b: (0, b, 0, 0)),
                   pl.BlockSpec((Bb, S, D), lambda b: (b, 0, 0))),
        compiler_params=pltpu.CompilerParams(dimension_semantics=("parallel",)),
    )(src_bf, pos_bf, query_embed, kbias, *packed_params)

    memory_out = jnp.transpose(mem_bf, (0, 2, 1)).reshape(B, C, Hh, Ww)
    if not return_intermediate:
        hs = hs[-1:]
    return hs, memory_out


# ----------------------------------------------------------- parameter setup
def init_raw_params(key):
    D, F = D_MODEL, DIM_FF

    def w(k, shape, s=0.1):
        return (s * jax.random.normal(k, shape)).astype(jnp.float32)

    def attn(k, pre):
        ks = jax.random.split(k, 8)
        return {pre + 'wq': w(ks[0], (D, D)), pre + 'bq': w(ks[1], (D,), 0.02),
                pre + 'wk': w(ks[2], (D, D)), pre + 'bk': w(ks[3], (D,), 0.02),
                pre + 'wv': w(ks[4], (D, D)), pre + 'bv': w(ks[5], (D,), 0.02),
                pre + 'wo': w(ks[6], (D, D)), pre + 'bo': w(ks[7], (D,), 0.02)}

    def ffn_norms(k, with_n3):
        ks = jax.random.split(k, 4)
        p = {'w1': w(ks[0], (D, F)), 'b1': w(ks[1], (F,), 0.02),
             'w2': w(ks[2], (F, D)), 'b2': w(ks[3], (D,), 0.02),
             'n1w': jnp.ones((D,), jnp.float32), 'n1b': jnp.zeros((D,), jnp.float32),
             'n2w': jnp.ones((D,), jnp.float32), 'n2b': jnp.zeros((D,), jnp.float32)}
        if with_n3:
            p['n3w'] = jnp.ones((D,), jnp.float32)
            p['n3b'] = jnp.zeros((D,), jnp.float32)
        return p

    enc, dec = [], []
    for l in range(NUM_ENC_LAYERS):
        k1, k2 = jax.random.split(jax.random.fold_in(key, 100 + l))
        enc.append({**attn(k1, 'sa_'), **ffn_norms(k2, False)})
    for l in range(NUM_DEC_LAYERS):
        k1, k2, k3 = jax.random.split(jax.random.fold_in(key, 200 + l), 3)
        dec.append({**attn(k1, 'sa_'), **attn(k2, 'ca_'), **ffn_norms(k3, True)})
    return {'enc': enc, 'dec': dec,
            'norm_w': jnp.ones((D_MODEL,), jnp.float32),
            'norm_b': jnp.zeros((D_MODEL,), jnp.float32)}


def pack_params(raw):
    """Pack raw (PyTorch-style) params for the kernel: q|k|v fused, 1/sqrt(dh) folded into
       the q columns, per-layer stacking, and D-width vectors grouped into one array."""
    scale = (D_MODEL // N_HEAD) ** -0.5

    def wqkv(p, pre):
        return jnp.concatenate([p[pre + 'wq'] * scale, p[pre + 'wk'], p[pre + 'wv']], axis=1)

    def bqkv(p, pre):
        return jnp.concatenate([p[pre + 'bq'] * scale, p[pre + 'bk'], p[pre + 'bv']])[None, :]

    enc, dec = raw['enc'], raw['dec']
    packed = (
        jnp.stack([wqkv(p, 'sa_') for p in enc]),                          # enc_wqkv (Le,D,3D)
        jnp.stack([bqkv(p, 'sa_') for p in enc]),                          # enc_bqkv (Le,1,3D)
        jnp.stack([p['sa_wo'] for p in enc]),                              # enc_wo   (Le,D,D)
        jnp.stack([p['w1'] for p in enc]),                                 # enc_w1   (Le,D,F)
        jnp.stack([p['b1'][None] for p in enc]),                           # enc_b1   (Le,1,F)
        jnp.stack([p['w2'] for p in enc]),                                 # enc_w2   (Le,F,D)
        jnp.stack([jnp.stack([p['sa_bo'], p['b2'], p['n1w'], p['n1b'],
                              p['n2w'], p['n2b']]) for p in enc]),         # enc_vd   (Le,6,D)
        jnp.stack([jnp.stack([wqkv(p, 'sa_'), wqkv(p, 'ca_')]) for p in dec]),  # (Ld,2,D,3D)
        jnp.stack([jnp.stack([bqkv(p, 'sa_'), bqkv(p, 'ca_')]) for p in dec]),  # (Ld,2,1,3D)
        jnp.stack([jnp.stack([p['sa_wo'], p['ca_wo']]) for p in dec]),          # (Ld,2,D,D)
        jnp.stack([p['w1'] for p in dec]),                                 # dec_w1   (Ld,D,F)
        jnp.stack([p['b1'][None] for p in dec]),                           # dec_b1   (Ld,1,F)
        jnp.stack([p['w2'] for p in dec]),                                 # dec_w2   (Ld,F,D)
        jnp.stack([jnp.stack([p['sa_bo'], p['ca_bo'], p['b2'],
                              p['n1w'], p['n1b'], p['n2w'], p['n2b'],
                              p['n3w'], p['n3b']]) for p in dec]),         # dec_vd   (Ld,9,D)
        jnp.stack([raw['norm_w'], raw['norm_b']]),                         # fin_norm (2,D)
    )
    return packed


# ------------------------------------------------------- pure-JAX reference
def _ref_ln(x, w, b):
    mu = jnp.mean(x, axis=-1, keepdims=True)
    var = jnp.mean((x - mu) ** 2, axis=-1, keepdims=True)
    return (x - mu) * jax.lax.rsqrt(var + EPS) * w + b


def _ref_mha(qin, kin, vin, p, pre, kbias):
    B, Tq, D = qin.shape
    dh = D // N_HEAD
    q = (qin @ p[pre + 'wq'] + p[pre + 'bq']) * (dh ** -0.5)   # torch MHA: scale after bias
    k = kin @ p[pre + 'wk'] + p[pre + 'bk']
    v = vin @ p[pre + 'wv'] + p[pre + 'bv']
    q = q.reshape(B, Tq, N_HEAD, dh)
    k = k.reshape(B, -1, N_HEAD, dh)
    v = v.reshape(B, -1, N_HEAD, dh)
    s = jnp.einsum('bqhd,bkhd->bhqk', q, k)
    if kbias is not None:
        s = s + kbias
    a = jax.nn.softmax(s, axis=-1)
    o = jnp.einsum('bhqk,bkhd->bqhd', a, v).reshape(B, Tq, D)
    return o @ p[pre + 'wo'] + p[pre + 'bo']


def _ref_enc_layer(x, pos, kbias, p):
    qk = x + pos
    sa = _ref_mha(qk, qk, x, p, 'sa_', kbias)
    x = _ref_ln(x + sa, p['n1w'], p['n1b'])
    h = jax.nn.relu(x @ p['w1'] + p['b1'])
    return _ref_ln(x + h @ p['w2'] + p['b2'], p['n2w'], p['n2b'])


def _ref_dec_layer(t, mem, qpos, pos, kbias, p):
    qk = t + qpos
    sa = _ref_mha(qk, qk, t, p, 'sa_', None)
    t = _ref_ln(t + sa, p['n1w'], p['n1b'])
    ca = _ref_mha(t + qpos, mem + pos, mem, p, 'ca_', kbias)
    t = _ref_ln(t + ca, p['n2w'], p['n2b'])
    h = jax.nn.relu(t @ p['w1'] + p['b1'])
    return _ref_ln(t + h @ p['w2'] + p['b2'], p['n3w'], p['n3b'])


def reference_forward(src, mask, query_embed, pos_embed, raw, return_intermediate=True):
    B, C, Hh, Ww = src.shape
    S, D = Hh * Ww, C
    T = query_embed.shape[0]
    x = jnp.transpose(src.reshape(B, C, S), (0, 2, 1))
    pos = jnp.transpose(pos_embed.reshape(B, C, S), (0, 2, 1))
    kbias = jnp.where(mask.reshape(B, 1, 1, S), NEG_INF, 0.0).astype(jnp.float32)
    qpos = jnp.broadcast_to(query_embed[None], (B, T, D))
    for p in raw['enc']:
        x = _ref_enc_layer(x, pos, kbias, p)
    mem = x
    t = jnp.zeros((B, T, D), jnp.float32)
    inters = []
    for p in raw['dec']:
        t = _ref_dec_layer(t, mem, qpos, pos, kbias, p)
        inters.append(_ref_ln(t, raw['norm_w'], raw['norm_b']))
    hs = jnp.stack(inters, axis=0)
    if not return_intermediate:
        hs = hs[-1:]
    memory_out = jnp.transpose(mem, (0, 2, 1)).reshape(B, C, Hh, Ww)
    return hs, memory_out


# ------------------------------------------------------------------- main
if __name__ == "__main__":
    key = jax.random.PRNGKey(0)
    B, C, Hh, Ww = 2, D_MODEL, 4, 4          # S = H*W = 16 memory tokens, d_model = 32
    T = 8                                    # number of object queries
    k1, k2, k3, k4 = jax.random.split(key, 4)
    src = jax.random.normal(k1, (B, C, Hh, Ww), jnp.float32)
    pos_embed = jax.random.normal(k2, (B, C, Hh, Ww), jnp.float32)
    query_embed = jax.random.normal(k3, (T, D_MODEL), jnp.float32)
    mask = jnp.zeros((B, Hh, Ww), dtype=bool)   # no padded positions

    raw = init_raw_params(k4)
    packed = pack_params(raw)

    hs, mem_out = transformer_forward(src, mask, query_embed, pos_embed, packed)
    hs = jax.block_until_ready(hs)
    mem_out = jax.block_until_ready(mem_out)

    hs_ref, mem_ref = reference_forward(src, mask, query_embed, pos_embed, raw)
    assert hs.shape == (NUM_DEC_LAYERS, B, T, D_MODEL), hs.shape
    assert mem_out.shape == (B, C, Hh, Ww), mem_out.shape
    # Tolerance covers the EUP approximate-reciprocal softmax normalization
    # (pl.reciprocal(..., approx=True)); with approx=False agreement is ~1e-5.
    assert jnp.allclose(hs, hs_ref, atol=3e-2, rtol=3e-2), \
        f"hs mismatch, max abs err {float(jnp.max(jnp.abs(hs - hs_ref)))}"
    assert jnp.allclose(mem_out, mem_ref, atol=3e-2, rtol=3e-2), \
        f"memory mismatch, max abs err {float(jnp.max(jnp.abs(mem_out - mem_ref)))}"
    print("KERNEL_OK")
</pallas_src>

<mosaic_0001>
module attributes {stable_mosaic.version = 11 : i64} {
  func.func @transformer_kernel(%arg0: i32, %arg1: memref<1x16x32xf32, #tpu.memory_space<vmem>>, %arg2: memref<1x16x32xf32, #tpu.memory_space<vmem>>, %arg3: memref<8x32xf32, #tpu.memory_space<vmem>>, %arg4: memref<1x1x16xf32, #tpu.memory_space<vmem>>, %arg5: memref<2x32x96xf32, #tpu.memory_space<vmem>>, %arg6: memref<2x1x96xf32, #tpu.memory_space<vmem>>, %arg7: memref<2x32x32xf32, #tpu.memory_space<vmem>>, %arg8: memref<2x32x64xf32, #tpu.memory_space<vmem>>, %arg9: memref<2x1x64xf32, #tpu.memory_space<vmem>>, %arg10: memref<2x64x32xf32, #tpu.memory_space<vmem>>, %arg11: memref<2x6x32xf32, #tpu.memory_space<vmem>>, %arg12: memref<2x2x32x96xf32, #tpu.memory_space<vmem>>, %arg13: memref<2x2x1x96xf32, #tpu.memory_space<vmem>>, %arg14: memref<2x2x32x32xf32, #tpu.memory_space<vmem>>, %arg15: memref<2x32x64xf32, #tpu.memory_space<vmem>>, %arg16: memref<2x1x64xf32, #tpu.memory_space<vmem>>, %arg17: memref<2x64x32xf32, #tpu.memory_space<vmem>>, %arg18: memref<2x9x32xf32, #tpu.memory_space<vmem>>, %arg19: memref<2x32xf32, #tpu.memory_space<vmem>>, %arg20: memref<2x1x8x32xf32, #tpu.memory_space<vmem>>, %arg21: memref<1x16x32xf32, #tpu.memory_space<vmem>>) attributes {dimension_semantics = [#tpu.dimension_semantics<parallel>], iteration_bounds = array<i64: 2>, scalar_prefetch = 0 : i64, scratch_operands = 0 : i64, tpu.core_type = #tpu.core_type<tc>, window_params = [{transform_indices = @transform_0, window_bounds = array<i64: 1, 16, 32>}, {transform_indices = @transform_1, window_bounds = array<i64: 1, 16, 32>}, {pipeline_mode = #tpu.pipeline_mode<synchronous>, transform_indices = @transform_2, window_bounds = array<i64: 8, 32>}, {transform_indices = @transform_3, window_bounds = array<i64: 1, 1, 16>}, {pipeline_mode = #tpu.pipeline_mode<synchronous>, transform_indices = @transform_4, window_bounds = array<i64: 2, 32, 96>}, {pipeline_mode = #tpu.pipeline_mode<synchronous>, transform_indices = @transform_5, window_bounds = array<i64: 2, 1, 96>}, {pipeline_mode = #tpu.pipeline_mode<synchronous>, transform_indices = @transform_6, window_bounds = array<i64: 2, 32, 32>}, {pipeline_mode = #tpu.pipeline_mode<synchronous>, transform_indices = @transform_7, window_bounds = array<i64: 2, 32, 64>}, {pipeline_mode = #tpu.pipeline_mode<synchronous>, transform_indices = @transform_8, window_bounds = array<i64: 2, 1, 64>}, {pipeline_mode = #tpu.pipeline_mode<synchronous>, transform_indices = @transform_9, window_bounds = array<i64: 2, 64, 32>}, {pipeline_mode = #tpu.pipeline_mode<synchronous>, transform_indices = @transform_10, window_bounds = array<i64: 2, 6, 32>}, {pipeline_mode = #tpu.pipeline_mode<synchronous>, transform_indices = @transform_11, window_bounds = array<i64: 2, 2, 32, 96>}, {pipeline_mode = #tpu.pipeline_mode<synchronous>, transform_indices = @transform_12, window_bounds = array<i64: 2, 2, 1, 96>}, {pipeline_mode = #tpu.pipeline_mode<synchronous>, transform_indices = @transform_13, window_bounds = array<i64: 2, 2, 32, 32>}, {pipeline_mode = #tpu.pipeline_mode<synchronous>, transform_indices = @transform_14, window_bounds = array<i64: 2, 32, 64>}, {pipeline_mode = #tpu.pipeline_mode<synchronous>, transform_indices = @transform_15, window_bounds = array<i64: 2, 1, 64>}, {pipeline_mode = #tpu.pipeline_mode<synchronous>, transform_indices = @transform_16, window_bounds = array<i64: 2, 64, 32>}, {pipeline_mode = #tpu.pipeline_mode<synchronous>, transform_indices = @transform_17, window_bounds = array<i64: 2, 9, 32>}, {pipeline_mode = #tpu.pipeline_mode<synchronous>, transform_indices = @transform_18, window_bounds = array<i64: 2, 32>}, {transform_indices = @transform_19, window_bounds = array<i64: 2, 1, 8, 32>}, {transform_indices = @transform_20, window_bounds = array<i64: 1, 16, 32>}]} {
    %c0 = arith.constant 0 : index
    %c0_0 = arith.constant 0 : index
    %c0_1 = arith.constant 0 : index
    %0 = vector.load %arg4[%c0, %c0_0, %c0_1] : memref<1x1x16xf32, #tpu.memory_space<vmem>>, vector<1x1x16xf32>
    %c0_2 = arith.constant 0 : index
    %c0_3 = arith.constant 0 : index
    %c0_4 = arith.constant 0 : index
    %1 = vector.load %arg2[%c0_2, %c0_3, %c0_4] : memref<1x16x32xf32, #tpu.memory_space<vmem>>, vector<1x16x32xf32>
    %2 = vector.shape_cast %1 : vector<1x16x32xf32> to vector<16x32xf32>
    %c0_5 = arith.constant 0 : index
    %c0_6 = arith.constant 0 : index
    %3 = vector.load %arg3[%c0_5, %c0_6] : memref<8x32xf32, #tpu.memory_space<vmem>>, vector<8x32xf32>
    %4 = vector.shape_cast %3 : vector<8x32xf32> to vector<1x8x32xf32>
    %5 = vector.shape_cast %4 : vector<1x8x32xf32> to vector<8x32xf32>
    %c0_7 = arith.constant 0 : index
    %c0_8 = arith.constant 0 : index
    %c0_9 = arith.constant 0 : index
    %6 = vector.load %arg1[%c0_7, %c0_8, %c0_9] : memref<1x16x32xf32, #tpu.memory_space<vmem>>, vector<1x16x32xf32>
    %7 = vector.shape_cast %6 : vector<1x16x32xf32> to vector<16x32xf32>
    %c0_10 = arith.constant 0 : index
    %c0_11 = arith.constant 0 : index
    %c0_12 = arith.constant 0 : index
    %8 = vector.load %arg11[%c0_10, %c0_11, %c0_12] : memref<2x6x32xf32, #tpu.memory_space<vmem>>, vector<1x6x32xf32>
    %9 = vector.shape_cast %8 : vector<1x6x32xf32> to vector<6x32xf32>
    %10 = arith.addf %7, %2 : vector<16x32xf32>
    %c0_13 = arith.constant 0 : index
    %c0_14 = arith.constant 0 : index
    %c0_15 = arith.constant 0 : index
    %11 = vector.load %arg5[%c0_13, %c0_14, %c0_15] : memref<2x32x96xf32, #tpu.memory_space<vmem>>, vector<1x32x96xf32>
    %12 = vector.shape_cast %11 : vector<1x32x96xf32> to vector<32x96xf32>
    %c0_16 = arith.constant 0 : index
    %c0_17 = arith.constant 0 : index
    %c0_18 = arith.constant 0 : index
    %13 = vector.load %arg6[%c0_16, %c0_17, %c0_18] : memref<2x1x96xf32, #tpu.memory_space<vmem>>, vector<1x1x96xf32>
    %14 = vector.shape_cast %13 : vector<1x1x96xf32> to vector<1x96xf32>
    %c0_19 = arith.constant 0 : index
    %c0_20 = arith.constant 0 : index
    %c0_21 = arith.constant 0 : index
    %15 = vector.load %arg7[%c0_19, %c0_20, %c0_21] : memref<2x32x32xf32, #tpu.memory_space<vmem>>, vector<1x32x32xf32>
    %16 = vector.shape_cast %15 : vector<1x32x32xf32> to vector<32x32xf32>
    %17 = vector.extract_strided_slice %9 {offsets = [0, 0], sizes = [1, 32], strides = [1, 1]} : vector<6x32xf32> to vector<1x32xf32>
    %18 = vector.extract_strided_slice %12 {offsets = [0, 0], sizes = [32, 64], strides = [1, 1]} : vector<32x96xf32> to vector<32x64xf32>
    %cst = arith.constant dense<0.000000e+00> : vector<16x64xf32>
    %19 = tpu.matmul %10, %18, %cst {dimension_numbers = #tpu.dot_dimension_numbers<[1], [0], [0], [1], [0, 0, 1, 1], [], []>} : vector<16x32xf32>, vector<32x64xf32>, vector<16x64xf32> -> vector<16x64xf32>
    %20 = vector.extract_strided_slice %14 {offsets = [0, 0], sizes = [1, 64], strides = [1, 1]} : vector<1x96xf32> to vector<1x64xf32>
    %21 = vector.broadcast %20 : vector<1x64xf32> to vector<16x64xf32>
    %22 = arith.addf %19, %21 : vector<16x64xf32>
    %23 = vector.extract_strided_slice %22 {offsets = [0, 0], sizes = [16, 32], strides = [1, 1]} : vector<16x64xf32> to vector<16x32xf32>
    %24 = vector.extract_strided_slice %22 {offsets = [0, 32], sizes = [16, 32], strides = [1, 1]} : vector<16x64xf32> to vector<16x32xf32>
    %25 = vector.extract_strided_slice %12 {offsets = [0, 64], sizes = [32, 32], strides = [1, 1]} : vector<32x96xf32> to vector<32x32xf32>
    %cst_22 = arith.constant dense<0.000000e+00> : vector<16x32xf32>
    %26 = tpu.matmul %7, %25, %cst_22 {dimension_numbers = #tpu.dot_dimension_numbers<[1], [0], [0], [1], [0, 0, 1, 1], [], []>} : vector<16x32xf32>, vector<32x32xf32>, vector<16x32xf32> -> vector<16x32xf32>
    %27 = vector.extract_strided_slice %14 {offsets = [0, 64], sizes = [1, 32], strides = [1, 1]} : vector<1x96xf32> to vector<1x32xf32>
    %28 = vector.broadcast %27 : vector<1x32xf32> to vector<16x32xf32>
    %29 = arith.addf %26, %28 : vector<16x32xf32>
    %30 = vector.shape_cast %23 : vector<16x32xf32> to vector<1x16x32xf32>
    %31 = vector.shape_cast %24 : vector<16x32xf32> to vector<1x16x32xf32>
    %32 = vector.shape_cast %29 : vector<16x32xf32> to vector<1x16x32xf32>
    %33 = vector.extract_strided_slice %30 {offsets = [0, 0, 0], sizes = [1, 16, 8], strides = [1, 1, 1]} : vector<1x16x32xf32> to vector<1x16x8xf32>
    %34 = vector.extract_strided_slice %31 {offsets = [0, 0, 0], sizes = [1, 16, 8], strides = [1, 1, 1]} : vector<1x16x32xf32> to vector<1x16x8xf32>
    "tpu.trace_start"() <{level = 10 : i32, message = "bqd,bkd->bqk"}> : () -> ()
    %cst_23 = arith.constant dense<0.000000e+00> : vector<1x16x16xf32>
    %35 = tpu.matmul %33, %34, %cst_23 {dimension_numbers = #tpu.dot_dimension_numbers<[2], [2], [1], [1], [0, 0, 0, 1, 1, 1], [0], [0]>} : vector<1x16x8xf32>, vector<1x16x8xf32>, vector<1x16x16xf32> -> vector<1x16x16xf32>
    "tpu.trace_stop"() : () -> ()
    %36 = vector.broadcast %0 : vector<1x1x16xf32> to vector<1x16x16xf32>
    %37 = arith.addf %35, %36 : vector<1x16x16xf32>
    %cst_24 = arith.constant dense<0xFF800000> : vector<1x16xf32>
    %38 = vector.multi_reduction <maximumf>, %37, %cst_24 [2] : vector<1x16x16xf32> to vector<1x16xf32>
    %39 = vector.shape_cast %38 : vector<1x16xf32> to vector<1x16x1xf32>
    %40 = vector.broadcast %39 : vector<1x16x1xf32> to vector<1x16x16xf32>
    %41 = arith.subf %37, %40 : vector<1x16x16xf32>
    %42 = math.exp %41 : vector<1x16x16xf32>
    %cst_25 = arith.constant dense<0.000000e+00> : vector<1x16xf32>
    %43 = vector.multi_reduction <add>, %42, %cst_25 [2] : vector<1x16x16xf32> to vector<1x16xf32>
    %44 = vector.shape_cast %43 : vector<1x16xf32> to vector<1x16x1xf32>
    %45 = tpu.reciprocal %44 {approx = true} : vector<1x16x1xf32> -> vector<1x16x1xf32>
    %46 = vector.broadcast %45 : vector<1x16x1xf32> to vector<1x16x16xf32>
    %47 = arith.mulf %42, %46 : vector<1x16x16xf32>
    %48 = vector.extract_strided_slice %32 {offsets = [0, 0, 0], sizes = [1, 16, 8], strides = [1, 1, 1]} : vector<1x16x32xf32> to vector<1x16x8xf32>
    "tpu.trace_start"() <{level = 10 : i32, message = "bqk,bkd->bqd"}> : () -> ()
    %cst_26 = arith.constant dense<0.000000e+00> : vector<1x16x8xf32>
    %49 = tpu.matmul %47, %48, %cst_26 {dimension_numbers = #tpu.dot_dimension_numbers<[2], [1], [1], [2], [0, 0, 0, 1, 1, 2], [0], [0]>} : vector<1x16x16xf32>, vector<1x16x8xf32>, vector<1x16x8xf32> -> vector<1x16x8xf32>
    "tpu.trace_stop"() : () -> ()
    %50 = vector.shape_cast %49 : vector<1x16x8xf32> to vector<16x8xf32>
    %51 = vector.extract_strided_slice %16 {offsets = [0, 0], sizes = [8, 32], strides = [1, 1]} : vector<32x32xf32> to vector<8x32xf32>
    %cst_27 = arith.constant dense<0.000000e+00> : vector<16x32xf32>
    %52 = tpu.matmul %50, %51, %cst_27 {dimension_numbers = #tpu.dot_dimension_numbers<[1], [0], [0], [1], [0, 0, 1, 1], [], []>} : vector<16x8xf32>, vector<8x32xf32>, vector<16x32xf32> -> vector<16x32xf32>
    %53 = vector.extract_strided_slice %30 {offsets = [0, 0, 8], sizes = [1, 16, 8], strides = [1, 1, 1]} : vector<1x16x32xf32> to vector<1x16x8xf32>
    %54 = vector.extract_strided_slice %31 {offsets = [0, 0, 8], sizes = [1, 16, 8], strides = [1, 1, 1]} : vector<1x16x32xf32> to vector<1x16x8xf32>
    "tpu.trace_start"() <{level = 10 : i32, message = "bqd,bkd->bqk"}> : () -> ()
    %cst_28 = arith.constant dense<0.000000e+00> : vector<1x16x16xf32>
    %55 = tpu.matmul %53, %54, %cst_28 {dimension_numbers = #tpu.dot_dimension_numbers<[2], [2], [1], [1], [0, 0, 0, 1, 1, 1], [0], [0]>} : vector<1x16x8xf32>, vector<1x16x8xf32>, vector<1x16x16xf32> -> vector<1x16x16xf32>
    "tpu.trace_stop"() : () -> ()
    %56 = vector.broadcast %0 : vector<1x1x16xf32> to vector<1x16x16xf32>
    %57 = arith.addf %55, %56 : vector<1x16x16xf32>
    %cst_29 = arith.constant dense<0xFF800000> : vector<1x16xf32>
    %58 = vector.multi_reduction <maximumf>, %57, %cst_29 [2] : vector<1x16x16xf32> to vector<1x16xf32>
    %59 = vector.shape_cast %58 : vector<1x16xf32> to vector<1x16x1xf32>
    %60 = vector.broadcast %59 : vector<1x16x1xf32> to vector<1x16x16xf32>
    %61 = arith.subf %57, %60 : vector<1x16x16xf32>
    %62 = math.exp %61 : vector<1x16x16xf32>
    %cst_30 = arith.constant dense<0.000000e+00> : vector<1x16xf32>
    %63 = vector.multi_reduction <add>, %62, %cst_30 [2] : vector<1x16x16xf32> to vector<1x16xf32>
    %64 = vector.shape_cast %63 : vector<1x16xf32> to vector<1x16x1xf32>
    %65 = tpu.reciprocal %64 {approx = true} : vector<1x16x1xf32> -> vector<1x16x1xf32>
    %66 = vector.broadcast %65 : vector<1x16x1xf32> to vector<1x16x16xf32>
    %67 = arith.mulf %62, %66 : vector<1x16x16xf32>
    %68 = vector.extract_strided_slice %32 {offsets = [0, 0, 8], sizes = [1, 16, 8], strides = [1, 1, 1]} : vector<1x16x32xf32> to vector<1x16x8xf32>
    "tpu.trace_start"() <{level = 10 : i32, message = "bqk,bkd->bqd"}> : () -> ()
    %cst_31 = arith.constant dense<0.000000e+00> : vector<1x16x8xf32>
    %69 = tpu.matmul %67, %68, %cst_31 {dimension_numbers = #tpu.dot_dimension_numbers<[2], [1], [1], [2], [0, 0, 0, 1, 1, 2], [0], [0]>} : vector<1x16x16xf32>, vector<1x16x8xf32>, vector<1x16x8xf32> -> vector<1x16x8xf32>
    "tpu.trace_stop"() : () -> ()
    %70 = vector.shape_cast %69 : vector<1x16x8xf32> to vector<16x8xf32>
    %71 = vector.extract_strided_slice %16 {offsets = [8, 0], sizes = [8, 32], strides = [1, 1]} : vector<32x32xf32> to vector<8x32xf32>
    %cst_32 = arith.constant dense<0.000000e+00> : vector<16x32xf32>
    %72 = tpu.matmul %70, %71, %cst_32 {dimension_numbers = #tpu.dot_dimension_numbers<[1], [0], [0], [1], [0, 0, 1, 1], [], []>} : vector<16x8xf32>, vector<8x32xf32>, vector<16x32xf32> -> vector<16x32xf32>
    %73 = arith.addf %52, %72 : vector<16x32xf32>
    %74 = vector.extract_strided_slice %30 {offsets = [0, 0, 16], sizes = [1, 16, 8], strides = [1, 1, 1]} : vector<1x16x32xf32> to vector<1x16x8xf32>
    %75 = vector.extract_strided_slice %31 {offsets = [0, 0, 16], sizes = [1, 16, 8], strides = [1, 1, 1]} : vector<1x16x32xf32> to vector<1x16x8xf32>
    "tpu.trace_start"() <{level = 10 : i32, message = "bqd,bkd->bqk"}> : () -> ()
    %cst_33 = arith.constant dense<0.000000e+00> : vector<1x16x16xf32>
    %76 = tpu.matmul %74, %75, %cst_33 {dimension_numbers = #tpu.dot_dimension_numbers<[2], [2], [1], [1], [0, 0, 0, 1, 1, 1], [0], [0]>} : vector<1x16x8xf32>, vector<1x16x8xf32>, vector<1x16x16xf32> -> vector<1x16x16xf32>
    "tpu.trace_stop"() : () -> ()
    %77 = vector.broadcast %0 : vector<1x1x16xf32> to vector<1x16x16xf32>
    %78 = arith.addf %76, %77 : vector<1x16x16xf32>
    %cst_34 = arith.constant dense<0xFF800000> : vector<1x16xf32>
    %79 = vector.multi_reduction <maximumf>, %78, %cst_34 [2] : vector<1x16x16xf32> to vector<1x16xf32>
    %80 = vector.shape_cast %79 : vector<1x16xf32> to vector<1x16x1xf32>
    %81 = vector.broadcast %80 : vector<1x16x1xf32> to vector<1x16x16xf32>
    %82 = arith.subf %78, %81 : vector<1x16x16xf32>
    %83 = math.exp %82 : vector<1x16x16xf32>
    %cst_35 = arith.constant dense<0.000000e+00> : vector<1x16xf32>
    %84 = vector.multi_reduction <add>, %83, %cst_35 [2] : vector<1x16x16xf32> to vector<1x16xf32>
    %85 = vector.shape_cast %84 : vector<1x16xf32> to vector<1x16x1xf32>
    %86 = tpu.reciprocal %85 {approx = true} : vector<1x16x1xf32> -> vector<1x16x1xf32>
    %87 = vector.broadcast %86 : vector<1x16x1xf32> to vector<1x16x16xf32>
    %88 = arith.mulf %83, %87 : vector<1x16x16xf32>
    %89 = vector.extract_strided_slice %32 {offsets = [0, 0, 16], sizes = [1, 16, 8], strides = [1, 1, 1]} : vector<1x16x32xf32> to vector<1x16x8xf32>
    "tpu.trace_start"() <{level = 10 : i32, message = "bqk,bkd->bqd"}> : () -> ()
    %cst_36 = arith.constant dense<0.000000e+00> : vector<1x16x8xf32>
    %90 = tpu.matmul %88, %89, %cst_36 {dimension_numbers = #tpu.dot_dimension_numbers<[2], [1], [1], [2], [0, 0, 0, 1, 1, 2], [0], [0]>} : vector<1x16x16xf32>, vector<1x16x8xf32>, vector<1x16x8xf32> -> vector<1x16x8xf32>
    "tpu.trace_stop"() : () -> ()
    %91 = vector.shape_cast %90 : vector<1x16x8xf32> to vector<16x8xf32>
    %92 = vector.extract_strided_slice %16 {offsets = [16, 0], sizes = [8, 32], strides = [1, 1]} : vector<32x32xf32> to vector<8x32xf32>
    %cst_37 = arith.constant dense<0.000000e+00> : vector<16x32xf32>
    %93 = tpu.matmul %91, %92, %cst_37 {dimension_numbers = #tpu.dot_dimension_numbers<[1], [0], [0], [1], [0, 0, 1, 1], [], []>} : vector<16x8xf32>, vector<8x32xf32>, vector<16x32xf32> -> vector<16x32xf32>
    %94 = arith.addf %73, %93 : vector<16x32xf32>
    %95 = vector.extract_strided_slice %30 {offsets = [0, 0, 24], sizes = [1, 16, 8], strides = [1, 1, 1]} : vector<1x16x32xf32> to vector<1x16x8xf32>
    %96 = vector.extract_strided_slice %31 {offsets = [0, 0, 24], sizes = [1, 16, 8], strides = [1, 1, 1]} : vector<1x16x32xf32> to vector<1x16x8xf32>
    "tpu.trace_start"() <{level = 10 : i32, message = "bqd,bkd->bqk"}> : () -> ()
    %cst_38 = arith.constant dense<0.000000e+00> : vector<1x16x16xf32>
    %97 = tpu.matmul %95, %96, %cst_38 {dimension_numbers = #tpu.dot_dimension_numbers<[2], [2], [1], [1], [0, 0, 0, 1, 1, 1], [0], [0]>} : vector<1x16x8xf32>, vector<1x16x8xf32>, vector<1x16x16xf32> -> vector<1x16x16xf32>
    "tpu.trace_stop"() : () -> ()
    %98 = vector.broadcast %0 : vector<1x1x16xf32> to vector<1x16x16xf32>
    %99 = arith.addf %97, %98 : vector<1x16x16xf32>
    %cst_39 = arith.constant dense<0xFF800000> : vector<1x16xf32>
    %100 = vector.multi_reduction <maximumf>, %99, %cst_39 [2] : vector<1x16x16xf32> to vector<1x16xf32>
    %101 = vector.shape_cast %100 : vector<1x16xf32> to vector<1x16x1xf32>
    %102 = vector.broadcast %101 : vector<1x16x1xf32> to vector<1x16x16xf32>
    %103 = arith.subf %99, %102 : vector<1x16x16xf32>
    %104 = math.exp %103 : vector<1x16x16xf32>
    %cst_40 = arith.constant dense<0.000000e+00> : vector<1x16xf32>
    %105 = vector.multi_reduction <add>, %104, %cst_40 [2] : vector<1x16x16xf32> to vector<1x16xf32>
    %106 = vector.shape_cast %105 : vector<1x16xf32> to vector<1x16x1xf32>
    %107 = tpu.reciprocal %106 {approx = true} : vector<1x16x1xf32> -> vector<1x16x1xf32>
    %108 = vector.broadcast %107 : vector<1x16x1xf32> to vector<1x16x16xf32>
    %109 = arith.mulf %104, %108 : vector<1x16x16xf32>
    %110 = vector.extract_strided_slice %32 {offsets = [0, 0, 24], sizes = [1, 16, 8], strides = [1, 1, 1]} : vector<1x16x32xf32> to vector<1x16x8xf32>
    "tpu.trace_start"() <{level = 10 : i32, message = "bqk,bkd->bqd"}> : () -> ()
    %cst_41 = arith.constant dense<0.000000e+00> : vector<1x16x8xf32>
    %111 = tpu.matmul %109, %110, %cst_41 {dimension_numbers = #tpu.dot_dimension_numbers<[2], [1], [1], [2], [0, 0, 0, 1, 1, 2], [0], [0]>} : vector<1x16x16xf32>, vector<1x16x8xf32>, vector<1x16x8xf32> -> vector<1x16x8xf32>
    "tpu.trace_stop"() : () -> ()
    %112 = vector.shape_cast %111 : vector<1x16x8xf32> to vector<16x8xf32>
    %113 = vector.extract_strided_slice %16 {offsets = [24, 0], sizes = [8, 32], strides = [1, 1]} : vector<32x32xf32> to vector<8x32xf32>
    %cst_42 = arith.constant dense<0.000000e+00> : vector<16x32xf32>
    %114 = tpu.matmul %112, %113, %cst_42 {dimension_numbers = #tpu.dot_dimension_numbers<[1], [0], [0], [1], [0, 0, 1, 1], [], []>} : vector<16x8xf32>, vector<8x32xf32>, vector<16x32xf32> -> vector<16x32xf32>
    %115 = arith.addf %94, %114 : vector<16x32xf32>
    %116 = vector.broadcast %17 : vector<1x32xf32> to vector<16x32xf32>
    %117 = arith.addf %115, %116 : vector<16x32xf32>
    %118 = arith.addf %7, %117 : vector<16x32xf32>
    %119 = vector.extract_strided_slice %9 {offsets = [2, 0], sizes = [1, 32], strides = [1, 1]} : vector<6x32xf32> to vector<1x32xf32>
    %120 = vector.extract_strided_slice %9 {offsets = [3, 0], sizes = [1, 32], strides = [1, 1]} : vector<6x32xf32> to vector<1x32xf32>
    %cst_43 = arith.constant dense<0.000000e+00> : vector<16xf32>
    %121 = vector.multi_reduction <add>, %118, %cst_43 [1] : vector<16x32xf32> to vector<16xf32>
    %122 = vector.shape_cast %121 : vector<16xf32> to vector<16x1xf32>
    %cst_44 = arith.constant 3.200000e+01 : f32
    %123 = vector.broadcast %cst_44 : f32 to vector<16x1xf32>
    %124 = arith.divf %122, %123 : vector<16x1xf32>
    %125 = vector.broadcast %124 : vector<16x1xf32> to vector<16x32xf32>
    %126 = arith.subf %118, %125 : vector<16x32xf32>
    %127 = arith.mulf %126, %126 : vector<16x32xf32>
    %cst_45 = arith.constant dense<0.000000e+00> : vector<16xf32>
    %128 = vector.multi_reduction <add>, %127, %cst_45 [1] : vector<16x32xf32> to vector<16xf32>
    %129 = vector.shape_cast %128 : vector<16xf32> to vector<16x1xf32>
    %cst_46 = arith.constant 3.200000e+01 : f32
    %130 = vector.broadcast %cst_46 : f32 to vector<16x1xf32>
    %131 = arith.divf %129, %130 : vector<16x1xf32>
    %132 = vector.broadcast %124 : vector<16x1xf32> to vector<16x32xf32>
    %133 = arith.subf %118, %132 : vector<16x32xf32>
    %cst_47 = arith.constant 9.99999974E-6 : f32
    %134 = vector.broadcast %cst_47 : f32 to vector<16x1xf32>
    %135 = arith.addf %131, %134 : vector<16x1xf32>
    %136 = math.rsqrt %135 : vector<16x1xf32>
    %137 = vector.broadcast %136 : vector<16x1xf32> to vector<16x32xf32>
    %138 = arith.mulf %133, %137 : vector<16x32xf32>
    %139 = vector.broadcast %119 : vector<1x32xf32> to vector<16x32xf32>
    %140 = arith.mulf %138, %139 : vector<16x32xf32>
    %141 = vector.broadcast %120 : vector<1x32xf32> to vector<16x32xf32>
    %142 = arith.addf %140, %141 : vector<16x32xf32>
    %c0_48 = arith.constant 0 : index
    %c0_49 = arith.constant 0 : index
    %c0_50 = arith.constant 0 : index
    %143 = vector.load %arg8[%c0_48, %c0_49, %c0_50] : memref<2x32x64xf32, #tpu.memory_space<vmem>>, vector<1x32x64xf32>
    %144 = vector.shape_cast %143 : vector<1x32x64xf32> to vector<32x64xf32>
    %cst_51 = arith.constant dense<0.000000e+00> : vector<16x64xf32>
    %145 = tpu.matmul %142, %144, %cst_51 {dimension_numbers = #tpu.dot_dimension_numbers<[1], [0], [0], [1], [0, 0, 1, 1], [], []>} : vector<16x32xf32>, vector<32x64xf32>, vector<16x64xf32> -> vector<16x64xf32>
    %c0_52 = arith.constant 0 : index
    %c0_53 = arith.constant 0 : index
    %c0_54 = arith.constant 0 : index
    %146 = vector.load %arg9[%c0_52, %c0_53, %c0_54] : memref<2x1x64xf32, #tpu.memory_space<vmem>>, vector<1x1x64xf32>
    %147 = vector.shape_cast %146 : vector<1x1x64xf32> to vector<1x64xf32>
    %148 = vector.broadcast %147 : vector<1x64xf32> to vector<16x64xf32>
    %149 = arith.addf %145, %148 : vector<16x64xf32>
    %cst_55 = arith.constant 0.000000e+00 : f32
    %150 = vector.broadcast %cst_55 : f32 to vector<16x64xf32>
    %151 = arith.maximumf %149, %150 : vector<16x64xf32>
    %c0_56 = arith.constant 0 : index
    %c0_57 = arith.constant 0 : index
    %c0_58 = arith.constant 0 : index
    %152 = vector.load %arg10[%c0_56, %c0_57, %c0_58] : memref<2x64x32xf32, #tpu.memory_space<vmem>>, vector<1x64x32xf32>
    %153 = vector.shape_cast %152 : vector<1x64x32xf32> to vector<64x32xf32>
    %cst_59 = arith.constant dense<0.000000e+00> : vector<16x32xf32>
    %154 = tpu.matmul %151, %153, %cst_59 {dimension_numbers = #tpu.dot_dimension_numbers<[1], [0], [0], [1], [0, 0, 1, 1], [], []>} : vector<16x64xf32>, vector<64x32xf32>, vector<16x32xf32> -> vector<16x32xf32>
    %155 = vector.extract_strided_slice %9 {offsets = [1, 0], sizes = [1, 32], strides = [1, 1]} : vector<6x32xf32> to vector<1x32xf32>
    %156 = vector.broadcast %155 : vector<1x32xf32> to vector<16x32xf32>
    %157 = arith.addf %154, %156 : vector<16x32xf32>
    %158 = arith.addf %142, %157 : vector<16x32xf32>
    %159 = vector.extract_strided_slice %9 {offsets = [4, 0], sizes = [1, 32], strides = [1, 1]} : vector<6x32xf32> to vector<1x32xf32>
    %160 = vector.extract_strided_slice %9 {offsets = [5, 0], sizes = [1, 32], strides = [1, 1]} : vector<6x32xf32> to vector<1x32xf32>
    %cst_60 = arith.constant dense<0.000000e+00> : vector<16xf32>
    %161 = vector.multi_reduction <add>, %158, %cst_60 [1] : vector<16x32xf32> to vector<16xf32>
    %162 = vector.shape_cast %161 : vector<16xf32> to vector<16x1xf32>
    %cst_61 = arith.constant 3.200000e+01 : f32
    %163 = vector.broadcast %cst_61 : f32 to vector<16x1xf32>
    %164 = arith.divf %162, %163 : vector<16x1xf32>
    %165 = vector.broadcast %164 : vector<16x1xf32> to vector<16x32xf32>
    %166 = arith.subf %158, %165 : vector<16x32xf32>
    %167 = arith.mulf %166, %166 : vector<16x32xf32>
    %cst_62 = arith.constant dense<0.000000e+00> : vector<16xf32>
    %168 = vector.multi_reduction <add>, %167, %cst_62 [1] : vector<16x32xf32> to vector<16xf32>
    %169 = vector.shape_cast %168 : vector<16xf32> to vector<16x1xf32>
    %cst_63 = arith.constant 3.200000e+01 : f32
    %170 = vector.broadcast %cst_63 : f32 to vector<16x1xf32>
    %171 = arith.divf %169, %170 : vector<16x1xf32>
    %172 = vector.broadcast %164 : vector<16x1xf32> to vector<16x32xf32>
    %173 = arith.subf %158, %172 : vector<16x32xf32>
    %cst_64 = arith.constant 9.99999974E-6 : f32
    %174 = vector.broadcast %cst_64 : f32 to vector<16x1xf32>
    %175 = arith.addf %171, %174 : vector<16x1xf32>
    %176 = math.rsqrt %175 : vector<16x1xf32>
    %177 = vector.broadcast %176 : vector<16x1xf32> to vector<16x32xf32>
    %178 = arith.mulf %173, %177 : vector<16x32xf32>
    %179 = vector.broadcast %159 : vector<1x32xf32> to vector<16x32xf32>
    %180 = arith.mulf %178, %179 : vector<16x32xf32>
    %181 = vector.broadcast %160 : vector<1x32xf32> to vector<16x32xf32>
    %182 = arith.addf %180, %181 : vector<16x32xf32>
    %c1 = arith.constant 1 : index
    %c0_65 = arith.constant 0 : index
    %c0_66 = arith.constant 0 : index
    %183 = vector.load %arg11[%c1, %c0_65, %c0_66] : memref<2x6x32xf32, #tpu.memory_space<vmem>>, vector<1x6x32xf32>
    %184 = vector.shape_cast %183 : vector<1x6x32xf32> to vector<6x32xf32>
    %185 = arith.addf %182, %2 : vector<16x32xf32>
    %c1_67 = arith.constant 1 : index
    %c0_68 = arith.constant 0 : index
    %c0_69 = arith.constant 0 : index
    %186 = vector.load %arg5[%c1_67, %c0_68, %c0_69] : memref<2x32x96xf32, #tpu.memory_space<vmem>>, vector<1x32x96xf32>
    %187 = vector.shape_cast %186 : vector<1x32x96xf32> to vector<32x96xf32>
    %c1_70 = arith.constant 1 : index
    %c0_71 = arith.constant 0 : index
    %c0_72 = arith.constant 0 : index
    %188 = vector.load %arg6[%c1_70, %c0_71, %c0_72] : memref<2x1x96xf32, #tpu.memory_space<vmem>>, vector<1x1x96xf32>
    %189 = vector.shape_cast %188 : vector<1x1x96xf32> to vector<1x96xf32>
    %c1_73 = arith.constant 1 : index
    %c0_74 = arith.constant 0 : index
    %c0_75 = arith.constant 0 : index
    %190 = vector.load %arg7[%c1_73, %c0_74, %c0_75] : memref<2x32x32xf32, #tpu.memory_space<vmem>>, vector<1x32x32xf32>
    %191 = vector.shape_cast %190 : vector<1x32x32xf32> to vector<32x32xf32>
    %192 = vector.extract_strided_slice %184 {offsets = [0, 0], sizes = [1, 32], strides = [1, 1]} : vector<6x32xf32> to vector<1x32xf32>
    %193 = vector.extract_strided_slice %187 {offsets = [0, 0], sizes = [32, 64], strides = [1, 1]} : vector<32x96xf32> to vector<32x64xf32>
    %cst_76 = arith.constant dense<0.000000e+00> : vector<16x64xf32>
    %194 = tpu.matmul %185, %193, %cst_76 {dimension_numbers = #tpu.dot_dimension_numbers<[1], [0], [0], [1], [0, 0, 1, 1], [], []>} : vector<16x32xf32>, vector<32x64xf32>, vector<16x64xf32> -> vector<16x64xf32>
    %195 = vector.extract_strided_slice %189 {offsets = [0, 0], sizes = [1, 64], strides = [1, 1]} : vector<1x96xf32> to vector<1x64xf32>
    %196 = vector.broadcast %195 : vector<1x64xf32> to vector<16x64xf32>
    %197 = arith.addf %194, %196 : vector<16x64xf32>
    %198 = vector.extract_strided_slice %197 {offsets = [0, 0], sizes = [16, 32], strides = [1, 1]} : vector<16x64xf32> to vector<16x32xf32>
    %199 = vector.extract_strided_slice %197 {offsets = [0, 32], sizes = [16, 32], strides = [1, 1]} : vector<16x64xf32> to vector<16x32xf32>
    %200 = vector.extract_strided_slice %187 {offsets = [0, 64], sizes = [32, 32], strides = [1, 1]} : vector<32x96xf32> to vector<32x32xf32>
    %cst_77 = arith.constant dense<0.000000e+00> : vector<16x32xf32>
    %201 = tpu.matmul %182, %200, %cst_77 {dimension_numbers = #tpu.dot_dimension_numbers<[1], [0], [0], [1], [0, 0, 1, 1], [], []>} : vector<16x32xf32>, vector<32x32xf32>, vector<16x32xf32> -> vector<16x32xf32>
    %202 = vector.extract_strided_slice %189 {offsets = [0, 64], sizes = [1, 32], strides = [1, 1]} : vector<1x96xf32> to vector<1x32xf32>
    %203 = vector.broadcast %202 : vector<1x32xf32> to vector<16x32xf32>
    %204 = arith.addf %201, %203 : vector<16x32xf32>
    %205 = vector.shape_cast %198 : vector<16x32xf32> to vector<1x16x32xf32>
    %206 = vector.shape_cast %199 : vector<16x32xf32> to vector<1x16x32xf32>
    %207 = vector.shape_cast %204 : vector<16x32xf32> to vector<1x16x32xf32>
    %208 = vector.extract_strided_slice %205 {offsets = [0, 0, 0], sizes = [1, 16, 8], strides = [1, 1, 1]} : vector<1x16x32xf32> to vector<1x16x8xf32>
    %209 = vector.extract_strided_slice %206 {offsets = [0, 0, 0], sizes = [1, 16, 8], strides = [1, 1, 1]} : vector<1x16x32xf32> to vector<1x16x8xf32>
    "tpu.trace_start"() <{level = 10 : i32, message = "bqd,bkd->bqk"}> : () -> ()
    %cst_78 = arith.constant dense<0.000000e+00> : vector<1x16x16xf32>
    %210 = tpu.matmul %208, %209, %cst_78 {dimension_numbers = #tpu.dot_dimension_numbers<[2], [2], [1], [1], [0, 0, 0, 1, 1, 1], [0], [0]>} : vector<1x16x8xf32>, vector<1x16x8xf32>, vector<1x16x16xf32> -> vector<1x16x16xf32>
    "tpu.trace_stop"() : () -> ()
    %211 = vector.broadcast %0 : vector<1x1x16xf32> to vector<1x16x16xf32>
    %212 = arith.addf %210, %211 : vector<1x16x16xf32>
    %cst_79 = arith.constant dense<0xFF800000> : vector<1x16xf32>
    %213 = vector.multi_reduction <maximumf>, %212, %cst_79 [2] : vector<1x16x16xf32> to vector<1x16xf32>
    %214 = vector.shape_cast %213 : vector<1x16xf32> to vector<1x16x1xf32>
    %215 = vector.broadcast %214 : vector<1x16x1xf32> to vector<1x16x16xf32>
    %216 = arith.subf %212, %215 : vector<1x16x16xf32>
    %217 = math.exp %216 : vector<1x16x16xf32>
    %cst_80 = arith.constant dense<0.000000e+00> : vector<1x16xf32>
    %218 = vector.multi_reduction <add>, %217, %cst_80 [2] : vector<1x16x16xf32> to vector<1x16xf32>
    %219 = vector.shape_cast %218 : vector<1x16xf32> to vector<1x16x1xf32>
    %220 = tpu.reciprocal %219 {approx = true} : vector<1x16x1xf32> -> vector<1x16x1xf32>
    %221 = vector.broadcast %220 : vector<1x16x1xf32> to vector<1x16x16xf32>
    %222 = arith.mulf %217, %221 : vector<1x16x16xf32>
    %223 = vector.extract_strided_slice %207 {offsets = [0, 0, 0], sizes = [1, 16, 8], strides = [1, 1, 1]} : vector<1x16x32xf32> to vector<1x16x8xf32>
    "tpu.trace_start"() <{level = 10 : i32, message = "bqk,bkd->bqd"}> : () -> ()
    %cst_81 = arith.constant dense<0.000000e+00> : vector<1x16x8xf32>
    %224 = tpu.matmul %222, %223, %cst_81 {dimension_numbers = #tpu.dot_dimension_numbers<[2], [1], [1], [2], [0, 0, 0, 1, 1, 2], [0], [0]>} : vector<1x16x16xf32>, vector<1x16x8xf32>, vector<1x16x8xf32> -> vector<1x16x8xf32>
    "tpu.trace_stop"() : () -> ()
    %225 = vector.shape_cast %224 : vector<1x16x8xf32> to vector<16x8xf32>
    %226 = vector.extract_strided_slice %191 {offsets = [0, 0], sizes = [8, 32], strides = [1, 1]} : vector<32x32xf32> to vector<8x32xf32>
    %cst_82 = arith.constant dense<0.000000e+00> : vector<16x32xf32>
    %227 = tpu.matmul %225, %226, %cst_82 {dimension_numbers = #tpu.dot_dimension_numbers<[1], [0], [0], [1], [0, 0, 1, 1], [], []>} : vector<16x8xf32>, vector<8x32xf32>, vector<16x32xf32> -> vector<16x32xf32>
    %228 = vector.extract_strided_slice %205 {offsets = [0, 0, 8], sizes = [1, 16, 8], strides = [1, 1, 1]} : vector<1x16x32xf32> to vector<1x16x8xf32>
    %229 = vector.extract_strided_slice %206 {offsets = [0, 0, 8], sizes = [1, 16, 8], strides = [1, 1, 1]} : vector<1x16x32xf32> to vector<1x16x8xf32>
    "tpu.trace_start"() <{level = 10 : i32, message = "bqd,bkd->bqk"}> : () -> ()
    %cst_83 = arith.constant dense<0.000000e+00> : vector<1x16x16xf32>
    %230 = tpu.matmul %228, %229, %cst_83 {dimension_numbers = #tpu.dot_dimension_numbers<[2], [2], [1], [1], [0, 0, 0, 1, 1, 1], [0], [0]>} : vector<1x16x8xf32>, vector<1x16x8xf32>, vector<1x16x16xf32> -> vector<1x16x16xf32>
    "tpu.trace_stop"() : () -> ()
    %231 = vector.broadcast %0 : vector<1x1x16xf32> to vector<1x16x16xf32>
    %232 = arith.addf %230, %231 : vector<1x16x16xf32>
    %cst_84 = arith.constant dense<0xFF800000> : vector<1x16xf32>
    %233 = vector.multi_reduction <maximumf>, %232, %cst_84 [2] : vector<1x16x16xf32> to vector<1x16xf32>
    %234 = vector.shape_cast %233 : vector<1x16xf32> to vector<1x16x1xf32>
    %235 = vector.broadcast %234 : vector<1x16x1xf32> to vector<1x16x16xf32>
    %236 = arith.subf %232, %235 : vector<1x16x16xf32>
    %237 = math.exp %236 : vector<1x16x16xf32>
    %cst_85 = arith.constant dense<0.000000e+00> : vector<1x16xf32>
    %238 = vector.multi_reduction <add>, %237, %cst_85 [2] : vector<1x16x16xf32> to vector<1x16xf32>
    %239 = vector.shape_cast %238 : vector<1x16xf32> to vector<1x16x1xf32>
    %240 = tpu.reciprocal %239 {approx = true} : vector<1x16x1xf32> -> vector<1x16x1xf32>
    %241 = vector.broadcast %240 : vector<1x16x1xf32> to vector<1x16x16xf32>
    %242 = arith.mulf %237, %241 : vector<1x16x16xf32>
    %243 = vector.extract_strided_slice %207 {offsets = [0, 0, 8], sizes = [1, 16, 8], strides = [1, 1, 1]} : vector<1x16x32xf32> to vector<1x16x8xf32>
    "tpu.trace_start"() <{level = 10 : i32, message = "bqk,bkd->bqd"}> : () -> ()
    %cst_86 = arith.constant dense<0.000000e+00> : vector<1x16x8xf32>
    %244 = tpu.matmul %242, %243, %cst_86 {dimension_numbers = #tpu.dot_dimension_numbers<[2], [1], [1], [2], [0, 0, 0, 1, 1, 2], [0], [0]>} : vector<1x16x16xf32>, vector<1x16x8xf32>, vector<1x16x8xf32> -> vector<1x16x8xf32>
    "tpu.trace_stop"() : () -> ()
    %245 = vector.shape_cast %244 : vector<1x16x8xf32> to vector<16x8xf32>
    %246 = vector.extract_strided_slice %191 {offsets = [8, 0], sizes = [8, 32], strides = [1, 1]} : vector<32x32xf32> to vector<8x32xf32>
    %cst_87 = arith.constant dense<0.000000e+00> : vector<16x32xf32>
    %247 = tpu.matmul %245, %246, %cst_87 {dimension_numbers = #tpu.dot_dimension_numbers<[1], [0], [0], [1], [0, 0, 1, 1], [], []>} : vector<16x8xf32>, vector<8x32xf32>, vector<16x32xf32> -> vector<16x32xf32>
    %248 = arith.addf %227, %247 : vector<16x32xf32>
    %249 = vector.extract_strided_slice %205 {offsets = [0, 0, 16], sizes = [1, 16, 8], strides = [1, 1, 1]} : vector<1x16x32xf32> to vector<1x16x8xf32>
    %250 = vector.extract_strided_slice %206 {offsets = [0, 0, 16], sizes = [1, 16, 8], strides = [1, 1, 1]} : vector<1x16x32xf32> to vector<1x16x8xf32>
    "tpu.trace_start"() <{level = 10 : i32, message = "bqd,bkd->bqk"}> : () -> ()
    %cst_88 = arith.constant dense<0.000000e+00> : vector<1x16x16xf32>
    %251 = tpu.matmul %249, %250, %cst_88 {dimension_numbers = #tpu.dot_dimension_numbers<[2], [2], [1], [1], [0, 0, 0, 1, 1, 1], [0], [0]>} : vector<1x16x8xf32>, vector<1x16x8xf32>, vector<1x16x16xf32> -> vector<1x16x16xf32>
    "tpu.trace_stop"() : () -> ()
    %252 = vector.broadcast %0 : vector<1x1x16xf32> to vector<1x16x16xf32>
    %253 = arith.addf %251, %252 : vector<1x16x16xf32>
    %cst_89 = arith.constant dense<0xFF800000> : vector<1x16xf32>
    %254 = vector.multi_reduction <maximumf>, %253, %cst_89 [2] : vector<1x16x16xf32> to vector<1x16xf32>
    %255 = vector.shape_cast %254 : vector<1x16xf32> to vector<1x16x1xf32>
    %256 = vector.broadcast %255 : vector<1x16x1xf32> to vector<1x16x16xf32>
    %257 = arith.subf %253, %256 : vector<1x16x16xf32>
    %258 = math.exp %257 : vector<1x16x16xf32>
    %cst_90 = arith.constant dense<0.000000e+00> : vector<1x16xf32>
    %259 = vector.multi_reduction <add>, %258, %cst_90 [2] : vector<1x16x16xf32> to vector<1x16xf32>
    %260 = vector.shape_cast %259 : vector<1x16xf32> to vector<1x16x1xf32>
    %261 = tpu.reciprocal %260 {approx = true} : vector<1x16x1xf32> -> vector<1x16x1xf32>
    %262 = vector.broadcast %261 : vector<1x16x1xf32> to vector<1x16x16xf32>
    %263 = arith.mulf %258, %262 : vector<1x16x16xf32>
    %264 = vector.extract_strided_slice %207 {offsets = [0, 0, 16], sizes = [1, 16, 8], strides = [1, 1, 1]} : vector<1x16x32xf32> to vector<1x16x8xf32>
    "tpu.trace_start"() <{level = 10 : i32, message = "bqk,bkd->bqd"}> : () -> ()
    %cst_91 = arith.constant dense<0.000000e+00> : vector<1x16x8xf32>
    %265 = tpu.matmul %263, %264, %cst_91 {dimension_numbers = #tpu.dot_dimension_numbers<[2], [1], [1], [2], [0, 0, 0, 1, 1, 2], [0], [0]>} : vector<1x16x16xf32>, vector<1x16x8xf32>, vector<1x16x8xf32> -> vector<1x16x8xf32>
    "tpu.trace_stop"() : () -> ()
    %266 = vector.shape_cast %265 : vector<1x16x8xf32> to vector<16x8xf32>
    %267 = vector.extract_strided_slice %191 {offsets = [16, 0], sizes = [8, 32], strides = [1, 1]} : vector<32x32xf32> to vector<8x32xf32>
    %cst_92 = arith.constant dense<0.000000e+00> : vector<16x32xf32>
    %268 = tpu.matmul %266, %267, %cst_92 {dimension_numbers = #tpu.dot_dimension_numbers<[1], [0], [0], [1], [0, 0, 1, 1], [], []>} : vector<16x8xf32>, vector<8x32xf32>, vector<16x32xf32> -> vector<16x32xf32>
    %269 = arith.addf %248, %268 : vector<16x32xf32>
    %270 = vector.extract_strided_slice %205 {offsets = [0, 0, 24], sizes = [1, 16, 8], strides = [1, 1, 1]} : vector<1x16x32xf32> to vector<1x16x8xf32>
    %271 = vector.extract_strided_slice %206 {offsets = [0, 0, 24], sizes = [1, 16, 8], strides = [1, 1, 1]} : vector<1x16x32xf32> to vector<1x16x8xf32>
    "tpu.trace_start"() <{level = 10 : i32, message = "bqd,bkd->bqk"}> : () -> ()
    %cst_93 = arith.constant dense<0.000000e+00> : vector<1x16x16xf32>
    %272 = tpu.matmul %270, %271, %cst_93 {dimension_numbers = #tpu.dot_dimension_numbers<[2], [2], [1], [1], [0, 0, 0, 1, 1, 1], [0], [0]>} : vector<1x16x8xf32>, vector<1x16x8xf32>, vector<1x16x16xf32> -> vector<1x16x16xf32>
    "tpu.trace_stop"() : () -> ()
    %273 = vector.broadcast %0 : vector<1x1x16xf32> to vector<1x16x16xf32>
    %274 = arith.addf %272, %273 : vector<1x16x16xf32>
    %cst_94 = arith.constant dense<0xFF800000> : vector<1x16xf32>
    %275 = vector.multi_reduction <maximumf>, %274, %cst_94 [2] : vector<1x16x16xf32> to vector<1x16xf32>
    %276 = vector.shape_cast %275 : vector<1x16xf32> to vector<1x16x1xf32>
    %277 = vector.broadcast %276 : vector<1x16x1xf32> to vector<1x16x16xf32>
    %278 = arith.subf %274, %277 : vector<1x16x16xf32>
    %279 = math.exp %278 : vector<1x16x16xf32>
    %cst_95 = arith.constant dense<0.000000e+00> : vector<1x16xf32>
    %280 = vector.multi_reduction <add>, %279, %cst_95 [2] : vector<1x16x16xf32> to vector<1x16xf32>
    %281 = vector.shape_cast %280 : vector<1x16xf32> to vector<1x16x1xf32>
    %282 = tpu.reciprocal %281 {approx = true} : vector<1x16x1xf32> -> vector<1x16x1xf32>
    %283 = vector.broadcast %282 : vector<1x16x1xf32> to vector<1x16x16xf32>
    %284 = arith.mulf %279, %283 : vector<1x16x16xf32>
    %285 = vector.extract_strided_slice %207 {offsets = [0, 0, 24], sizes = [1, 16, 8], strides = [1, 1, 1]} : vector<1x16x32xf32> to vector<1x16x8xf32>
    "tpu.trace_start"() <{level = 10 : i32, message = "bqk,bkd->bqd"}> : () -> ()
    %cst_96 = arith.constant dense<0.000000e+00> : vector<1x16x8xf32>
    %286 = tpu.matmul %284, %285, %cst_96 {dimension_numbers = #tpu.dot_dimension_numbers<[2], [1], [1], [2], [0, 0, 0, 1, 1, 2], [0], [0]>} : vector<1x16x16xf32>, vector<1x16x8xf32>, vector<1x16x8xf32> -> vector<1x16x8xf32>
    "tpu.trace_stop"() : () -> ()
    %287 = vector.shape_cast %286 : vector<1x16x8xf32> to vector<16x8xf32>
    %288 = vector.extract_strided_slice %191 {offsets = [24, 0], sizes = [8, 32], strides = [1, 1]} : vector<32x32xf32> to vector<8x32xf32>
    %cst_97 = arith.constant dense<0.000000e+00> : vector<16x32xf32>
    %289 = tpu.matmul %287, %288, %cst_97 {dimension_numbers = #tpu.dot_dimension_numbers<[1], [0], [0], [1], [0, 0, 1, 1], [], []>} : vector<16x8xf32>, vector<8x32xf32>, vector<16x32xf32> -> vector<16x32xf32>
    %290 = arith.addf %269, %289 : vector<16x32xf32>
    %291 = vector.broadcast %192 : vector<1x32xf32> to vector<16x32xf32>
    %292 = arith.addf %290, %291 : vector<16x32xf32>
    %293 = arith.addf %182, %292 : vector<16x32xf32>
    %294 = vector.extract_strided_slice %184 {offsets = [2, 0], sizes = [1, 32], strides = [1, 1]} : vector<6x32xf32> to vector<1x32xf32>
    %295 = vector.extract_strided_slice %184 {offsets = [3, 0], sizes = [1, 32], strides = [1, 1]} : vector<6x32xf32> to vector<1x32xf32>
    %cst_98 = arith.constant dense<0.000000e+00> : vector<16xf32>
    %296 = vector.multi_reduction <add>, %293, %cst_98 [1] : vector<16x32xf32> to vector<16xf32>
    %297 = vector.shape_cast %296 : vector<16xf32> to vector<16x1xf32>
    %cst_99 = arith.constant 3.200000e+01 : f32
    %298 = vector.broadcast %cst_99 : f32 to vector<16x1xf32>
    %299 = arith.divf %297, %298 : vector<16x1xf32>
    %300 = vector.broadcast %299 : vector<16x1xf32> to vector<16x32xf32>
    %301 = arith.subf %293, %300 : vector<16x32xf32>
    %302 = arith.mulf %301, %301 : vector<16x32xf32>
    %cst_100 = arith.constant dense<0.000000e+00> : vector<16xf32>
    %303 = vector.multi_reduction <add>, %302, %cst_100 [1] : vector<16x32xf32> to vector<16xf32>
    %304 = vector.shape_cast %303 : vector<16xf32> to vector<16x1xf32>
    %cst_101 = arith.constant 3.200000e+01 : f32
    %305 = vector.broadcast %cst_101 : f32 to vector<16x1xf32>
    %306 = arith.divf %304, %305 : vector<16x1xf32>
    %307 = vector.broadcast %299 : vector<16x1xf32> to vector<16x32xf32>
    %308 = arith.subf %293, %307 : vector<16x32xf32>
    %cst_102 = arith.constant 9.99999974E-6 : f32
    %309 = vector.broadcast %cst_102 : f32 to vector<16x1xf32>
    %310 = arith.addf %306, %309 : vector<16x1xf32>
    %311 = math.rsqrt %310 : vector<16x1xf32>
    %312 = vector.broadcast %311 : vector<16x1xf32> to vector<16x32xf32>
    %313 = arith.mulf %308, %312 : vector<16x32xf32>
    %314 = vector.broadcast %294 : vector<1x32xf32> to vector<16x32xf32>
    %315 = arith.mulf %313, %314 : vector<16x32xf32>
    %316 = vector.broadcast %295 : vector<1x32xf32> to vector<16x32xf32>
    %317 = arith.addf %315, %316 : vector<16x32xf32>
    %c1_103 = arith.constant 1 : index
    %c0_104 = arith.constant 0 : index
    %c0_105 = arith.constant 0 : index
    %318 = vector.load %arg8[%c1_103, %c0_104, %c0_105] : memref<2x32x64xf32, #tpu.memory_space<vmem>>, vector<1x32x64xf32>
    %319 = vector.shape_cast %318 : vector<1x32x64xf32> to vector<32x64xf32>
    %cst_106 = arith.constant dense<0.000000e+00> : vector<16x64xf32>
    %320 = tpu.matmul %317, %319, %cst_106 {dimension_numbers = #tpu.dot_dimension_numbers<[1], [0], [0], [1], [0, 0, 1, 1], [], []>} : vector<16x32xf32>, vector<32x64xf32>, vector<16x64xf32> -> vector<16x64xf32>
    %c1_107 = arith.constant 1 : index
    %c0_108 = arith.constant 0 : index
    %c0_109 = arith.constant 0 : index
    %321 = vector.load %arg9[%c1_107, %c0_108, %c0_109] : memref<2x1x64xf32, #tpu.memory_space<vmem>>, vector<1x1x64xf32>
    %322 = vector.shape_cast %321 : vector<1x1x64xf32> to vector<1x64xf32>
    %323 = vector.broadcast %322 : vector<1x64xf32> to vector<16x64xf32>
    %324 = arith.addf %320, %323 : vector<16x64xf32>
    %cst_110 = arith.constant 0.000000e+00 : f32
    %325 = vector.broadcast %cst_110 : f32 to vector<16x64xf32>
    %326 = arith.maximumf %324, %325 : vector<16x64xf32>
    %c1_111 = arith.constant 1 : index
    %c0_112 = arith.constant 0 : index
    %c0_113 = arith.constant 0 : index
    %327 = vector.load %arg10[%c1_111, %c0_112, %c0_113] : memref<2x64x32xf32, #tpu.memory_space<vmem>>, vector<1x64x32xf32>
    %328 = vector.shape_cast %327 : vector<1x64x32xf32> to vector<64x32xf32>
    %cst_114 = arith.constant dense<0.000000e+00> : vector<16x32xf32>
    %329 = tpu.matmul %326, %328, %cst_114 {dimension_numbers = #tpu.dot_dimension_numbers<[1], [0], [0], [1], [0, 0, 1, 1], [], []>} : vector<16x64xf32>, vector<64x32xf32>, vector<16x32xf32> -> vector<16x32xf32>
    %330 = vector.extract_strided_slice %184 {offsets = [1, 0], sizes = [1, 32], strides = [1, 1]} : vector<6x32xf32> to vector<1x32xf32>
    %331 = vector.broadcast %330 : vector<1x32xf32> to vector<16x32xf32>
    %332 = arith.addf %329, %331 : vector<16x32xf32>
    %333 = arith.addf %317, %332 : vector<16x32xf32>
    %334 = vector.extract_strided_slice %184 {offsets = [4, 0], sizes = [1, 32], strides = [1, 1]} : vector<6x32xf32> to vector<1x32xf32>
    %335 = vector.extract_strided_slice %184 {offsets = [5, 0], sizes = [1, 32], strides = [1, 1]} : vector<6x32xf32> to vector<1x32xf32>
    %cst_115 = arith.constant dense<0.000000e+00> : vector<16xf32>
    %336 = vector.multi_reduction <add>, %333, %cst_115 [1] : vector<16x32xf32> to vector<16xf32>
    %337 = vector.shape_cast %336 : vector<16xf32> to vector<16x1xf32>
    %cst_116 = arith.constant 3.200000e+01 : f32
    %338 = vector.broadcast %cst_116 : f32 to vector<16x1xf32>
    %339 = arith.divf %337, %338 : vector<16x1xf32>
    %340 = vector.broadcast %339 : vector<16x1xf32> to vector<16x32xf32>
    %341 = arith.subf %333, %340 : vector<16x32xf32>
    %342 = arith.mulf %341, %341 : vector<16x32xf32>
    %cst_117 = arith.constant dense<0.000000e+00> : vector<16xf32>
    %343 = vector.multi_reduction <add>, %342, %cst_117 [1] : vector<16x32xf32> to vector<16xf32>
    %344 = vector.shape_cast %343 : vector<16xf32> to vector<16x1xf32>
    %cst_118 = arith.constant 3.200000e+01 : f32
    %345 = vector.broadcast %cst_118 : f32 to vector<16x1xf32>
    %346 = arith.divf %344, %345 : vector<16x1xf32>
    %347 = vector.broadcast %339 : vector<16x1xf32> to vector<16x32xf32>
    %348 = arith.subf %333, %347 : vector<16x32xf32>
    %cst_119 = arith.constant 9.99999974E-6 : f32
    %349 = vector.broadcast %cst_119 : f32 to vector<16x1xf32>
    %350 = arith.addf %346, %349 : vector<16x1xf32>
    %351 = math.rsqrt %350 : vector<16x1xf32>
    %352 = vector.broadcast %351 : vector<16x1xf32> to vector<16x32xf32>
    %353 = arith.mulf %348, %352 : vector<16x32xf32>
    %354 = vector.broadcast %334 : vector<1x32xf32> to vector<16x32xf32>
    %355 = arith.mulf %353, %354 : vector<16x32xf32>
    %356 = vector.broadcast %335 : vector<1x32xf32> to vector<16x32xf32>
    %357 = arith.addf %355, %356 : vector<16x32xf32>
    %358 = vector.shape_cast %357 : vector<16x32xf32> to vector<1x16x32xf32>
    %c0_120 = arith.constant 0 : index
    %c0_121 = arith.constant 0 : index
    %c0_122 = arith.constant 0 : index
    %359 = vector.load %arg21[%c0_120, %c0_121, %c0_122] : memref<1x16x32xf32, #tpu.memory_space<vmem>>, vector<1x16x32xf32>
    tpu.vector_store %arg21[%c0_120, %c0_121, %c0_122], %358 {strides = array<i32>} : memref<1x16x32xf32, #tpu.memory_space<vmem>>, vector<1x16x32xf32>,
    %c0_123 = arith.constant 0 : index
    %c0_124 = arith.constant 0 : index
    %360 = vector.load %arg19[%c0_123, %c0_124] : memref<2x32xf32, #tpu.memory_space<vmem>>, vector<2x32xf32>
    %cst_125 = arith.constant 0.000000e+00 : f32
    %361 = vector.broadcast %cst_125 : f32 to vector<8x32xf32>
    %c0_126 = arith.constant 0 : index
    %c0_127 = arith.constant 0 : index
    %c0_128 = arith.constant 0 : index
    %362 = vector.load %arg18[%c0_126, %c0_127, %c0_128] : memref<2x9x32xf32, #tpu.memory_space<vmem>>, vector<1x9x32xf32>
    %363 = vector.shape_cast %362 : vector<1x9x32xf32> to vector<9x32xf32>
    %364 = arith.addf %361, %5 : vector<8x32xf32>
    %c0_129 = arith.constant 0 : index
    %c0_130 = arith.constant 0 : index
    %c0_131 = arith.constant 0 : index
    %c0_132 = arith.constant 0 : index
    %365 = vector.load %arg12[%c0_129, %c0_130, %c0_131, %c0_132] : memref<2x2x32x96xf32, #tpu.memory_space<vmem>>, vector<1x1x32x96xf32>
    %366 = vector.shape_cast %365 : vector<1x1x32x96xf32> to vector<32x96xf32>
    %c0_133 = arith.constant 0 : index
    %c0_134 = arith.constant 0 : index
    %c0_135 = arith.constant 0 : index
    %c0_136 = arith.constant 0 : index
    %367 = vector.load %arg13[%c0_133, %c0_134, %c0_135, %c0_136] : memref<2x2x1x96xf32, #tpu.memory_space<vmem>>, vector<1x1x1x96xf32>
    %368 = vector.shape_cast %367 : vector<1x1x1x96xf32> to vector<1x96xf32>
    %c0_137 = arith.constant 0 : index
    %c0_138 = arith.constant 0 : index
    %c0_139 = arith.constant 0 : index
    %c0_140 = arith.constant 0 : index
    %369 = vector.load %arg14[%c0_137, %c0_138, %c0_139, %c0_140] : memref<2x2x32x32xf32, #tpu.memory_space<vmem>>, vector<1x1x32x32xf32>
    %370 = vector.shape_cast %369 : vector<1x1x32x32xf32> to vector<32x32xf32>
    %371 = vector.extract_strided_slice %363 {offsets = [0, 0], sizes = [1, 32], strides = [1, 1]} : vector<9x32xf32> to vector<1x32xf32>
    %372 = vector.extract_strided_slice %366 {offsets = [0, 0], sizes = [32, 64], strides = [1, 1]} : vector<32x96xf32> to vector<32x64xf32>
    %cst_141 = arith.constant dense<0.000000e+00> : vector<8x64xf32>
    %373 = tpu.matmul %364, %372, %cst_141 {dimension_numbers = #tpu.dot_dimension_numbers<[1], [0], [0], [1], [0, 0, 1, 1], [], []>} : vector<8x32xf32>, vector<32x64xf32>, vector<8x64xf32> -> vector<8x64xf32>
    %374 = vector.extract_strided_slice %368 {offsets = [0, 0], sizes = [1, 64], strides = [1, 1]} : vector<1x96xf32> to vector<1x64xf32>
    %375 = vector.broadcast %374 : vector<1x64xf32> to vector<8x64xf32>
    %376 = arith.addf %373, %375 : vector<8x64xf32>
    %377 = vector.extract_strided_slice %376 {offsets = [0, 0], sizes = [8, 32], strides = [1, 1]} : vector<8x64xf32> to vector<8x32xf32>
    %378 = vector.extract_strided_slice %376 {offsets = [0, 32], sizes = [8, 32], strides = [1, 1]} : vector<8x64xf32> to vector<8x32xf32>
    %379 = vector.extract_strided_slice %366 {offsets = [0, 64], sizes = [32, 32], strides = [1, 1]} : vector<32x96xf32> to vector<32x32xf32>
    %cst_142 = arith.constant dense<0.000000e+00> : vector<8x32xf32>
    %380 = tpu.matmul %361, %379, %cst_142 {dimension_numbers = #tpu.dot_dimension_numbers<[1], [0], [0], [1], [0, 0, 1, 1], [], []>} : vector<8x32xf32>, vector<32x32xf32>, vector<8x32xf32> -> vector<8x32xf32>
    %381 = vector.extract_strided_slice %368 {offsets = [0, 64], sizes = [1, 32], strides = [1, 1]} : vector<1x96xf32> to vector<1x32xf32>
    %382 = vector.broadcast %381 : vector<1x32xf32> to vector<8x32xf32>
    %383 = arith.addf %380, %382 : vector<8x32xf32>
    %384 = vector.shape_cast %377 : vector<8x32xf32> to vector<1x8x32xf32>
    %385 = vector.shape_cast %378 : vector<8x32xf32> to vector<1x8x32xf32>
    %386 = vector.shape_cast %383 : vector<8x32xf32> to vector<1x8x32xf32>
    %387 = vector.extract_strided_slice %384 {offsets = [0, 0, 0], sizes = [1, 8, 8], strides = [1, 1, 1]} : vector<1x8x32xf32> to vector<1x8x8xf32>
    %388 = vector.extract_strided_slice %385 {offsets = [0, 0, 0], sizes = [1, 8, 8], strides = [1, 1, 1]} : vector<1x8x32xf32> to vector<1x8x8xf32>
    "tpu.trace_start"() <{level = 10 : i32, message = "bqd,bkd->bqk"}> : () -> ()
    %cst_143 = arith.constant dense<0.000000e+00> : vector<1x8x8xf32>
    %389 = tpu.matmul %387, %388, %cst_143 {dimension_numbers = #tpu.dot_dimension_numbers<[2], [2], [1], [1], [0, 0, 0, 1, 1, 1], [0], [0]>} : vector<1x8x8xf32>, vector<1x8x8xf32>, vector<1x8x8xf32> -> vector<1x8x8xf32>
    "tpu.trace_stop"() : () -> ()
    %cst_144 = arith.constant dense<0xFF800000> : vector<1x8xf32>
    %390 = vector.multi_reduction <maximumf>, %389, %cst_144 [2] : vector<1x8x8xf32> to vector<1x8xf32>
    %391 = vector.shape_cast %390 : vector<1x8xf32> to vector<1x8x1xf32>
    %392 = vector.broadcast %391 : vector<1x8x1xf32> to vector<1x8x8xf32>
    %393 = arith.subf %389, %392 : vector<1x8x8xf32>
    %394 = math.exp %393 : vector<1x8x8xf32>
    %cst_145 = arith.constant dense<0.000000e+00> : vector<1x8xf32>
    %395 = vector.multi_reduction <add>, %394, %cst_145 [2] : vector<1x8x8xf32> to vector<1x8xf32>
    %396 = vector.shape_cast %395 : vector<1x8xf32> to vector<1x8x1xf32>
    %397 = tpu.reciprocal %396 {approx = true} : vector<1x8x1xf32> -> vector<1x8x1xf32>
    %398 = vector.broadcast %397 : vector<1x8x1xf32> to vector<1x8x8xf32>
    %399 = arith.mulf %394, %398 : vector<1x8x8xf32>
    %400 = vector.extract_strided_slice %386 {offsets = [0, 0, 0], sizes = [1, 8, 8], strides = [1, 1, 1]} : vector<1x8x32xf32> to vector<1x8x8xf32>
    "tpu.trace_start"() <{level = 10 : i32, message = "bqk,bkd->bqd"}> : () -> ()
    %cst_146 = arith.constant dense<0.000000e+00> : vector<1x8x8xf32>
    %401 = tpu.matmul %399, %400, %cst_146 {dimension_numbers = #tpu.dot_dimension_numbers<[2], [1], [1], [2], [0, 0, 0, 1, 1, 2], [0], [0]>} : vector<1x8x8xf32>, vector<1x8x8xf32>, vector<1x8x8xf32> -> vector<1x8x8xf32>
    "tpu.trace_stop"() : () -> ()
    %402 = vector.shape_cast %401 : vector<1x8x8xf32> to vector<8x8xf32>
    %403 = vector.extract_strided_slice %370 {offsets = [0, 0], sizes = [8, 32], strides = [1, 1]} : vector<32x32xf32> to vector<8x32xf32>
    %cst_147 = arith.constant dense<0.000000e+00> : vector<8x32xf32>
    %404 = tpu.matmul %402, %403, %cst_147 {dimension_numbers = #tpu.dot_dimension_numbers<[1], [0], [0], [1], [0, 0, 1, 1], [], []>} : vector<8x8xf32>, vector<8x32xf32>, vector<8x32xf32> -> vector<8x32xf32>
    %405 = vector.extract_strided_slice %384 {offsets = [0, 0, 8], sizes = [1, 8, 8], strides = [1, 1, 1]} : vector<1x8x32xf32> to vector<1x8x8xf32>
    %406 = vector.extract_strided_slice %385 {offsets = [0, 0, 8], sizes = [1, 8, 8], strides = [1, 1, 1]} : vector<1x8x32xf32> to vector<1x8x8xf32>
    "tpu.trace_start"() <{level = 10 : i32, message = "bqd,bkd->bqk"}> : () -> ()
    %cst_148 = arith.constant dense<0.000000e+00> : vector<1x8x8xf32>
    %407 = tpu.matmul %405, %406, %cst_148 {dimension_numbers = #tpu.dot_dimension_numbers<[2], [2], [1], [1], [0, 0, 0, 1, 1, 1], [0], [0]>} : vector<1x8x8xf32>, vector<1x8x8xf32>, vector<1x8x8xf32> -> vector<1x8x8xf32>
    "tpu.trace_stop"() : () -> ()
    %cst_149 = arith.constant dense<0xFF800000> : vector<1x8xf32>
    %408 = vector.multi_reduction <maximumf>, %407, %cst_149 [2] : vector<1x8x8xf32> to vector<1x8xf32>
    %409 = vector.shape_cast %408 : vector<1x8xf32> to vector<1x8x1xf32>
    %410 = vector.broadcast %409 : vector<1x8x1xf32> to vector<1x8x8xf32>
    %411 = arith.subf %407, %410 : vector<1x8x8xf32>
    %412 = math.exp %411 : vector<1x8x8xf32>
    %cst_150 = arith.constant dense<0.000000e+00> : vector<1x8xf32>
    %413 = vector.multi_reduction <add>, %412, %cst_150 [2] : vector<1x8x8xf32> to vector<1x8xf32>
    %414 = vector.shape_cast %413 : vector<1x8xf32> to vector<1x8x1xf32>
    %415 = tpu.reciprocal %414 {approx = true} : vector<1x8x1xf32> -> vector<1x8x1xf32>
    %416 = vector.broadcast %415 : vector<1x8x1xf32> to vector<1x8x8xf32>
    %417 = arith.mulf %412, %416 : vector<1x8x8xf32>
    %418 = vector.extract_strided_slice %386 {offsets = [0, 0, 8], sizes = [1, 8, 8], strides = [1, 1, 1]} : vector<1x8x32xf32> to vector<1x8x8xf32>
    "tpu.trace_start"() <{level = 10 : i32, message = "bqk,bkd->bqd"}> : () -> ()
    %cst_151 = arith.constant dense<0.000000e+00> : vector<1x8x8xf32>
    %419 = tpu.matmul %417, %418, %cst_151 {dimension_numbers = #tpu.dot_dimension_numbers<[2], [1], [1], [2], [0, 0, 0, 1, 1, 2], [0], [0]>} : vector<1x8x8xf32>, vector<1x8x8xf32>, vector<1x8x8xf32> -> vector<1x8x8xf32>
    "tpu.trace_stop"() : () -> ()
    %420 = vector.shape_cast %419 : vector<1x8x8xf32> to vector<8x8xf32>
    %421 = vector.extract_strided_slice %370 {offsets = [8, 0], sizes = [8, 32], strides = [1, 1]} : vector<32x32xf32> to vector<8x32xf32>
    %cst_152 = arith.constant dense<0.000000e+00> : vector<8x32xf32>
    %422 = tpu.matmul %420, %421, %cst_152 {dimension_numbers = #tpu.dot_dimension_numbers<[1], [0], [0], [1], [0, 0, 1, 1], [], []>} : vector<8x8xf32>, vector<8x32xf32>, vector<8x32xf32> -> vector<8x32xf32>
    %423 = arith.addf %404, %422 : vector<8x32xf32>
    %424 = vector.extract_strided_slice %384 {offsets = [0, 0, 16], sizes = [1, 8, 8], strides = [1, 1, 1]} : vector<1x8x32xf32> to vector<1x8x8xf32>
    %425 = vector.extract_strided_slice %385 {offsets = [0, 0, 16], sizes = [1, 8, 8], strides = [1, 1, 1]} : vector<1x8x32xf32> to vector<1x8x8xf32>
    "tpu.trace_start"() <{level = 10 : i32, message = "bqd,bkd->bqk"}> : () -> ()
    %cst_153 = arith.constant dense<0.000000e+00> : vector<1x8x8xf32>
    %426 = tpu.matmul %424, %425, %cst_153 {dimension_numbers = #tpu.dot_dimension_numbers<[2], [2], [1], [1], [0, 0, 0, 1, 1, 1], [0], [0]>} : vector<1x8x8xf32>, vector<1x8x8xf32>, vector<1x8x8xf32> -> vector<1x8x8xf32>
    "tpu.trace_stop"() : () -> ()
    %cst_154 = arith.constant dense<0xFF800000> : vector<1x8xf32>
    %427 = vector.multi_reduction <maximumf>, %426, %cst_154 [2] : vector<1x8x8xf32> to vector<1x8xf32>
    %428 = vector.shape_cast %427 : vector<1x8xf32> to vector<1x8x1xf32>
    %429 = vector.broadcast %428 : vector<1x8x1xf32> to vector<1x8x8xf32>
    %430 = arith.subf %426, %429 : vector<1x8x8xf32>
    %431 = math.exp %430 : vector<1x8x8xf32>
    %cst_155 = arith.constant dense<0.000000e+00> : vector<1x8xf32>
    %432 = vector.multi_reduction <add>, %431, %cst_155 [2] : vector<1x8x8xf32> to vector<1x8xf32>
    %433 = vector.shape_cast %432 : vector<1x8xf32> to vector<1x8x1xf32>
    %434 = tpu.reciprocal %433 {approx = true} : vector<1x8x1xf32> -> vector<1x8x1xf32>
    %435 = vector.broadcast %434 : vector<1x8x1xf32> to vector<1x8x8xf32>
    %436 = arith.mulf %431, %435 : vector<1x8x8xf32>
    %437 = vector.extract_strided_slice %386 {offsets = [0, 0, 16], sizes = [1, 8, 8], strides = [1, 1, 1]} : vector<1x8x32xf32> to vector<1x8x8xf32>
    "tpu.trace_start"() <{level = 10 : i32, message = "bqk,bkd->bqd"}> : () -> ()
    %cst_156 = arith.constant dense<0.000000e+00> : vector<1x8x8xf32>
    %438 = tpu.matmul %436, %437, %cst_156 {dimension_numbers = #tpu.dot_dimension_numbers<[2], [1], [1], [2], [0, 0, 0, 1, 1, 2], [0], [0]>} : vector<1x8x8xf32>, vector<1x8x8xf32>, vector<1x8x8xf32> -> vector<1x8x8xf32>
    "tpu.trace_stop"() : () -> ()
    %439 = vector.shape_cast %438 : vector<1x8x8xf32> to vector<8x8xf32>
    %440 = vector.extract_strided_slice %370 {offsets = [16, 0], sizes = [8, 32], strides = [1, 1]} : vector<32x32xf32> to vector<8x32xf32>
    %cst_157 = arith.constant dense<0.000000e+00> : vector<8x32xf32>
    %441 = tpu.matmul %439, %440, %cst_157 {dimension_numbers = #tpu.dot_dimension_numbers<[1], [0], [0], [1], [0, 0, 1, 1], [], []>} : vector<8x8xf32>, vector<8x32xf32>, vector<8x32xf32> -> vector<8x32xf32>
    %442 = arith.addf %423, %441 : vector<8x32xf32>
    %443 = vector.extract_strided_slice %384 {offsets = [0, 0, 24], sizes = [1, 8, 8], strides = [1, 1, 1]} : vector<1x8x32xf32> to vector<1x8x8xf32>
    %444 = vector.extract_strided_slice %385 {offsets = [0, 0, 24], sizes = [1, 8, 8], strides = [1, 1, 1]} : vector<1x8x32xf32> to vector<1x8x8xf32>
    "tpu.trace_start"() <{level = 10 : i32, message = "bqd,bkd->bqk"}> : () -> ()
    %cst_158 = arith.constant dense<0.000000e+00> : vector<1x8x8xf32>
    %445 = tpu.matmul %443, %444, %cst_158 {dimension_numbers = #tpu.dot_dimension_numbers<[2], [2], [1], [1], [0, 0, 0, 1, 1, 1], [0], [0]>} : vector<1x8x8xf32>, vector<1x8x8xf32>, vector<1x8x8xf32> -> vector<1x8x8xf32>
    "tpu.trace_stop"() : () -> ()
    %cst_159 = arith.constant dense<0xFF800000> : vector<1x8xf32>
    %446 = vector.multi_reduction <maximumf>, %445, %cst_159 [2] : vector<1x8x8xf32> to vector<1x8xf32>
    %447 = vector.shape_cast %446 : vector<1x8xf32> to vector<1x8x1xf32>
    %448 = vector.broadcast %447 : vector<1x8x1xf32> to vector<1x8x8xf32>
    %449 = arith.subf %445, %448 : vector<1x8x8xf32>
    %450 = math.exp %449 : vector<1x8x8xf32>
    %cst_160 = arith.constant dense<0.000000e+00> : vector<1x8xf32>
    %451 = vector.multi_reduction <add>, %450, %cst_160 [2] : vector<1x8x8xf32> to vector<1x8xf32>
    %452 = vector.shape_cast %451 : vector<1x8xf32> to vector<1x8x1xf32>
    %453 = tpu.reciprocal %452 {approx = true} : vector<1x8x1xf32> -> vector<1x8x1xf32>
    %454 = vector.broadcast %453 : vector<1x8x1xf32> to vector<1x8x8xf32>
    %455 = arith.mulf %450, %454 : vector<1x8x8xf32>
    %456 = vector.extract_strided_slice %386 {offsets = [0, 0, 24], sizes = [1, 8, 8], strides = [1, 1, 1]} : vector<1x8x32xf32> to vector<1x8x8xf32>
    "tpu.trace_start"() <{level = 10 : i32, message = "bqk,bkd->bqd"}> : () -> ()
    %cst_161 = arith.constant dense<0.000000e+00> : vector<1x8x8xf32>
    %457 = tpu.matmul %455, %456, %cst_161 {dimension_numbers = #tpu.dot_dimension_numbers<[2], [1], [1], [2], [0, 0, 0, 1, 1, 2], [0], [0]>} : vector<1x8x8xf32>, vector<1x8x8xf32>, vector<1x8x8xf32> -> vector<1x8x8xf32>
    "tpu.trace_stop"() : () -> ()
    %458 = vector.shape_cast %457 : vector<1x8x8xf32> to vector<8x8xf32>
    %459 = vector.extract_strided_slice %370 {offsets = [24, 0], sizes = [8, 32], strides = [1, 1]} : vector<32x32xf32> to vector<8x32xf32>
    %cst_162 = arith.constant dense<0.000000e+00> : vector<8x32xf32>
    %460 = tpu.matmul %458, %459, %cst_162 {dimension_numbers = #tpu.dot_dimension_numbers<[1], [0], [0], [1], [0, 0, 1, 1], [], []>} : vector<8x8xf32>, vector<8x32xf32>, vector<8x32xf32> -> vector<8x32xf32>
    %461 = arith.addf %442, %460 : vector<8x32xf32>
    %462 = vector.broadcast %371 : vector<1x32xf32> to vector<8x32xf32>
    %463 = arith.addf %461, %462 : vector<8x32xf32>
    %464 = arith.addf %361, %463 : vector<8x32xf32>
    %465 = vector.extract_strided_slice %363 {offsets = [3, 0], sizes = [1, 32], strides = [1, 1]} : vector<9x32xf32> to vector<1x32xf32>
    %466 = vector.extract_strided_slice %363 {offsets = [4, 0], sizes = [1, 32], strides = [1, 1]} : vector<9x32xf32> to vector<1x32xf32>
    %cst_163 = arith.constant dense<0.000000e+00> : vector<8xf32>
    %467 = vector.multi_reduction <add>, %464, %cst_163 [1] : vector<8x32xf32> to vector<8xf32>
    %468 = vector.shape_cast %467 : vector<8xf32> to vector<8x1xf32>
    %cst_164 = arith.constant 3.200000e+01 : f32
    %469 = vector.broadcast %cst_164 : f32 to vector<8x1xf32>
    %470 = arith.divf %468, %469 : vector<8x1xf32>
    %471 = vector.broadcast %470 : vector<8x1xf32> to vector<8x32xf32>
    %472 = arith.subf %464, %471 : vector<8x32xf32>
    %473 = arith.mulf %472, %472 : vector<8x32xf32>
    %cst_165 = arith.constant dense<0.000000e+00> : vector<8xf32>
    %474 = vector.multi_reduction <add>, %473, %cst_165 [1] : vector<8x32xf32> to vector<8xf32>
    %475 = vector.shape_cast %474 : vector<8xf32> to vector<8x1xf32>
    %cst_166 = arith.constant 3.200000e+01 : f32
    %476 = vector.broadcast %cst_166 : f32 to vector<8x1xf32>
    %477 = arith.divf %475, %476 : vector<8x1xf32>
    %478 = vector.broadcast %470 : vector<8x1xf32> to vector<8x32xf32>
    %479 = arith.subf %464, %478 : vector<8x32xf32>
    %cst_167 = arith.constant 9.99999974E-6 : f32
    %480 = vector.broadcast %cst_167 : f32 to vector<8x1xf32>
    %481 = arith.addf %477, %480 : vector<8x1xf32>
    %482 = math.rsqrt %481 : vector<8x1xf32>
    %483 = vector.broadcast %482 : vector<8x1xf32> to vector<8x32xf32>
    %484 = arith.mulf %479, %483 : vector<8x32xf32>
    %485 = vector.broadcast %465 : vector<1x32xf32> to vector<8x32xf32>
    %486 = arith.mulf %484, %485 : vector<8x32xf32>
    %487 = vector.broadcast %466 : vector<1x32xf32> to vector<8x32xf32>
    %488 = arith.addf %486, %487 : vector<8x32xf32>
    %489 = arith.addf %488, %5 : vector<8x32xf32>
    %490 = arith.addf %357, %2 : vector<16x32xf32>
    %c0_168 = arith.constant 0 : index
    %c1_169 = arith.constant 1 : index
    %c0_170 = arith.constant 0 : index
    %c0_171 = arith.constant 0 : index
    %491 = vector.load %arg12[%c0_168, %c1_169, %c0_170, %c0_171] : memref<2x2x32x96xf32, #tpu.memory_space<vmem>>, vector<1x1x32x96xf32>
    %492 = vector.shape_cast %491 : vector<1x1x32x96xf32> to vector<32x96xf32>
    %c0_172 = arith.constant 0 : index
    %c1_173 = arith.constant 1 : index
    %c0_174 = arith.constant 0 : index
    %c0_175 = arith.constant 0 : index
    %493 = vector.load %arg13[%c0_172, %c1_173, %c0_174, %c0_175] : memref<2x2x1x96xf32, #tpu.memory_space<vmem>>, vector<1x1x1x96xf32>
    %494 = vector.shape_cast %493 : vector<1x1x1x96xf32> to vector<1x96xf32>
    %c0_176 = arith.constant 0 : index
    %c1_177 = arith.constant 1 : index
    %c0_178 = arith.constant 0 : index
    %c0_179 = arith.constant 0 : index
    %495 = vector.load %arg14[%c0_176, %c1_177, %c0_178, %c0_179] : memref<2x2x32x32xf32, #tpu.memory_space<vmem>>, vector<1x1x32x32xf32>
    %496 = vector.shape_cast %495 : vector<1x1x32x32xf32> to vector<32x32xf32>
    %497 = vector.extract_strided_slice %363 {offsets = [1, 0], sizes = [1, 32], strides = [1, 1]} : vector<9x32xf32> to vector<1x32xf32>
    %498 = vector.extract_strided_slice %492 {offsets = [0, 0], sizes = [32, 32], strides = [1, 1]} : vector<32x96xf32> to vector<32x32xf32>
    %cst_180 = arith.constant dense<0.000000e+00> : vector<8x32xf32>
    %499 = tpu.matmul %489, %498, %cst_180 {dimension_numbers = #tpu.dot_dimension_numbers<[1], [0], [0], [1], [0, 0, 1, 1], [], []>} : vector<8x32xf32>, vector<32x32xf32>, vector<8x32xf32> -> vector<8x32xf32>
    %500 = vector.extract_strided_slice %494 {offsets = [0, 0], sizes = [1, 32], strides = [1, 1]} : vector<1x96xf32> to vector<1x32xf32>
    %501 = vector.broadcast %500 : vector<1x32xf32> to vector<8x32xf32>
    %502 = arith.addf %499, %501 : vector<8x32xf32>
    %503 = vector.extract_strided_slice %492 {offsets = [0, 32], sizes = [32, 32], strides = [1, 1]} : vector<32x96xf32> to vector<32x32xf32>
    %cst_181 = arith.constant dense<0.000000e+00> : vector<16x32xf32>
    %504 = tpu.matmul %490, %503, %cst_181 {dimension_numbers = #tpu.dot_dimension_numbers<[1], [0], [0], [1], [0, 0, 1, 1], [], []>} : vector<16x32xf32>, vector<32x32xf32>, vector<16x32xf32> -> vector<16x32xf32>
    %505 = vector.extract_strided_slice %494 {offsets = [0, 32], sizes = [1, 32], strides = [1, 1]} : vector<1x96xf32> to vector<1x32xf32>
    %506 = vector.broadcast %505 : vector<1x32xf32> to vector<16x32xf32>
    %507 = arith.addf %504, %506 : vector<16x32xf32>
    %508 = vector.extract_strided_slice %492 {offsets = [0, 64], sizes = [32, 32], strides = [1, 1]} : vector<32x96xf32> to vector<32x32xf32>
    %cst_182 = arith.constant dense<0.000000e+00> : vector<16x32xf32>
    %509 = tpu.matmul %357, %508, %cst_182 {dimension_numbers = #tpu.dot_dimension_numbers<[1], [0], [0], [1], [0, 0, 1, 1], [], []>} : vector<16x32xf32>, vector<32x32xf32>, vector<16x32xf32> -> vector<16x32xf32>
    %510 = vector.extract_strided_slice %494 {offsets = [0, 64], sizes = [1, 32], strides = [1, 1]} : vector<1x96xf32> to vector<1x32xf32>
    %511 = vector.broadcast %510 : vector<1x32xf32> to vector<16x32xf32>
    %512 = arith.addf %509, %511 : vector<16x32xf32>
    %513 = vector.shape_cast %502 : vector<8x32xf32> to vector<1x8x32xf32>
    %514 = vector.shape_cast %507 : vector<16x32xf32> to vector<1x16x32xf32>
    %515 = vector.shape_cast %512 : vector<16x32xf32> to vector<1x16x32xf32>
    %516 = vector.extract_strided_slice %513 {offsets = [0, 0, 0], sizes = [1, 8, 8], strides = [1, 1, 1]} : vector<1x8x32xf32> to vector<1x8x8xf32>
    %517 = vector.extract_strided_slice %514 {offsets = [0, 0, 0], sizes = [1, 16, 8], strides = [1, 1, 1]} : vector<1x16x32xf32> to vector<1x16x8xf32>
    "tpu.trace_start"() <{level = 10 : i32, message = "bqd,bkd->bqk"}> : () -> ()
    %cst_183 = arith.constant dense<0.000000e+00> : vector<1x8x16xf32>
    %518 = tpu.matmul %516, %517, %cst_183 {dimension_numbers = #tpu.dot_dimension_numbers<[2], [2], [1], [1], [0, 0, 0, 1, 1, 1], [0], [0]>} : vector<1x8x8xf32>, vector<1x16x8xf32>, vector<1x8x16xf32> -> vector<1x8x16xf32>
    "tpu.trace_stop"() : () -> ()
    %519 = vector.broadcast %0 : vector<1x1x16xf32> to vector<1x8x16xf32>
    %520 = arith.addf %518, %519 : vector<1x8x16xf32>
    %cst_184 = arith.constant dense<0xFF800000> : vector<1x8xf32>
    %521 = vector.multi_reduction <maximumf>, %520, %cst_184 [2] : vector<1x8x16xf32> to vector<1x8xf32>
    %522 = vector.shape_cast %521 : vector<1x8xf32> to vector<1x8x1xf32>
    %523 = vector.broadcast %522 : vector<1x8x1xf32> to vector<1x8x16xf32>
    %524 = arith.subf %520, %523 : vector<1x8x16xf32>
    %525 = math.exp %524 : vector<1x8x16xf32>
    %cst_185 = arith.constant dense<0.000000e+00> : vector<1x8xf32>
    %526 = vector.multi_reduction <add>, %525, %cst_185 [2] : vector<1x8x16xf32> to vector<1x8xf32>
    %527 = vector.shape_cast %526 : vector<1x8xf32> to vector<1x8x1xf32>
    %528 = tpu.reciprocal %527 {approx = true} : vector<1x8x1xf32> -> vector<1x8x1xf32>
    %529 = vector.broadcast %528 : vector<1x8x1xf32> to vector<1x8x16xf32>
    %530 = arith.mulf %525, %529 : vector<1x8x16xf32>
    %531 = vector.extract_strided_slice %515 {offsets = [0, 0, 0], sizes = [1, 16, 8], strides = [1, 1, 1]} : vector<1x16x32xf32> to vector<1x16x8xf32>
    "tpu.trace_start"() <{level = 10 : i32, message = "bqk,bkd->bqd"}> : () -> ()
    %cst_186 = arith.constant dense<0.000000e+00> : vector<1x8x8xf32>
    %532 = tpu.matmul %530, %531, %cst_186 {dimension_numbers = #tpu.dot_dimension_numbers<[2], [1], [1], [2], [0, 0, 0, 1, 1, 2], [0], [0]>} : vector<1x8x16xf32>, vector<1x16x8xf32>, vector<1x8x8xf32> -> vector<1x8x8xf32>
    "tpu.trace_stop"() : () -> ()
    %533 = vector.shape_cast %532 : vector<1x8x8xf32> to vector<8x8xf32>
    %534 = vector.extract_strided_slice %496 {offsets = [0, 0], sizes = [8, 32], strides = [1, 1]} : vector<32x32xf32> to vector<8x32xf32>
    %cst_187 = arith.constant dense<0.000000e+00> : vector<8x32xf32>
    %535 = tpu.matmul %533, %534, %cst_187 {dimension_numbers = #tpu.dot_dimension_numbers<[1], [0], [0], [1], [0, 0, 1, 1], [], []>} : vector<8x8xf32>, vector<8x32xf32>, vector<8x32xf32> -> vector<8x32xf32>
    %536 = vector.extract_strided_slice %513 {offsets = [0, 0, 8], sizes = [1, 8, 8], strides = [1, 1, 1]} : vector<1x8x32xf32> to vector<1x8x8xf32>
    %537 = vector.extract_strided_slice %514 {offsets = [0, 0, 8], sizes = [1, 16, 8], strides = [1, 1, 1]} : vector<1x16x32xf32> to vector<1x16x8xf32>
    "tpu.trace_start"() <{level = 10 : i32, message = "bqd,bkd->bqk"}> : () -> ()
    %cst_188 = arith.constant dense<0.000000e+00> : vector<1x8x16xf32>
    %538 = tpu.matmul %536, %537, %cst_188 {dimension_numbers = #tpu.dot_dimension_numbers<[2], [2], [1], [1], [0, 0, 0, 1, 1, 1], [0], [0]>} : vector<1x8x8xf32>, vector<1x16x8xf32>, vector<1x8x16xf32> -> vector<1x8x16xf32>
    "tpu.trace_stop"() : () -> ()
    %539 = vector.broadcast %0 : vector<1x1x16xf32> to vector<1x8x16xf32>
    %540 = arith.addf %538, %539 : vector<1x8x16xf32>
    %cst_189 = arith.constant dense<0xFF800000> : vector<1x8xf32>
    %541 = vector.multi_reduction <maximumf>, %540, %cst_189 [2] : vector<1x8x16xf32> to vector<1x8xf32>
    %542 = vector.shape_cast %541 : vector<1x8xf32> to vector<1x8x1xf32>
    %543 = vector.broadcast %542 : vector<1x8x1xf32> to vector<1x8x16xf32>
    %544 = arith.subf %540, %543 : vector<1x8x16xf32>
    %545 = math.exp %544 : vector<1x8x16xf32>
    %cst_190 = arith.constant dense<0.000000e+00> : vector<1x8xf32>
    %546 = vector.multi_reduction <add>, %545, %cst_190 [2] : vector<1x8x16xf32> to vector<1x8xf32>
    %547 = vector.shape_cast %546 : vector<1x8xf32> to vector<1x8x1xf32>
    %548 = tpu.reciprocal %547 {approx = true} : vector<1x8x1xf32> -> vector<1x8x1xf32>
    %549 = vector.broadcast %548 : vector<1x8x1xf32> to vector<1x8x16xf32>
    %550 = arith.mulf %545, %549 : vector<1x8x16xf32>
    %551 = vector.extract_strided_slice %515 {offsets = [0, 0, 8], sizes = [1, 16, 8], strides = [1, 1, 1]} : vector<1x16x32xf32> to vector<1x16x8xf32>
    "tpu.trace_start"() <{level = 10 : i32, message = "bqk,bkd->bqd"}> : () -> ()
    %cst_191 = arith.constant dense<0.000000e+00> : vector<1x8x8xf32>
    %552 = tpu.matmul %550, %551, %cst_191 {dimension_numbers = #tpu.dot_dimension_numbers<[2], [1], [1], [2], [0, 0, 0, 1, 1, 2], [0], [0]>} : vector<1x8x16xf32>, vector<1x16x8xf32>, vector<1x8x8xf32> -> vector<1x8x8xf32>
    "tpu.trace_stop"() : () -> ()
    %553 = vector.shape_cast %552 : vector<1x8x8xf32> to vector<8x8xf32>
    %554 = vector.extract_strided_slice %496 {offsets = [8, 0], sizes = [8, 32], strides = [1, 1]} : vector<32x32xf32> to vector<8x32xf32>
    %cst_192 = arith.constant dense<0.000000e+00> : vector<8x32xf32>
    %555 = tpu.matmul %553, %554, %cst_192 {dimension_numbers = #tpu.dot_dimension_numbers<[1], [0], [0], [1], [0, 0, 1, 1], [], []>} : vector<8x8xf32>, vector<8x32xf32>, vector<8x32xf32> -> vector<8x32xf32>
    %556 = arith.addf %535, %555 : vector<8x32xf32>
    %557 = vector.extract_strided_slice %513 {offsets = [0, 0, 16], sizes = [1, 8, 8], strides = [1, 1, 1]} : vector<1x8x32xf32> to vector<1x8x8xf32>
    %558 = vector.extract_strided_slice %514 {offsets = [0, 0, 16], sizes = [1, 16, 8], strides = [1, 1, 1]} : vector<1x16x32xf32> to vector<1x16x8xf32>
    "tpu.trace_start"() <{level = 10 : i32, message = "bqd,bkd->bqk"}> : () -> ()
    %cst_193 = arith.constant dense<0.000000e+00> : vector<1x8x16xf32>
    %559 = tpu.matmul %557, %558, %cst_193 {dimension_numbers = #tpu.dot_dimension_numbers<[2], [2], [1], [1], [0, 0, 0, 1, 1, 1], [0], [0]>} : vector<1x8x8xf32>, vector<1x16x8xf32>, vector<1x8x16xf32> -> vector<1x8x16xf32>
    "tpu.trace_stop"() : () -> ()
    %560 = vector.broadcast %0 : vector<1x1x16xf32> to vector<1x8x16xf32>
    %561 = arith.addf %559, %560 : vector<1x8x16xf32>
    %cst_194 = arith.constant dense<0xFF800000> : vector<1x8xf32>
    %562 = vector.multi_reduction <maximumf>, %561, %cst_194 [2] : vector<1x8x16xf32> to vector<1x8xf32>
    %563 = vector.shape_cast %562 : vector<1x8xf32> to vector<1x8x1xf32>
    %564 = vector.broadcast %563 : vector<1x8x1xf32> to vector<1x8x16xf32>
    %565 = arith.subf %561, %564 : vector<1x8x16xf32>
    %566 = math.exp %565 : vector<1x8x16xf32>
    %cst_195 = arith.constant dense<0.000000e+00> : vector<1x8xf32>
    %567 = vector.multi_reduction <add>, %566, %cst_195 [2] : vector<1x8x16xf32> to vector<1x8xf32>
    %568 = vector.shape_cast %567 : vector<1x8xf32> to vector<1x8x1xf32>
    %569 = tpu.reciprocal %568 {approx = true} : vector<1x8x1xf32> -> vector<1x8x1xf32>
    %570 = vector.broadcast %569 : vector<1x8x1xf32> to vector<1x8x16xf32>
    %571 = arith.mulf %566, %570 : vector<1x8x16xf32>
    %572 = vector.extract_strided_slice %515 {offsets = [0, 0, 16], sizes = [1, 16, 8], strides = [1, 1, 1]} : vector<1x16x32xf32> to vector<1x16x8xf32>
    "tpu.trace_start"() <{level = 10 : i32, message = "bqk,bkd->bqd"}> : () -> ()
    %cst_196 = arith.constant dense<0.000000e+00> : vector<1x8x8xf32>
    %573 = tpu.matmul %571, %572, %cst_196 {dimension_numbers = #tpu.dot_dimension_numbers<[2], [1], [1], [2], [0, 0, 0, 1, 1, 2], [0], [0]>} : vector<1x8x16xf32>, vector<1x16x8xf32>, vector<1x8x8xf32> -> vector<1x8x8xf32>
    "tpu.trace_stop"() : () -> ()
    %574 = vector.shape_cast %573 : vector<1x8x8xf32> to vector<8x8xf32>
    %575 = vector.extract_strided_slice %496 {offsets = [16, 0], sizes = [8, 32], strides = [1, 1]} : vector<32x32xf32> to vector<8x32xf32>
    %cst_197 = arith.constant dense<0.000000e+00> : vector<8x32xf32>
    %576 = tpu.matmul %574, %575, %cst_197 {dimension_numbers = #tpu.dot_dimension_numbers<[1], [0], [0], [1], [0, 0, 1, 1], [], []>} : vector<8x8xf32>, vector<8x32xf32>, vector<8x32xf32> -> vector<8x32xf32>
    %577 = arith.addf %556, %576 : vector<8x32xf32>
    %578 = vector.extract_strided_slice %513 {offsets = [0, 0, 24], sizes = [1, 8, 8], strides = [1, 1, 1]} : vector<1x8x32xf32> to vector<1x8x8xf32>
    %579 = vector.extract_strided_slice %514 {offsets = [0, 0, 24], sizes = [1, 16, 8], strides = [1, 1, 1]} : vector<1x16x32xf32> to vector<1x16x8xf32>
    "tpu.trace_start"() <{level = 10 : i32, message = "bqd,bkd->bqk"}> : () -> ()
    %cst_198 = arith.constant dense<0.000000e+00> : vector<1x8x16xf32>
    %580 = tpu.matmul %578, %579, %cst_198 {dimension_numbers = #tpu.dot_dimension_numbers<[2], [2], [1], [1], [0, 0, 0, 1, 1, 1], [0], [0]>} : vector<1x8x8xf32>, vector<1x16x8xf32>, vector<1x8x16xf32> -> vector<1x8x16xf32>
    "tpu.trace_stop"() : () -> ()
    %581 = vector.broadcast %0 : vector<1x1x16xf32> to vector<1x8x16xf32>
    %582 = arith.addf %580, %581 : vector<1x8x16xf32>
    %cst_199 = arith.constant dense<0xFF800000> : vector<1x8xf32>
    %583 = vector.multi_reduction <maximumf>, %582, %cst_199 [2] : vector<1x8x16xf32> to vector<1x8xf32>
    %584 = vector.shape_cast %583 : vector<1x8xf32> to vector<1x8x1xf32>
    %585 = vector.broadcast %584 : vector<1x8x1xf32> to vector<1x8x16xf32>
    %586 = arith.subf %582, %585 : vector<1x8x16xf32>
    %587 = math.exp %586 : vector<1x8x16xf32>
    %cst_200 = arith.constant dense<0.000000e+00> : vector<1x8xf32>
    %588 = vector.multi_reduction <add>, %587, %cst_200 [2] : vector<1x8x16xf32> to vector<1x8xf32>
    %589 = vector.shape_cast %588 : vector<1x8xf32> to vector<1x8x1xf32>
    %590 = tpu.reciprocal %589 {approx = true} : vector<1x8x1xf32> -> vector<1x8x1xf32>
    %591 = vector.broadcast %590 : vector<1x8x1xf32> to vector<1x8x16xf32>
    %592 = arith.mulf %587, %591 : vector<1x8x16xf32>
    %593 = vector.extract_strided_slice %515 {offsets = [0, 0, 24], sizes = [1, 16, 8], strides = [1, 1, 1]} : vector<1x16x32xf32> to vector<1x16x8xf32>
    "tpu.trace_start"() <{level = 10 : i32, message = "bqk,bkd->bqd"}> : () -> ()
    %cst_201 = arith.constant dense<0.000000e+00> : vector<1x8x8xf32>
    %594 = tpu.matmul %592, %593, %cst_201 {dimension_numbers = #tpu.dot_dimension_numbers<[2], [1], [1], [2], [0, 0, 0, 1, 1, 2], [0], [0]>} : vector<1x8x16xf32>, vector<1x16x8xf32>, vector<1x8x8xf32> -> vector<1x8x8xf32>
    "tpu.trace_stop"() : () -> ()
    %595 = vector.shape_cast %594 : vector<1x8x8xf32> to vector<8x8xf32>
    %596 = vector.extract_strided_slice %496 {offsets = [24, 0], sizes = [8, 32], strides = [1, 1]} : vector<32x32xf32> to vector<8x32xf32>
    %cst_202 = arith.constant dense<0.000000e+00> : vector<8x32xf32>
    %597 = tpu.matmul %595, %596, %cst_202 {dimension_numbers = #tpu.dot_dimension_numbers<[1], [0], [0], [1], [0, 0, 1, 1], [], []>} : vector<8x8xf32>, vector<8x32xf32>, vector<8x32xf32> -> vector<8x32xf32>
    %598 = arith.addf %577, %597 : vector<8x32xf32>
    %599 = vector.broadcast %497 : vector<1x32xf32> to vector<8x32xf32>
    %600 = arith.addf %598, %599 : vector<8x32xf32>
    %601 = arith.addf %488, %600 : vector<8x32xf32>
    %602 = vector.extract_strided_slice %363 {offsets = [5, 0], sizes = [1, 32], strides = [1, 1]} : vector<9x32xf32> to vector<1x32xf32>
    %603 = vector.extract_strided_slice %363 {offsets = [6, 0], sizes = [1, 32], strides = [1, 1]} : vector<9x32xf32> to vector<1x32xf32>
    %cst_203 = arith.constant dense<0.000000e+00> : vector<8xf32>
    %604 = vector.multi_reduction <add>, %601, %cst_203 [1] : vector<8x32xf32> to vector<8xf32>
    %605 = vector.shape_cast %604 : vector<8xf32> to vector<8x1xf32>
    %cst_204 = arith.constant 3.200000e+01 : f32
    %606 = vector.broadcast %cst_204 : f32 to vector<8x1xf32>
    %607 = arith.divf %605, %606 : vector<8x1xf32>
    %608 = vector.broadcast %607 : vector<8x1xf32> to vector<8x32xf32>
    %609 = arith.subf %601, %608 : vector<8x32xf32>
    %610 = arith.mulf %609, %609 : vector<8x32xf32>
    %cst_205 = arith.constant dense<0.000000e+00> : vector<8xf32>
    %611 = vector.multi_reduction <add>, %610, %cst_205 [1] : vector<8x32xf32> to vector<8xf32>
    %612 = vector.shape_cast %611 : vector<8xf32> to vector<8x1xf32>
    %cst_206 = arith.constant 3.200000e+01 : f32
    %613 = vector.broadcast %cst_206 : f32 to vector<8x1xf32>
    %614 = arith.divf %612, %613 : vector<8x1xf32>
    %615 = vector.broadcast %607 : vector<8x1xf32> to vector<8x32xf32>
    %616 = arith.subf %601, %615 : vector<8x32xf32>
    %cst_207 = arith.constant 9.99999974E-6 : f32
    %617 = vector.broadcast %cst_207 : f32 to vector<8x1xf32>
    %618 = arith.addf %614, %617 : vector<8x1xf32>
    %619 = math.rsqrt %618 : vector<8x1xf32>
    %620 = vector.broadcast %619 : vector<8x1xf32> to vector<8x32xf32>
    %621 = arith.mulf %616, %620 : vector<8x32xf32>
    %622 = vector.broadcast %602 : vector<1x32xf32> to vector<8x32xf32>
    %623 = arith.mulf %621, %622 : vector<8x32xf32>
    %624 = vector.broadcast %603 : vector<1x32xf32> to vector<8x32xf32>
    %625 = arith.addf %623, %624 : vector<8x32xf32>
    %c0_208 = arith.constant 0 : index
    %c0_209 = arith.constant 0 : index
    %c0_210 = arith.constant 0 : index
    %626 = vector.load %arg15[%c0_208, %c0_209, %c0_210] : memref<2x32x64xf32, #tpu.memory_space<vmem>>, vector<1x32x64xf32>
    %627 = vector.shape_cast %626 : vector<1x32x64xf32> to vector<32x64xf32>
    %cst_211 = arith.constant dense<0.000000e+00> : vector<8x64xf32>
    %628 = tpu.matmul %625, %627, %cst_211 {dimension_numbers = #tpu.dot_dimension_numbers<[1], [0], [0], [1], [0, 0, 1, 1], [], []>} : vector<8x32xf32>, vector<32x64xf32>, vector<8x64xf32> -> vector<8x64xf32>
    %c0_212 = arith.constant 0 : index
    %c0_213 = arith.constant 0 : index
    %c0_214 = arith.constant 0 : index
    %629 = vector.load %arg16[%c0_212, %c0_213, %c0_214] : memref<2x1x64xf32, #tpu.memory_space<vmem>>, vector<1x1x64xf32>
    %630 = vector.shape_cast %629 : vector<1x1x64xf32> to vector<1x64xf32>
    %631 = vector.broadcast %630 : vector<1x64xf32> to vector<8x64xf32>
    %632 = arith.addf %628, %631 : vector<8x64xf32>
    %cst_215 = arith.constant 0.000000e+00 : f32
    %633 = vector.broadcast %cst_215 : f32 to vector<8x64xf32>
    %634 = arith.maximumf %632, %633 : vector<8x64xf32>
    %c0_216 = arith.constant 0 : index
    %c0_217 = arith.constant 0 : index
    %c0_218 = arith.constant 0 : index
    %635 = vector.load %arg17[%c0_216, %c0_217, %c0_218] : memref<2x64x32xf32, #tpu.memory_space<vmem>>, vector<1x64x32xf32>
    %636 = vector.shape_cast %635 : vector<1x64x32xf32> to vector<64x32xf32>
    %cst_219 = arith.constant dense<0.000000e+00> : vector<8x32xf32>
    %637 = tpu.matmul %634, %636, %cst_219 {dimension_numbers = #tpu.dot_dimension_numbers<[1], [0], [0], [1], [0, 0, 1, 1], [], []>} : vector<8x64xf32>, vector<64x32xf32>, vector<8x32xf32> -> vector<8x32xf32>
    %638 = vector.extract_strided_slice %363 {offsets = [2, 0], sizes = [1, 32], strides = [1, 1]} : vector<9x32xf32> to vector<1x32xf32>
    %639 = vector.broadcast %638 : vector<1x32xf32> to vector<8x32xf32>
    %640 = arith.addf %637, %639 : vector<8x32xf32>
    %641 = arith.addf %625, %640 : vector<8x32xf32>
    %642 = vector.extract_strided_slice %363 {offsets = [7, 0], sizes = [1, 32], strides = [1, 1]} : vector<9x32xf32> to vector<1x32xf32>
    %643 = vector.extract_strided_slice %363 {offsets = [8, 0], sizes = [1, 32], strides = [1, 1]} : vector<9x32xf32> to vector<1x32xf32>
    %cst_220 = arith.constant dense<0.000000e+00> : vector<8xf32>
    %644 = vector.multi_reduction <add>, %641, %cst_220 [1] : vector<8x32xf32> to vector<8xf32>
    %645 = vector.shape_cast %644 : vector<8xf32> to vector<8x1xf32>
    %cst_221 = arith.constant 3.200000e+01 : f32
    %646 = vector.broadcast %cst_221 : f32 to vector<8x1xf32>
    %647 = arith.divf %645, %646 : vector<8x1xf32>
    %648 = vector.broadcast %647 : vector<8x1xf32> to vector<8x32xf32>
    %649 = arith.subf %641, %648 : vector<8x32xf32>
    %650 = arith.mulf %649, %649 : vector<8x32xf32>
    %cst_222 = arith.constant dense<0.000000e+00> : vector<8xf32>
    %651 = vector.multi_reduction <add>, %650, %cst_222 [1] : vector<8x32xf32> to vector<8xf32>
    %652 = vector.shape_cast %651 : vector<8xf32> to vector<8x1xf32>
    %cst_223 = arith.constant 3.200000e+01 : f32
    %653 = vector.broadcast %cst_223 : f32 to vector<8x1xf32>
    %654 = arith.divf %652, %653 : vector<8x1xf32>
    %655 = vector.broadcast %647 : vector<8x1xf32> to vector<8x32xf32>
    %656 = arith.subf %641, %655 : vector<8x32xf32>
    %cst_224 = arith.constant 9.99999974E-6 : f32
    %657 = vector.broadcast %cst_224 : f32 to vector<8x1xf32>
    %658 = arith.addf %654, %657 : vector<8x1xf32>
    %659 = math.rsqrt %658 : vector<8x1xf32>
    %660 = vector.broadcast %659 : vector<8x1xf32> to vector<8x32xf32>
    %661 = arith.mulf %656, %660 : vector<8x32xf32>
    %662 = vector.broadcast %642 : vector<1x32xf32> to vector<8x32xf32>
    %663 = arith.mulf %661, %662 : vector<8x32xf32>
    %664 = vector.broadcast %643 : vector<1x32xf32> to vector<8x32xf32>
    %665 = arith.addf %663, %664 : vector<8x32xf32>
    %666 = vector.extract_strided_slice %360 {offsets = [0, 0], sizes = [1, 32], strides = [1, 1]} : vector<2x32xf32> to vector<1x32xf32>
    %667 = vector.extract_strided_slice %360 {offsets = [1, 0], sizes = [1, 32], strides = [1, 1]} : vector<2x32xf32> to vector<1x32xf32>
    %cst_225 = arith.constant dense<0.000000e+00> : vector<8xf32>
    %668 = vector.multi_reduction <add>, %665, %cst_225 [1] : vector<8x32xf32> to vector<8xf32>
    %669 = vector.shape_cast %668 : vector<8xf32> to vector<8x1xf32>
    %cst_226 = arith.constant 3.200000e+01 : f32
    %670 = vector.broadcast %cst_226 : f32 to vector<8x1xf32>
    %671 = arith.divf %669, %670 : vector<8x1xf32>
    %672 = vector.broadcast %671 : vector<8x1xf32> to vector<8x32xf32>
    %673 = arith.subf %665, %672 : vector<8x32xf32>
    %674 = arith.mulf %673, %673 : vector<8x32xf32>
    %cst_227 = arith.constant dense<0.000000e+00> : vector<8xf32>
    %675 = vector.multi_reduction <add>, %674, %cst_227 [1] : vector<8x32xf32> to vector<8xf32>
    %676 = vector.shape_cast %675 : vector<8xf32> to vector<8x1xf32>
    %cst_228 = arith.constant 3.200000e+01 : f32
    %677 = vector.broadcast %cst_228 : f32 to vector<8x1xf32>
    %678 = arith.divf %676, %677 : vector<8x1xf32>
    %679 = vector.broadcast %671 : vector<8x1xf32> to vector<8x32xf32>
    %680 = arith.subf %665, %679 : vector<8x32xf32>
    %cst_229 = arith.constant 9.99999974E-6 : f32
    %681 = vector.broadcast %cst_229 : f32 to vector<8x1xf32>
    %682 = arith.addf %678, %681 : vector<8x1xf32>
    %683 = math.rsqrt %682 : vector<8x1xf32>
    %684 = vector.broadcast %683 : vector<8x1xf32> to vector<8x32xf32>
    %685 = arith.mulf %680, %684 : vector<8x32xf32>
    %686 = vector.broadcast %666 : vector<1x32xf32> to vector<8x32xf32>
    %687 = arith.mulf %685, %686 : vector<8x32xf32>
    %688 = vector.broadcast %667 : vector<1x32xf32> to vector<8x32xf32>
    %689 = arith.addf %687, %688 : vector<8x32xf32>
    %690 = vector.shape_cast %689 : vector<8x32xf32> to vector<1x8x32xf32>
    %c0_230 = arith.constant 0 : index
    %c0_231 = arith.constant 0 : index
    %c0_232 = arith.constant 0 : index
    %c0_233 = arith.constant 0 : index
    %691 = vector.load %arg20[%c0_230, %c0_231, %c0_232, %c0_233] : memref<2x1x8x32xf32, #tpu.memory_space<vmem>>, vector<1x1x8x32xf32>
    %692 = vector.shape_cast %691 : vector<1x1x8x32xf32> to vector<1x8x32xf32>
    %693 = vector.shape_cast %690 : vector<1x8x32xf32> to vector<1x1x8x32xf32>
    tpu.vector_store %arg20[%c0_230, %c0_231, %c0_232, %c0_233], %693 {strides = array<i32>} : memref<2x1x8x32xf32, #tpu.memory_space<vmem>>, vector<1x1x8x32xf32>,
    %c1_234 = arith.constant 1 : index
    %c0_235 = arith.constant 0 : index
    %c0_236 = arith.constant 0 : index
    %694 = vector.load %arg18[%c1_234, %c0_235, %c0_236] : memref<2x9x32xf32, #tpu.memory_space<vmem>>, vector<1x9x32xf32>
    %695 = vector.shape_cast %694 : vector<1x9x32xf32> to vector<9x32xf32>
    %696 = arith.addf %665, %5 : vector<8x32xf32>
    %c1_237 = arith.constant 1 : index
    %c0_238 = arith.constant 0 : index
    %c0_239 = arith.constant 0 : index
    %c0_240 = arith.constant 0 : index
    %697 = vector.load %arg12[%c1_237, %c0_238, %c0_239, %c0_240] : memref<2x2x32x96xf32, #tpu.memory_space<vmem>>, vector<1x1x32x96xf32>
    %698 = vector.shape_cast %697 : vector<1x1x32x96xf32> to vector<32x96xf32>
    %c1_241 = arith.constant 1 : index
    %c0_242 = arith.constant 0 : index
    %c0_243 = arith.constant 0 : index
    %c0_244 = arith.constant 0 : index
    %699 = vector.load %arg13[%c1_241, %c0_242, %c0_243, %c0_244] : memref<2x2x1x96xf32, #tpu.memory_space<vmem>>, vector<1x1x1x96xf32>
    %700 = vector.shape_cast %699 : vector<1x1x1x96xf32> to vector<1x96xf32>
    %c1_245 = arith.constant 1 : index
    %c0_246 = arith.constant 0 : index
    %c0_247 = arith.constant 0 : index
    %c0_248 = arith.constant 0 : index
    %701 = vector.load %arg14[%c1_245, %c0_246, %c0_247, %c0_248] : memref<2x2x32x32xf32, #tpu.memory_space<vmem>>, vector<1x1x32x32xf32>
    %702 = vector.shape_cast %701 : vector<1x1x32x32xf32> to vector<32x32xf32>
    %703 = vector.extract_strided_slice %695 {offsets = [0, 0], sizes = [1, 32], strides = [1, 1]} : vector<9x32xf32> to vector<1x32xf32>
    %704 = vector.extract_strided_slice %698 {offsets = [0, 0], sizes = [32, 64], strides = [1, 1]} : vector<32x96xf32> to vector<32x64xf32>
    %cst_249 = arith.constant dense<0.000000e+00> : vector<8x64xf32>
    %705 = tpu.matmul %696, %704, %cst_249 {dimension_numbers = #tpu.dot_dimension_numbers<[1], [0], [0], [1], [0, 0, 1, 1], [], []>} : vector<8x32xf32>, vector<32x64xf32>, vector<8x64xf32> -> vector<8x64xf32>
    %706 = vector.extract_strided_slice %700 {offsets = [0, 0], sizes = [1, 64], strides = [1, 1]} : vector<1x96xf32> to vector<1x64xf32>
    %707 = vector.broadcast %706 : vector<1x64xf32> to vector<8x64xf32>
    %708 = arith.addf %705, %707 : vector<8x64xf32>
    %709 = vector.extract_strided_slice %708 {offsets = [0, 0], sizes = [8, 32], strides = [1, 1]} : vector<8x64xf32> to vector<8x32xf32>
    %710 = vector.extract_strided_slice %708 {offsets = [0, 32], sizes = [8, 32], strides = [1, 1]} : vector<8x64xf32> to vector<8x32xf32>
    %711 = vector.extract_strided_slice %698 {offsets = [0, 64], sizes = [32, 32], strides = [1, 1]} : vector<32x96xf32> to vector<32x32xf32>
    %cst_250 = arith.constant dense<0.000000e+00> : vector<8x32xf32>
    %712 = tpu.matmul %665, %711, %cst_250 {dimension_numbers = #tpu.dot_dimension_numbers<[1], [0], [0], [1], [0, 0, 1, 1], [], []>} : vector<8x32xf32>, vector<32x32xf32>, vector<8x32xf32> -> vector<8x32xf32>
    %713 = vector.extract_strided_slice %700 {offsets = [0, 64], sizes = [1, 32], strides = [1, 1]} : vector<1x96xf32> to vector<1x32xf32>
    %714 = vector.broadcast %713 : vector<1x32xf32> to vector<8x32xf32>
    %715 = arith.addf %712, %714 : vector<8x32xf32>
    %716 = vector.shape_cast %709 : vector<8x32xf32> to vector<1x8x32xf32>
    %717 = vector.shape_cast %710 : vector<8x32xf32> to vector<1x8x32xf32>
    %718 = vector.shape_cast %715 : vector<8x32xf32> to vector<1x8x32xf32>
    %719 = vector.extract_strided_slice %716 {offsets = [0, 0, 0], sizes = [1, 8, 8], strides = [1, 1, 1]} : vector<1x8x32xf32> to vector<1x8x8xf32>
    %720 = vector.extract_strided_slice %717 {offsets = [0, 0, 0], sizes = [1, 8, 8], strides = [1, 1, 1]} : vector<1x8x32xf32> to vector<1x8x8xf32>
    "tpu.trace_start"() <{level = 10 : i32, message = "bqd,bkd->bqk"}> : () -> ()
    %cst_251 = arith.constant dense<0.000000e+00> : vector<1x8x8xf32>
    %721 = tpu.matmul %719, %720, %cst_251 {dimension_numbers = #tpu.dot_dimension_numbers<[2], [2], [1], [1], [0, 0, 0, 1, 1, 1], [0], [0]>} : vector<1x8x8xf32>, vector<1x8x8xf32>, vector<1x8x8xf32> -> vector<1x8x8xf32>
    "tpu.trace_stop"() : () -> ()
    %cst_252 = arith.constant dense<0xFF800000> : vector<1x8xf32>
    %722 = vector.multi_reduction <maximumf>, %721, %cst_252 [2] : vector<1x8x8xf32> to vector<1x8xf32>
    %723 = vector.shape_cast %722 : vector<1x8xf32> to vector<1x8x1xf32>
    %724 = vector.broadcast %723 : vector<1x8x1xf32> to vector<1x8x8xf32>
    %725 = arith.subf %721, %724 : vector<1x8x8xf32>
    %726 = math.exp %725 : vector<1x8x8xf32>
    %cst_253 = arith.constant dense<0.000000e+00> : vector<1x8xf32>
    %727 = vector.multi_reduction <add>, %726, %cst_253 [2] : vector<1x8x8xf32> to vector<1x8xf32>
    %728 = vector.shape_cast %727 : vector<1x8xf32> to vector<1x8x1xf32>
    %729 = tpu.reciprocal %728 {approx = true} : vector<1x8x1xf32> -> vector<1x8x1xf32>
    %730 = vector.broadcast %729 : vector<1x8x1xf32> to vector<1x8x8xf32>
    %731 = arith.mulf %726, %730 : vector<1x8x8xf32>
    %732 = vector.extract_strided_slice %718 {offsets = [0, 0, 0], sizes = [1, 8, 8], strides = [1, 1, 1]} : vector<1x8x32xf32> to vector<1x8x8xf32>
    "tpu.trace_start"() <{level = 10 : i32, message = "bqk,bkd->bqd"}> : () -> ()
    %cst_254 = arith.constant dense<0.000000e+00> : vector<1x8x8xf32>
    %733 = tpu.matmul %731, %732, %cst_254 {dimension_numbers = #tpu.dot_dimension_numbers<[2], [1], [1], [2], [0, 0, 0, 1, 1, 2], [0], [0]>} : vector<1x8x8xf32>, vector<1x8x8xf32>, vector<1x8x8xf32> -> vector<1x8x8xf32>
    "tpu.trace_stop"() : () -> ()
    %734 = vector.shape_cast %733 : vector<1x8x8xf32> to vector<8x8xf32>
    %735 = vector.extract_strided_slice %702 {offsets = [0, 0], sizes = [8, 32], strides = [1, 1]} : vector<32x32xf32> to vector<8x32xf32>
    %cst_255 = arith.constant dense<0.000000e+00> : vector<8x32xf32>
    %736 = tpu.matmul %734, %735, %cst_255 {dimension_numbers = #tpu.dot_dimension_numbers<[1], [0], [0], [1], [0, 0, 1, 1], [], []>} : vector<8x8xf32>, vector<8x32xf32>, vector<8x32xf32> -> vector<8x32xf32>
    %737 = vector.extract_strided_slice %716 {offsets = [0, 0, 8], sizes = [1, 8, 8], strides = [1, 1, 1]} : vector<1x8x32xf32> to vector<1x8x8xf32>
    %738 = vector.extract_strided_slice %717 {offsets = [0, 0, 8], sizes = [1, 8, 8], strides = [1, 1, 1]} : vector<1x8x32xf32> to vector<1x8x8xf32>
    "tpu.trace_start"() <{level = 10 : i32, message = "bqd,bkd->bqk"}> : () -> ()
    %cst_256 = arith.constant dense<0.000000e+00> : vector<1x8x8xf32>
    %739 = tpu.matmul %737, %738, %cst_256 {dimension_numbers = #tpu.dot_dimension_numbers<[2], [2], [1], [1], [0, 0, 0, 1, 1, 1], [0], [0]>} : vector<1x8x8xf32>, vector<1x8x8xf32>, vector<1x8x8xf32> -> vector<1x8x8xf32>
    "tpu.trace_stop"() : () -> ()
    %cst_257 = arith.constant dense<0xFF800000> : vector<1x8xf32>
    %740 = vector.multi_reduction <maximumf>, %739, %cst_257 [2] : vector<1x8x8xf32> to vector<1x8xf32>
    %741 = vector.shape_cast %740 : vector<1x8xf32> to vector<1x8x1xf32>
    %742 = vector.broadcast %741 : vector<1x8x1xf32> to vector<1x8x8xf32>
    %743 = arith.subf %739, %742 : vector<1x8x8xf32>
    %744 = math.exp %743 : vector<1x8x8xf32>
    %cst_258 = arith.constant dense<0.000000e+00> : vector<1x8xf32>
    %745 = vector.multi_reduction <add>, %744, %cst_258 [2] : vector<1x8x8xf32> to vector<1x8xf32>
    %746 = vector.shape_cast %745 : vector<1x8xf32> to vector<1x8x1xf32>
    %747 = tpu.reciprocal %746 {approx = true} : vector<1x8x1xf32> -> vector<1x8x1xf32>
    %748 = vector.broadcast %747 : vector<1x8x1xf32> to vector<1x8x8xf32>
    %749 = arith.mulf %744, %748 : vector<1x8x8xf32>
    %750 = vector.extract_strided_slice %718 {offsets = [0, 0, 8], sizes = [1, 8, 8], strides = [1, 1, 1]} : vector<1x8x32xf32> to vector<1x8x8xf32>
    "tpu.trace_start"() <{level = 10 : i32, message = "bqk,bkd->bqd"}> : () -> ()
    %cst_259 = arith.constant dense<0.000000e+00> : vector<1x8x8xf32>
    %751 = tpu.matmul %749, %750, %cst_259 {dimension_numbers = #tpu.dot_dimension_numbers<[2], [1], [1], [2], [0, 0, 0, 1, 1, 2], [0], [0]>} : vector<1x8x8xf32>, vector<1x8x8xf32>, vector<1x8x8xf32> -> vector<1x8x8xf32>
    "tpu.trace_stop"() : () -> ()
    %752 = vector.shape_cast %751 : vector<1x8x8xf32> to vector<8x8xf32>
    %753 = vector.extract_strided_slice %702 {offsets = [8, 0], sizes = [8, 32], strides = [1, 1]} : vector<32x32xf32> to vector<8x32xf32>
    %cst_260 = arith.constant dense<0.000000e+00> : vector<8x32xf32>
    %754 = tpu.matmul %752, %753, %cst_260 {dimension_numbers = #tpu.dot_dimension_numbers<[1], [0], [0], [1], [0, 0, 1, 1], [], []>} : vector<8x8xf32>, vector<8x32xf32>, vector<8x32xf32> -> vector<8x32xf32>
    %755 = arith.addf %736, %754 : vector<8x32xf32>
    %756 = vector.extract_strided_slice %716 {offsets = [0, 0, 16], sizes = [1, 8, 8], strides = [1, 1, 1]} : vector<1x8x32xf32> to vector<1x8x8xf32>
    %757 = vector.extract_strided_slice %717 {offsets = [0, 0, 16], sizes = [1, 8, 8], strides = [1, 1, 1]} : vector<1x8x32xf32> to vector<1x8x8xf32>
    "tpu.trace_start"() <{level = 10 : i32, message = "bqd,bkd->bqk"}> : () -> ()
    %cst_261 = arith.constant dense<0.000000e+00> : vector<1x8x8xf32>
    %758 = tpu.matmul %756, %757, %cst_261 {dimension_numbers = #tpu.dot_dimension_numbers<[2], [2], [1], [1], [0, 0, 0, 1, 1, 1], [0], [0]>} : vector<1x8x8xf32>, vector<1x8x8xf32>, vector<1x8x8xf32> -> vector<1x8x8xf32>
    "tpu.trace_stop"() : () -> ()
    %cst_262 = arith.constant dense<0xFF800000> : vector<1x8xf32>
    %759 = vector.multi_reduction <maximumf>, %758, %cst_262 [2] : vector<1x8x8xf32> to vector<1x8xf32>
    %760 = vector.shape_cast %759 : vector<1x8xf32> to vector<1x8x1xf32>
    %761 = vector.broadcast %760 : vector<1x8x1xf32> to vector<1x8x8xf32>
    %762 = arith.subf %758, %761 : vector<1x8x8xf32>
    %763 = math.exp %762 : vector<1x8x8xf32>
    %cst_263 = arith.constant dense<0.000000e+00> : vector<1x8xf32>
    %764 = vector.multi_reduction <add>, %763, %cst_263 [2] : vector<1x8x8xf32> to vector<1x8xf32>
    %765 = vector.shape_cast %764 : vector<1x8xf32> to vector<1x8x1xf32>
    %766 = tpu.reciprocal %765 {approx = true} : vector<1x8x1xf32> -> vector<1x8x1xf32>
    %767 = vector.broadcast %766 : vector<1x8x1xf32> to vector<1x8x8xf32>
    %768 = arith.mulf %763, %767 : vector<1x8x8xf32>
    %769 = vector.extract_strided_slice %718 {offsets = [0, 0, 16], sizes = [1, 8, 8], strides = [1, 1, 1]} : vector<1x8x32xf32> to vector<1x8x8xf32>
    "tpu.trace_start"() <{level = 10 : i32, message = "bqk,bkd->bqd"}> : () -> ()
    %cst_264 = arith.constant dense<0.000000e+00> : vector<1x8x8xf32>
    %770 = tpu.matmul %768, %769, %cst_264 {dimension_numbers = #tpu.dot_dimension_numbers<[2], [1], [1], [2], [0, 0, 0, 1, 1, 2], [0], [0]>} : vector<1x8x8xf32>, vector<1x8x8xf32>, vector<1x8x8xf32> -> vector<1x8x8xf32>
    "tpu.trace_stop"() : () -> ()
    %771 = vector.shape_cast %770 : vector<1x8x8xf32> to vector<8x8xf32>
    %772 = vector.extract_strided_slice %702 {offsets = [16, 0], sizes = [8, 32], strides = [1, 1]} : vector<32x32xf32> to vector<8x32xf32>
    %cst_265 = arith.constant dense<0.000000e+00> : vector<8x32xf32>
    %773 = tpu.matmul %771, %772, %cst_265 {dimension_numbers = #tpu.dot_dimension_numbers<[1], [0], [0], [1], [0, 0, 1, 1], [], []>} : vector<8x8xf32>, vector<8x32xf32>, vector<8x32xf32> -> vector<8x32xf32>
    %774 = arith.addf %755, %773 : vector<8x32xf32>
    %775 = vector.extract_strided_slice %716 {offsets = [0, 0, 24], sizes = [1, 8, 8], strides = [1, 1, 1]} : vector<1x8x32xf32> to vector<1x8x8xf32>
    %776 = vector.extract_strided_slice %717 {offsets = [0, 0, 24], sizes = [1, 8, 8], strides = [1, 1, 1]} : vector<1x8x32xf32> to vector<1x8x8xf32>
    "tpu.trace_start"() <{level = 10 : i32, message = "bqd,bkd->bqk"}> : () -> ()
    %cst_266 = arith.constant dense<0.000000e+00> : vector<1x8x8xf32>
    %777 = tpu.matmul %775, %776, %cst_266 {dimension_numbers = #tpu.dot_dimension_numbers<[2], [2], [1], [1], [0, 0, 0, 1, 1, 1], [0], [0]>} : vector<1x8x8xf32>, vector<1x8x8xf32>, vector<1x8x8xf32> -> vector<1x8x8xf32>
    "tpu.trace_stop"() : () -> ()
    %cst_267 = arith.constant dense<0xFF800000> : vector<1x8xf32>
    %778 = vector.multi_reduction <maximumf>, %777, %cst_267 [2] : vector<1x8x8xf32> to vector<1x8xf32>
    %779 = vector.shape_cast %778 : vector<1x8xf32> to vector<1x8x1xf32>
    %780 = vector.broadcast %779 : vector<1x8x1xf32> to vector<1x8x8xf32>
    %781 = arith.subf %777, %780 : vector<1x8x8xf32>
    %782 = math.exp %781 : vector<1x8x8xf32>
    %cst_268 = arith.constant dense<0.000000e+00> : vector<1x8xf32>
    %783 = vector.multi_reduction <add>, %782, %cst_268 [2] : vector<1x8x8xf32> to vector<1x8xf32>
    %784 = vector.shape_cast %783 : vector<1x8xf32> to vector<1x8x1xf32>
    %785 = tpu.reciprocal %784 {approx = true} : vector<1x8x1xf32> -> vector<1x8x1xf32>
    %786 = vector.broadcast %785 : vector<1x8x1xf32> to vector<1x8x8xf32>
    %787 = arith.mulf %782, %786 : vector<1x8x8xf32>
    %788 = vector.extract_strided_slice %718 {offsets = [0, 0, 24], sizes = [1, 8, 8], strides = [1, 1, 1]} : vector<1x8x32xf32> to vector<1x8x8xf32>
    "tpu.trace_start"() <{level = 10 : i32, message = "bqk,bkd->bqd"}> : () -> ()
    %cst_269 = arith.constant dense<0.000000e+00> : vector<1x8x8xf32>
    %789 = tpu.matmul %787, %788, %cst_269 {dimension_numbers = #tpu.dot_dimension_numbers<[2], [1], [1], [2], [0, 0, 0, 1, 1, 2], [0], [0]>} : vector<1x8x8xf32>, vector<1x8x8xf32>, vector<1x8x8xf32> -> vector<1x8x8xf32>
    "tpu.trace_stop"() : () -> ()
    %790 = vector.shape_cast %789 : vector<1x8x8xf32> to vector<8x8xf32>
    %791 = vector.extract_strided_slice %702 {offsets = [24, 0], sizes = [8, 32], strides = [1, 1]} : vector<32x32xf32> to vector<8x32xf32>
    %cst_270 = arith.constant dense<0.000000e+00> : vector<8x32xf32>
    %792 = tpu.matmul %790, %791, %cst_270 {dimension_numbers = #tpu.dot_dimension_numbers<[1], [0], [0], [1], [0, 0, 1, 1], [], []>} : vector<8x8xf32>, vector<8x32xf32>, vector<8x32xf32> -> vector<8x32xf32>
    %793 = arith.addf %774, %792 : vector<8x32xf32>
    %794 = vector.broadcast %703 : vector<1x32xf32> to vector<8x32xf32>
    %795 = arith.addf %793, %794 : vector<8x32xf32>
    %796 = arith.addf %665, %795 : vector<8x32xf32>
    %797 = vector.extract_strided_slice %695 {offsets = [3, 0], sizes = [1, 32], strides = [1, 1]} : vector<9x32xf32> to vector<1x32xf32>
    %798 = vector.extract_strided_slice %695 {offsets = [4, 0], sizes = [1, 32], strides = [1, 1]} : vector<9x32xf32> to vector<1x32xf32>
    %cst_271 = arith.constant dense<0.000000e+00> : vector<8xf32>
    %799 = vector.multi_reduction <add>, %796, %cst_271 [1] : vector<8x32xf32> to vector<8xf32>
    %800 = vector.shape_cast %799 : vector<8xf32> to vector<8x1xf32>
    %cst_272 = arith.constant 3.200000e+01 : f32
    %801 = vector.broadcast %cst_272 : f32 to vector<8x1xf32>
    %802 = arith.divf %800, %801 : vector<8x1xf32>
    %803 = vector.broadcast %802 : vector<8x1xf32> to vector<8x32xf32>
    %804 = arith.subf %796, %803 : vector<8x32xf32>
    %805 = arith.mulf %804, %804 : vector<8x32xf32>
    %cst_273 = arith.constant dense<0.000000e+00> : vector<8xf32>
    %806 = vector.multi_reduction <add>, %805, %cst_273 [1] : vector<8x32xf32> to vector<8xf32>
    %807 = vector.shape_cast %806 : vector<8xf32> to vector<8x1xf32>
    %cst_274 = arith.constant 3.200000e+01 : f32
    %808 = vector.broadcast %cst_274 : f32 to vector<8x1xf32>
    %809 = arith.divf %807, %808 : vector<8x1xf32>
    %810 = vector.broadcast %802 : vector<8x1xf32> to vector<8x32xf32>
    %811 = arith.subf %796, %810 : vector<8x32xf32>
    %cst_275 = arith.constant 9.99999974E-6 : f32
    %812 = vector.broadcast %cst_275 : f32 to vector<8x1xf32>
    %813 = arith.addf %809, %812 : vector<8x1xf32>
    %814 = math.rsqrt %813 : vector<8x1xf32>
    %815 = vector.broadcast %814 : vector<8x1xf32> to vector<8x32xf32>
    %816 = arith.mulf %811, %815 : vector<8x32xf32>
    %817 = vector.broadcast %797 : vector<1x32xf32> to vector<8x32xf32>
    %818 = arith.mulf %816, %817 : vector<8x32xf32>
    %819 = vector.broadcast %798 : vector<1x32xf32> to vector<8x32xf32>
    %820 = arith.addf %818, %819 : vector<8x32xf32>
    %821 = arith.addf %820, %5 : vector<8x32xf32>
    %822 = arith.addf %357, %2 : vector<16x32xf32>
    %c1_276 = arith.constant 1 : index
    %c1_277 = arith.constant 1 : index
    %c0_278 = arith.constant 0 : index
    %c0_279 = arith.constant 0 : index
    %823 = vector.load %arg12[%c1_276, %c1_277, %c0_278, %c0_279] : memref<2x2x32x96xf32, #tpu.memory_space<vmem>>, vector<1x1x32x96xf32>
    %824 = vector.shape_cast %823 : vector<1x1x32x96xf32> to vector<32x96xf32>
    %c1_280 = arith.constant 1 : index
    %c1_281 = arith.constant 1 : index
    %c0_282 = arith.constant 0 : index
    %c0_283 = arith.constant 0 : index
    %825 = vector.load %arg13[%c1_280, %c1_281, %c0_282, %c0_283] : memref<2x2x1x96xf32, #tpu.memory_space<vmem>>, vector<1x1x1x96xf32>
    %826 = vector.shape_cast %825 : vector<1x1x1x96xf32> to vector<1x96xf32>
    %c1_284 = arith.constant 1 : index
    %c1_285 = arith.constant 1 : index
    %c0_286 = arith.constant 0 : index
    %c0_287 = arith.constant 0 : index
    %827 = vector.load %arg14[%c1_284, %c1_285, %c0_286, %c0_287] : memref<2x2x32x32xf32, #tpu.memory_space<vmem>>, vector<1x1x32x32xf32>
    %828 = vector.shape_cast %827 : vector<1x1x32x32xf32> to vector<32x32xf32>
    %829 = vector.extract_strided_slice %695 {offsets = [1, 0], sizes = [1, 32], strides = [1, 1]} : vector<9x32xf32> to vector<1x32xf32>
    %830 = vector.extract_strided_slice %824 {offsets = [0, 0], sizes = [32, 32], strides = [1, 1]} : vector<32x96xf32> to vector<32x32xf32>
    %cst_288 = arith.constant dense<0.000000e+00> : vector<8x32xf32>
    %831 = tpu.matmul %821, %830, %cst_288 {dimension_numbers = #tpu.dot_dimension_numbers<[1], [0], [0], [1], [0, 0, 1, 1], [], []>} : vector<8x32xf32>, vector<32x32xf32>, vector<8x32xf32> -> vector<8x32xf32>
    %832 = vector.extract_strided_slice %826 {offsets = [0, 0], sizes = [1, 32], strides = [1, 1]} : vector<1x96xf32> to vector<1x32xf32>
    %833 = vector.broadcast %832 : vector<1x32xf32> to vector<8x32xf32>
    %834 = arith.addf %831, %833 : vector<8x32xf32>
    %835 = vector.extract_strided_slice %824 {offsets = [0, 32], sizes = [32, 32], strides = [1, 1]} : vector<32x96xf32> to vector<32x32xf32>
    %cst_289 = arith.constant dense<0.000000e+00> : vector<16x32xf32>
    %836 = tpu.matmul %822, %835, %cst_289 {dimension_numbers = #tpu.dot_dimension_numbers<[1], [0], [0], [1], [0, 0, 1, 1], [], []>} : vector<16x32xf32>, vector<32x32xf32>, vector<16x32xf32> -> vector<16x32xf32>
    %837 = vector.extract_strided_slice %826 {offsets = [0, 32], sizes = [1, 32], strides = [1, 1]} : vector<1x96xf32> to vector<1x32xf32>
    %838 = vector.broadcast %837 : vector<1x32xf32> to vector<16x32xf32>
    %839 = arith.addf %836, %838 : vector<16x32xf32>
    %840 = vector.extract_strided_slice %824 {offsets = [0, 64], sizes = [32, 32], strides = [1, 1]} : vector<32x96xf32> to vector<32x32xf32>
    %cst_290 = arith.constant dense<0.000000e+00> : vector<16x32xf32>
    %841 = tpu.matmul %357, %840, %cst_290 {dimension_numbers = #tpu.dot_dimension_numbers<[1], [0], [0], [1], [0, 0, 1, 1], [], []>} : vector<16x32xf32>, vector<32x32xf32>, vector<16x32xf32> -> vector<16x32xf32>
    %842 = vector.extract_strided_slice %826 {offsets = [0, 64], sizes = [1, 32], strides = [1, 1]} : vector<1x96xf32> to vector<1x32xf32>
    %843 = vector.broadcast %842 : vector<1x32xf32> to vector<16x32xf32>
    %844 = arith.addf %841, %843 : vector<16x32xf32>
    %845 = vector.shape_cast %834 : vector<8x32xf32> to vector<1x8x32xf32>
    %846 = vector.shape_cast %839 : vector<16x32xf32> to vector<1x16x32xf32>
    %847 = vector.shape_cast %844 : vector<16x32xf32> to vector<1x16x32xf32>
    %848 = vector.extract_strided_slice %845 {offsets = [0, 0, 0], sizes = [1, 8, 8], strides = [1, 1, 1]} : vector<1x8x32xf32> to vector<1x8x8xf32>
    %849 = vector.extract_strided_slice %846 {offsets = [0, 0, 0], sizes = [1, 16, 8], strides = [1, 1, 1]} : vector<1x16x32xf32> to vector<1x16x8xf32>
    "tpu.trace_start"() <{level = 10 : i32, message = "bqd,bkd->bqk"}> : () -> ()
    %cst_291 = arith.constant dense<0.000000e+00> : vector<1x8x16xf32>
    %850 = tpu.matmul %848, %849, %cst_291 {dimension_numbers = #tpu.dot_dimension_numbers<[2], [2], [1], [1], [0, 0, 0, 1, 1, 1], [0], [0]>} : vector<1x8x8xf32>, vector<1x16x8xf32>, vector<1x8x16xf32> -> vector<1x8x16xf32>
    "tpu.trace_stop"() : () -> ()
    %851 = vector.broadcast %0 : vector<1x1x16xf32> to vector<1x8x16xf32>
    %852 = arith.addf %850, %851 : vector<1x8x16xf32>
    %cst_292 = arith.constant dense<0xFF800000> : vector<1x8xf32>
    %853 = vector.multi_reduction <maximumf>, %852, %cst_292 [2] : vector<1x8x16xf32> to vector<1x8xf32>
    %854 = vector.shape_cast %853 : vector<1x8xf32> to vector<1x8x1xf32>
    %855 = vector.broadcast %854 : vector<1x8x1xf32> to vector<1x8x16xf32>
    %856 = arith.subf %852, %855 : vector<1x8x16xf32>
    %857 = math.exp %856 : vector<1x8x16xf32>
    %cst_293 = arith.constant dense<0.000000e+00> : vector<1x8xf32>
    %858 = vector.multi_reduction <add>, %857, %cst_293 [2] : vector<1x8x16xf32> to vector<1x8xf32>
    %859 = vector.shape_cast %858 : vector<1x8xf32> to vector<1x8x1xf32>
    %860 = tpu.reciprocal %859 {approx = true} : vector<1x8x1xf32> -> vector<1x8x1xf32>
    %861 = vector.broadcast %860 : vector<1x8x1xf32> to vector<1x8x16xf32>
    %862 = arith.mulf %857, %861 : vector<1x8x16xf32>
    %863 = vector.extract_strided_slice %847 {offsets = [0, 0, 0], sizes = [1, 16, 8], strides = [1, 1, 1]} : vector<1x16x32xf32> to vector<1x16x8xf32>
    "tpu.trace_start"() <{level = 10 : i32, message = "bqk,bkd->bqd"}> : () -> ()
    %cst_294 = arith.constant dense<0.000000e+00> : vector<1x8x8xf32>
    %864 = tpu.matmul %862, %863, %cst_294 {dimension_numbers = #tpu.dot_dimension_numbers<[2], [1], [1], [2], [0, 0, 0, 1, 1, 2], [0], [0]>} : vector<1x8x16xf32>, vector<1x16x8xf32>, vector<1x8x8xf32> -> vector<1x8x8xf32>
    "tpu.trace_stop"() : () -> ()
    %865 = vector.shape_cast %864 : vector<1x8x8xf32> to vector<8x8xf32>
    %866 = vector.extract_strided_slice %828 {offsets = [0, 0], sizes = [8, 32], strides = [1, 1]} : vector<32x32xf32> to vector<8x32xf32>
    %cst_295 = arith.constant dense<0.000000e+00> : vector<8x32xf32>
    %867 = tpu.matmul %865, %866, %cst_295 {dimension_numbers = #tpu.dot_dimension_numbers<[1], [0], [0], [1], [0, 0, 1, 1], [], []>} : vector<8x8xf32>, vector<8x32xf32>, vector<8x32xf32> -> vector<8x32xf32>
    %868 = vector.extract_strided_slice %845 {offsets = [0, 0, 8], sizes = [1, 8, 8], strides = [1, 1, 1]} : vector<1x8x32xf32> to vector<1x8x8xf32>
    %869 = vector.extract_strided_slice %846 {offsets = [0, 0, 8], sizes = [1, 16, 8], strides = [1, 1, 1]} : vector<1x16x32xf32> to vector<1x16x8xf32>
    "tpu.trace_start"() <{level = 10 : i32, message = "bqd,bkd->bqk"}> : () -> ()
    %cst_296 = arith.constant dense<0.000000e+00> : vector<1x8x16xf32>
    %870 = tpu.matmul %868, %869, %cst_296 {dimension_numbers = #tpu.dot_dimension_numbers<[2], [2], [1], [1], [0, 0, 0, 1, 1, 1], [0], [0]>} : vector<1x8x8xf32>, vector<1x16x8xf32>, vector<1x8x16xf32> -> vector<1x8x16xf32>
    "tpu.trace_stop"() : () -> ()
    %871 = vector.broadcast %0 : vector<1x1x16xf32> to vector<1x8x16xf32>
    %872 = arith.addf %870, %871 : vector<1x8x16xf32>
    %cst_297 = arith.constant dense<0xFF800000> : vector<1x8xf32>
    %873 = vector.multi_reduction <maximumf>, %872, %cst_297 [2] : vector<1x8x16xf32> to vector<1x8xf32>
    %874 = vector.shape_cast %873 : vector<1x8xf32> to vector<1x8x1xf32>
    %875 = vector.broadcast %874 : vector<1x8x1xf32> to vector<1x8x16xf32>
    %876 = arith.subf %872, %875 : vector<1x8x16xf32>
    %877 = math.exp %876 : vector<1x8x16xf32>
    %cst_298 = arith.constant dense<0.000000e+00> : vector<1x8xf32>
    %878 = vector.multi_reduction <add>, %877, %cst_298 [2] : vector<1x8x16xf32> to vector<1x8xf32>
    %879 = vector.shape_cast %878 : vector<1x8xf32> to vector<1x8x1xf32>
    %880 = tpu.reciprocal %879 {approx = true} : vector<1x8x1xf32> -> vector<1x8x1xf32>
    %881 = vector.broadcast %880 : vector<1x8x1xf32> to vector<1x8x16xf32>
    %882 = arith.mulf %877, %881 : vector<1x8x16xf32>
    %883 = vector.extract_strided_slice %847 {offsets = [0, 0, 8], sizes = [1, 16, 8], strides = [1, 1, 1]} : vector<1x16x32xf32> to vector<1x16x8xf32>
    "tpu.trace_start"() <{level = 10 : i32, message = "bqk,bkd->bqd"}> : () -> ()
    %cst_299 = arith.constant dense<0.000000e+00> : vector<1x8x8xf32>
    %884 = tpu.matmul %882, %883, %cst_299 {dimension_numbers = #tpu.dot_dimension_numbers<[2], [1], [1], [2], [0, 0, 0, 1, 1, 2], [0], [0]>} : vector<1x8x16xf32>, vector<1x16x8xf32>, vector<1x8x8xf32> -> vector<1x8x8xf32>
    "tpu.trace_stop"() : () -> ()
    %885 = vector.shape_cast %884 : vector<1x8x8xf32> to vector<8x8xf32>
    %886 = vector.extract_strided_slice %828 {offsets = [8, 0], sizes = [8, 32], strides = [1, 1]} : vector<32x32xf32> to vector<8x32xf32>
    %cst_300 = arith.constant dense<0.000000e+00> : vector<8x32xf32>
    %887 = tpu.matmul %885, %886, %cst_300 {dimension_numbers = #tpu.dot_dimension_numbers<[1], [0], [0], [1], [0, 0, 1, 1], [], []>} : vector<8x8xf32>, vector<8x32xf32>, vector<8x32xf32> -> vector<8x32xf32>
    %888 = arith.addf %867, %887 : vector<8x32xf32>
    %889 = vector.extract_strided_slice %845 {offsets = [0, 0, 16], sizes = [1, 8, 8], strides = [1, 1, 1]} : vector<1x8x32xf32> to vector<1x8x8xf32>
    %890 = vector.extract_strided_slice %846 {offsets = [0, 0, 16], sizes = [1, 16, 8], strides = [1, 1, 1]} : vector<1x16x32xf32> to vector<1x16x8xf32>
    "tpu.trace_start"() <{level = 10 : i32, message = "bqd,bkd->bqk"}> : () -> ()
    %cst_301 = arith.constant dense<0.000000e+00> : vector<1x8x16xf32>
    %891 = tpu.matmul %889, %890, %cst_301 {dimension_numbers = #tpu.dot_dimension_numbers<[2], [2], [1], [1], [0, 0, 0, 1, 1, 1], [0], [0]>} : vector<1x8x8xf32>, vector<1x16x8xf32>, vector<1x8x16xf32> -> vector<1x8x16xf32>
    "tpu.trace_stop"() : () -> ()
    %892 = vector.broadcast %0 : vector<1x1x16xf32> to vector<1x8x16xf32>
    %893 = arith.addf %891, %892 : vector<1x8x16xf32>
    %cst_302 = arith.constant dense<0xFF800000> : vector<1x8xf32>
    %894 = vector.multi_reduction <maximumf>, %893, %cst_302 [2] : vector<1x8x16xf32> to vector<1x8xf32>
    %895 = vector.shape_cast %894 : vector<1x8xf32> to vector<1x8x1xf32>
    %896 = vector.broadcast %895 : vector<1x8x1xf32> to vector<1x8x16xf32>
    %897 = arith.subf %893, %896 : vector<1x8x16xf32>
    %898 = math.exp %897 : vector<1x8x16xf32>
    %cst_303 = arith.constant dense<0.000000e+00> : vector<1x8xf32>
    %899 = vector.multi_reduction <add>, %898, %cst_303 [2] : vector<1x8x16xf32> to vector<1x8xf32>
    %900 = vector.shape_cast %899 : vector<1x8xf32> to vector<1x8x1xf32>
    %901 = tpu.reciprocal %900 {approx = true} : vector<1x8x1xf32> -> vector<1x8x1xf32>
    %902 = vector.broadcast %901 : vector<1x8x1xf32> to vector<1x8x16xf32>
    %903 = arith.mulf %898, %902 : vector<1x8x16xf32>
    %904 = vector.extract_strided_slice %847 {offsets = [0, 0, 16], sizes = [1, 16, 8], strides = [1, 1, 1]} : vector<1x16x32xf32> to vector<1x16x8xf32>
    "tpu.trace_start"() <{level = 10 : i32, message = "bqk,bkd->bqd"}> : () -> ()
    %cst_304 = arith.constant dense<0.000000e+00> : vector<1x8x8xf32>
    %905 = tpu.matmul %903, %904, %cst_304 {dimension_numbers = #tpu.dot_dimension_numbers<[2], [1], [1], [2], [0, 0, 0, 1, 1, 2], [0], [0]>} : vector<1x8x16xf32>, vector<1x16x8xf32>, vector<1x8x8xf32> -> vector<1x8x8xf32>
    "tpu.trace_stop"() : () -> ()
    %906 = vector.shape_cast %905 : vector<1x8x8xf32> to vector<8x8xf32>
    %907 = vector.extract_strided_slice %828 {offsets = [16, 0], sizes = [8, 32], strides = [1, 1]} : vector<32x32xf32> to vector<8x32xf32>
    %cst_305 = arith.constant dense<0.000000e+00> : vector<8x32xf32>
    %908 = tpu.matmul %906, %907, %cst_305 {dimension_numbers = #tpu.dot_dimension_numbers<[1], [0], [0], [1], [0, 0, 1, 1], [], []>} : vector<8x8xf32>, vector<8x32xf32>, vector<8x32xf32> -> vector<8x32xf32>
    %909 = arith.addf %888, %908 : vector<8x32xf32>
    %910 = vector.extract_strided_slice %845 {offsets = [0, 0, 24], sizes = [1, 8, 8], strides = [1, 1, 1]} : vector<1x8x32xf32> to vector<1x8x8xf32>
    %911 = vector.extract_strided_slice %846 {offsets = [0, 0, 24], sizes = [1, 16, 8], strides = [1, 1, 1]} : vector<1x16x32xf32> to vector<1x16x8xf32>
    "tpu.trace_start"() <{level = 10 : i32, message = "bqd,bkd->bqk"}> : () -> ()
    %cst_306 = arith.constant dense<0.000000e+00> : vector<1x8x16xf32>
    %912 = tpu.matmul %910, %911, %cst_306 {dimension_numbers = #tpu.dot_dimension_numbers<[2], [2], [1], [1], [0, 0, 0, 1, 1, 1], [0], [0]>} : vector<1x8x8xf32>, vector<1x16x8xf32>, vector<1x8x16xf32> -> vector<1x8x16xf32>
    "tpu.trace_stop"() : () -> ()
    %913 = vector.broadcast %0 : vector<1x1x16xf32> to vector<1x8x16xf32>
    %914 = arith.addf %912, %913 : vector<1x8x16xf32>
    %cst_307 = arith.constant dense<0xFF800000> : vector<1x8xf32>
    %915 = vector.multi_reduction <maximumf>, %914, %cst_307 [2] : vector<1x8x16xf32> to vector<1x8xf32>
    %916 = vector.shape_cast %915 : vector<1x8xf32> to vector<1x8x1xf32>
    %917 = vector.broadcast %916 : vector<1x8x1xf32> to vector<1x8x16xf32>
    %918 = arith.subf %914, %917 : vector<1x8x16xf32>
    %919 = math.exp %918 : vector<1x8x16xf32>
    %cst_308 = arith.constant dense<0.000000e+00> : vector<1x8xf32>
    %920 = vector.multi_reduction <add>, %919, %cst_308 [2] : vector<1x8x16xf32> to vector<1x8xf32>
    %921 = vector.shape_cast %920 : vector<1x8xf32> to vector<1x8x1xf32>
    %922 = tpu.reciprocal %921 {approx = true} : vector<1x8x1xf32> -> vector<1x8x1xf32>
    %923 = vector.broadcast %922 : vector<1x8x1xf32> to vector<1x8x16xf32>
    %924 = arith.mulf %919, %923 : vector<1x8x16xf32>
    %925 = vector.extract_strided_slice %847 {offsets = [0, 0, 24], sizes = [1, 16, 8], strides = [1, 1, 1]} : vector<1x16x32xf32> to vector<1x16x8xf32>
    "tpu.trace_start"() <{level = 10 : i32, message = "bqk,bkd->bqd"}> : () -> ()
    %cst_309 = arith.constant dense<0.000000e+00> : vector<1x8x8xf32>
    %926 = tpu.matmul %924, %925, %cst_309 {dimension_numbers = #tpu.dot_dimension_numbers<[2], [1], [1], [2], [0, 0, 0, 1, 1, 2], [0], [0]>} : vector<1x8x16xf32>, vector<1x16x8xf32>, vector<1x8x8xf32> -> vector<1x8x8xf32>
    "tpu.trace_stop"() : () -> ()
    %927 = vector.shape_cast %926 : vector<1x8x8xf32> to vector<8x8xf32>
    %928 = vector.extract_strided_slice %828 {offsets = [24, 0], sizes = [8, 32], strides = [1, 1]} : vector<32x32xf32> to vector<8x32xf32>
    %cst_310 = arith.constant dense<0.000000e+00> : vector<8x32xf32>
    %929 = tpu.matmul %927, %928, %cst_310 {dimension_numbers = #tpu.dot_dimension_numbers<[1], [0], [0], [1], [0, 0, 1, 1], [], []>} : vector<8x8xf32>, vector<8x32xf32>, vector<8x32xf32> -> vector<8x32xf32>
    %930 = arith.addf %909, %929 : vector<8x32xf32>
    %931 = vector.broadcast %829 : vector<1x32xf32> to vector<8x32xf32>
    %932 = arith.addf %930, %931 : vector<8x32xf32>
    %933 = arith.addf %820, %932 : vector<8x32xf32>
    %934 = vector.extract_strided_slice %695 {offsets = [5, 0], sizes = [1, 32], strides = [1, 1]} : vector<9x32xf32> to vector<1x32xf32>
    %935 = vector.extract_strided_slice %695 {offsets = [6, 0], sizes = [1, 32], strides = [1, 1]} : vector<9x32xf32> to vector<1x32xf32>
    %cst_311 = arith.constant dense<0.000000e+00> : vector<8xf32>
    %936 = vector.multi_reduction <add>, %933, %cst_311 [1] : vector<8x32xf32> to vector<8xf32>
    %937 = vector.shape_cast %936 : vector<8xf32> to vector<8x1xf32>
    %cst_312 = arith.constant 3.200000e+01 : f32
    %938 = vector.broadcast %cst_312 : f32 to vector<8x1xf32>
    %939 = arith.divf %937, %938 : vector<8x1xf32>
    %940 = vector.broadcast %939 : vector<8x1xf32> to vector<8x32xf32>
    %941 = arith.subf %933, %940 : vector<8x32xf32>
    %942 = arith.mulf %941, %941 : vector<8x32xf32>
    %cst_313 = arith.constant dense<0.000000e+00> : vector<8xf32>
    %943 = vector.multi_reduction <add>, %942, %cst_313 [1] : vector<8x32xf32> to vector<8xf32>
    %944 = vector.shape_cast %943 : vector<8xf32> to vector<8x1xf32>
    %cst_314 = arith.constant 3.200000e+01 : f32
    %945 = vector.broadcast %cst_314 : f32 to vector<8x1xf32>
    %946 = arith.divf %944, %945 : vector<8x1xf32>
    %947 = vector.broadcast %939 : vector<8x1xf32> to vector<8x32xf32>
    %948 = arith.subf %933, %947 : vector<8x32xf32>
    %cst_315 = arith.constant 9.99999974E-6 : f32
    %949 = vector.broadcast %cst_315 : f32 to vector<8x1xf32>
    %950 = arith.addf %946, %949 : vector<8x1xf32>
    %951 = math.rsqrt %950 : vector<8x1xf32>
    %952 = vector.broadcast %951 : vector<8x1xf32> to vector<8x32xf32>
    %953 = arith.mulf %948, %952 : vector<8x32xf32>
    %954 = vector.broadcast %934 : vector<1x32xf32> to vector<8x32xf32>
    %955 = arith.mulf %953, %954 : vector<8x32xf32>
    %956 = vector.broadcast %935 : vector<1x32xf32> to vector<8x32xf32>
    %957 = arith.addf %955, %956 : vector<8x32xf32>
    %c1_316 = arith.constant 1 : index
    %c0_317 = arith.constant 0 : index
    %c0_318 = arith.constant 0 : index
    %958 = vector.load %arg15[%c1_316, %c0_317, %c0_318] : memref<2x32x64xf32, #tpu.memory_space<vmem>>, vector<1x32x64xf32>
    %959 = vector.shape_cast %958 : vector<1x32x64xf32> to vector<32x64xf32>
    %cst_319 = arith.constant dense<0.000000e+00> : vector<8x64xf32>
    %960 = tpu.matmul %957, %959, %cst_319 {dimension_numbers = #tpu.dot_dimension_numbers<[1], [0], [0], [1], [0, 0, 1, 1], [], []>} : vector<8x32xf32>, vector<32x64xf32>, vector<8x64xf32> -> vector<8x64xf32>
    %c1_320 = arith.constant 1 : index
    %c0_321 = arith.constant 0 : index
    %c0_322 = arith.constant 0 : index
    %961 = vector.load %arg16[%c1_320, %c0_321, %c0_322] : memref<2x1x64xf32, #tpu.memory_space<vmem>>, vector<1x1x64xf32>
    %962 = vector.shape_cast %961 : vector<1x1x64xf32> to vector<1x64xf32>
    %963 = vector.broadcast %962 : vector<1x64xf32> to vector<8x64xf32>
    %964 = arith.addf %960, %963 : vector<8x64xf32>
    %cst_323 = arith.constant 0.000000e+00 : f32
    %965 = vector.broadcast %cst_323 : f32 to vector<8x64xf32>
    %966 = arith.maximumf %964, %965 : vector<8x64xf32>
    %c1_324 = arith.constant 1 : index
    %c0_325 = arith.constant 0 : index
    %c0_326 = arith.constant 0 : index
    %967 = vector.load %arg17[%c1_324, %c0_325, %c0_326] : memref<2x64x32xf32, #tpu.memory_space<vmem>>, vector<1x64x32xf32>
    %968 = vector.shape_cast %967 : vector<1x64x32xf32> to vector<64x32xf32>
    %cst_327 = arith.constant dense<0.000000e+00> : vector<8x32xf32>
    %969 = tpu.matmul %966, %968, %cst_327 {dimension_numbers = #tpu.dot_dimension_numbers<[1], [0], [0], [1], [0, 0, 1, 1], [], []>} : vector<8x64xf32>, vector<64x32xf32>, vector<8x32xf32> -> vector<8x32xf32>
    %970 = vector.extract_strided_slice %695 {offsets = [2, 0], sizes = [1, 32], strides = [1, 1]} : vector<9x32xf32> to vector<1x32xf32>
    %971 = vector.broadcast %970 : vector<1x32xf32> to vector<8x32xf32>
    %972 = arith.addf %969, %971 : vector<8x32xf32>
    %973 = arith.addf %957, %972 : vector<8x32xf32>
    %974 = vector.extract_strided_slice %695 {offsets = [7, 0], sizes = [1, 32], strides = [1, 1]} : vector<9x32xf32> to vector<1x32xf32>
    %975 = vector.extract_strided_slice %695 {offsets = [8, 0], sizes = [1, 32], strides = [1, 1]} : vector<9x32xf32> to vector<1x32xf32>
    %cst_328 = arith.constant dense<0.000000e+00> : vector<8xf32>
    %976 = vector.multi_reduction <add>, %973, %cst_328 [1] : vector<8x32xf32> to vector<8xf32>
    %977 = vector.shape_cast %976 : vector<8xf32> to vector<8x1xf32>
    %cst_329 = arith.constant 3.200000e+01 : f32
    %978 = vector.broadcast %cst_329 : f32 to vector<8x1xf32>
    %979 = arith.divf %977, %978 : vector<8x1xf32>
    %980 = vector.broadcast %979 : vector<8x1xf32> to vector<8x32xf32>
    %981 = arith.subf %973, %980 : vector<8x32xf32>
    %982 = arith.mulf %981, %981 : vector<8x32xf32>
    %cst_330 = arith.constant dense<0.000000e+00> : vector<8xf32>
    %983 = vector.multi_reduction <add>, %982, %cst_330 [1] : vector<8x32xf32> to vector<8xf32>
    %984 = vector.shape_cast %983 : vector<8xf32> to vector<8x1xf32>
    %cst_331 = arith.constant 3.200000e+01 : f32
    %985 = vector.broadcast %cst_331 : f32 to vector<8x1xf32>
    %986 = arith.divf %984, %985 : vector<8x1xf32>
    %987 = vector.broadcast %979 : vector<8x1xf32> to vector<8x32xf32>
    %988 = arith.subf %973, %987 : vector<8x32xf32>
    %cst_332 = arith.constant 9.99999974E-6 : f32
    %989 = vector.broadcast %cst_332 : f32 to vector<8x1xf32>
    %990 = arith.addf %986, %989 : vector<8x1xf32>
    %991 = math.rsqrt %990 : vector<8x1xf32>
    %992 = vector.broadcast %991 : vector<8x1xf32> to vector<8x32xf32>
    %993 = arith.mulf %988, %992 : vector<8x32xf32>
    %994 = vector.broadcast %974 : vector<1x32xf32> to vector<8x32xf32>
    %995 = arith.mulf %993, %994 : vector<8x32xf32>
    %996 = vector.broadcast %975 : vector<1x32xf32> to vector<8x32xf32>
    %997 = arith.addf %995, %996 : vector<8x32xf32>
    %998 = vector.extract_strided_slice %360 {offsets = [0, 0], sizes = [1, 32], strides = [1, 1]} : vector<2x32xf32> to vector<1x32xf32>
    %999 = vector.extract_strided_slice %360 {offsets = [1, 0], sizes = [1, 32], strides = [1, 1]} : vector<2x32xf32> to vector<1x32xf32>
    %cst_333 = arith.constant dense<0.000000e+00> : vector<8xf32>
    %1000 = vector.multi_reduction <add>, %997, %cst_333 [1] : vector<8x32xf32> to vector<8xf32>
    %1001 = vector.shape_cast %1000 : vector<8xf32> to vector<8x1xf32>
    %cst_334 = arith.constant 3.200000e+01 : f32
    %1002 = vector.broadcast %cst_334 : f32 to vector<8x1xf32>
    %1003 = arith.divf %1001, %1002 : vector<8x1xf32>
    %1004 = vector.broadcast %1003 : vector<8x1xf32> to vector<8x32xf32>
    %1005 = arith.subf %997, %1004 : vector<8x32xf32>
    %1006 = arith.mulf %1005, %1005 : vector<8x32xf32>
    %cst_335 = arith.constant dense<0.000000e+00> : vector<8xf32>
    %1007 = vector.multi_reduction <add>, %1006, %cst_335 [1] : vector<8x32xf32> to vector<8xf32>
    %1008 = vector.shape_cast %1007 : vector<8xf32> to vector<8x1xf32>
    %cst_336 = arith.constant 3.200000e+01 : f32
    %1009 = vector.broadcast %cst_336 : f32 to vector<8x1xf32>
    %1010 = arith.divf %1008, %1009 : vector<8x1xf32>
    %1011 = vector.broadcast %1003 : vector<8x1xf32> to vector<8x32xf32>
    %1012 = arith.subf %997, %1011 : vector<8x32xf32>
    %cst_337 = arith.constant 9.99999974E-6 : f32
    %1013 = vector.broadcast %cst_337 : f32 to vector<8x1xf32>
    %1014 = arith.addf %1010, %1013 : vector<8x1xf32>
    %1015 = math.rsqrt %1014 : vector<8x1xf32>
    %1016 = vector.broadcast %1015 : vector<8x1xf32> to vector<8x32xf32>
    %1017 = arith.mulf %1012, %1016 : vector<8x32xf32>
    %1018 = vector.broadcast %998 : vector<1x32xf32> to vector<8x32xf32>
    %1019 = arith.mulf %1017, %1018 : vector<8x32xf32>
    %1020 = vector.broadcast %999 : vector<1x32xf32> to vector<8x32xf32>
    %1021 = arith.addf %1019, %1020 : vector<8x32xf32>
    %1022 = vector.shape_cast %1021 : vector<8x32xf32> to vector<1x8x32xf32>
    %c1_338 = arith.constant 1 : index
    %c0_339 = arith.constant 0 : index
    %c0_340 = arith.constant 0 : index
    %c0_341 = arith.constant 0 : index
    %1023 = vector.load %arg20[%c1_338, %c0_339, %c0_340, %c0_341] : memref<2x1x8x32xf32, #tpu.memory_space<vmem>>, vector<1x1x8x32xf32>
    %1024 = vector.shape_cast %1023 : vector<1x1x8x32xf32> to vector<1x8x32xf32>
    %1025 = vector.shape_cast %1022 : vector<1x8x32xf32> to vector<1x1x8x32xf32>
    tpu.vector_store %arg20[%c1_338, %c0_339, %c0_340, %c0_341], %1025 {strides = array<i32>} : memref<2x1x8x32xf32, #tpu.memory_space<vmem>>, vector<1x1x8x32xf32>,
    return
  }
  func.func @transform_0(%arg0: i32) -> (i32, i32, i32) {
    %c0_i32 = arith.constant 0 : i32
    %c0_i32_0 = arith.constant 0 : i32
    %c0_i32_1 = arith.constant 0 : i32
    return %arg0, %c0_i32, %c0_i32_0 : i32, i32, i32
  }
  func.func @transform_1(%arg0: i32) -> (i32, i32, i32) {
    %c0_i32 = arith.constant 0 : i32
    %c0_i32_0 = arith.constant 0 : i32
    %c0_i32_1 = arith.constant 0 : i32
    return %arg0, %c0_i32, %c0_i32_0 : i32, i32, i32
  }
  func.func @transform_2(%arg0: i32) -> (i32, i32) {
    %c0_i32 = arith.constant 0 : i32
    %c0_i32_0 = arith.constant 0 : i32
    %c0_i32_1 = arith.constant 0 : i32
    return %c0_i32, %c0_i32_0 : i32, i32
  }
  func.func @transform_3(%arg0: i32) -> (i32, i32, i32) {
    %c0_i32 = arith.constant 0 : i32
    %c0_i32_0 = arith.constant 0 : i32
    %c0_i32_1 = arith.constant 0 : i32
    return %arg0, %c0_i32, %c0_i32_0 : i32, i32, i32
  }
  func.func @transform_4(%arg0: i32) -> (i32, i32, i32) {
    %c0_i32 = arith.constant 0 : i32
    %c0_i32_0 = arith.constant 0 : i32
    %c0_i32_1 = arith.constant 0 : i32
    %c0_i32_2 = arith.constant 0 : i32
    return %c0_i32, %c0_i32_0, %c0_i32_1 : i32, i32, i32
  }
  func.func @transform_5(%arg0: i32) -> (i32, i32, i32) {
    %c0_i32 = arith.constant 0 : i32
    %c0_i32_0 = arith.constant 0 : i32
    %c0_i32_1 = arith.constant 0 : i32
    %c0_i32_2 = arith.constant 0 : i32
    return %c0_i32, %c0_i32_0, %c0_i32_1 : i32, i32, i32
  }
  func.func @transform_6(%arg0: i32) -> (i32, i32, i32) {
    %c0_i32 = arith.constant 0 : i32
    %c0_i32_0 = arith.constant 0 : i32
    %c0_i32_1 = arith.constant 0 : i32
    %c0_i32_2 = arith.constant 0 : i32
    return %c0_i32, %c0_i32_0, %c0_i32_1 : i32, i32, i32
  }
  func.func @transform_7(%arg0: i32) -> (i32, i32, i32) {
    %c0_i32 = arith.constant 0 : i32
    %c0_i32_0 = arith.constant 0 : i32
    %c0_i32_1 = arith.constant 0 : i32
    %c0_i32_2 = arith.constant 0 : i32
    return %c0_i32, %c0_i32_0, %c0_i32_1 : i32, i32, i32
  }
  func.func @transform_8(%arg0: i32) -> (i32, i32, i32) {
    %c0_i32 = arith.constant 0 : i32
    %c0_i32_0 = arith.constant 0 : i32
    %c0_i32_1 = arith.constant 0 : i32
    %c0_i32_2 = arith.constant 0 : i32
    return %c0_i32, %c0_i32_0, %c0_i32_1 : i32, i32, i32
  }
  func.func @transform_9(%arg0: i32) -> (i32, i32, i32) {
    %c0_i32 = arith.constant 0 : i32
    %c0_i32_0 = arith.constant 0 : i32
    %c0_i32_1 = arith.constant 0 : i32
    %c0_i32_2 = arith.constant 0 : i32
    return %c0_i32, %c0_i32_0, %c0_i32_1 : i32, i32, i32
  }
  func.func @transform_10(%arg0: i32) -> (i32, i32, i32) {
    %c0_i32 = arith.constant 0 : i32
    %c0_i32_0 = arith.constant 0 : i32
    %c0_i32_1 = arith.constant 0 : i32
    %c0_i32_2 = arith.constant 0 : i32
    return %c0_i32, %c0_i32_0, %c0_i32_1 : i32, i32, i32
  }
  func.func @transform_11(%arg0: i32) -> (i32, i32, i32, i32) {
    %c0_i32 = arith.constant 0 : i32
    %c0_i32_0 = arith.constant 0 : i32
    %c0_i32_1 = arith.constant 0 : i32
    %c0_i32_2 = arith.constant 0 : i32
    %c0_i32_3 = arith.constant 0 : i32
    return %c0_i32, %c0_i32_0, %c0_i32_1, %c0_i32_2 : i32, i32, i32, i32
  }
  func.func @transform_12(%arg0: i32) -> (i32, i32, i32, i32) {
    %c0_i32 = arith.constant 0 : i32
    %c0_i32_0 = arith.constant 0 : i32
    %c0_i32_1 = arith.constant 0 : i32
    %c0_i32_2 = arith.constant 0 : i32
    %c0_i32_3 = arith.constant 0 : i32
    return %c0_i32, %c0_i32_0, %c0_i32_1, %c0_i32_2 : i32, i32, i32, i32
  }
  func.func @transform_13(%arg0: i32) -> (i32, i32, i32, i32) {
    %c0_i32 = arith.constant 0 : i32
    %c0_i32_0 = arith.constant 0 : i32
    %c0_i32_1 = arith.constant 0 : i32
    %c0_i32_2 = arith.constant 0 : i32
    %c0_i32_3 = arith.constant 0 : i32
    return %c0_i32, %c0_i32_0, %c0_i32_1, %c0_i32_2 : i32, i32, i32, i32
  }
  func.func @transform_14(%arg0: i32) -> (i32, i32, i32) {
    %c0_i32 = arith.constant 0 : i32
    %c0_i32_0 = arith.constant 0 : i32
    %c0_i32_1 = arith.constant 0 : i32
    %c0_i32_2 = arith.constant 0 : i32
    return %c0_i32, %c0_i32_0, %c0_i32_1 : i32, i32, i32
  }
  func.func @transform_15(%arg0: i32) -> (i32, i32, i32) {
    %c0_i32 = arith.constant 0 : i32
    %c0_i32_0 = arith.constant 0 : i32
    %c0_i32_1 = arith.constant 0 : i32
    %c0_i32_2 = arith.constant 0 : i32
    return %c0_i32, %c0_i32_0, %c0_i32_1 : i32, i32, i32
  }
  func.func @transform_16(%arg0: i32) -> (i32, i32, i32) {
    %c0_i32 = arith.constant 0 : i32
    %c0_i32_0 = arith.constant 0 : i32
    %c0_i32_1 = arith.constant 0 : i32
    %c0_i32_2 = arith.constant 0 : i32
    return %c0_i32, %c0_i32_0, %c0_i32_1 : i32, i32, i32
  }
  func.func @transform_17(%arg0: i32) -> (i32, i32, i32) {
    %c0_i32 = arith.constant 0 : i32
    %c0_i32_0 = arith.constant 0 : i32
    %c0_i32_1 = arith.constant 0 : i32
    %c0_i32_2 = arith.constant 0 : i32
    return %c0_i32, %c0_i32_0, %c0_i32_1 : i32, i32, i32
  }
  func.func @transform_18(%arg0: i32) -> (i32, i32) {
    %c0_i32 = arith.constant 0 : i32
    %c0_i32_0 = arith.constant 0 : i32
    %c0_i32_1 = arith.constant 0 : i32
    return %c0_i32, %c0_i32_0 : i32, i32
  }
  func.func @transform_19(%arg0: i32) -> (i32, i32, i32, i32) {
    %c0_i32 = arith.constant 0 : i32
    %c0_i32_0 = arith.constant 0 : i32
    %c0_i32_1 = arith.constant 0 : i32
    %c0_i32_2 = arith.constant 0 : i32
    return %c0_i32, %arg0, %c0_i32_0, %c0_i32_1 : i32, i32, i32, i32
  }
  func.func @transform_20(%arg0: i32) -> (i32, i32, i32) {
    %c0_i32 = arith.constant 0 : i32
    %c0_i32_0 = arith.constant 0 : i32
    %c0_i32_1 = arith.constant 0 : i32
    return %arg0, %c0_i32, %c0_i32_0 : i32, i32, i32
  }
}

</mosaic_0001>

<llo_original>
// kernel: tpu_custom_call.1
$region0: #{tpu_custom_call.1}
  #allocation0 [shape = 'u32[]', space=smem, size = 0x4, offset = 0x4, fixed_abs, tag = 'smem constant byte address 0x4 - core index']
  #allocation1 [shape = 'u32[72,128]{1,0:T(1,128)}', space=vmem, size = 0x9000, scoped, tag = 'internal scratch']
  %s0 = inlined_call_operand.hbm [shape: f32[2,16,32], index: 0, kind: input, shape index: {}]
  %s1 = inlined_call_operand.hbm [shape: f32[2,16,32], index: 1, kind: input, shape index: {}]
  %s2 = inlined_call_operand.hbm [shape: f32[8,32], index: 2, kind: input, shape index: {}]
  %s3 = inlined_call_operand.hbm [shape: f32[2,1,16], index: 3, kind: input, shape index: {}]
  %s4 = inlined_call_operand.vmem [shape: f32[2,32,96], index: 4, kind: input, shape index: {}]
  %s5 = inlined_call_operand.hbm [shape: f32[2,1,96], index: 5, kind: input, shape index: {}]
  %s6 = inlined_call_operand.hbm [shape: f32[2,32,32], index: 6, kind: input, shape index: {}]
  %s7 = inlined_call_operand.hbm [shape: f32[2,32,64], index: 7, kind: input, shape index: {}]
  %s8 = inlined_call_operand.hbm [shape: f32[2,1,64], index: 8, kind: input, shape index: {}]
  %s9 = inlined_call_operand.vmem [shape: f32[2,64,32], index: 9, kind: input, shape index: {}]
  %s10 = inlined_call_operand.vmem [shape: f32[2,6,32], index: 10, kind: input, shape index: {}]
  %s11 = inlined_call_operand.vmem [shape: f32[2,2,32,96], index: 11, kind: input, shape index: {}]
  %s12 = inlined_call_operand.vmem [shape: f32[2,2,1,96], index: 12, kind: input, shape index: {}]
  %s13 = inlined_call_operand.vmem [shape: f32[2,2,32,32], index: 13, kind: input, shape index: {}]
  %s14 = inlined_call_operand.hbm [shape: f32[2,32,64], index: 14, kind: input, shape index: {}]
  %s15 = inlined_call_operand.vmem [shape: f32[2,1,64], index: 15, kind: input, shape index: {}]
  %s16 = inlined_call_operand.vmem [shape: f32[2,64,32], index: 16, kind: input, shape index: {}]
  %s17 = inlined_call_operand.vmem [shape: f32[2,9,32], index: 17, kind: input, shape index: {}]
  %s18 = inlined_call_operand.vmem [shape: f32[2,32], index: 18, kind: input, shape index: {}]
  %s19 = inlined_call_operand.hbm [shape: f32[2,2,8,32], index: 19, kind: output, shape index: {0}]
  %s20 = inlined_call_operand.hbm [shape: f32[2,16,32], index: 20, kind: output, shape index: {1}]
  %21 = xla_tuple %s19, %s20
  %s22 = sld [smem:[#allocation0]]
  $region153: #{tpu_custom_call.1} parent=0
    _
  %s24 = ssub.s32 1, %s22
  %s25 = scalar_select 0, %s24, %s22
  $region1: #{tpu_custom_call.1} parent=0
    #allocation2 [shape = 'u8[16384]{0}', space=vmem, size = 0x4000, scoped, tag = 'input window, operand 0']
    #allocation3 [shape = 's32[2]{0}', space=sflag, size = 0x8, scoped, tag = 'scoped memory for tpu_custom_call.1']
    #allocation4 [shape = 's32[2]{0}', space=sflag, size = 0x8, scoped, tag = 'scoped memory for tpu_custom_call.1']
    #allocation5 [shape = 'u8[16384]{0}', space=vmem, size = 0x4000, scoped, tag = 'input window, operand 1']
    #allocation6 [shape = 's32[2]{0}', space=sflag, size = 0x8, scoped, tag = 'scoped memory for tpu_custom_call.1']
    #allocation7 [shape = 'u8[4096]{0}', space=vmem, size = 0x1000, scoped, tag = 'input window, operand 2, single buffered']
    #allocation8 [shape = 'u8[1024]{0}', space=vmem, size = 0x400, scoped, tag = 'input window, operand 3']
    #allocation9 [shape = 's32[2]{0}', space=sflag, size = 0x8, scoped, tag = 'scoped memory for tpu_custom_call.1']
    #allocation10 [shape = 'u8[1024]{0}', space=vmem, size = 0x400, scoped, tag = 'input window, operand 5, single buffered']
    #allocation11 [shape = 'u8[32768]{0}', space=vmem, size = 0x8000, scoped, tag = 'input window, operand 6, single buffered']
    #allocation12 [shape = 's32[1]{0}', space=sflag, size = 0x4, scoped, tag = 'scoped memory for tpu_custom_call.1']
    #allocation13 [shape = 'u8[32768]{0}', space=vmem, size = 0x8000, scoped, tag = 'input window, operand 7, single buffered']
    #allocation14 [shape = 'u8[1024]{0}', space=vmem, size = 0x400, scoped, tag = 'input window, operand 8, single buffered']
    #allocation15 [shape = 's32[1]{0}', space=sflag, size = 0x4, scoped, tag = 'scoped memory for tpu_custom_call.1']
    #allocation16 [shape = 'u8[32768]{0}', space=vmem, size = 0x8000, scoped, tag = 'input window, operand 14, single buffered']
    #allocation17 [shape = 'u8[16384]{0}', space=vmem, size = 0x4000, scoped, tag = 'output window, operand 0']
    #allocation18 [shape = 'u8[16384]{0}', space=vmem, size = 0x4000, scoped, tag = 'output window, operand 1']
    #allocation19 [shape = 's32[2]{0}', space=sflag, size = 0x8, scoped, tag = 'scoped memory for tpu_custom_call.1']
    %26 = vsyncpa [#allocation3], 0
    %s27 = scalar_lea.sflag [#allocation3], 1
    %28 = vsyncpa %s27, 0
    %29 = vsyncpa [#allocation6], 0
    %s30 = scalar_lea.sflag [#allocation6], 1
    %31 = vsyncpa %s30, 0
    %32 = vsyncpa [#allocation9], 0
    %s33 = scalar_lea.sflag [#allocation9], 1
    %34 = vsyncpa %s33, 0
    %35 = vsyncpa [#allocation12], 0
    %36 = vsyncpa [#allocation15], 0
    %37 = vsyncpa [#allocation4], 0
    %s38 = scalar_lea.sflag [#allocation4], 1
    %39 = vsyncpa %s38, 0
    %40 = vsyncpa [#allocation19], 0
    %s41 = scalar_lea.sflag [#allocation19], 1
    %42 = vsyncpa %s41, 0
    loop: start=0, step=1, limit=4
    $region2: #{tpu_custom_call.1} parent=1 // loop_pre_header
      _
    $region3: #{tpu_custom_call.1} parent=1 // loop_header
      %s44 = sphi 0, %s48
      %p45 = scmp.ge.s32.totalorder %s44, 4
      %s54 = sphi 0, %s56
      %s57 = sphi 0, %s54
      %s58 = sphi 0, %s57
      %s74 = sphi 0, %s58
      %s80 = sphi 0, %s82
      %s83 = sphi 0, %s80
      %s84 = sphi 0, %s83
      %s100 = sphi 0, %s84
      %s104 = sphi 0, %s104
      %s106 = sphi 0, %s104
      %s107 = sphi 0, %s106
      %s121 = sphi 0, %s107
      %s127 = sphi 0, %s129
      %s130 = sphi 0, %s127
      %s131 = sphi 0, %s130
      %s147 = sphi 0, %s131
      %s151 = sphi 0, %s151
      %s153 = sphi 0, %s151
      %s154 = sphi 0, %s153
      %s168 = sphi 0, %s154
      %s172 = sphi 0, %s172
      %s174 = sphi 0, %s172
      %s175 = sphi 0, %s174
      %s189 = sphi 0, %s175
      %s193 = sphi 0, %s193
      %s195 = sphi 0, %s193
      %s196 = sphi 0, %s195
      %s210 = sphi 0, %s196
      %s214 = sphi 0, %s214
      %s216 = sphi 0, %s214
      %s217 = sphi 0, %s216
      %s231 = sphi 0, %s217
      %s235 = sphi 0, %s235
      %s237 = sphi 0, %s235
      %s238 = sphi 0, %s237
      %s252 = sphi 0, %s238
      %s256 = sphi 0, %s256
      %s258 = sphi 0, %s256
      %s259 = sphi 0, %s258
      %s273 = sphi 0, %s259
      %s277 = sphi 0, %s277
      %s279 = sphi 0, %s277
      %s280 = sphi 0, %s279
      %s294 = sphi 0, %s280
      %s298 = sphi 0, %s298
      %s300 = sphi 0, %s298
      %s301 = sphi 0, %s300
      %s315 = sphi 0, %s301
      %s319 = sphi 0, %s319
      %s321 = sphi 0, %s319
      %s322 = sphi 0, %s321
      %s336 = sphi 0, %s322
      %s340 = sphi 0, %s340
      %s342 = sphi 0, %s340
      %s343 = sphi 0, %s342
      %s357 = sphi 0, %s343
      %s361 = sphi 0, %s361
      %s363 = sphi 0, %s361
      %s364 = sphi 0, %s363
      %s378 = sphi 0, %s364
      %s382 = sphi 0, %s382
      %s384 = sphi 0, %s382
      %s385 = sphi 0, %s384
      %s399 = sphi 0, %s385
      %s403 = sphi 0, %s403
      %s405 = sphi 0, %s403
      %s406 = sphi 0, %s405
      %s420 = sphi 0, %s406
      %s424 = sphi 0, %s424
      %s426 = sphi 0, %s424
      %s427 = sphi 0, %s426
      %s441 = sphi 0, %s427
      %s445 = sphi 0, %s445
      %s447 = sphi 0, %s445
      %s448 = sphi 0, %s447
      %s462 = sphi 0, %s448
      %s468 = sphi 0, %s470
      %s471 = sphi 0, %s468
      %s472 = sphi 0, %s471
      %s488 = sphi 0, %s472
      %s494 = sphi 0, %s496
      %s497 = sphi 0, %s494
      %s498 = sphi 0, %s497
      %s514 = sphi 0, %s498
    $region4: #{tpu_custom_call.1} parent=1 // loop_header_branch
      %47 = sbr.rel (%p45) target = $region8
    $region5: #{tpu_custom_call.1} parent=1 // loop_body
      %s49 = ssub.s32 %s44, 1
      %s50 = ssub.s32 %s44, 2
      %s51 = sadd.s32 %s44, 1
      %s52 = ssub.s32 %s44, %s51
      %p53 = scmp.eq.s32.totalorder %s52, 0
      %s55 = sadd.s32 %s54, 1
      %s56 = scalar_select %p53, %s54, %s55
      %p59 = pneg %p53
      %p60 = scmp.eq.s32.totalorder %s44, 1
      %p61 = por %p59, %p60
      %p62 = scmp.ne.s32.totalorder %s54, %s57
      %p63 = scmp.eq.s32.totalorder %s44, 0
      %p64 = por %p62, %p63
      %p65 = scmp.ne.s32.totalorder %s54, %s57
      %p66 = scmp.eq.s32.totalorder %s49, 1
      %p67 = por %p65, %p66
      %p68 = scmp.ne.s32.totalorder %s57, %s58
      %p69 = scmp.eq.s32.totalorder %s49, 0
      %p70 = por %p68, %p69
      %p71 = scmp.ne.s32.totalorder %s57, %s58
      %p72 = scmp.eq.s32.totalorder %s50, 1
      %p73 = por %p71, %p72
      %p75 = scmp.ne.s32.totalorder %s58, %s74
      %p76 = scmp.eq.s32.totalorder %s50, 0
      %p77 = por %p75, %p76
      %s78 = ssub.s32 %s44, %s51
      %p79 = scmp.eq.s32.totalorder %s78, 0
      %s81 = sadd.s32 %s80, 1
      %s82 = scalar_select %p79, %s80, %s81
      %p85 = pneg %p79
      %p86 = scmp.eq.s32.totalorder %s44, 1
      %p87 = por %p85, %p86
      %p88 = scmp.ne.s32.totalorder %s80, %s83
      %p89 = scmp.eq.s32.totalorder %s44, 0
      %p90 = por %p88, %p89
      %p91 = scmp.ne.s32.totalorder %s80, %s83
      %p92 = scmp.eq.s32.totalorder %s49, 1
      %p93 = por %p91, %p92
      %p94 = scmp.ne.s32.totalorder %s83, %s84
      %p95 = scmp.eq.s32.totalorder %s49, 0
      %p96 = por %p94, %p95
      %p97 = scmp.ne.s32.totalorder %s83, %s84
      %p98 = scmp.eq.s32.totalorder %s50, 1
      %p99 = por %p97, %p98
      %p101 = scmp.ne.s32.totalorder %s84, %s100
      %p102 = scmp.eq.s32.totalorder %s50, 0
      %p103 = por %p101, %p102
      %s105 = sadd.s32 %s104, 1
      %p108 = scmp.eq.s32.totalorder %s44, 1
      %p109 = scmp.ne.s32.totalorder %s104, %s106
      %p110 = scmp.eq.s32.totalorder %s44, 0
      %p111 = por %p109, %p110
      %p112 = scmp.ne.s32.totalorder %s104, %s106
      %p113 = scmp.eq.s32.totalorder %s49, 1
      %p114 = por %p112, %p113
      %p115 = scmp.ne.s32.totalorder %s106, %s107
      %p116 = scmp.eq.s32.totalorder %s49, 0
      %p117 = por %p115, %p116
      %p118 = scmp.ne.s32.totalorder %s106, %s107
      %p119 = scmp.eq.s32.totalorder %s50, 1
      %p120 = por %p118, %p119
      %p122 = scmp.ne.s32.totalorder %s107, %s121
      %p123 = scmp.eq.s32.totalorder %s50, 0
      %p124 = por %p122, %p123
      %s125 = ssub.s32 %s44, %s51
      %p126 = scmp.eq.s32.totalorder %s125, 0
      %s128 = sadd.s32 %s127, 1
      %s129 = scalar_select %p126, %s127, %s128
      %p132 = pneg %p126
      %p133 = scmp.eq.s32.totalorder %s44, 1
      %p134 = por %p132, %p133
      %p135 = scmp.ne.s32.totalorder %s127, %s130
      %p136 = scmp.eq.s32.totalorder %s44, 0
      %p137 = por %p135, %p136
      %p138 = scmp.ne.s32.totalorder %s127, %s130
      %p139 = scmp.eq.s32.totalorder %s49, 1
      %p140 = por %p138, %p139
      %p141 = scmp.ne.s32.totalorder %s130, %s131
      %p142 = scmp.eq.s32.totalorder %s49, 0
      %p143 = por %p141, %p142
      %p144 = scmp.ne.s32.totalorder %s130, %s131
      %p145 = scmp.eq.s32.totalorder %s50, 1
      %p146 = por %p144, %p145
      %p148 = scmp.ne.s32.totalorder %s131, %s147
      %p149 = scmp.eq.s32.totalorder %s50, 0
      %p150 = por %p148, %p149
      %s152 = sadd.s32 %s151, 1
      %p155 = scmp.eq.s32.totalorder %s44, 1
      %p156 = scmp.ne.s32.totalorder %s151, %s153
      %p157 = scmp.eq.s32.totalorder %s44, 0
      %p158 = por %p156, %p157
      %p159 = scmp.ne.s32.totalorder %s151, %s153
      %p160 = scmp.eq.s32.totalorder %s49, 1
      %p161 = por %p159, %p160
      %p162 = scmp.ne.s32.totalorder %s153, %s154
      %p163 = scmp.eq.s32.totalorder %s49, 0
      %p164 = por %p162, %p163
      %p165 = scmp.ne.s32.totalorder %s153, %s154
      %p166 = scmp.eq.s32.totalorder %s50, 1
      %p167 = por %p165, %p166
      %p169 = scmp.ne.s32.totalorder %s154, %s168
      %p170 = scmp.eq.s32.totalorder %s50, 0
      %p171 = por %p169, %p170
      %s173 = sadd.s32 %s172, 1
      %p176 = scmp.eq.s32.totalorder %s44, 1
      %p177 = scmp.ne.s32.totalorder %s172, %s174
      %p178 = scmp.eq.s32.totalorder %s44, 0
      %p179 = por %p177, %p178
      %p180 = scmp.ne.s32.totalorder %s172, %s174
      %p181 = scmp.eq.s32.totalorder %s49, 1
      %p182 = por %p180, %p181
      %p183 = scmp.ne.s32.totalorder %s174, %s175
      %p184 = scmp.eq.s32.totalorder %s49, 0
      %p185 = por %p183, %p184
      %p186 = scmp.ne.s32.totalorder %s174, %s175
      %p187 = scmp.eq.s32.totalorder %s50, 1
      %p188 = por %p186, %p187
      %p190 = scmp.ne.s32.totalorder %s175, %s189
      %p191 = scmp.eq.s32.totalorder %s50, 0
      %p192 = por %p190, %p191
      %s194 = sadd.s32 %s193, 1
      %p197 = scmp.eq.s32.totalorder %s44, 1
      %p198 = scmp.ne.s32.totalorder %s193, %s195
      %p199 = scmp.eq.s32.totalorder %s44, 0
      %p200 = por %p198, %p199
      %p201 = scmp.ne.s32.totalorder %s193, %s195
      %p202 = scmp.eq.s32.totalorder %s49, 1
      %p203 = por %p201, %p202
      %p204 = scmp.ne.s32.totalorder %s195, %s196
      %p205 = scmp.eq.s32.totalorder %s49, 0
      %p206 = por %p204, %p205
      %p207 = scmp.ne.s32.totalorder %s195, %s196
      %p208 = scmp.eq.s32.totalorder %s50, 1
      %p209 = por %p207, %p208
      %p211 = scmp.ne.s32.totalorder %s196, %s210
      %p212 = scmp.eq.s32.totalorder %s50, 0
      %p213 = por %p211, %p212
      %s215 = sadd.s32 %s214, 1
      %p218 = scmp.eq.s32.totalorder %s44, 1
      %p219 = scmp.ne.s32.totalorder %s214, %s216
      %p220 = scmp.eq.s32.totalorder %s44, 0
      %p221 = por %p219, %p220
      %p222 = scmp.ne.s32.totalorder %s214, %s216
      %p223 = scmp.eq.s32.totalorder %s49, 1
      %p224 = por %p222, %p223
      %p225 = scmp.ne.s32.totalorder %s216, %s217
      %p226 = scmp.eq.s32.totalorder %s49, 0
      %p227 = por %p225, %p226
      %p228 = scmp.ne.s32.totalorder %s216, %s217
      %p229 = scmp.eq.s32.totalorder %s50, 1
      %p230 = por %p228, %p229
      %p232 = scmp.ne.s32.totalorder %s217, %s231
      %p233 = scmp.eq.s32.totalorder %s50, 0
      %p234 = por %p232, %p233
      %s236 = sadd.s32 %s235, 1
      %p239 = scmp.eq.s32.totalorder %s44, 1
      %p240 = scmp.ne.s32.totalorder %s235, %s237
      %p241 = scmp.eq.s32.totalorder %s44, 0
      %p242 = por %p240, %p241
      %p243 = scmp.ne.s32.totalorder %s235, %s237
      %p244 = scmp.eq.s32.totalorder %s49, 1
      %p245 = por %p243, %p244
      %p246 = scmp.ne.s32.totalorder %s237, %s238
      %p247 = scmp.eq.s32.totalorder %s49, 0
      %p248 = por %p246, %p247
      %p249 = scmp.ne.s32.totalorder %s237, %s238
      %p250 = scmp.eq.s32.totalorder %s50, 1
      %p251 = por %p249, %p250
      %p253 = scmp.ne.s32.totalorder %s238, %s252
      %p254 = scmp.eq.s32.totalorder %s50, 0
      %p255 = por %p253, %p254
      %s257 = sadd.s32 %s256, 1
      %p260 = scmp.eq.s32.totalorder %s44, 1
      %p261 = scmp.ne.s32.totalorder %s256, %s258
      %p262 = scmp.eq.s32.totalorder %s44, 0
      %p263 = por %p261, %p262
      %p264 = scmp.ne.s32.totalorder %s256, %s258
      %p265 = scmp.eq.s32.totalorder %s49, 1
      %p266 = por %p264, %p265
      %p267 = scmp.ne.s32.totalorder %s258, %s259
      %p268 = scmp.eq.s32.totalorder %s49, 0
      %p269 = por %p267, %p268
      %p270 = scmp.ne.s32.totalorder %s258, %s259
      %p271 = scmp.eq.s32.totalorder %s50, 1
      %p272 = por %p270, %p271
      %p274 = scmp.ne.s32.totalorder %s259, %s273
      %p275 = scmp.eq.s32.totalorder %s50, 0
      %p276 = por %p274, %p275
      %s278 = sadd.s32 %s277, 1
      %p281 = scmp.eq.s32.totalorder %s44, 1
      %p282 = scmp.ne.s32.totalorder %s277, %s279
      %p283 = scmp.eq.s32.totalorder %s44, 0
      %p284 = por %p282, %p283
      %p285 = scmp.ne.s32.totalorder %s277, %s279
      %p286 = scmp.eq.s32.totalorder %s49, 1
      %p287 = por %p285, %p286
      %p288 = scmp.ne.s32.totalorder %s279, %s280
      %p289 = scmp.eq.s32.totalorder %s49, 0
      %p290 = por %p288, %p289
      %p291 = scmp.ne.s32.totalorder %s279, %s280
      %p292 = scmp.eq.s32.totalorder %s50, 1
      %p293 = por %p291, %p292
      %p295 = scmp.ne.s32.totalorder %s280, %s294
      %p296 = scmp.eq.s32.totalorder %s50, 0
      %p297 = por %p295, %p296
      %s299 = sadd.s32 %s298, 1
      %p302 = scmp.eq.s32.totalorder %s44, 1
      %p303 = scmp.ne.s32.totalorder %s298, %s300
      %p304 = scmp.eq.s32.totalorder %s44, 0
      %p305 = por %p303, %p304
      %p306 = scmp.ne.s32.totalorder %s298, %s300
      %p307 = scmp.eq.s32.totalorder %s49, 1
      %p308 = por %p306, %p307
      %p309 = scmp.ne.s32.totalorder %s300, %s301
      %p310 = scmp.eq.s32.totalorder %s49, 0
      %p311 = por %p309, %p310
      %p312 = scmp.ne.s32.totalorder %s300, %s301
      %p313 = scmp.eq.s32.totalorder %s50, 1
      %p314 = por %p312, %p313
      %p316 = scmp.ne.s32.totalorder %s301, %s315
      %p317 = scmp.eq.s32.totalorder %s50, 0
      %p318 = por %p316, %p317
      %s320 = sadd.s32 %s319, 1
      %p323 = scmp.eq.s32.totalorder %s44, 1
      %p324 = scmp.ne.s32.totalorder %s319, %s321
      %p325 = scmp.eq.s32.totalorder %s44, 0
      %p326 = por %p324, %p325
      %p327 = scmp.ne.s32.totalorder %s319, %s321
      %p328 = scmp.eq.s32.totalorder %s49, 1
      %p329 = por %p327, %p328
      %p330 = scmp.ne.s32.totalorder %s321, %s322
      %p331 = scmp.eq.s32.totalorder %s49, 0
      %p332 = por %p330, %p331
      %p333 = scmp.ne.s32.totalorder %s321, %s322
      %p334 = scmp.eq.s32.totalorder %s50, 1
      %p335 = por %p333, %p334
      %p337 = scmp.ne.s32.totalorder %s322, %s336
      %p338 = scmp.eq.s32.totalorder %s50, 0
      %p339 = por %p337, %p338
      %s341 = sadd.s32 %s340, 1
      %p344 = scmp.eq.s32.totalorder %s44, 1
      %p345 = scmp.ne.s32.totalorder %s340, %s342
      %p346 = scmp.eq.s32.totalorder %s44, 0
      %p347 = por %p345, %p346
      %p348 = scmp.ne.s32.totalorder %s340, %s342
      %p349 = scmp.eq.s32.totalorder %s49, 1
      %p350 = por %p348, %p349
      %p351 = scmp.ne.s32.totalorder %s342, %s343
      %p352 = scmp.eq.s32.totalorder %s49, 0
      %p353 = por %p351, %p352
      %p354 = scmp.ne.s32.totalorder %s342, %s343
      %p355 = scmp.eq.s32.totalorder %s50, 1
      %p356 = por %p354, %p355
      %p358 = scmp.ne.s32.totalorder %s343, %s357
      %p359 = scmp.eq.s32.totalorder %s50, 0
      %p360 = por %p358, %p359
      %s362 = sadd.s32 %s361, 1
      %p365 = scmp.eq.s32.totalorder %s44, 1
      %p366 = scmp.ne.s32.totalorder %s361, %s363
      %p367 = scmp.eq.s32.totalorder %s44, 0
      %p368 = por %p366, %p367
      %p369 = scmp.ne.s32.totalorder %s361, %s363
      %p370 = scmp.eq.s32.totalorder %s49, 1
      %p371 = por %p369, %p370
      %p372 = scmp.ne.s32.totalorder %s363, %s364
      %p373 = scmp.eq.s32.totalorder %s49, 0
      %p374 = por %p372, %p373
      %p375 = scmp.ne.s32.totalorder %s363, %s364
      %p376 = scmp.eq.s32.totalorder %s50, 1
      %p377 = por %p375, %p376
      %p379 = scmp.ne.s32.totalorder %s364, %s378
      %p380 = scmp.eq.s32.totalorder %s50, 0
      %p381 = por %p379, %p380
      %s383 = sadd.s32 %s382, 1
      %p386 = scmp.eq.s32.totalorder %s44, 1
      %p387 = scmp.ne.s32.totalorder %s382, %s384
      %p388 = scmp.eq.s32.totalorder %s44, 0
      %p389 = por %p387, %p388
      %p390 = scmp.ne.s32.totalorder %s382, %s384
      %p391 = scmp.eq.s32.totalorder %s49, 1
      %p392 = por %p390, %p391
      %p393 = scmp.ne.s32.totalorder %s384, %s385
      %p394 = scmp.eq.s32.totalorder %s49, 0
      %p395 = por %p393, %p394
      %p396 = scmp.ne.s32.totalorder %s384, %s385
      %p397 = scmp.eq.s32.totalorder %s50, 1
      %p398 = por %p396, %p397
      %p400 = scmp.ne.s32.totalorder %s385, %s399
      %p401 = scmp.eq.s32.totalorder %s50, 0
      %p402 = por %p400, %p401
      %s404 = sadd.s32 %s403, 1
      %p407 = scmp.eq.s32.totalorder %s44, 1
      %p408 = scmp.ne.s32.totalorder %s403, %s405
      %p409 = scmp.eq.s32.totalorder %s44, 0
      %p410 = por %p408, %p409
      %p411 = scmp.ne.s32.totalorder %s403, %s405
      %p412 = scmp.eq.s32.totalorder %s49, 1
      %p413 = por %p411, %p412
      %p414 = scmp.ne.s32.totalorder %s405, %s406
      %p415 = scmp.eq.s32.totalorder %s49, 0
      %p416 = por %p414, %p415
      %p417 = scmp.ne.s32.totalorder %s405, %s406
      %p418 = scmp.eq.s32.totalorder %s50, 1
      %p419 = por %p417, %p418
      %p421 = scmp.ne.s32.totalorder %s406, %s420
      %p422 = scmp.eq.s32.totalorder %s50, 0
      %p423 = por %p421, %p422
      %s425 = sadd.s32 %s424, 1
      %p428 = scmp.eq.s32.totalorder %s44, 1
      %p429 = scmp.ne.s32.totalorder %s424, %s426
      %p430 = scmp.eq.s32.totalorder %s44, 0
      %p431 = por %p429, %p430
      %p432 = scmp.ne.s32.totalorder %s424, %s426
      %p433 = scmp.eq.s32.totalorder %s49, 1
      %p434 = por %p432, %p433
      %p435 = scmp.ne.s32.totalorder %s426, %s427
      %p436 = scmp.eq.s32.totalorder %s49, 0
      %p437 = por %p435, %p436
      %p438 = scmp.ne.s32.totalorder %s426, %s427
      %p439 = scmp.eq.s32.totalorder %s50, 1
      %p440 = por %p438, %p439
      %p442 = scmp.ne.s32.totalorder %s427, %s441
      %p443 = scmp.eq.s32.totalorder %s50, 0
      %p444 = por %p442, %p443
      %s446 = sadd.s32 %s445, 1
      %p449 = scmp.eq.s32.totalorder %s44, 1
      %p450 = scmp.ne.s32.totalorder %s445, %s447
      %p451 = scmp.eq.s32.totalorder %s44, 0
      %p452 = por %p450, %p451
      %p453 = scmp.ne.s32.totalorder %s445, %s447
      %p454 = scmp.eq.s32.totalorder %s49, 1
      %p455 = por %p453, %p454
      %p456 = scmp.ne.s32.totalorder %s447, %s448
      %p457 = scmp.eq.s32.totalorder %s49, 0
      %p458 = por %p456, %p457
      %p459 = scmp.ne.s32.totalorder %s447, %s448
      %p460 = scmp.eq.s32.totalorder %s50, 1
      %p461 = por %p459, %p460
      %p463 = scmp.ne.s32.totalorder %s448, %s462
      %p464 = scmp.eq.s32.totalorder %s50, 0
      %p465 = por %p463, %p464
      %s466 = ssub.s32 %s44, %s51
      %p467 = scmp.eq.s32.totalorder %s466, 0
      %s469 = sadd.s32 %s468, 1
      %s470 = scalar_select %p467, %s468, %s469
      %p473 = pneg %p467
      %p474 = scmp.eq.s32.totalorder %s44, 1
      %p475 = por %p473, %p474
      %p476 = scmp.ne.s32.totalorder %s468, %s471
      %p477 = scmp.eq.s32.totalorder %s44, 0
      %p478 = por %p476, %p477
      %p479 = scmp.ne.s32.totalorder %s468, %s471
      %p480 = scmp.eq.s32.totalorder %s49, 1
      %p481 = por %p479, %p480
      %p482 = scmp.ne.s32.totalorder %s471, %s472
      %p483 = scmp.eq.s32.totalorder %s49, 0
      %p484 = por %p482, %p483
      %p485 = scmp.ne.s32.totalorder %s471, %s472
      %p486 = scmp.eq.s32.totalorder %s50, 1
      %p487 = por %p485, %p486
      %p489 = scmp.ne.s32.totalorder %s472, %s488
      %p490 = scmp.eq.s32.totalorder %s50, 0
      %p491 = por %p489, %p490
      %s492 = ssub.s32 %s44, %s51
      %p493 = scmp.eq.s32.totalorder %s492, 0
      %s495 = sadd.s32 %s494, 1
      %s496 = scalar_select %p493, %s494, %s495
      %p499 = pneg %p493
      %p500 = scmp.eq.s32.totalorder %s44, 1
      %p501 = por %p499, %p500
      %p502 = scmp.ne.s32.totalorder %s494, %s497
      %p503 = scmp.eq.s32.totalorder %s44, 0
      %p504 = por %p502, %p503
      %p505 = scmp.ne.s32.totalorder %s494, %s497
      %p506 = scmp.eq.s32.totalorder %s49, 1
      %p507 = por %p505, %p506
      %p508 = scmp.ne.s32.totalorder %s497, %s498
      %p509 = scmp.eq.s32.totalorder %s49, 0
      %p510 = por %p508, %p509
      %p511 = scmp.ne.s32.totalorder %s497, %s498
      %p512 = scmp.eq.s32.totalorder %s50, 1
      %p513 = por %p511, %p512
      %p515 = scmp.ne.s32.totalorder %s498, %s514
      %p516 = scmp.eq.s32.totalorder %s50, 0
      %p517 = por %p515, %p516
      %p518 = scmp.le.s32.totalorder 1, %s44
      %p519 = scmp.lt.s32.totalorder %s44, 3
      %p520 = pnand %p518, %p519
      %p521 = pneg %p520
      // Predicated region
      $region9: #{tpu_custom_call.1} parent=5 // pred_check
        _
      $region10: #{tpu_custom_call.1} parent=5 // pred_check_branch
        %523 = sbr.rel (%p520) target = $region12
      $region11: #{tpu_custom_call.1} parent=5 // pred_region
        %s524 = ssub.s32 %s44, 1
        // Predicated region
        $region13: #{tpu_custom_call.1} parent=11 // pred_check
          %p525 = pneg %p117
        $region14: #{tpu_custom_call.1} parent=11 // pred_check_branch
          %527 = sbr.rel (%p525) target = $region16
        $region15: #{tpu_custom_call.1} parent=11 // pred_region
          %529 = vsyncadd [#allocation6], 0
          %s531 = sshll.u32 %s2, 4
          %s532 = int_to_ptr.hbm [resolvable:$true] %s531
          %s533 = sshll.u32 [#allocation7], 4
          %s534 = int_to_ptr.vmem [resolvable:$true] %s533
          %536 = dma.hbm_to_vmem [thread:$0]  %s532, 128, %s534, [#allocation6]
        $region16: #{tpu_custom_call.1} parent=11 // pred_fallthru
          _
        // Predicated region
        $region17: #{tpu_custom_call.1} parent=11 // pred_check
          %p537 = pneg %p164
        $region18: #{tpu_custom_call.1} parent=11 // pred_check_branch
          %539 = sbr.rel (%p537) target = $region20
        $region19: #{tpu_custom_call.1} parent=11 // pred_region
          _
        $region20: #{tpu_custom_call.1} parent=11 // pred_fallthru
          _
        // Predicated region
        $region21: #{tpu_custom_call.1} parent=11 // pred_check
          %p540 = pneg %p185
        $region22: #{tpu_custom_call.1} parent=11 // pred_check_branch
          %542 = sbr.rel (%p540) target = $region24
        $region23: #{tpu_custom_call.1} parent=11 // pred_region
          %544 = vsyncadd [#allocation9], 0
          %s545 = sshll.u32 %s5, 4
          %s546 = int_to_ptr.hbm [resolvable:$true] %s545
          %s547 = sshll.u32 [#allocation10], 4
          %s548 = int_to_ptr.vmem [resolvable:$true] %s547
          %553 = dma.hbm_to_vmem [thread:$0]  %s546, 32, %s548, [#allocation9], 16, 16, 1
        $region24: #{tpu_custom_call.1} parent=11 // pred_fallthru
          _
        // Predicated region
        $region25: #{tpu_custom_call.1} parent=11 // pred_check
          %p554 = pneg %p206
        $region26: #{tpu_custom_call.1} parent=11 // pred_check_branch
          %556 = sbr.rel (%p554) target = $region28
        $region27: #{tpu_custom_call.1} parent=11 // pred_region
          %558 = vsyncadd [#allocation12], 0
          %s559 = sshll.u32 %s6, 4
          %s560 = int_to_ptr.hbm [resolvable:$true] %s559
          %s561 = sshll.u32 [#allocation11], 4
          %s562 = int_to_ptr.vmem [resolvable:$true] %s561
          %567 = dma.hbm_to_vmem [thread:$0]  %s560, 1024, %s562, [#allocation12], 128, 128, 8
        $region28: #{tpu_custom_call.1} parent=11 // pred_fallthru
          _
        // Predicated region
        $region29: #{tpu_custom_call.1} parent=11 // pred_check
          %p568 = pneg %p227
        $region30: #{tpu_custom_call.1} parent=11 // pred_check_branch
          %570 = sbr.rel (%p568) target = $region32
        $region31: #{tpu_custom_call.1} parent=11 // pred_region
          %572 = vsyncadd [#allocation12], 0
          %s573 = sshll.u32 %s7, 4
          %s574 = int_to_ptr.hbm [resolvable:$true] %s573
          %s575 = sshll.u32 [#allocation13], 4
          %s576 = int_to_ptr.vmem [resolvable:$true] %s575
          %581 = dma.hbm_to_vmem [thread:$0]  %s574, 1024, %s576, [#allocation12], 128, 128, 8
        $region32: #{tpu_custom_call.1} parent=11 // pred_fallthru
          _
        // Predicated region
        $region33: #{tpu_custom_call.1} parent=11 // pred_check
          %p582 = pneg %p248
        $region34: #{tpu_custom_call.1} parent=11 // pred_check_branch
          %584 = sbr.rel (%p582) target = $region36
        $region35: #{tpu_custom_call.1} parent=11 // pred_region
          %586 = vsyncadd [#allocation15], 0
          %s587 = sshll.u32 %s8, 4
          %s588 = int_to_ptr.hbm [resolvable:$true] %s587
          %s589 = sshll.u32 [#allocation14], 4
          %s590 = int_to_ptr.vmem [resolvable:$true] %s589
          %595 = dma.hbm_to_vmem [thread:$0]  %s588, 32, %s590, [#allocation15], 16, 16, 1
        $region36: #{tpu_custom_call.1} parent=11 // pred_fallthru
          _
        // Predicated region
        $region37: #{tpu_custom_call.1} parent=11 // pred_check
          %p596 = pneg %p269
        $region38: #{tpu_custom_call.1} parent=11 // pred_check_branch
          %598 = sbr.rel (%p596) target = $region40
        $region39: #{tpu_custom_call.1} parent=11 // pred_region
          _
        $region40: #{tpu_custom_call.1} parent=11 // pred_fallthru
          _
        // Predicated region
        $region41: #{tpu_custom_call.1} parent=11 // pred_check
          %p599 = pneg %p290
        $region42: #{tpu_custom_call.1} parent=11 // pred_check_branch
          %601 = sbr.rel (%p599) target = $region44
        $region43: #{tpu_custom_call.1} parent=11 // pred_region
          _
        $region44: #{tpu_custom_call.1} parent=11 // pred_fallthru
          _
        // Predicated region
        $region45: #{tpu_custom_call.1} parent=11 // pred_check
          %p602 = pneg %p311
        $region46: #{tpu_custom_call.1} parent=11 // pred_check_branch
          %604 = sbr.rel (%p602) target = $region48
        $region47: #{tpu_custom_call.1} parent=11 // pred_region
          _
        $region48: #{tpu_custom_call.1} parent=11 // pred_fallthru
          _
        // Predicated region
        $region49: #{tpu_custom_call.1} parent=11 // pred_check
          %p605 = pneg %p332
        $region50: #{tpu_custom_call.1} parent=11 // pred_check_branch
          %607 = sbr.rel (%p605) target = $region52
        $region51: #{tpu_custom_call.1} parent=11 // pred_region
          _
        $region52: #{tpu_custom_call.1} parent=11 // pred_fallthru
          _
        // Predicated region
        $region53: #{tpu_custom_call.1} parent=11 // pred_check
          %p608 = pneg %p353
        $region54: #{tpu_custom_call.1} parent=11 // pred_check_branch
          %610 = sbr.rel (%p608) target = $region56
        $region55: #{tpu_custom_call.1} parent=11 // pred_region
          _
        $region56: #{tpu_custom_call.1} parent=11 // pred_fallthru
          _
        // Predicated region
        $region57: #{tpu_custom_call.1} parent=11 // pred_check
          %p611 = pneg %p374
        $region58: #{tpu_custom_call.1} parent=11 // pred_check_branch
          %613 = sbr.rel (%p611) target = $region60
        $region59: #{tpu_custom_call.1} parent=11 // pred_region
          %615 = vsyncadd [#allocation15], 0
          %s616 = sshll.u32 %s14, 4
          %s617 = int_to_ptr.hbm [resolvable:$true] %s616
          %s618 = sshll.u32 [#allocation16], 4
          %s619 = int_to_ptr.vmem [resolvable:$true] %s618
          %624 = dma.hbm_to_vmem [thread:$0]  %s617, 1024, %s619, [#allocation15], 128, 128, 8
        $region60: #{tpu_custom_call.1} parent=11 // pred_fallthru
          _
        // Predicated region
        $region61: #{tpu_custom_call.1} parent=11 // pred_check
          %p625 = pneg %p395
        $region62: #{tpu_custom_call.1} parent=11 // pred_check_branch
          %627 = sbr.rel (%p625) target = $region64
        $region63: #{tpu_custom_call.1} parent=11 // pred_region
          _
        $region64: #{tpu_custom_call.1} parent=11 // pred_fallthru
          _
        // Predicated region
        $region65: #{tpu_custom_call.1} parent=11 // pred_check
          %p628 = pneg %p416
        $region66: #{tpu_custom_call.1} parent=11 // pred_check_branch
          %630 = sbr.rel (%p628) target = $region68
        $region67: #{tpu_custom_call.1} parent=11 // pred_region
          _
        $region68: #{tpu_custom_call.1} parent=11 // pred_fallthru
          _
        // Predicated region
        $region69: #{tpu_custom_call.1} parent=11 // pred_check
          %p631 = pneg %p437
        $region70: #{tpu_custom_call.1} parent=11 // pred_check_branch
          %633 = sbr.rel (%p631) target = $region72
        $region71: #{tpu_custom_call.1} parent=11 // pred_region
          _
        $region72: #{tpu_custom_call.1} parent=11 // pred_fallthru
          _
        // Predicated region
        $region73: #{tpu_custom_call.1} parent=11 // pred_check
          %p634 = pneg %p458
        $region74: #{tpu_custom_call.1} parent=11 // pred_check_branch
          %636 = sbr.rel (%p634) target = $region76
        $region75: #{tpu_custom_call.1} parent=11 // pred_region
          _
        $region76: #{tpu_custom_call.1} parent=11 // pred_fallthru
          _
      $region12: #{tpu_custom_call.1} parent=5 // pred_fallthru
        _
      %p637 = scmp.lt.s32.totalorder %s44, 2
      // Predicated region
      $region77: #{tpu_custom_call.1} parent=5 // pred_check
        %p638 = pneg %p637
      $region78: #{tpu_custom_call.1} parent=5 // pred_check_branch
        %640 = sbr.rel (%p638) target = $region80
      $region79: #{tpu_custom_call.1} parent=5 // pred_region
        // Predicated region
        $region81: #{tpu_custom_call.1} parent=79 // pred_check
          %p641 = pneg %p64
        $region82: #{tpu_custom_call.1} parent=79 // pred_check_branch
          %643 = sbr.rel (%p641) target = $region84
        $region83: #{tpu_custom_call.1} parent=79 // pred_region
          %s644 = sand.u32 %s54, 1
          %s645 = scalar_lea.sflag [#allocation3], %s644
          %s646 = sand.u32 %s54, 1
          %s647 = smul.addr %s646, 16
          %s648 = scalar_lea.vmem [#allocation2], %s647
          %650 = vsyncadd %s645, 0
          %s651 = smul.addr %s44, 2
          %s652 = smul.addr %s651, 8
          %s653 = scalar_lea.hbm %s0, %s652
          %s654 = sshll.u32 %s653, 4
          %s655 = int_to_ptr.hbm [resolvable:$true] %s654
          %s656 = sshll.u32 %s648, 4
          %s657 = int_to_ptr.vmem [resolvable:$true] %s656
          %662 = dma.hbm_to_vmem [thread:$0]  %s655, 256, %s657, %s645, 128, 128, 8
        $region84: #{tpu_custom_call.1} parent=79 // pred_fallthru
          _
        // Predicated region
        $region85: #{tpu_custom_call.1} parent=79 // pred_check
          %p663 = pneg %p90
        $region86: #{tpu_custom_call.1} parent=79 // pred_check_branch
          %665 = sbr.rel (%p663) target = $region88
        $region87: #{tpu_custom_call.1} parent=79 // pred_region
          %s666 = sand.u32 %s44, 1
          %s667 = scalar_lea.sflag [#allocation6], %s666
          %s668 = sand.u32 %s80, 1
          %s669 = smul.addr %s668, 16
          %s670 = scalar_lea.vmem [#allocation5], %s669
          %672 = vsyncadd %s667, 0
          %s673 = smul.addr %s44, 2
          %s674 = smul.addr %s673, 8
          %s675 = scalar_lea.hbm %s1, %s674
          %s676 = sshll.u32 %s675, 4
          %s677 = int_to_ptr.hbm [resolvable:$true] %s676
          %s678 = sshll.u32 %s670, 4
          %s679 = int_to_ptr.vmem [resolvable:$true] %s678
          %684 = dma.hbm_to_vmem [thread:$0]  %s677, 256, %s679, %s667, 128, 128, 8
        $region88: #{tpu_custom_call.1} parent=79 // pred_fallthru
          _
        // Predicated region
        $region89: #{tpu_custom_call.1} parent=79 // pred_check
          %p685 = pneg %p137
        $region90: #{tpu_custom_call.1} parent=79 // pred_check_branch
          %687 = sbr.rel (%p685) target = $region92
        $region91: #{tpu_custom_call.1} parent=79 // pred_region
          %s688 = sand.u32 %s44, 1
          %s689 = scalar_lea.sflag [#allocation9], %s688
          %s690 = sand.u32 %s127, 1
          %s691 = scalar_lea.vmem [#allocation8], %s690
          %693 = vsyncadd %s689, 0
          %s694 = scalar_lea.hbm %s3, %s44
          %s696 = sshll.u32 %s694, 4
          %s697 = int_to_ptr.hbm [resolvable:$true] %s696
          %s698 = sshll.u32 %s691, 4
          %s699 = int_to_ptr.vmem [resolvable:$true] %s698
          %701 = dma.hbm_to_vmem [thread:$0]  %s697, 16, %s699, %s689
        $region92: #{tpu_custom_call.1} parent=79 // pred_fallthru
          _
      $region80: #{tpu_custom_call.1} parent=5 // pred_fallthru
        _
      %p702 = scmp.le.s32.totalorder 1, %s44
      %p703 = scmp.lt.s32.totalorder %s44, 3
      %p704 = pnand %p702, %p703
      %p705 = pneg %p704
      // Predicated region
      $region93: #{tpu_custom_call.1} parent=5 // pred_check
        _
      $region94: #{tpu_custom_call.1} parent=5 // pred_check_branch
        %707 = sbr.rel (%p704) target = $region96
      $region95: #{tpu_custom_call.1} parent=5 // pred_region
        %s708 = ssub.s32 %s44, 1
        %s709 = sand.u32 %s57, 1
        %s710 = scalar_lea.sflag [#allocation3], %s709
        %s711 = sand.u32 %s57, 1
        %s712 = smul.addr %s711, 16
        %s713 = scalar_lea.vmem [#allocation2], %s712
        // Predicated region
        $region97: #{tpu_custom_call.1} parent=95 // pred_check
          %p714 = pneg %p70
        $region98: #{tpu_custom_call.1} parent=95 // pred_check_branch
          %716 = sbr.rel (%p714) target = $region100
        $region99: #{tpu_custom_call.1} parent=95 // pred_region
          %718 = dma.done %s710, 256
        $region100: #{tpu_custom_call.1} parent=95 // pred_fallthru
          _
        %s719 = sand.u32 %s49, 1
        %s720 = scalar_lea.sflag [#allocation6], %s719
        %s721 = sand.u32 %s83, 1
        %s722 = smul.addr %s721, 16
        %s723 = scalar_lea.vmem [#allocation5], %s722
        // Predicated region
        $region101: #{tpu_custom_call.1} parent=95 // pred_check
          %p724 = pneg %p96
        $region102: #{tpu_custom_call.1} parent=95 // pred_check_branch
          %726 = sbr.rel (%p724) target = $region104
        $region103: #{tpu_custom_call.1} parent=95 // pred_region
          %728 = dma.done %s720, 256
        $region104: #{tpu_custom_call.1} parent=95 // pred_fallthru
          _
        // Predicated region
        $region105: #{tpu_custom_call.1} parent=95 // pred_check
          %p729 = pneg %p117
        $region106: #{tpu_custom_call.1} parent=95 // pred_check_branch
          %731 = sbr.rel (%p729) target = $region108
        $region107: #{tpu_custom_call.1} parent=95 // pred_region
          %733 = dma.done [#allocation6], 128
        $region108: #{tpu_custom_call.1} parent=95 // pred_fallthru
          _
        %s734 = sand.u32 %s49, 1
        %s735 = scalar_lea.sflag [#allocation9], %s734
        %s736 = sand.u32 %s130, 1
        %s737 = scalar_lea.vmem [#allocation8], %s736
        // Predicated region
        $region109: #{tpu_custom_call.1} parent=95 // pred_check
          %p738 = pneg %p143
        $region110: #{tpu_custom_call.1} parent=95 // pred_check_branch
          %740 = sbr.rel (%p738) target = $region112
        $region111: #{tpu_custom_call.1} parent=95 // pred_region
          %742 = dma.done %s735, 16
        $region112: #{tpu_custom_call.1} parent=95 // pred_fallthru
          _
        // Predicated region
        $region113: #{tpu_custom_call.1} parent=95 // pred_check
          %p743 = pneg %p185
        $region114: #{tpu_custom_call.1} parent=95 // pred_check_branch
          %745 = sbr.rel (%p743) target = $region116
        $region115: #{tpu_custom_call.1} parent=95 // pred_region
          %747 = dma.done [#allocation9], 32
        $region116: #{tpu_custom_call.1} parent=95 // pred_fallthru
          _
        // Predicated region
        $region117: #{tpu_custom_call.1} parent=95 // pred_check
          %p748 = pneg %p206
        $region118: #{tpu_custom_call.1} parent=95 // pred_check_branch
          %750 = sbr.rel (%p748) target = $region120
        $region119: #{tpu_custom_call.1} parent=95 // pred_region
          %752 = dma.done [#allocation12], 1024
        $region120: #{tpu_custom_call.1} parent=95 // pred_fallthru
          _
        // Predicated region
        $region121: #{tpu_custom_call.1} parent=95 // pred_check
          %p753 = pneg %p227
        $region122: #{tpu_custom_call.1} parent=95 // pred_check_branch
          %755 = sbr.rel (%p753) target = $region124
        $region123: #{tpu_custom_call.1} parent=95 // pred_region
          %757 = dma.done [#allocation12], 1024
        $region124: #{tpu_custom_call.1} parent=95 // pred_fallthru
          _
        // Predicated region
        $region125: #{tpu_custom_call.1} parent=95 // pred_check
          %p758 = pneg %p248
        $region126: #{tpu_custom_call.1} parent=95 // pred_check_branch
          %760 = sbr.rel (%p758) target = $region128
        $region127: #{tpu_custom_call.1} parent=95 // pred_region
          %762 = dma.done [#allocation15], 32
        $region128: #{tpu_custom_call.1} parent=95 // pred_fallthru
          _
        // Predicated region
        $region129: #{tpu_custom_call.1} parent=95 // pred_check
          %p763 = pneg %p374
        $region130: #{tpu_custom_call.1} parent=95 // pred_check_branch
          %765 = sbr.rel (%p763) target = $region132
        $region131: #{tpu_custom_call.1} parent=95 // pred_region
          %767 = dma.done [#allocation15], 1024
        $region132: #{tpu_custom_call.1} parent=95 // pred_fallthru
          _
        %s768 = sand.u32 %s57, 1
        %s769 = scalar_lea.sflag [#allocation3], %s768
        %s770 = sand.u32 %s57, 1
        %s771 = smul.addr %s770, 16
        %s772 = scalar_lea.vmem [#allocation2], %s771
        %p773 = pneg %p70
        %p774 = pneg %p67
        %s775 = sand.u32 %s49, 1
        %s776 = scalar_lea.sflag [#allocation6], %s775
        %s777 = sand.u32 %s83, 1
        %s778 = smul.addr %s777, 16
        %s779 = scalar_lea.vmem [#allocation5], %s778
        %p780 = pneg %p96
        %p781 = pneg %p93
        %p782 = pneg %p117
        %p783 = pneg %p114
        %s784 = sand.u32 %s49, 1
        %s785 = scalar_lea.sflag [#allocation9], %s784
        %s786 = sand.u32 %s130, 1
        %s787 = scalar_lea.vmem [#allocation8], %s786
        %p788 = pneg %p143
        %p789 = pneg %p140
        %p790 = pneg %p164
        %p791 = pneg %p161
        %p792 = pneg %p185
        %p793 = pneg %p182
        %p794 = pneg %p206
        %p795 = pneg %p203
        %p796 = pneg %p227
        %p797 = pneg %p224
        %p798 = pneg %p248
        %p799 = pneg %p245
        %p800 = pneg %p269
        %p801 = pneg %p266
        %p802 = pneg %p290
        %p803 = pneg %p287
        %p804 = pneg %p311
        %p805 = pneg %p308
        %p806 = pneg %p332
        %p807 = pneg %p329
        %p808 = pneg %p353
        %p809 = pneg %p350
        %p810 = pneg %p374
        %p811 = pneg %p371
        %p812 = pneg %p395
        %p813 = pneg %p392
        %p814 = pneg %p416
        %p815 = pneg %p413
        %p816 = pneg %p437
        %p817 = pneg %p434
        %p818 = pneg %p458
        %p819 = pneg %p455
        %p820 = pneg %p484
        %p821 = pneg %p481
        %s822 = sand.u32 %s471, 1
        %s823 = scalar_lea.sflag [#allocation4], %s822
        %s824 = sand.u32 %s471, 1
        %s825 = smul.addr %s824, 16
        %s826 = scalar_lea.vmem [#allocation17], %s825
        %p827 = pneg %p510
        %p828 = pneg %p507
        %s829 = sand.u32 %s497, 1
        %s830 = scalar_lea.sflag [#allocation19], %s829
        %s831 = sand.u32 %s497, 1
        %s832 = smul.addr %s831, 16
        %s833 = scalar_lea.vmem [#allocation18], %s832
        %v834 = vld [vmem:[%s737] sm:$0x1]
        %v835 = vld [vmem:[%s723] sm:$0xff]
        %v836 = vld [vmem:[%s723 + $0x8] sm:$0xff]
        %v837 = vld [vmem:[#allocation7] sm:$0xff]
        %v838 = vld [vmem:[%s713] sm:$0xff]
        %v839 = vld [vmem:[%s713 + $0x8] sm:$0xff]
        %v840 = vld [vmem:[%s10] sm:$0x3f]
        %v841 = vadd.f32 %v838, %v835
        %v842 = vadd.f32 %v839, %v836
        %v843 = vld [vmem:[%s4] sm:$0xff]
        %v844 = vld [vmem:[%s4 + $0x8] sm:$0xff]
        %v845 = vld [vmem:[%s4 + $0x10] sm:$0xff]
        %v846 = vld [vmem:[%s4 + $0x18] sm:$0xff]
        %v847 = vld [vmem:[#allocation10] sm:$0x1]
        %v848 = vld [vmem:[#allocation11] sm:$0xff]
        %v849 = vld [vmem:[#allocation11 + $0x8] sm:$0xff]
        %v850 = vld [vmem:[#allocation11 + $0x10] sm:$0xff]
        %v851 = vld [vmem:[#allocation11 + $0x18] sm:$0xff]
        %v853 = vperm.slane %v847, 0
        %vm855 = vcmask 261120
        %v857 = vsel %vm855, %v841, 0
        %v860 = vsel %vm855, %v842, 0
        %862 = vmatpush.msra.mxu0 0.0
        %863 = vmatpush.msra.mxu0 0.0
        %864 = vmatpush.msra.mxu0 0.0
        %865 = vmatpush.msra.mxu0 0.0
        %866 = vmatpush.msra.mxu0 0.0
        %867 = vmatpush.msra.mxu0 0.0
        %868 = vmatpush.msra.mxu0 0.0
        %869 = vmatpush.msra.mxu0 0.0
        %870 = vmatpush.msra.mxu0 0.0
        %871 = vmatpush.msra.mxu0 0.0
        %872 = vmatpush.msra.mxu0 0.0
        %873 = vmatpush.msra.mxu0 0.0
        %874 = vmatpush.msra.mxu0 %v846
        %875 = vmatpush.msra.mxu0 %v845
        %876 = vmatpush.msra.mxu0 %v844
        %877 = vmatpush.msra.mxu0 %v843
        %878 = vmatmul.f32.gmra.mxu0 %v857
        %v879 = vpop.f32.mrf.mxu0
        %v880 = vadd.f32 %v853, %v879
        %881 = vmatmul.f32.gmra.mxu0 %v860
        %v882 = vpop.f32.mrf.mxu0
        %v883 = vadd.f32 %v853, %v882
        %884 = vdwg.mxu0
        %889 = vrot.lane.b32.xlu0 %v843, 64
        %v890 = vpop.permute.xlu0 %889
        %891 = vrot.lane.b32.xlu0 %v844, 64
        %v892 = vpop.permute.xlu0 %891
        %893 = vrot.lane.b32.xlu0 %v845, 64
        %v894 = vpop.permute.xlu0 %893
        %895 = vrot.lane.b32.xlu0 %v846, 64
        %v896 = vpop.permute.xlu0 %895
        %901 = vrot.lane.b32.xlu0 %v853, 64
        %v902 = vpop.permute.xlu0 %901
        %v905 = vsel %vm855, %v838, 0
        %v908 = vsel %vm855, %v839, 0
        %910 = vmatpush.msra.mxu0 0.0
        %911 = vmatpush.msra.mxu0 0.0
        %912 = vmatpush.msra.mxu0 0.0
        %913 = vmatpush.msra.mxu0 0.0
        %914 = vmatpush.msra.mxu0 0.0
        %915 = vmatpush.msra.mxu0 0.0
        %916 = vmatpush.msra.mxu0 0.0
        %917 = vmatpush.msra.mxu0 0.0
        %918 = vmatpush.msra.mxu0 0.0
        %919 = vmatpush.msra.mxu0 0.0
        %920 = vmatpush.msra.mxu0 0.0
        %921 = vmatpush.msra.mxu0 0.0
        %922 = vmatpush.msra.mxu0 %v896
        %923 = vmatpush.msra.mxu0 %v894
        %924 = vmatpush.msra.mxu0 %v892
        %925 = vmatpush.msra.mxu0 %v890
        %926 = vmatmul.f32.gmra.mxu0 %v905
        %v927 = vpop.f32.mrf.mxu0
        %v928 = vadd.f32 %v902, %v927
        %929 = vmatmul.f32.gmra.mxu0 %v908
        %v930 = vpop.f32.mrf.mxu0
        %v931 = vadd.f32 %v902, %v930
        %932 = vdwg.mxu0
        %v934 = vperm.slane %v834, 0
        %938 = vrot.lane.b32.xlu0 %v880, 96
        %v939 = vpop.permute.xlu0 %938
        %940 = vrot.lane.b32.xlu0 %v883, 96
        %v941 = vpop.permute.xlu0 %940
        %vm942 = vcmask 64512
        %v943 = vsel %vm942, %v880, 0
        %v945 = vsel %vm942, %v883, 0
        %v947 = vsel %vm942, %v939, 0
        %v949 = vsel %vm942, %v941, 0
        %951 = vmatpush.xpose.msra.mxu0 0.0
        %952 = vmatpush.xpose.msra.mxu0 0.0
        %953 = vmatpush.xpose.msra.mxu0 0.0
        %954 = vmatpush.xpose.msra.mxu0 0.0
        %955 = vmatpush.xpose.msra.mxu0 0.0
        %956 = vmatpush.xpose.msra.mxu0 0.0
        %957 = vmatpush.xpose.msra.mxu0 0.0
        %958 = vmatpush.xpose.msra.mxu0 0.0
        %959 = vmatpush.xpose.msra.mxu0 0.0
        %960 = vmatpush.xpose.msra.mxu0 0.0
        %961 = vmatpush.xpose.msra.mxu0 0.0
        %962 = vmatpush.xpose.msra.mxu0 0.0
        %963 = vmatpush.xpose.msra.mxu0 0.0
        %964 = vmatpush.xpose.msra.mxu0 0.0
        %965 = vmatpush.xpose.msra.mxu0 %v949
        %966 = vmatpush.xpose.msra.mxu0 %v947
        %967 = vmatmul.f32.gmra.mxu0 %v943
        %v968 = vpop.f32.mrf.mxu0
        %v969 = vadd.f32 %v934, %v968
        %970 = vmatmul.f32.gmra.mxu0 %v945
        %v971 = vpop.f32.mrf.mxu0
        %v972 = vadd.f32 %v934, %v971
        %973 = vdwg.mxu0
        %vm974 = vcmask 130048
        %v975 = vsel %vm974, %v969, -inf
        %976 = vmax.xlane.f32.xlu0 %v975
        %v977 = vpop.xlane.xlu0 %976
        %v978 = vsel %vm974, %v972, -inf
        %979 = vmax.xlane.f32.xlu0 %v978
        %v980 = vpop.xlane.xlu0 %979
        %v981 = vsub.f32 %v969, %v977
        %v982 = vsub.f32 %v972, %v980
        %v983 = vmul.f32 %v981, 1.442695
        %v984 = vpow.pop %v983
        %v985 = vmul.f32 %v982, 1.442695
        %v986 = vpow.pop %v985
        %v987 = vsel %vm974, %v984, 0.0
        %988 = vadd.xlane.f32.xlu0 %v987
        %v989 = vpop.xlane.xlu0 %988
        %v990 = vsel %vm974, %v986, 0.0
        %991 = vadd.xlane.f32.xlu0 %v990
        %v992 = vpop.xlane.xlu0 %991
        %v993 = vrcp.pop %v989
        %v994 = vrcp.pop %v992
        %v995 = vmul.f32 %v984, %v993
        %v996 = vmul.f32 %v986, %v994
        %v998 = vsel %vm974, %v995, 0
        %v1001 = vsel %vm974, %v996, 0
        %1003 = vmatpush.msra.mxu0 0.0
        %1004 = vmatpush.msra.mxu0 0.0
        %1005 = vmatpush.msra.mxu0 0.0
        %1006 = vmatpush.msra.mxu0 0.0
        %1007 = vmatpush.msra.mxu0 0.0
        %1008 = vmatpush.msra.mxu0 0.0
        %1009 = vmatpush.msra.mxu0 0.0
        %1010 = vmatpush.msra.mxu0 0.0
        %1011 = vmatpush.msra.mxu0 0.0
        %1012 = vmatpush.msra.mxu0 0.0
        %1013 = vmatpush.msra.mxu0 0.0
        %1014 = vmatpush.msra.mxu0 0.0
        %1015 = vmatpush.msra.mxu0 0.0
        %1016 = vmatpush.msra.mxu0 0.0
        %1017 = vmatpush.msra.mxu0 %v931
        %1018 = vmatpush.msra.mxu0 %v928
        %1019 = vmatmul.f32.gmra.mxu0 %v998
        %v1020 = vpop.f32.mrf.mxu0
        %v1021 = vadd.f32 0.0, %v1020
        %1022 = vmatmul.f32.gmra.mxu0 %v1001
        %v1023 = vpop.f32.mrf.mxu0
        %v1024 = vadd.f32 0.0, %v1023
        %1025 = vdwg.mxu0
        %1026 = vrot.lane.b32.xlu0 %v880, 120
        %v1027 = vpop.permute.xlu0 %1026
        %1028 = vrot.lane.b32.xlu0 %v883, 120
        %v1029 = vpop.permute.xlu0 %1028
        %1030 = vrot.lane.b32.xlu0 %v880, 88
        %v1031 = vpop.permute.xlu0 %1030
        %1032 = vrot.lane.b32.xlu0 %v883, 88
        %v1033 = vpop.permute.xlu0 %1032
        %v1034 = vsel %vm942, %v1027, 0
        %v1036 = vsel %vm942, %v1029, 0
        %v1038 = vsel %vm942, %v1031, 0
        %v1040 = vsel %vm942, %v1033, 0
        %1042 = vmatpush.xpose.msra.mxu0 0.0
        %1043 = vmatpush.xpose.msra.mxu0 0.0
        %1044 = vmatpush.xpose.msra.mxu0 0.0
        %1045 = vmatpush.xpose.msra.mxu0 0.0
        %1046 = vmatpush.xpose.msra.mxu0 0.0
        %1047 = vmatpush.xpose.msra.mxu0 0.0
        %1048 = vmatpush.xpose.msra.mxu0 0.0
        %1049 = vmatpush.xpose.msra.mxu0 0.0
        %1050 = vmatpush.xpose.msra.mxu0 0.0
        %1051 = vmatpush.xpose.msra.mxu0 0.0
        %1052 = vmatpush.xpose.msra.mxu0 0.0
        %1053 = vmatpush.xpose.msra.mxu0 0.0
        %1054 = vmatpush.xpose.msra.mxu0 0.0
        %1055 = vmatpush.xpose.msra.mxu0 0.0
        %1056 = vmatpush.xpose.msra.mxu0 %v1040
        %1057 = vmatpush.xpose.msra.mxu0 %v1038
        %1058 = vmatmul.f32.gmra.mxu0 %v1034
        %v1059 = vpop.f32.mrf.mxu0
        %v1060 = vadd.f32 %v934, %v1059
        %1061 = vmatmul.f32.gmra.mxu0 %v1036
        %v1062 = vpop.f32.mrf.mxu0
        %v1063 = vadd.f32 %v934, %v1062
        %1064 = vdwg.mxu0
        %v1065 = vsel %vm974, %v1060, -inf
        %1066 = vmax.xlane.f32.xlu0 %v1065
        %v1067 = vpop.xlane.xlu0 %1066
        %v1068 = vsel %vm974, %v1063, -inf
        %1069 = vmax.xlane.f32.xlu0 %v1068
        %v1070 = vpop.xlane.xlu0 %1069
        %v1071 = vsub.f32 %v1060, %v1067
        %v1072 = vsub.f32 %v1063, %v1070
        %v1073 = vmul.f32 %v1071, 1.442695
        %v1074 = vpow.pop %v1073
        %v1075 = vmul.f32 %v1072, 1.442695
        %v1076 = vpow.pop %v1075
        %v1077 = vsel %vm974, %v1074, 0.0
        %1078 = vadd.xlane.f32.xlu0 %v1077
        %v1079 = vpop.xlane.xlu0 %1078
        %v1080 = vsel %vm974, %v1076, 0.0
        %1081 = vadd.xlane.f32.xlu0 %v1080
        %v1082 = vpop.xlane.xlu0 %1081
        %v1083 = vrcp.pop %v1079
        %v1084 = vrcp.pop %v1082
        %v1085 = vmul.f32 %v1074, %v1083
        %v1086 = vmul.f32 %v1076, %v1084
        %1089 = vrot.lane.b32.xlu0 %v928, 120
        %v1090 = vpop.permute.xlu0 %1089
        %1091 = vrot.lane.b32.xlu0 %v931, 120
        %v1092 = vpop.permute.xlu0 %1091
        %v1096 = vsel %vm974, %v1085, 0
        %v1099 = vsel %vm974, %v1086, 0
        %1101 = vmatpush.msra.mxu0 0.0
        %1102 = vmatpush.msra.mxu0 0.0
        %1103 = vmatpush.msra.mxu0 0.0
        %1104 = vmatpush.msra.mxu0 0.0
        %1105 = vmatpush.msra.mxu0 0.0
        %1106 = vmatpush.msra.mxu0 0.0
        %1107 = vmatpush.msra.mxu0 0.0
        %1108 = vmatpush.msra.mxu0 0.0
        %1109 = vmatpush.msra.mxu0 0.0
        %1110 = vmatpush.msra.mxu0 0.0
        %1111 = vmatpush.msra.mxu0 0.0
        %1112 = vmatpush.msra.mxu0 0.0
        %1113 = vmatpush.msra.mxu0 0.0
        %1114 = vmatpush.msra.mxu0 0.0
        %1115 = vmatpush.msra.mxu0 %v1092
        %1116 = vmatpush.msra.mxu0 %v1090
        %1117 = vmatmul.f32.gmra.mxu0 %v1096
        %v1118 = vpop.f32.mrf.mxu0
        %v1119 = vadd.f32 0.0, %v1118
        %1120 = vmatmul.f32.gmra.mxu0 %v1099
        %v1121 = vpop.f32.mrf.mxu0
        %v1122 = vadd.f32 0.0, %v1121
        %1123 = vdwg.mxu0
        %v1125 = vsel %vm942, %v1119, 0
        %v1128 = vsel %vm942, %v1122, 0
        %1130 = vmatpush.msra.mxu0 0.0
        %1131 = vmatpush.msra.mxu0 0.0
        %1132 = vmatpush.msra.mxu0 0.0
        %1133 = vmatpush.msra.mxu0 0.0
        %1134 = vmatpush.msra.mxu0 0.0
        %1135 = vmatpush.msra.mxu0 0.0
        %1136 = vmatpush.msra.mxu0 0.0
        %1137 = vmatpush.msra.mxu0 0.0
        %1138 = vmatpush.msra.mxu0 0.0
        %1139 = vmatpush.msra.mxu0 0.0
        %1140 = vmatpush.msra.mxu0 0.0
        %1141 = vmatpush.msra.mxu0 0.0
        %1142 = vmatpush.msra.mxu0 0.0
        %1143 = vmatpush.msra.mxu0 0.0
        %1144 = vmatpush.msra.mxu0 0.0
        %1145 = vmatpush.msra.mxu0 %v849
        %1146 = vmatmul.f32.gmra.mxu0 %v1125
        %v1147 = vpop.f32.mrf.mxu0
        %v1148 = vadd.f32 0.0, %v1147
        %1149 = vmatmul.f32.gmra.mxu0 %v1128
        %v1150 = vpop.f32.mrf.mxu0
        %v1151 = vadd.f32 0.0, %v1150
        %1152 = vdwg.mxu0
        %v1154 = vsel %vm942, %v1021, 0
        %v1157 = vsel %vm942, %v1024, 0
        %1159 = vmatpush.msra.mxu0 0.0
        %1160 = vmatpush.msra.mxu0 0.0
        %1161 = vmatpush.msra.mxu0 0.0
        %1162 = vmatpush.msra.mxu0 0.0
        %1163 = vmatpush.msra.mxu0 0.0
        %1164 = vmatpush.msra.mxu0 0.0
        %1165 = vmatpush.msra.mxu0 0.0
        %1166 = vmatpush.msra.mxu0 0.0
        %1167 = vmatpush.msra.mxu0 0.0
        %1168 = vmatpush.msra.mxu0 0.0
        %1169 = vmatpush.msra.mxu0 0.0
        %1170 = vmatpush.msra.mxu0 0.0
        %1171 = vmatpush.msra.mxu0 0.0
        %1172 = vmatpush.msra.mxu0 0.0
        %1173 = vmatpush.msra.mxu0 0.0
        %1174 = vmatpush.msra.mxu0 %v848
        %1175 = vmatmul.f32.gmra.mxu0 %v1154
        %v1176 = vpop.f32.mrf.mxu0
        %v1177 = vadd.f32 %v1148, %v1176
        %1178 = vmatmul.f32.gmra.mxu0 %v1157
        %v1179 = vpop.f32.mrf.mxu0
        %v1180 = vadd.f32 %v1151, %v1179
        %1181 = vdwg.mxu0
        %1182 = vrot.lane.b32.xlu0 %v880, 112
        %v1183 = vpop.permute.xlu0 %1182
        %1184 = vrot.lane.b32.xlu0 %v883, 112
        %v1185 = vpop.permute.xlu0 %1184
        %1186 = vrot.lane.b32.xlu0 %v880, 80
        %v1187 = vpop.permute.xlu0 %1186
        %1188 = vrot.lane.b32.xlu0 %v883, 80
        %v1189 = vpop.permute.xlu0 %1188
        %v1190 = vsel %vm942, %v1183, 0
        %v1192 = vsel %vm942, %v1185, 0
        %v1194 = vsel %vm942, %v1187, 0
        %v1196 = vsel %vm942, %v1189, 0
        %1198 = vmatpush.xpose.msra.mxu0 0.0
        %1199 = vmatpush.xpose.msra.mxu0 0.0
        %1200 = vmatpush.xpose.msra.mxu0 0.0
        %1201 = vmatpush.xpose.msra.mxu0 0.0
        %1202 = vmatpush.xpose.msra.mxu0 0.0
        %1203 = vmatpush.xpose.msra.mxu0 0.0
        %1204 = vmatpush.xpose.msra.mxu0 0.0
        %1205 = vmatpush.xpose.msra.mxu0 0.0
        %1206 = vmatpush.xpose.msra.mxu0 0.0
        %1207 = vmatpush.xpose.msra.mxu0 0.0
        %1208 = vmatpush.xpose.msra.mxu0 0.0
        %1209 = vmatpush.xpose.msra.mxu0 0.0
        %1210 = vmatpush.xpose.msra.mxu0 0.0
        %1211 = vmatpush.xpose.msra.mxu0 0.0
        %1212 = vmatpush.xpose.msra.mxu0 %v1196
        %1213 = vmatpush.xpose.msra.mxu0 %v1194
        %1214 = vmatmul.f32.gmra.mxu0 %v1190
        %v1215 = vpop.f32.mrf.mxu0
        %v1216 = vadd.f32 %v934, %v1215
        %1217 = vmatmul.f32.gmra.mxu0 %v1192
        %v1218 = vpop.f32.mrf.mxu0
        %v1219 = vadd.f32 %v934, %v1218
        %1220 = vdwg.mxu0
        %v1221 = vsel %vm974, %v1216, -inf
        %1222 = vmax.xlane.f32.xlu0 %v1221
        %v1223 = vpop.xlane.xlu0 %1222
        %v1224 = vsel %vm974, %v1219, -inf
        %1225 = vmax.xlane.f32.xlu0 %v1224
        %v1226 = vpop.xlane.xlu0 %1225
        %v1227 = vsub.f32 %v1216, %v1223
        %v1228 = vsub.f32 %v1219, %v1226
        %v1229 = vmul.f32 %v1227, 1.442695
        %v1230 = vpow.pop %v1229
        %v1231 = vmul.f32 %v1228, 1.442695
        %v1232 = vpow.pop %v1231
        %v1233 = vsel %vm974, %v1230, 0.0
        %1234 = vadd.xlane.f32.xlu0 %v1233
        %v1235 = vpop.xlane.xlu0 %1234
        %v1236 = vsel %vm974, %v1232, 0.0
        %1237 = vadd.xlane.f32.xlu0 %v1236
        %v1238 = vpop.xlane.xlu0 %1237
        %v1239 = vrcp.pop %v1235
        %v1240 = vrcp.pop %v1238
        %v1241 = vmul.f32 %v1230, %v1239
        %v1242 = vmul.f32 %v1232, %v1240
        %1243 = vrot.lane.b32.xlu0 %v928, 112
        %v1244 = vpop.permute.xlu0 %1243
        %1245 = vrot.lane.b32.xlu0 %v931, 112
        %v1246 = vpop.permute.xlu0 %1245
        %v1250 = vsel %vm974, %v1241, 0
        %v1253 = vsel %vm974, %v1242, 0
        %1255 = vmatpush.msra.mxu0 0.0
        %1256 = vmatpush.msra.mxu0 0.0
        %1257 = vmatpush.msra.mxu0 0.0
        %1258 = vmatpush.msra.mxu0 0.0
        %1259 = vmatpush.msra.mxu0 0.0
        %1260 = vmatpush.msra.mxu0 0.0
        %1261 = vmatpush.msra.mxu0 0.0
        %1262 = vmatpush.msra.mxu0 0.0
        %1263 = vmatpush.msra.mxu0 0.0
        %1264 = vmatpush.msra.mxu0 0.0
        %1265 = vmatpush.msra.mxu0 0.0
        %1266 = vmatpush.msra.mxu0 0.0
        %1267 = vmatpush.msra.mxu0 0.0
        %1268 = vmatpush.msra.mxu0 0.0
        %1269 = vmatpush.msra.mxu0 %v1246
        %1270 = vmatpush.msra.mxu0 %v1244
        %1271 = vmatmul.f32.gmra.mxu0 %v1250
        %v1272 = vpop.f32.mrf.mxu0
        %v1273 = vadd.f32 0.0, %v1272
        %1274 = vmatmul.f32.gmra.mxu0 %v1253
        %v1275 = vpop.f32.mrf.mxu0
        %v1276 = vadd.f32 0.0, %v1275
        %1277 = vdwg.mxu0
        %v1279 = vsel %vm942, %v1273, 0
        %v1282 = vsel %vm942, %v1276, 0
        %1284 = vmatpush.msra.mxu0 0.0
        %1285 = vmatpush.msra.mxu0 0.0
        %1286 = vmatpush.msra.mxu0 0.0
        %1287 = vmatpush.msra.mxu0 0.0
        %1288 = vmatpush.msra.mxu0 0.0
        %1289 = vmatpush.msra.mxu0 0.0
        %1290 = vmatpush.msra.mxu0 0.0
        %1291 = vmatpush.msra.mxu0 0.0
        %1292 = vmatpush.msra.mxu0 0.0
        %1293 = vmatpush.msra.mxu0 0.0
        %1294 = vmatpush.msra.mxu0 0.0
        %1295 = vmatpush.msra.mxu0 0.0
        %1296 = vmatpush.msra.mxu0 0.0
        %1297 = vmatpush.msra.mxu0 0.0
        %1298 = vmatpush.msra.mxu0 0.0
        %1299 = vmatpush.msra.mxu0 %v850
        %1300 = vmatmul.f32.gmra.mxu0 %v1279
        %v1301 = vpop.f32.mrf.mxu0
        %v1302 = vadd.f32 0.0, %v1301
        %1303 = vmatmul.f32.gmra.mxu0 %v1282
        %v1304 = vpop.f32.mrf.mxu0
        %v1305 = vadd.f32 0.0, %v1304
        %1306 = vdwg.mxu0
        %v1307 = vadd.f32 %v1177, %v1302
        %v1308 = vadd.f32 %v1180, %v1305
        %1309 = vrot.lane.b32.xlu0 %v880, 104
        %v1310 = vpop.permute.xlu0 %1309
        %1311 = vrot.lane.b32.xlu0 %v883, 104
        %v1312 = vpop.permute.xlu0 %1311
        %1313 = vrot.lane.b32.xlu0 %v880, 72
        %v1314 = vpop.permute.xlu0 %1313
        %1315 = vrot.lane.b32.xlu0 %v883, 72
        %v1316 = vpop.permute.xlu0 %1315
        %v1317 = vsel %vm942, %v1310, 0
        %v1319 = vsel %vm942, %v1312, 0
        %v1321 = vsel %vm942, %v1314, 0
        %v1323 = vsel %vm942, %v1316, 0
        %1325 = vmatpush.xpose.msra.mxu0 0.0
        %1326 = vmatpush.xpose.msra.mxu0 0.0
        %1327 = vmatpush.xpose.msra.mxu0 0.0
        %1328 = vmatpush.xpose.msra.mxu0 0.0
        %1329 = vmatpush.xpose.msra.mxu0 0.0
        %1330 = vmatpush.xpose.msra.mxu0 0.0
        %1331 = vmatpush.xpose.msra.mxu0 0.0
        %1332 = vmatpush.xpose.msra.mxu0 0.0
        %1333 = vmatpush.xpose.msra.mxu0 0.0
        %1334 = vmatpush.xpose.msra.mxu0 0.0
        %1335 = vmatpush.xpose.msra.mxu0 0.0
        %1336 = vmatpush.xpose.msra.mxu0 0.0
        %1337 = vmatpush.xpose.msra.mxu0 0.0
        %1338 = vmatpush.xpose.msra.mxu0 0.0
        %1339 = vmatpush.xpose.msra.mxu0 %v1323
        %1340 = vmatpush.xpose.msra.mxu0 %v1321
        %1341 = vmatmul.f32.gmra.mxu0 %v1317
        %v1342 = vpop.f32.mrf.mxu0
        %v1343 = vadd.f32 %v934, %v1342
        %1344 = vmatmul.f32.gmra.mxu0 %v1319
        %v1345 = vpop.f32.mrf.mxu0
        %v1346 = vadd.f32 %v934, %v1345
        %1347 = vdwg.mxu0
        %v1348 = vsel %vm974, %v1343, -inf
        %1349 = vmax.xlane.f32.xlu0 %v1348
        %v1350 = vpop.xlane.xlu0 %1349
        %v1351 = vsel %vm974, %v1346, -inf
        %1352 = vmax.xlane.f32.xlu0 %v1351
        %v1353 = vpop.xlane.xlu0 %1352
        %v1354 = vsub.f32 %v1343, %v1350
        %v1355 = vsub.f32 %v1346, %v1353
        %v1356 = vmul.f32 %v1354, 1.442695
        %v1357 = vpow.pop %v1356
        %v1358 = vmul.f32 %v1355, 1.442695
        %v1359 = vpow.pop %v1358
        %v1360 = vsel %vm974, %v1357, 0.0
        %1361 = vadd.xlane.f32.xlu0 %v1360
        %v1362 = vpop.xlane.xlu0 %1361
        %v1363 = vsel %vm974, %v1359, 0.0
        %1364 = vadd.xlane.f32.xlu0 %v1363
        %v1365 = vpop.xlane.xlu0 %1364
        %v1366 = vrcp.pop %v1362
        %v1367 = vrcp.pop %v1365
        %v1368 = vmul.f32 %v1357, %v1366
        %v1369 = vmul.f32 %v1359, %v1367
        %1370 = vrot.lane.b32.xlu0 %v928, 104
        %v1371 = vpop.permute.xlu0 %1370
        %1372 = vrot.lane.b32.xlu0 %v931, 104
        %v1373 = vpop.permute.xlu0 %1372
        %v1377 = vsel %vm974, %v1368, 0
        %v1380 = vsel %vm974, %v1369, 0
        %1382 = vmatpush.msra.mxu0 0.0
        %1383 = vmatpush.msra.mxu0 0.0
        %1384 = vmatpush.msra.mxu0 0.0
        %1385 = vmatpush.msra.mxu0 0.0
        %1386 = vmatpush.msra.mxu0 0.0
        %1387 = vmatpush.msra.mxu0 0.0
        %1388 = vmatpush.msra.mxu0 0.0
        %1389 = vmatpush.msra.mxu0 0.0
        %1390 = vmatpush.msra.mxu0 0.0
        %1391 = vmatpush.msra.mxu0 0.0
        %1392 = vmatpush.msra.mxu0 0.0
        %1393 = vmatpush.msra.mxu0 0.0
        %1394 = vmatpush.msra.mxu0 0.0
        %1395 = vmatpush.msra.mxu0 0.0
        %1396 = vmatpush.msra.mxu0 %v1373
        %1397 = vmatpush.msra.mxu0 %v1371
        %1398 = vmatmul.f32.gmra.mxu0 %v1377
        %v1399 = vpop.f32.mrf.mxu0
        %v1400 = vadd.f32 0.0, %v1399
        %1401 = vmatmul.f32.gmra.mxu0 %v1380
        %v1402 = vpop.f32.mrf.mxu0
        %v1403 = vadd.f32 0.0, %v1402
        %1404 = vdwg.mxu0
        %v1406 = vsel %vm942, %v1400, 0
        %v1409 = vsel %vm942, %v1403, 0
        %1411 = vmatpush.msra.mxu0 0.0
        %1412 = vmatpush.msra.mxu0 0.0
        %1413 = vmatpush.msra.mxu0 0.0
        %1414 = vmatpush.msra.mxu0 0.0
        %1415 = vmatpush.msra.mxu0 0.0
        %1416 = vmatpush.msra.mxu0 0.0
        %1417 = vmatpush.msra.mxu0 0.0
        %1418 = vmatpush.msra.mxu0 0.0
        %1419 = vmatpush.msra.mxu0 0.0
        %1420 = vmatpush.msra.mxu0 0.0
        %1421 = vmatpush.msra.mxu0 0.0
        %1422 = vmatpush.msra.mxu0 0.0
        %1423 = vmatpush.msra.mxu0 0.0
        %1424 = vmatpush.msra.mxu0 0.0
        %1425 = vmatpush.msra.mxu0 0.0
        %1426 = vmatpush.msra.mxu0 %v851
        %1427 = vmatmul.f32.gmra.mxu0 %v1406
        %v1428 = vpop.f32.mrf.mxu0
        %v1429 = vadd.f32 0.0, %v1428
        %1430 = vmatmul.f32.gmra.mxu0 %v1409
        %v1431 = vpop.f32.mrf.mxu0
        %v1432 = vadd.f32 0.0, %v1431
        %1433 = vdwg.mxu0
        %v1434 = vadd.f32 %v1307, %v1429
        %v1435 = vadd.f32 %v1308, %v1432
        %v1436 = vperm.slane %v840, 0
        %v1437 = vadd.f32 %v1434, %v1436
        %v1438 = vadd.f32 %v1435, %v1436
        %v1439 = vadd.f32 %v838, %v1437
        %v1440 = vadd.f32 %v839, %v1438
        %v1441 = vsel %vm855, %v1439, 0.0
        %1442 = vadd.xlane.f32.xlu0 %v1441
        %v1443 = vpop.xlane.xlu0 %1442
        %v1444 = vsel %vm855, %v1440, 0.0
        %1445 = vadd.xlane.f32.xlu0 %v1444
        %v1446 = vpop.xlane.xlu0 %1445
        %v1447 = vrcp.pop 32.0
        %v1448 = vmul.f32 32.0, %v1447
        %v1449 = vsub.f32 1.0, %v1448
        %v1450 = vmul.f32 %v1447, %v1449
        %v1451 = vadd.f32 %v1447, %v1450
        %vm1452 = vweird.f32 %v1447
        %v1453 = vsel %vm1452, %v1447, %v1451
        %v1454 = vmul.f32 %v1443, %v1453
        %v1455 = vmul.f32 %v1446, %v1453
        %v1456 = vsub.f32 %v1439, %v1454
        %v1457 = vsub.f32 %v1440, %v1455
        %v1458 = vmul.f32 %v1456, %v1456
        %v1459 = vmul.f32 %v1457, %v1457
        %v1460 = vsel %vm855, %v1458, 0.0
        %1461 = vadd.xlane.f32.xlu0 %v1460
        %v1462 = vpop.xlane.xlu0 %1461
        %v1463 = vsel %vm855, %v1459, 0.0
        %1464 = vadd.xlane.f32.xlu0 %v1463
        %v1465 = vpop.xlane.xlu0 %1464
        %v1466 = vmul.f32 %v1462, %v1453
        %v1467 = vmul.f32 %v1465, %v1453
        %v1468 = vadd.f32 %v1466, 1e-05
        %v1469 = vadd.f32 %v1467, 1e-05
        %v1470 = vrsqrt.pop %v1468
        %v1471 = vmul.f32 %v1470, %v1468
        %v1472 = vmul.f32 %v1471, %v1470
        %v1473 = vmul.f32 0.5, %v1472
        %v1474 = vsub.f32 1.5, %v1473
        %v1475 = vmul.f32 %v1470, %v1474
        %vm1476 = vweird.f32 %v1468
        %vm1477 = vweird.f32 %v1470
        %vm1478 = vmor %vm1476, %vm1477
        %v1479 = vsel %vm1478, %v1470, %v1475
        %v1480 = vrsqrt.pop %v1469
        %v1481 = vmul.f32 %v1480, %v1469
        %v1482 = vmul.f32 %v1481, %v1480
        %v1483 = vmul.f32 0.5, %v1482
        %v1484 = vsub.f32 1.5, %v1483
        %v1485 = vmul.f32 %v1480, %v1484
        %vm1486 = vweird.f32 %v1469
        %vm1487 = vweird.f32 %v1480
        %vm1488 = vmor %vm1486, %vm1487
        %v1489 = vsel %vm1488, %v1480, %v1485
        %v1490 = vmul.f32 %v1456, %v1479
        %v1491 = vmul.f32 %v1457, %v1489
        %v1492 = vperm.slane %v840, 2
        %v1493 = vmul.f32 %v1490, %v1492
        %v1494 = vmul.f32 %v1491, %v1492
        %v1495 = vperm.slane %v840, 3
        %v1496 = vadd.f32 %v1493, %v1495
        %v1497 = vadd.f32 %v1494, %v1495
        %v1498 = vld [vmem:[#allocation13] sm:$0xff]
        %v1499 = vld [vmem:[#allocation13 + $0x8] sm:$0xff]
        %v1500 = vld [vmem:[#allocation13 + $0x10] sm:$0xff]
        %v1501 = vld [vmem:[#allocation13 + $0x18] sm:$0xff]
        %v1502 = vld [vmem:[#allocation14] sm:$0x1]
        %v1504 = vperm.slane %v1502, 0
        %v1507 = vsel %vm855, %v1496, 0
        %v1510 = vsel %vm855, %v1497, 0
        %1512 = vmatpush.msra.mxu0 0.0
        %1513 = vmatpush.msra.mxu0 0.0
        %1514 = vmatpush.msra.mxu0 0.0
        %1515 = vmatpush.msra.mxu0 0.0
        %1516 = vmatpush.msra.mxu0 0.0
        %1517 = vmatpush.msra.mxu0 0.0
        %1518 = vmatpush.msra.mxu0 0.0
        %1519 = vmatpush.msra.mxu0 0.0
        %1520 = vmatpush.msra.mxu0 0.0
        %1521 = vmatpush.msra.mxu0 0.0
        %1522 = vmatpush.msra.mxu0 0.0
        %1523 = vmatpush.msra.mxu0 0.0
        %1524 = vmatpush.msra.mxu0 %v1501
        %1525 = vmatpush.msra.mxu0 %v1500
        %1526 = vmatpush.msra.mxu0 %v1499
        %1527 = vmatpush.msra.mxu0 %v1498
        %1528 = vmatmul.f32.gmra.mxu0 %v1507
        %v1529 = vpop.f32.mrf.mxu0
        %v1530 = vadd.f32 %v1504, %v1529
        %1531 = vmatmul.f32.gmra.mxu0 %v1510
        %v1532 = vpop.f32.mrf.mxu0
        %v1533 = vadd.f32 %v1504, %v1532
        %1534 = vdwg.mxu0
        %v1535 = vmax.f32 %v1530, 0.0
        %v1536 = vmax.f32 %v1533, 0.0
        %v1537 = vld [vmem:[%s9] sm:$0xff]
        %v1538 = vld [vmem:[%s9 + $0x8] sm:$0xff]
        %v1539 = vld [vmem:[%s9 + $0x10] sm:$0xff]
        %v1540 = vld [vmem:[%s9 + $0x18] sm:$0xff]
        %v1541 = vld [vmem:[%s9 + $0x20] sm:$0xff]
        %v1542 = vld [vmem:[%s9 + $0x28] sm:$0xff]
        %v1543 = vld [vmem:[%s9 + $0x30] sm:$0xff]
        %v1544 = vld [vmem:[%s9 + $0x38] sm:$0xff]
        %v1545 = vperm.slane %v840, 1
        %vm1546 = vcmask 523264
        %v1548 = vsel %vm1546, %v1535, 0
        %v1551 = vsel %vm1546, %v1536, 0
        %1553 = vmatpush.msra.mxu0 0.0
        %1554 = vmatpush.msra.mxu0 0.0
        %1555 = vmatpush.msra.mxu0 0.0
        %1556 = vmatpush.msra.mxu0 0.0
        %1557 = vmatpush.msra.mxu0 0.0
        %1558 = vmatpush.msra.mxu0 0.0
        %1559 = vmatpush.msra.mxu0 0.0
        %1560 = vmatpush.msra.mxu0 0.0
        %1561 = vmatpush.msra.mxu0 %v1544
        %1562 = vmatpush.msra.mxu0 %v1543
        %1563 = vmatpush.msra.mxu0 %v1542
        %1564 = vmatpush.msra.mxu0 %v1541
        %1565 = vmatpush.msra.mxu0 %v1540
        %1566 = vmatpush.msra.mxu0 %v1539
        %1567 = vmatpush.msra.mxu0 %v1538
        %1568 = vmatpush.msra.mxu0 %v1537
        %1569 = vmatmul.f32.gmra.mxu0 %v1548
        %v1570 = vpop.f32.mrf.mxu0
        %v1571 = vadd.f32 %v1545, %v1570
        %1572 = vmatmul.f32.gmra.mxu0 %v1551
        %v1573 = vpop.f32.mrf.mxu0
        %v1574 = vadd.f32 %v1545, %v1573
        %1575 = vdwg.mxu0
        %v1576 = vadd.f32 %v1496, %v1571
        %v1577 = vadd.f32 %v1497, %v1574
        %v1578 = vsel %vm855, %v1576, 0.0
        %1579 = vadd.xlane.f32.xlu0 %v1578
        %v1580 = vpop.xlane.xlu0 %1579
        %v1581 = vsel %vm855, %v1577, 0.0
        %1582 = vadd.xlane.f32.xlu0 %v1581
        %v1583 = vpop.xlane.xlu0 %1582
        %v1584 = vmul.f32 %v1580, %v1453
        %v1585 = vmul.f32 %v1583, %v1453
        %v1586 = vsub.f32 %v1576, %v1584
        %v1587 = vsub.f32 %v1577, %v1585
        %v1588 = vmul.f32 %v1586, %v1586
        %v1589 = vmul.f32 %v1587, %v1587
        %v1590 = vsel %vm855, %v1588, 0.0
        %1591 = vadd.xlane.f32.xlu0 %v1590
        %v1592 = vpop.xlane.xlu0 %1591
        %v1593 = vsel %vm855, %v1589, 0.0
        %1594 = vadd.xlane.f32.xlu0 %v1593
        %v1595 = vpop.xlane.xlu0 %1594
        %v1596 = vmul.f32 %v1592, %v1453
        %v1597 = vmul.f32 %v1595, %v1453
        %v1598 = vadd.f32 %v1596, 1e-05
        %v1599 = vadd.f32 %v1597, 1e-05
        %v1600 = vrsqrt.pop %v1598
        %v1601 = vmul.f32 %v1600, %v1598
        %v1602 = vmul.f32 %v1601, %v1600
        %v1603 = vmul.f32 0.5, %v1602
        %v1604 = vsub.f32 1.5, %v1603
        %v1605 = vmul.f32 %v1600, %v1604
        %vm1606 = vweird.f32 %v1598
        %vm1607 = vweird.f32 %v1600
        %vm1608 = vmor %vm1606, %vm1607
        %v1609 = vsel %vm1608, %v1600, %v1605
        %v1610 = vrsqrt.pop %v1599
        %v1611 = vmul.f32 %v1610, %v1599
        %v1612 = vmul.f32 %v1611, %v1610
        %v1613 = vmul.f32 0.5, %v1612
        %v1614 = vsub.f32 1.5, %v1613
        %v1615 = vmul.f32 %v1610, %v1614
        %vm1616 = vweird.f32 %v1599
        %vm1617 = vweird.f32 %v1610
        %vm1618 = vmor %vm1616, %vm1617
        %v1619 = vsel %vm1618, %v1610, %v1615
        %v1620 = vmul.f32 %v1586, %v1609
        %v1621 = vmul.f32 %v1587, %v1619
        %v1622 = vperm.slane %v840, 4
        %v1623 = vmul.f32 %v1620, %v1622
        %v1624 = vmul.f32 %v1621, %v1622
        %v1625 = vperm.slane %v840, 5
        %v1626 = vadd.f32 %v1623, %v1625
        %v1627 = vadd.f32 %v1624, %v1625
        %s1628 = scalar_lea.vmem %s10, 8
        %v1629 = vld [vmem:[%s1628] sm:$0x3f]
        %v1630 = vadd.f32 %v1626, %v835
        %v1631 = vadd.f32 %v1627, %v836
        %s1632 = scalar_lea.vmem %s4, 32
        %v1633 = vld [vmem:[%s1632] sm:$0xff]
        %v1634 = vld [vmem:[%s1632 + $0x8] sm:$0xff]
        %v1635 = vld [vmem:[%s1632 + $0x10] sm:$0xff]
        %v1636 = vld [vmem:[%s1632 + $0x18] sm:$0xff]
        %s1637 = scalar_lea.vmem [#allocation10], 1
        %v1638 = vld [vmem:[%s1637] sm:$0x1]
        %s1639 = scalar_lea.vmem [#allocation11], 32
        %v1640 = vld [vmem:[%s1639] sm:$0xff]
        %v1641 = vld [vmem:[%s1639 + $0x8] sm:$0xff]
        %v1642 = vld [vmem:[%s1639 + $0x10] sm:$0xff]
        %v1643 = vld [vmem:[%s1639 + $0x18] sm:$0xff]
        %v1645 = vperm.slane %v1638, 0
        %v1648 = vsel %vm855, %v1630, 0
        %v1651 = vsel %vm855, %v1631, 0
        %1653 = vmatpush.msra.mxu0 0.0
        %1654 = vmatpush.msra.mxu0 0.0
        %1655 = vmatpush.msra.mxu0 0.0
        %1656 = vmatpush.msra.mxu0 0.0
        %1657 = vmatpush.msra.mxu0 0.0
        %1658 = vmatpush.msra.mxu0 0.0
        %1659 = vmatpush.msra.mxu0 0.0
        %1660 = vmatpush.msra.mxu0 0.0
        %1661 = vmatpush.msra.mxu0 0.0
        %1662 = vmatpush.msra.mxu0 0.0
        %1663 = vmatpush.msra.mxu0 0.0
        %1664 = vmatpush.msra.mxu0 0.0
        %1665 = vmatpush.msra.mxu0 %v1636
        %1666 = vmatpush.msra.mxu0 %v1635
        %1667 = vmatpush.msra.mxu0 %v1634
        %1668 = vmatpush.msra.mxu0 %v1633
        %1669 = vmatmul.f32.gmra.mxu0 %v1648
        %v1670 = vpop.f32.mrf.mxu0
        %v1671 = vadd.f32 %v1645, %v1670
        %1672 = vmatmul.f32.gmra.mxu0 %v1651
        %v1673 = vpop.f32.mrf.mxu0
        %v1674 = vadd.f32 %v1645, %v1673
        %1675 = vdwg.mxu0
        %1680 = vrot.lane.b32.xlu0 %v1633, 64
        %v1681 = vpop.permute.xlu0 %1680
        %1682 = vrot.lane.b32.xlu0 %v1634, 64
        %v1683 = vpop.permute.xlu0 %1682
        %1684 = vrot.lane.b32.xlu0 %v1635, 64
        %v1685 = vpop.permute.xlu0 %1684
        %1686 = vrot.lane.b32.xlu0 %v1636, 64
        %v1687 = vpop.permute.xlu0 %1686
        %1692 = vrot.lane.b32.xlu0 %v1645, 64
        %v1693 = vpop.permute.xlu0 %1692
        %v1696 = vsel %vm855, %v1626, 0
        %v1699 = vsel %vm855, %v1627, 0
        %1701 = vmatpush.msra.mxu0 0.0
        %1702 = vmatpush.msra.mxu0 0.0
        %1703 = vmatpush.msra.mxu0 0.0
        %1704 = vmatpush.msra.mxu0 0.0
        %1705 = vmatpush.msra.mxu0 0.0
        %1706 = vmatpush.msra.mxu0 0.0
        %1707 = vmatpush.msra.mxu0 0.0
        %1708 = vmatpush.msra.mxu0 0.0
        %1709 = vmatpush.msra.mxu0 0.0
        %1710 = vmatpush.msra.mxu0 0.0
        %1711 = vmatpush.msra.mxu0 0.0
        %1712 = vmatpush.msra.mxu0 0.0
        %1713 = vmatpush.msra.mxu0 %v1687
        %1714 = vmatpush.msra.mxu0 %v1685
        %1715 = vmatpush.msra.mxu0 %v1683
        %1716 = vmatpush.msra.mxu0 %v1681
        %1717 = vmatmul.f32.gmra.mxu0 %v1696
        %v1718 = vpop.f32.mrf.mxu0
        %v1719 = vadd.f32 %v1693, %v1718
        %1720 = vmatmul.f32.gmra.mxu0 %v1699
        %v1721 = vpop.f32.mrf.mxu0
        %v1722 = vadd.f32 %v1693, %v1721
        %1723 = vdwg.mxu0
        %1726 = vrot.lane.b32.xlu0 %v1671, 96
        %v1727 = vpop.permute.xlu0 %1726
        %1728 = vrot.lane.b32.xlu0 %v1674, 96
        %v1729 = vpop.permute.xlu0 %1728
        %v1730 = vsel %vm942, %v1671, 0
        %v1732 = vsel %vm942, %v1674, 0
        %v1734 = vsel %vm942, %v1727, 0
        %v1736 = vsel %vm942, %v1729, 0
        %1738 = vmatpush.xpose.msra.mxu0 0.0
        %1739 = vmatpush.xpose.msra.mxu0 0.0
        %1740 = vmatpush.xpose.msra.mxu0 0.0
        %1741 = vmatpush.xpose.msra.mxu0 0.0
        %1742 = vmatpush.xpose.msra.mxu0 0.0
        %1743 = vmatpush.xpose.msra.mxu0 0.0
        %1744 = vmatpush.xpose.msra.mxu0 0.0
        %1745 = vmatpush.xpose.msra.mxu0 0.0
        %1746 = vmatpush.xpose.msra.mxu0 0.0
        %1747 = vmatpush.xpose.msra.mxu0 0.0
        %1748 = vmatpush.xpose.msra.mxu0 0.0
        %1749 = vmatpush.xpose.msra.mxu0 0.0
        %1750 = vmatpush.xpose.msra.mxu0 0.0
        %1751 = vmatpush.xpose.msra.mxu0 0.0
        %1752 = vmatpush.xpose.msra.mxu0 %v1736
        %1753 = vmatpush.xpose.msra.mxu0 %v1734
        %1754 = vmatmul.f32.gmra.mxu0 %v1730
        %v1755 = vpop.f32.mrf.mxu0
        %v1756 = vadd.f32 %v934, %v1755
        %1757 = vmatmul.f32.gmra.mxu0 %v1732
        %v1758 = vpop.f32.mrf.mxu0
        %v1759 = vadd.f32 %v934, %v1758
        %1760 = vdwg.mxu0
        %v1761 = vsel %vm974, %v1756, -inf
        %1762 = vmax.xlane.f32.xlu0 %v1761
        %v1763 = vpop.xlane.xlu0 %1762
        %v1764 = vsel %vm974, %v1759, -inf
        %1765 = vmax.xlane.f32.xlu0 %v1764
        %v1766 = vpop.xlane.xlu0 %1765
        %v1767 = vsub.f32 %v1756, %v1763
        %v1768 = vsub.f32 %v1759, %v1766
        %v1769 = vmul.f32 %v1767, 1.442695
        %v1770 = vpow.pop %v1769
        %v1771 = vmul.f32 %v1768, 1.442695
        %v1772 = vpow.pop %v1771
        %v1773 = vsel %vm974, %v1770, 0.0
        %1774 = vadd.xlane.f32.xlu0 %v1773
        %v1775 = vpop.xlane.xlu0 %1774
        %v1776 = vsel %vm974, %v1772, 0.0
        %1777 = vadd.xlane.f32.xlu0 %v1776
        %v1778 = vpop.xlane.xlu0 %1777
        %v1779 = vrcp.pop %v1775
        %v1780 = vrcp.pop %v1778
        %v1781 = vmul.f32 %v1770, %v1779
        %v1782 = vmul.f32 %v1772, %v1780
        %v1784 = vsel %vm974, %v1781, 0
        %v1787 = vsel %vm974, %v1782, 0
        %1789 = vmatpush.msra.mxu0 0.0
        %1790 = vmatpush.msra.mxu0 0.0
        %1791 = vmatpush.msra.mxu0 0.0
        %1792 = vmatpush.msra.mxu0 0.0
        %1793 = vmatpush.msra.mxu0 0.0
        %1794 = vmatpush.msra.mxu0 0.0
        %1795 = vmatpush.msra.mxu0 0.0
        %1796 = vmatpush.msra.mxu0 0.0
        %1797 = vmatpush.msra.mxu0 0.0
        %1798 = vmatpush.msra.mxu0 0.0
        %1799 = vmatpush.msra.mxu0 0.0
        %1800 = vmatpush.msra.mxu0 0.0
        %1801 = vmatpush.msra.mxu0 0.0
        %1802 = vmatpush.msra.mxu0 0.0
        %1803 = vmatpush.msra.mxu0 %v1722
        %1804 = vmatpush.msra.mxu0 %v1719
        %1805 = vmatmul.f32.gmra.mxu0 %v1784
        %v1806 = vpop.f32.mrf.mxu0
        %v1807 = vadd.f32 0.0, %v1806
        %1808 = vmatmul.f32.gmra.mxu0 %v1787
        %v1809 = vpop.f32.mrf.mxu0
        %v1810 = vadd.f32 0.0, %v1809
        %1811 = vdwg.mxu0
        %1812 = vrot.lane.b32.xlu0 %v1671, 120
        %v1813 = vpop.permute.xlu0 %1812
        %1814 = vrot.lane.b32.xlu0 %v1674, 120
        %v1815 = vpop.permute.xlu0 %1814
        %1816 = vrot.lane.b32.xlu0 %v1671, 88
        %v1817 = vpop.permute.xlu0 %1816
        %1818 = vrot.lane.b32.xlu0 %v1674, 88
        %v1819 = vpop.permute.xlu0 %1818
        %v1820 = vsel %vm942, %v1813, 0
        %v1822 = vsel %vm942, %v1815, 0
        %v1824 = vsel %vm942, %v1817, 0
        %v1826 = vsel %vm942, %v1819, 0
        %1828 = vmatpush.xpose.msra.mxu0 0.0
        %1829 = vmatpush.xpose.msra.mxu0 0.0
        %1830 = vmatpush.xpose.msra.mxu0 0.0
        %1831 = vmatpush.xpose.msra.mxu0 0.0
        %1832 = vmatpush.xpose.msra.mxu0 0.0
        %1833 = vmatpush.xpose.msra.mxu0 0.0
        %1834 = vmatpush.xpose.msra.mxu0 0.0
        %1835 = vmatpush.xpose.msra.mxu0 0.0
        %1836 = vmatpush.xpose.msra.mxu0 0.0
        %1837 = vmatpush.xpose.msra.mxu0 0.0
        %1838 = vmatpush.xpose.msra.mxu0 0.0
        %1839 = vmatpush.xpose.msra.mxu0 0.0
        %1840 = vmatpush.xpose.msra.mxu0 0.0
        %1841 = vmatpush.xpose.msra.mxu0 0.0
        %1842 = vmatpush.xpose.msra.mxu0 %v1826
        %1843 = vmatpush.xpose.msra.mxu0 %v1824
        %1844 = vmatmul.f32.gmra.mxu0 %v1820
        %v1845 = vpop.f32.mrf.mxu0
        %v1846 = vadd.f32 %v934, %v1845
        %1847 = vmatmul.f32.gmra.mxu0 %v1822
        %v1848 = vpop.f32.mrf.mxu0
        %v1849 = vadd.f32 %v934, %v1848
        %1850 = vdwg.mxu0
        %v1851 = vsel %vm974, %v1846, -inf
        %1852 = vmax.xlane.f32.xlu0 %v1851
        %v1853 = vpop.xlane.xlu0 %1852
        %v1854 = vsel %vm974, %v1849, -inf
        %1855 = vmax.xlane.f32.xlu0 %v1854
        %v1856 = vpop.xlane.xlu0 %1855
        %v1857 = vsub.f32 %v1846, %v1853
        %v1858 = vsub.f32 %v1849, %v1856
        %v1859 = vmul.f32 %v1857, 1.442695
        %v1860 = vpow.pop %v1859
        %v1861 = vmul.f32 %v1858, 1.442695
        %v1862 = vpow.pop %v1861
        %v1863 = vsel %vm974, %v1860, 0.0
        %1864 = vadd.xlane.f32.xlu0 %v1863
        %v1865 = vpop.xlane.xlu0 %1864
        %v1866 = vsel %vm974, %v1862, 0.0
        %1867 = vadd.xlane.f32.xlu0 %v1866
        %v1868 = vpop.xlane.xlu0 %1867
        %v1869 = vrcp.pop %v1865
        %v1870 = vrcp.pop %v1868
        %v1871 = vmul.f32 %v1860, %v1869
        %v1872 = vmul.f32 %v1862, %v1870
        %1875 = vrot.lane.b32.xlu0 %v1719, 120
        %v1876 = vpop.permute.xlu0 %1875
        %1877 = vrot.lane.b32.xlu0 %v1722, 120
        %v1878 = vpop.permute.xlu0 %1877
        %v1882 = vsel %vm974, %v1871, 0
        %v1885 = vsel %vm974, %v1872, 0
        %1887 = vmatpush.msra.mxu0 0.0
        %1888 = vmatpush.msra.mxu0 0.0
        %1889 = vmatpush.msra.mxu0 0.0
        %1890 = vmatpush.msra.mxu0 0.0
        %1891 = vmatpush.msra.mxu0 0.0
        %1892 = vmatpush.msra.mxu0 0.0
        %1893 = vmatpush.msra.mxu0 0.0
        %1894 = vmatpush.msra.mxu0 0.0
        %1895 = vmatpush.msra.mxu0 0.0
        %1896 = vmatpush.msra.mxu0 0.0
        %1897 = vmatpush.msra.mxu0 0.0
        %1898 = vmatpush.msra.mxu0 0.0
        %1899 = vmatpush.msra.mxu0 0.0
        %1900 = vmatpush.msra.mxu0 0.0
        %1901 = vmatpush.msra.mxu0 %v1878
        %1902 = vmatpush.msra.mxu0 %v1876
        %1903 = vmatmul.f32.gmra.mxu0 %v1882
        %v1904 = vpop.f32.mrf.mxu0
        %v1905 = vadd.f32 0.0, %v1904
        %1906 = vmatmul.f32.gmra.mxu0 %v1885
        %v1907 = vpop.f32.mrf.mxu0
        %v1908 = vadd.f32 0.0, %v1907
        %1909 = vdwg.mxu0
        %v1911 = vsel %vm942, %v1905, 0
        %v1914 = vsel %vm942, %v1908, 0
        %1916 = vmatpush.msra.mxu0 0.0
        %1917 = vmatpush.msra.mxu0 0.0
        %1918 = vmatpush.msra.mxu0 0.0
        %1919 = vmatpush.msra.mxu0 0.0
        %1920 = vmatpush.msra.mxu0 0.0
        %1921 = vmatpush.msra.mxu0 0.0
        %1922 = vmatpush.msra.mxu0 0.0
        %1923 = vmatpush.msra.mxu0 0.0
        %1924 = vmatpush.msra.mxu0 0.0
        %1925 = vmatpush.msra.mxu0 0.0
        %1926 = vmatpush.msra.mxu0 0.0
        %1927 = vmatpush.msra.mxu0 0.0
        %1928 = vmatpush.msra.mxu0 0.0
        %1929 = vmatpush.msra.mxu0 0.0
        %1930 = vmatpush.msra.mxu0 0.0
        %1931 = vmatpush.msra.mxu0 %v1641
        %1932 = vmatmul.f32.gmra.mxu0 %v1911
        %v1933 = vpop.f32.mrf.mxu0
        %v1934 = vadd.f32 0.0, %v1933
        %1935 = vmatmul.f32.gmra.mxu0 %v1914
        %v1936 = vpop.f32.mrf.mxu0
        %v1937 = vadd.f32 0.0, %v1936
        %1938 = vdwg.mxu0
        %v1940 = vsel %vm942, %v1807, 0
        %v1943 = vsel %vm942, %v1810, 0
        %1945 = vmatpush.msra.mxu0 0.0
        %1946 = vmatpush.msra.mxu0 0.0
        %1947 = vmatpush.msra.mxu0 0.0
        %1948 = vmatpush.msra.mxu0 0.0
        %1949 = vmatpush.msra.mxu0 0.0
        %1950 = vmatpush.msra.mxu0 0.0
        %1951 = vmatpush.msra.mxu0 0.0
        %1952 = vmatpush.msra.mxu0 0.0
        %1953 = vmatpush.msra.mxu0 0.0
        %1954 = vmatpush.msra.mxu0 0.0
        %1955 = vmatpush.msra.mxu0 0.0
        %1956 = vmatpush.msra.mxu0 0.0
        %1957 = vmatpush.msra.mxu0 0.0
        %1958 = vmatpush.msra.mxu0 0.0
        %1959 = vmatpush.msra.mxu0 0.0
        %1960 = vmatpush.msra.mxu0 %v1640
        %1961 = vmatmul.f32.gmra.mxu0 %v1940
        %v1962 = vpop.f32.mrf.mxu0
        %v1963 = vadd.f32 %v1934, %v1962
        %1964 = vmatmul.f32.gmra.mxu0 %v1943
        %v1965 = vpop.f32.mrf.mxu0
        %v1966 = vadd.f32 %v1937, %v1965
        %1967 = vdwg.mxu0
        %1968 = vrot.lane.b32.xlu0 %v1671, 112
        %v1969 = vpop.permute.xlu0 %1968
        %1970 = vrot.lane.b32.xlu0 %v1674, 112
        %v1971 = vpop.permute.xlu0 %1970
        %1972 = vrot.lane.b32.xlu0 %v1671, 80
        %v1973 = vpop.permute.xlu0 %1972
        %1974 = vrot.lane.b32.xlu0 %v1674, 80
        %v1975 = vpop.permute.xlu0 %1974
        %v1976 = vsel %vm942, %v1969, 0
        %v1978 = vsel %vm942, %v1971, 0
        %v1980 = vsel %vm942, %v1973, 0
        %v1982 = vsel %vm942, %v1975, 0
        %1984 = vmatpush.xpose.msra.mxu0 0.0
        %1985 = vmatpush.xpose.msra.mxu0 0.0
        %1986 = vmatpush.xpose.msra.mxu0 0.0
        %1987 = vmatpush.xpose.msra.mxu0 0.0
        %1988 = vmatpush.xpose.msra.mxu0 0.0
        %1989 = vmatpush.xpose.msra.mxu0 0.0
        %1990 = vmatpush.xpose.msra.mxu0 0.0
        %1991 = vmatpush.xpose.msra.mxu0 0.0
        %1992 = vmatpush.xpose.msra.mxu0 0.0
        %1993 = vmatpush.xpose.msra.mxu0 0.0
        %1994 = vmatpush.xpose.msra.mxu0 0.0
        %1995 = vmatpush.xpose.msra.mxu0 0.0
        %1996 = vmatpush.xpose.msra.mxu0 0.0
        %1997 = vmatpush.xpose.msra.mxu0 0.0
        %1998 = vmatpush.xpose.msra.mxu0 %v1982
        %1999 = vmatpush.xpose.msra.mxu0 %v1980
        %2000 = vmatmul.f32.gmra.mxu0 %v1976
        %v2001 = vpop.f32.mrf.mxu0
        %v2002 = vadd.f32 %v934, %v2001
        %2003 = vmatmul.f32.gmra.mxu0 %v1978
        %v2004 = vpop.f32.mrf.mxu0
        %v2005 = vadd.f32 %v934, %v2004
        %2006 = vdwg.mxu0
        %v2007 = vsel %vm974, %v2002, -inf
        %2008 = vmax.xlane.f32.xlu0 %v2007
        %v2009 = vpop.xlane.xlu0 %2008
        %v2010 = vsel %vm974, %v2005, -inf
        %2011 = vmax.xlane.f32.xlu0 %v2010
        %v2012 = vpop.xlane.xlu0 %2011
        %v2013 = vsub.f32 %v2002, %v2009
        %v2014 = vsub.f32 %v2005, %v2012
        %v2015 = vmul.f32 %v2013, 1.442695
        %v2016 = vpow.pop %v2015
        %v2017 = vmul.f32 %v2014, 1.442695
        %v2018 = vpow.pop %v2017
        %v2019 = vsel %vm974, %v2016, 0.0
        %2020 = vadd.xlane.f32.xlu0 %v2019
        %v2021 = vpop.xlane.xlu0 %2020
        %v2022 = vsel %vm974, %v2018, 0.0
        %2023 = vadd.xlane.f32.xlu0 %v2022
        %v2024 = vpop.xlane.xlu0 %2023
        %v2025 = vrcp.pop %v2021
        %v2026 = vrcp.pop %v2024
        %v2027 = vmul.f32 %v2016, %v2025
        %v2028 = vmul.f32 %v2018, %v2026
        %2029 = vrot.lane.b32.xlu0 %v1719, 112
        %v2030 = vpop.permute.xlu0 %2029
        %2031 = vrot.lane.b32.xlu0 %v1722, 112
        %v2032 = vpop.permute.xlu0 %2031
        %v2036 = vsel %vm974, %v2027, 0
        %v2039 = vsel %vm974, %v2028, 0
        %2041 = vmatpush.msra.mxu0 0.0
        %2042 = vmatpush.msra.mxu0 0.0
        %2043 = vmatpush.msra.mxu0 0.0
        %2044 = vmatpush.msra.mxu0 0.0
        %2045 = vmatpush.msra.mxu0 0.0
        %2046 = vmatpush.msra.mxu0 0.0
        %2047 = vmatpush.msra.mxu0 0.0
        %2048 = vmatpush.msra.mxu0 0.0
        %2049 = vmatpush.msra.mxu0 0.0
        %2050 = vmatpush.msra.mxu0 0.0
        %2051 = vmatpush.msra.mxu0 0.0
        %2052 = vmatpush.msra.mxu0 0.0
        %2053 = vmatpush.msra.mxu0 0.0
        %2054 = vmatpush.msra.mxu0 0.0
        %2055 = vmatpush.msra.mxu0 %v2032
        %2056 = vmatpush.msra.mxu0 %v2030
        %2057 = vmatmul.f32.gmra.mxu0 %v2036
        %v2058 = vpop.f32.mrf.mxu0
        %v2059 = vadd.f32 0.0, %v2058
        %2060 = vmatmul.f32.gmra.mxu0 %v2039
        %v2061 = vpop.f32.mrf.mxu0
        %v2062 = vadd.f32 0.0, %v2061
        %2063 = vdwg.mxu0
        %v2065 = vsel %vm942, %v2059, 0
        %v2068 = vsel %vm942, %v2062, 0
        %2070 = vmatpush.msra.mxu0 0.0
        %2071 = vmatpush.msra.mxu0 0.0
        %2072 = vmatpush.msra.mxu0 0.0
        %2073 = vmatpush.msra.mxu0 0.0
        %2074 = vmatpush.msra.mxu0 0.0
        %2075 = vmatpush.msra.mxu0 0.0
        %2076 = vmatpush.msra.mxu0 0.0
        %2077 = vmatpush.msra.mxu0 0.0
        %2078 = vmatpush.msra.mxu0 0.0
        %2079 = vmatpush.msra.mxu0 0.0
        %2080 = vmatpush.msra.mxu0 0.0
        %2081 = vmatpush.msra.mxu0 0.0
        %2082 = vmatpush.msra.mxu0 0.0
        %2083 = vmatpush.msra.mxu0 0.0
        %2084 = vmatpush.msra.mxu0 0.0
        %2085 = vmatpush.msra.mxu0 %v1642
        %2086 = vmatmul.f32.gmra.mxu0 %v2065
        %v2087 = vpop.f32.mrf.mxu0
        %v2088 = vadd.f32 0.0, %v2087
        %2089 = vmatmul.f32.gmra.mxu0 %v2068
        %v2090 = vpop.f32.mrf.mxu0
        %v2091 = vadd.f32 0.0, %v2090
        %2092 = vdwg.mxu0
        %v2093 = vadd.f32 %v1963, %v2088
        %v2094 = vadd.f32 %v1966, %v2091
        %2095 = vrot.lane.b32.xlu0 %v1671, 104
        %v2096 = vpop.permute.xlu0 %2095
        %2097 = vrot.lane.b32.xlu0 %v1674, 104
        %v2098 = vpop.permute.xlu0 %2097
        %2099 = vrot.lane.b32.xlu0 %v1671, 72
        %v2100 = vpop.permute.xlu0 %2099
        %2101 = vrot.lane.b32.xlu0 %v1674, 72
        %v2102 = vpop.permute.xlu0 %2101
        %v2103 = vsel %vm942, %v2096, 0
        %v2105 = vsel %vm942, %v2098, 0
        %v2107 = vsel %vm942, %v2100, 0
        %v2109 = vsel %vm942, %v2102, 0
        %2111 = vmatpush.xpose.msra.mxu0 0.0
        %2112 = vmatpush.xpose.msra.mxu0 0.0
        %2113 = vmatpush.xpose.msra.mxu0 0.0
        %2114 = vmatpush.xpose.msra.mxu0 0.0
        %2115 = vmatpush.xpose.msra.mxu0 0.0
        %2116 = vmatpush.xpose.msra.mxu0 0.0
        %2117 = vmatpush.xpose.msra.mxu0 0.0
        %2118 = vmatpush.xpose.msra.mxu0 0.0
        %2119 = vmatpush.xpose.msra.mxu0 0.0
        %2120 = vmatpush.xpose.msra.mxu0 0.0
        %2121 = vmatpush.xpose.msra.mxu0 0.0
        %2122 = vmatpush.xpose.msra.mxu0 0.0
        %2123 = vmatpush.xpose.msra.mxu0 0.0
        %2124 = vmatpush.xpose.msra.mxu0 0.0
        %2125 = vmatpush.xpose.msra.mxu0 %v2109
        %2126 = vmatpush.xpose.msra.mxu0 %v2107
        %2127 = vmatmul.f32.gmra.mxu0 %v2103
        %v2128 = vpop.f32.mrf.mxu0
        %v2129 = vadd.f32 %v934, %v2128
        %2130 = vmatmul.f32.gmra.mxu0 %v2105
        %v2131 = vpop.f32.mrf.mxu0
        %v2132 = vadd.f32 %v934, %v2131
        %2133 = vdwg.mxu0
        %v2134 = vsel %vm974, %v2129, -inf
        %2135 = vmax.xlane.f32.xlu0 %v2134
        %v2136 = vpop.xlane.xlu0 %2135
        %v2137 = vsel %vm974, %v2132, -inf
        %2138 = vmax.xlane.f32.xlu0 %v2137
        %v2139 = vpop.xlane.xlu0 %2138
        %v2140 = vsub.f32 %v2129, %v2136
        %v2141 = vsub.f32 %v2132, %v2139
        %v2142 = vmul.f32 %v2140, 1.442695
        %v2143 = vpow.pop %v2142
        %v2144 = vmul.f32 %v2141, 1.442695
        %v2145 = vpow.pop %v2144
        %v2146 = vsel %vm974, %v2143, 0.0
        %2147 = vadd.xlane.f32.xlu0 %v2146
        %v2148 = vpop.xlane.xlu0 %2147
        %v2149 = vsel %vm974, %v2145, 0.0
        %2150 = vadd.xlane.f32.xlu0 %v2149
        %v2151 = vpop.xlane.xlu0 %2150
        %v2152 = vrcp.pop %v2148
        %v2153 = vrcp.pop %v2151
        %v2154 = vmul.f32 %v2143, %v2152
        %v2155 = vmul.f32 %v2145, %v2153
        %2156 = vrot.lane.b32.xlu0 %v1719, 104
        %v2157 = vpop.permute.xlu0 %2156
        %2158 = vrot.lane.b32.xlu0 %v1722, 104
        %v2159 = vpop.permute.xlu0 %2158
        %v2163 = vsel %vm974, %v2154, 0
        %v2166 = vsel %vm974, %v2155, 0
        %2168 = vmatpush.msra.mxu0 0.0
        %2169 = vmatpush.msra.mxu0 0.0
        %2170 = vmatpush.msra.mxu0 0.0
        %2171 = vmatpush.msra.mxu0 0.0
        %2172 = vmatpush.msra.mxu0 0.0
        %2173 = vmatpush.msra.mxu0 0.0
        %2174 = vmatpush.msra.mxu0 0.0
        %2175 = vmatpush.msra.mxu0 0.0
        %2176 = vmatpush.msra.mxu0 0.0
        %2177 = vmatpush.msra.mxu0 0.0
        %2178 = vmatpush.msra.mxu0 0.0
        %2179 = vmatpush.msra.mxu0 0.0
        %2180 = vmatpush.msra.mxu0 0.0
        %2181 = vmatpush.msra.mxu0 0.0
        %2182 = vmatpush.msra.mxu0 %v2159
        %2183 = vmatpush.msra.mxu0 %v2157
        %2184 = vmatmul.f32.gmra.mxu0 %v2163
        %v2185 = vpop.f32.mrf.mxu0
        %v2186 = vadd.f32 0.0, %v2185
        %2187 = vmatmul.f32.gmra.mxu0 %v2166
        %v2188 = vpop.f32.mrf.mxu0
        %v2189 = vadd.f32 0.0, %v2188
        %2190 = vdwg.mxu0
        %v2192 = vsel %vm942, %v2186, 0
        %v2195 = vsel %vm942, %v2189, 0
        %2197 = vmatpush.msra.mxu0 0.0
        %2198 = vmatpush.msra.mxu0 0.0
        %2199 = vmatpush.msra.mxu0 0.0
        %2200 = vmatpush.msra.mxu0 0.0
        %2201 = vmatpush.msra.mxu0 0.0
        %2202 = vmatpush.msra.mxu0 0.0
        %2203 = vmatpush.msra.mxu0 0.0
        %2204 = vmatpush.msra.mxu0 0.0
        %2205 = vmatpush.msra.mxu0 0.0
        %2206 = vmatpush.msra.mxu0 0.0
        %2207 = vmatpush.msra.mxu0 0.0
        %2208 = vmatpush.msra.mxu0 0.0
        %2209 = vmatpush.msra.mxu0 0.0
        %2210 = vmatpush.msra.mxu0 0.0
        %2211 = vmatpush.msra.mxu0 0.0
        %2212 = vmatpush.msra.mxu0 %v1643
        %2213 = vmatmul.f32.gmra.mxu0 %v2192
        %v2214 = vpop.f32.mrf.mxu0
        %v2215 = vadd.f32 0.0, %v2214
        %2216 = vmatmul.f32.gmra.mxu0 %v2195
        %v2217 = vpop.f32.mrf.mxu0
        %v2218 = vadd.f32 0.0, %v2217
        %2219 = vdwg.mxu0
        %v2220 = vadd.f32 %v2093, %v2215
        %v2221 = vadd.f32 %v2094, %v2218
        %v2222 = vperm.slane %v1629, 0
        %v2223 = vadd.f32 %v2220, %v2222
        %v2224 = vadd.f32 %v2221, %v2222
        %v2225 = vadd.f32 %v1626, %v2223
        %v2226 = vadd.f32 %v1627, %v2224
        %v2227 = vsel %vm855, %v2225, 0.0
        %2228 = vadd.xlane.f32.xlu0 %v2227
        %v2229 = vpop.xlane.xlu0 %2228
        %v2230 = vsel %vm855, %v2226, 0.0
        %2231 = vadd.xlane.f32.xlu0 %v2230
        %v2232 = vpop.xlane.xlu0 %2231
        %v2233 = vmul.f32 %v2229, %v1453
        %v2234 = vmul.f32 %v2232, %v1453
        %v2235 = vsub.f32 %v2225, %v2233
        %v2236 = vsub.f32 %v2226, %v2234
        %v2237 = vmul.f32 %v2235, %v2235
        %v2238 = vmul.f32 %v2236, %v2236
        %v2239 = vsel %vm855, %v2237, 0.0
        %2240 = vadd.xlane.f32.xlu0 %v2239
        %v2241 = vpop.xlane.xlu0 %2240
        %v2242 = vsel %vm855, %v2238, 0.0
        %2243 = vadd.xlane.f32.xlu0 %v2242
        %v2244 = vpop.xlane.xlu0 %2243
        %v2245 = vmul.f32 %v2241, %v1453
        %v2246 = vmul.f32 %v2244, %v1453
        %v2247 = vadd.f32 %v2245, 1e-05
        %v2248 = vadd.f32 %v2246, 1e-05
        %v2249 = vrsqrt.pop %v2247
        %v2250 = vmul.f32 %v2249, %v2247
        %v2251 = vmul.f32 %v2250, %v2249
        %v2252 = vmul.f32 0.5, %v2251
        %v2253 = vsub.f32 1.5, %v2252
        %v2254 = vmul.f32 %v2249, %v2253
        %vm2255 = vweird.f32 %v2247
        %vm2256 = vweird.f32 %v2249
        %vm2257 = vmor %vm2255, %vm2256
        %v2258 = vsel %vm2257, %v2249, %v2254
        %v2259 = vrsqrt.pop %v2248
        %v2260 = vmul.f32 %v2259, %v2248
        %v2261 = vmul.f32 %v2260, %v2259
        %v2262 = vmul.f32 0.5, %v2261
        %v2263 = vsub.f32 1.5, %v2262
        %v2264 = vmul.f32 %v2259, %v2263
        %vm2265 = vweird.f32 %v2248
        %vm2266 = vweird.f32 %v2259
        %vm2267 = vmor %vm2265, %vm2266
        %v2268 = vsel %vm2267, %v2259, %v2264
        %v2269 = vmul.f32 %v2235, %v2258
        %v2270 = vmul.f32 %v2236, %v2268
        %v2271 = vperm.slane %v1629, 2
        %v2272 = vmul.f32 %v2269, %v2271
        %v2273 = vmul.f32 %v2270, %v2271
        %v2274 = vperm.slane %v1629, 3
        %v2275 = vadd.f32 %v2272, %v2274
        %v2276 = vadd.f32 %v2273, %v2274
        %s2277 = scalar_lea.vmem [#allocation13], 32
        %v2278 = vld [vmem:[%s2277] sm:$0xff]
        %v2279 = vld [vmem:[%s2277 + $0x8] sm:$0xff]
        %v2280 = vld [vmem:[%s2277 + $0x10] sm:$0xff]
        %v2281 = vld [vmem:[%s2277 + $0x18] sm:$0xff]
        %s2282 = scalar_lea.vmem [#allocation14], 1
        %v2283 = vld [vmem:[%s2282] sm:$0x1]
        %v2285 = vperm.slane %v2283, 0
        %v2288 = vsel %vm855, %v2275, 0
        %v2291 = vsel %vm855, %v2276, 0
        %2293 = vmatpush.msra.mxu0 0.0
        %2294 = vmatpush.msra.mxu0 0.0
        %2295 = vmatpush.msra.mxu0 0.0
        %2296 = vmatpush.msra.mxu0 0.0
        %2297 = vmatpush.msra.mxu0 0.0
        %2298 = vmatpush.msra.mxu0 0.0
        %2299 = vmatpush.msra.mxu0 0.0
        %2300 = vmatpush.msra.mxu0 0.0
        %2301 = vmatpush.msra.mxu0 0.0
        %2302 = vmatpush.msra.mxu0 0.0
        %2303 = vmatpush.msra.mxu0 0.0
        %2304 = vmatpush.msra.mxu0 0.0
        %2305 = vmatpush.msra.mxu0 %v2281
        %2306 = vmatpush.msra.mxu0 %v2280
        %2307 = vmatpush.msra.mxu0 %v2279
        %2308 = vmatpush.msra.mxu0 %v2278
        %2309 = vmatmul.f32.gmra.mxu0 %v2288
        %v2310 = vpop.f32.mrf.mxu0
        %v2311 = vadd.f32 %v2285, %v2310
        %2312 = vmatmul.f32.gmra.mxu0 %v2291
        %v2313 = vpop.f32.mrf.mxu0
        %v2314 = vadd.f32 %v2285, %v2313
        %2315 = vdwg.mxu0
        %v2316 = vmax.f32 %v2311, 0.0
        %v2317 = vmax.f32 %v2314, 0.0
        %s2318 = scalar_lea.vmem %s9, 64
        %v2319 = vld [vmem:[%s2318] sm:$0xff]
        %v2320 = vld [vmem:[%s2318 + $0x8] sm:$0xff]
        %v2321 = vld [vmem:[%s2318 + $0x10] sm:$0xff]
        %v2322 = vld [vmem:[%s2318 + $0x18] sm:$0xff]
        %v2323 = vld [vmem:[%s2318 + $0x20] sm:$0xff]
        %v2324 = vld [vmem:[%s2318 + $0x28] sm:$0xff]
        %v2325 = vld [vmem:[%s2318 + $0x30] sm:$0xff]
        %v2326 = vld [vmem:[%s2318 + $0x38] sm:$0xff]
        %v2327 = vperm.slane %v1629, 1
        %v2329 = vsel %vm1546, %v2316, 0
        %v2332 = vsel %vm1546, %v2317, 0
        %2334 = vmatpush.msra.mxu0 0.0
        %2335 = vmatpush.msra.mxu0 0.0
        %2336 = vmatpush.msra.mxu0 0.0
        %2337 = vmatpush.msra.mxu0 0.0
        %2338 = vmatpush.msra.mxu0 0.0
        %2339 = vmatpush.msra.mxu0 0.0
        %2340 = vmatpush.msra.mxu0 0.0
        %2341 = vmatpush.msra.mxu0 0.0
        %2342 = vmatpush.msra.mxu0 %v2326
        %2343 = vmatpush.msra.mxu0 %v2325
        %2344 = vmatpush.msra.mxu0 %v2324
        %2345 = vmatpush.msra.mxu0 %v2323
        %2346 = vmatpush.msra.mxu0 %v2322
        %2347 = vmatpush.msra.mxu0 %v2321
        %2348 = vmatpush.msra.mxu0 %v2320
        %2349 = vmatpush.msra.mxu0 %v2319
        %2350 = vmatmul.f32.gmra.mxu0 %v2329
        %v2351 = vpop.f32.mrf.mxu0
        %v2352 = vadd.f32 %v2327, %v2351
        %2353 = vmatmul.f32.gmra.mxu0 %v2332
        %v2354 = vpop.f32.mrf.mxu0
        %v2355 = vadd.f32 %v2327, %v2354
        %2356 = vdwg.mxu0
        %v2357 = vadd.f32 %v2275, %v2352
        %v2358 = vadd.f32 %v2276, %v2355
        %v2359 = vsel %vm855, %v2357, 0.0
        %2360 = vadd.xlane.f32.xlu0 %v2359
        %v2361 = vpop.xlane.xlu0 %2360
        %v2362 = vsel %vm855, %v2358, 0.0
        %2363 = vadd.xlane.f32.xlu0 %v2362
        %v2364 = vpop.xlane.xlu0 %2363
        %v2365 = vmul.f32 %v2361, %v1453
        %v2366 = vmul.f32 %v2364, %v1453
        %v2367 = vsub.f32 %v2357, %v2365
        %v2368 = vsub.f32 %v2358, %v2366
        %v2369 = vmul.f32 %v2367, %v2367
        %v2370 = vmul.f32 %v2368, %v2368
        %v2371 = vsel %vm855, %v2369, 0.0
        %2372 = vadd.xlane.f32.xlu0 %v2371
        %v2373 = vpop.xlane.xlu0 %2372
        %v2374 = vsel %vm855, %v2370, 0.0
        %2375 = vadd.xlane.f32.xlu0 %v2374
        %v2376 = vpop.xlane.xlu0 %2375
        %v2377 = vmul.f32 %v2373, %v1453
        %v2378 = vmul.f32 %v2376, %v1453
        %v2379 = vadd.f32 %v2377, 1e-05
        %v2380 = vadd.f32 %v2378, 1e-05
        %v2381 = vrsqrt.pop %v2379
        %v2382 = vmul.f32 %v2381, %v2379
        %v2383 = vmul.f32 %v2382, %v2381
        %v2384 = vmul.f32 0.5, %v2383
        %v2385 = vsub.f32 1.5, %v2384
        %v2386 = vmul.f32 %v2381, %v2385
        %vm2387 = vweird.f32 %v2379
        %vm2388 = vweird.f32 %v2381
        %vm2389 = vmor %vm2387, %vm2388
        %v2390 = vsel %vm2389, %v2381, %v2386
        %v2391 = vrsqrt.pop %v2380
        %v2392 = vmul.f32 %v2391, %v2380
        %v2393 = vmul.f32 %v2392, %v2391
        %v2394 = vmul.f32 0.5, %v2393
        %v2395 = vsub.f32 1.5, %v2394
        %v2396 = vmul.f32 %v2391, %v2395
        %vm2397 = vweird.f32 %v2380
        %vm2398 = vweird.f32 %v2391
        %vm2399 = vmor %vm2397, %vm2398
        %v2400 = vsel %vm2399, %v2391, %v2396
        %v2401 = vmul.f32 %v2367, %v2390
        %v2402 = vmul.f32 %v2368, %v2400
        %v2403 = vperm.slane %v1629, 4
        %v2404 = vmul.f32 %v2401, %v2403
        %v2405 = vmul.f32 %v2402, %v2403
        %v2406 = vperm.slane %v1629, 5
        %v2407 = vadd.f32 %v2404, %v2406
        %v2408 = vadd.f32 %v2405, %v2406
        %2409 = vst.msk [vmem:[%s833] sm:$0xff] %vm855, %v2407
        %2410 = vst.msk [vmem:[%s833 + $0x8] sm:$0xff] %vm855, %v2408
        %v2411 = vld [vmem:[%s18] sm:$0x3]
        %v2412 = vld [vmem:[%s17] sm:$0xff]
        %v2413 = vld [vmem:[%s17 + $0x8] sm:$0x1]
        %v2414 = vadd.f32 %v837, 0.0
        %v2415 = vld [vmem:[%s11] sm:$0xff]
        %v2416 = vld [vmem:[%s11 + $0x8] sm:$0xff]
        %v2417 = vld [vmem:[%s11 + $0x10] sm:$0xff]
        %v2418 = vld [vmem:[%s11 + $0x18] sm:$0xff]
        %v2419 = vld [vmem:[%s12] sm:$0x1]
        %v2420 = vld [vmem:[%s13] sm:$0xff]
        %v2421 = vld [vmem:[%s13 + $0x8] sm:$0xff]
        %v2422 = vld [vmem:[%s13 + $0x10] sm:$0xff]
        %v2423 = vld [vmem:[%s13 + $0x18] sm:$0xff]
        %v2425 = vperm.slane %v2419, 0
        %v2428 = vsel %vm855, %v2414, 0
        %2430 = vmatpush.msra.mxu0 0.0
        %2431 = vmatpush.msra.mxu0 0.0
        %2432 = vmatpush.msra.mxu0 0.0
        %2433 = vmatpush.msra.mxu0 0.0
        %2434 = vmatpush.msra.mxu0 0.0
        %2435 = vmatpush.msra.mxu0 0.0
        %2436 = vmatpush.msra.mxu0 0.0
        %2437 = vmatpush.msra.mxu0 0.0
        %2438 = vmatpush.msra.mxu0 0.0
        %2439 = vmatpush.msra.mxu0 0.0
        %2440 = vmatpush.msra.mxu0 0.0
        %2441 = vmatpush.msra.mxu0 0.0
        %2442 = vmatpush.msra.mxu0 %v2418
        %2443 = vmatpush.msra.mxu0 %v2417
        %2444 = vmatpush.msra.mxu0 %v2416
        %2445 = vmatpush.msra.mxu0 %v2415
        %2446 = vmatmul.f32.gmra.mxu0 %v2428
        %v2447 = vpop.f32.mrf.mxu0
        %v2448 = vadd.f32 %v2425, %v2447
        %2449 = vdwg.mxu0
        %2454 = vrot.lane.b32.xlu0 %v2415, 64
        %v2455 = vpop.permute.xlu0 %2454
        %2456 = vrot.lane.b32.xlu0 %v2416, 64
        %v2457 = vpop.permute.xlu0 %2456
        %2458 = vrot.lane.b32.xlu0 %v2417, 64
        %v2459 = vpop.permute.xlu0 %2458
        %2460 = vrot.lane.b32.xlu0 %v2418, 64
        %v2461 = vpop.permute.xlu0 %2460
        %2466 = vrot.lane.b32.xlu0 %v2425, 64
        %v2467 = vpop.permute.xlu0 %2466
        %v2470 = vsel %vm855, 0.0, 0
        %2472 = vmatpush.msra.mxu0 0.0
        %2473 = vmatpush.msra.mxu0 0.0
        %2474 = vmatpush.msra.mxu0 0.0
        %2475 = vmatpush.msra.mxu0 0.0
        %2476 = vmatpush.msra.mxu0 0.0
        %2477 = vmatpush.msra.mxu0 0.0
        %2478 = vmatpush.msra.mxu0 0.0
        %2479 = vmatpush.msra.mxu0 0.0
        %2480 = vmatpush.msra.mxu0 0.0
        %2481 = vmatpush.msra.mxu0 0.0
        %2482 = vmatpush.msra.mxu0 0.0
        %2483 = vmatpush.msra.mxu0 0.0
        %2484 = vmatpush.msra.mxu0 %v2461
        %2485 = vmatpush.msra.mxu0 %v2459
        %2486 = vmatpush.msra.mxu0 %v2457
        %2487 = vmatpush.msra.mxu0 %v2455
        %2488 = vmatmul.f32.gmra.mxu0 %v2470
        %v2489 = vpop.f32.mrf.mxu0
        %v2490 = vadd.f32 %v2467, %v2489
        %2491 = vdwg.mxu0
        %2493 = vrot.lane.b32.xlu0 %v2448, 96
        %v2494 = vpop.permute.xlu0 %2493
        %v2495 = vsel %vm942, %v2448, 0
        %v2497 = vsel %vm942, %v2494, 0
        %2499 = vmatpush.xpose.msra.mxu0 0.0
        %2500 = vmatpush.xpose.msra.mxu0 0.0
        %2501 = vmatpush.xpose.msra.mxu0 0.0
        %2502 = vmatpush.xpose.msra.mxu0 0.0
        %2503 = vmatpush.xpose.msra.mxu0 0.0
        %2504 = vmatpush.xpose.msra.mxu0 0.0
        %2505 = vmatpush.xpose.msra.mxu0 0.0
        %2506 = vmatpush.xpose.msra.mxu0 0.0
        %2507 = vmatpush.xpose.msra.mxu0 0.0
        %2508 = vmatpush.xpose.msra.mxu0 0.0
        %2509 = vmatpush.xpose.msra.mxu0 0.0
        %2510 = vmatpush.xpose.msra.mxu0 0.0
        %2511 = vmatpush.xpose.msra.mxu0 0.0
        %2512 = vmatpush.xpose.msra.mxu0 0.0
        %2513 = vmatpush.xpose.msra.mxu0 0.0
        %2514 = vmatpush.xpose.msra.mxu0 %v2497
        %2515 = vmatmul.f32.gmra.mxu0 %v2495
        %v2516 = vpop.f32.mrf.mxu0
        %v2517 = vadd.f32 0.0, %v2516
        %2518 = vdwg.mxu0
        %v2519 = vsel %vm942, %v2517, -inf
        %2520 = vmax.xlane.f32.xlu0 %v2519
        %v2521 = vpop.xlane.xlu0 %2520
        %v2522 = vsub.f32 %v2517, %v2521
        %v2523 = vmul.f32 %v2522, 1.442695
        %v2524 = vpow.pop %v2523
        %v2525 = vsel %vm942, %v2524, 0.0
        %2526 = vadd.xlane.f32.xlu0 %v2525
        %v2527 = vpop.xlane.xlu0 %2526
        %v2528 = vrcp.pop %v2527
        %v2529 = vmul.f32 %v2524, %v2528
        %v2531 = vsel %vm942, %v2529, 0
        %2533 = vmatpush.msra.mxu0 0.0
        %2534 = vmatpush.msra.mxu0 0.0
        %2535 = vmatpush.msra.mxu0 0.0
        %2536 = vmatpush.msra.mxu0 0.0
        %2537 = vmatpush.msra.mxu0 0.0
        %2538 = vmatpush.msra.mxu0 0.0
        %2539 = vmatpush.msra.mxu0 0.0
        %2540 = vmatpush.msra.mxu0 0.0
        %2541 = vmatpush.msra.mxu0 0.0
        %2542 = vmatpush.msra.mxu0 0.0
        %2543 = vmatpush.msra.mxu0 0.0
        %2544 = vmatpush.msra.mxu0 0.0
        %2545 = vmatpush.msra.mxu0 0.0
        %2546 = vmatpush.msra.mxu0 0.0
        %2547 = vmatpush.msra.mxu0 0.0
        %2548 = vmatpush.msra.mxu0 %v2490
        %2549 = vmatmul.f32.gmra.mxu0 %v2531
        %v2550 = vpop.f32.mrf.mxu0
        %v2551 = vadd.f32 0.0, %v2550
        %2552 = vdwg.mxu0
        %2553 = vrot.lane.b32.xlu0 %v2448, 120
        %v2554 = vpop.permute.xlu0 %2553
        %2555 = vrot.lane.b32.xlu0 %v2448, 88
        %v2556 = vpop.permute.xlu0 %2555
        %v2557 = vsel %vm942, %v2554, 0
        %v2559 = vsel %vm942, %v2556, 0
        %2561 = vmatpush.xpose.msra.mxu0 0.0
        %2562 = vmatpush.xpose.msra.mxu0 0.0
        %2563 = vmatpush.xpose.msra.mxu0 0.0
        %2564 = vmatpush.xpose.msra.mxu0 0.0
        %2565 = vmatpush.xpose.msra.mxu0 0.0
        %2566 = vmatpush.xpose.msra.mxu0 0.0
        %2567 = vmatpush.xpose.msra.mxu0 0.0
        %2568 = vmatpush.xpose.msra.mxu0 0.0
        %2569 = vmatpush.xpose.msra.mxu0 0.0
        %2570 = vmatpush.xpose.msra.mxu0 0.0
        %2571 = vmatpush.xpose.msra.mxu0 0.0
        %2572 = vmatpush.xpose.msra.mxu0 0.0
        %2573 = vmatpush.xpose.msra.mxu0 0.0
        %2574 = vmatpush.xpose.msra.mxu0 0.0
        %2575 = vmatpush.xpose.msra.mxu0 0.0
        %2576 = vmatpush.xpose.msra.mxu0 %v2559
        %2577 = vmatmul.f32.gmra.mxu0 %v2557
        %v2578 = vpop.f32.mrf.mxu0
        %v2579 = vadd.f32 0.0, %v2578
        %2580 = vdwg.mxu0
        %v2581 = vsel %vm942, %v2579, -inf
        %2582 = vmax.xlane.f32.xlu0 %v2581
        %v2583 = vpop.xlane.xlu0 %2582
        %v2584 = vsub.f32 %v2579, %v2583
        %v2585 = vmul.f32 %v2584, 1.442695
        %v2586 = vpow.pop %v2585
        %v2587 = vsel %vm942, %v2586, 0.0
        %2588 = vadd.xlane.f32.xlu0 %v2587
        %v2589 = vpop.xlane.xlu0 %2588
        %v2590 = vrcp.pop %v2589
        %v2591 = vmul.f32 %v2586, %v2590
        %2593 = vrot.lane.b32.xlu0 %v2490, 120
        %v2594 = vpop.permute.xlu0 %2593
        %v2597 = vsel %vm942, %v2591, 0
        %2599 = vmatpush.msra.mxu0 0.0
        %2600 = vmatpush.msra.mxu0 0.0
        %2601 = vmatpush.msra.mxu0 0.0
        %2602 = vmatpush.msra.mxu0 0.0
        %2603 = vmatpush.msra.mxu0 0.0
        %2604 = vmatpush.msra.mxu0 0.0
        %2605 = vmatpush.msra.mxu0 0.0
        %2606 = vmatpush.msra.mxu0 0.0
        %2607 = vmatpush.msra.mxu0 0.0
        %2608 = vmatpush.msra.mxu0 0.0
        %2609 = vmatpush.msra.mxu0 0.0
        %2610 = vmatpush.msra.mxu0 0.0
        %2611 = vmatpush.msra.mxu0 0.0
        %2612 = vmatpush.msra.mxu0 0.0
        %2613 = vmatpush.msra.mxu0 0.0
        %2614 = vmatpush.msra.mxu0 %v2594
        %2615 = vmatmul.f32.gmra.mxu0 %v2597
        %v2616 = vpop.f32.mrf.mxu0
        %v2617 = vadd.f32 0.0, %v2616
        %2618 = vdwg.mxu0
        %v2620 = vsel %vm942, %v2617, 0
        %2622 = vmatpush.msra.mxu0 0.0
        %2623 = vmatpush.msra.mxu0 0.0
        %2624 = vmatpush.msra.mxu0 0.0
        %2625 = vmatpush.msra.mxu0 0.0
        %2626 = vmatpush.msra.mxu0 0.0
        %2627 = vmatpush.msra.mxu0 0.0
        %2628 = vmatpush.msra.mxu0 0.0
        %2629 = vmatpush.msra.mxu0 0.0
        %2630 = vmatpush.msra.mxu0 0.0
        %2631 = vmatpush.msra.mxu0 0.0
        %2632 = vmatpush.msra.mxu0 0.0
        %2633 = vmatpush.msra.mxu0 0.0
        %2634 = vmatpush.msra.mxu0 0.0
        %2635 = vmatpush.msra.mxu0 0.0
        %2636 = vmatpush.msra.mxu0 0.0
        %2637 = vmatpush.msra.mxu0 %v2421
        %2638 = vmatmul.f32.gmra.mxu0 %v2620
        %v2639 = vpop.f32.mrf.mxu0
        %v2640 = vadd.f32 0.0, %v2639
        %2641 = vdwg.mxu0
        %v2643 = vsel %vm942, %v2551, 0
        %2645 = vmatpush.msra.mxu0 0.0
        %2646 = vmatpush.msra.mxu0 0.0
        %2647 = vmatpush.msra.mxu0 0.0
        %2648 = vmatpush.msra.mxu0 0.0
        %2649 = vmatpush.msra.mxu0 0.0
        %2650 = vmatpush.msra.mxu0 0.0
        %2651 = vmatpush.msra.mxu0 0.0
        %2652 = vmatpush.msra.mxu0 0.0
        %2653 = vmatpush.msra.mxu0 0.0
        %2654 = vmatpush.msra.mxu0 0.0
        %2655 = vmatpush.msra.mxu0 0.0
        %2656 = vmatpush.msra.mxu0 0.0
        %2657 = vmatpush.msra.mxu0 0.0
        %2658 = vmatpush.msra.mxu0 0.0
        %2659 = vmatpush.msra.mxu0 0.0
        %2660 = vmatpush.msra.mxu0 %v2420
        %2661 = vmatmul.f32.gmra.mxu0 %v2643
        %v2662 = vpop.f32.mrf.mxu0
        %v2663 = vadd.f32 %v2640, %v2662
        %2664 = vdwg.mxu0
        %2665 = vrot.lane.b32.xlu0 %v2448, 112
        %v2666 = vpop.permute.xlu0 %2665
        %2667 = vrot.lane.b32.xlu0 %v2448, 80
        %v2668 = vpop.permute.xlu0 %2667
        %v2669 = vsel %vm942, %v2666, 0
        %v2671 = vsel %vm942, %v2668, 0
        %2673 = vmatpush.xpose.msra.mxu0 0.0
        %2674 = vmatpush.xpose.msra.mxu0 0.0
        %2675 = vmatpush.xpose.msra.mxu0 0.0
        %2676 = vmatpush.xpose.msra.mxu0 0.0
        %2677 = vmatpush.xpose.msra.mxu0 0.0
        %2678 = vmatpush.xpose.msra.mxu0 0.0
        %2679 = vmatpush.xpose.msra.mxu0 0.0
        %2680 = vmatpush.xpose.msra.mxu0 0.0
        %2681 = vmatpush.xpose.msra.mxu0 0.0
        %2682 = vmatpush.xpose.msra.mxu0 0.0
        %2683 = vmatpush.xpose.msra.mxu0 0.0
        %2684 = vmatpush.xpose.msra.mxu0 0.0
        %2685 = vmatpush.xpose.msra.mxu0 0.0
        %2686 = vmatpush.xpose.msra.mxu0 0.0
        %2687 = vmatpush.xpose.msra.mxu0 0.0
        %2688 = vmatpush.xpose.msra.mxu0 %v2671
        %2689 = vmatmul.f32.gmra.mxu0 %v2669
        %v2690 = vpop.f32.mrf.mxu0
        %v2691 = vadd.f32 0.0, %v2690
        %2692 = vdwg.mxu0
        %v2693 = vsel %vm942, %v2691, -inf
        %2694 = vmax.xlane.f32.xlu0 %v2693
        %v2695 = vpop.xlane.xlu0 %2694
        %v2696 = vsub.f32 %v2691, %v2695
        %v2697 = vmul.f32 %v2696, 1.442695
        %v2698 = vpow.pop %v2697
        %v2699 = vsel %vm942, %v2698, 0.0
        %2700 = vadd.xlane.f32.xlu0 %v2699
        %v2701 = vpop.xlane.xlu0 %2700
        %v2702 = vrcp.pop %v2701
        %v2703 = vmul.f32 %v2698, %v2702
        %2704 = vrot.lane.b32.xlu0 %v2490, 112
        %v2705 = vpop.permute.xlu0 %2704
        %v2708 = vsel %vm942, %v2703, 0
        %2710 = vmatpush.msra.mxu0 0.0
        %2711 = vmatpush.msra.mxu0 0.0
        %2712 = vmatpush.msra.mxu0 0.0
        %2713 = vmatpush.msra.mxu0 0.0
        %2714 = vmatpush.msra.mxu0 0.0
        %2715 = vmatpush.msra.mxu0 0.0
        %2716 = vmatpush.msra.mxu0 0.0
        %2717 = vmatpush.msra.mxu0 0.0
        %2718 = vmatpush.msra.mxu0 0.0
        %2719 = vmatpush.msra.mxu0 0.0
        %2720 = vmatpush.msra.mxu0 0.0
        %2721 = vmatpush.msra.mxu0 0.0
        %2722 = vmatpush.msra.mxu0 0.0
        %2723 = vmatpush.msra.mxu0 0.0
        %2724 = vmatpush.msra.mxu0 0.0
        %2725 = vmatpush.msra.mxu0 %v2705
        %2726 = vmatmul.f32.gmra.mxu0 %v2708
        %v2727 = vpop.f32.mrf.mxu0
        %v2728 = vadd.f32 0.0, %v2727
        %2729 = vdwg.mxu0
        %v2731 = vsel %vm942, %v2728, 0
        %2733 = vmatpush.msra.mxu0 0.0
        %2734 = vmatpush.msra.mxu0 0.0
        %2735 = vmatpush.msra.mxu0 0.0
        %2736 = vmatpush.msra.mxu0 0.0
        %2737 = vmatpush.msra.mxu0 0.0
        %2738 = vmatpush.msra.mxu0 0.0
        %2739 = vmatpush.msra.mxu0 0.0
        %2740 = vmatpush.msra.mxu0 0.0
        %2741 = vmatpush.msra.mxu0 0.0
        %2742 = vmatpush.msra.mxu0 0.0
        %2743 = vmatpush.msra.mxu0 0.0
        %2744 = vmatpush.msra.mxu0 0.0
        %2745 = vmatpush.msra.mxu0 0.0
        %2746 = vmatpush.msra.mxu0 0.0
        %2747 = vmatpush.msra.mxu0 0.0
        %2748 = vmatpush.msra.mxu0 %v2422
        %2749 = vmatmul.f32.gmra.mxu0 %v2731
        %v2750 = vpop.f32.mrf.mxu0
        %v2751 = vadd.f32 0.0, %v2750
        %2752 = vdwg.mxu0
        %v2753 = vadd.f32 %v2663, %v2751
        %2754 = vrot.lane.b32.xlu0 %v2448, 104
        %v2755 = vpop.permute.xlu0 %2754
        %2756 = vrot.lane.b32.xlu0 %v2448, 72
        %v2757 = vpop.permute.xlu0 %2756
        %v2758 = vsel %vm942, %v2755, 0
        %v2760 = vsel %vm942, %v2757, 0
        %2762 = vmatpush.xpose.msra.mxu0 0.0
        %2763 = vmatpush.xpose.msra.mxu0 0.0
        %2764 = vmatpush.xpose.msra.mxu0 0.0
        %2765 = vmatpush.xpose.msra.mxu0 0.0
        %2766 = vmatpush.xpose.msra.mxu0 0.0
        %2767 = vmatpush.xpose.msra.mxu0 0.0
        %2768 = vmatpush.xpose.msra.mxu0 0.0
        %2769 = vmatpush.xpose.msra.mxu0 0.0
        %2770 = vmatpush.xpose.msra.mxu0 0.0
        %2771 = vmatpush.xpose.msra.mxu0 0.0
        %2772 = vmatpush.xpose.msra.mxu0 0.0
        %2773 = vmatpush.xpose.msra.mxu0 0.0
        %2774 = vmatpush.xpose.msra.mxu0 0.0
        %2775 = vmatpush.xpose.msra.mxu0 0.0
        %2776 = vmatpush.xpose.msra.mxu0 0.0
        %2777 = vmatpush.xpose.msra.mxu0 %v2760
        %2778 = vmatmul.f32.gmra.mxu0 %v2758
        %v2779 = vpop.f32.mrf.mxu0
        %v2780 = vadd.f32 0.0, %v2779
        %2781 = vdwg.mxu0
        %v2782 = vsel %vm942, %v2780, -inf
        %2783 = vmax.xlane.f32.xlu0 %v2782
        %v2784 = vpop.xlane.xlu0 %2783
        %v2785 = vsub.f32 %v2780, %v2784
        %v2786 = vmul.f32 %v2785, 1.442695
        %v2787 = vpow.pop %v2786
        %v2788 = vsel %vm942, %v2787, 0.0
        %2789 = vadd.xlane.f32.xlu0 %v2788
        %v2790 = vpop.xlane.xlu0 %2789
        %v2791 = vrcp.pop %v2790
        %v2792 = vmul.f32 %v2787, %v2791
        %2793 = vrot.lane.b32.xlu0 %v2490, 104
        %v2794 = vpop.permute.xlu0 %2793
        %v2797 = vsel %vm942, %v2792, 0
        %2799 = vmatpush.msra.mxu0 0.0
        %2800 = vmatpush.msra.mxu0 0.0
        %2801 = vmatpush.msra.mxu0 0.0
        %2802 = vmatpush.msra.mxu0 0.0
        %2803 = vmatpush.msra.mxu0 0.0
        %2804 = vmatpush.msra.mxu0 0.0
        %2805 = vmatpush.msra.mxu0 0.0
        %2806 = vmatpush.msra.mxu0 0.0
        %2807 = vmatpush.msra.mxu0 0.0
        %2808 = vmatpush.msra.mxu0 0.0
        %2809 = vmatpush.msra.mxu0 0.0
        %2810 = vmatpush.msra.mxu0 0.0
        %2811 = vmatpush.msra.mxu0 0.0
        %2812 = vmatpush.msra.mxu0 0.0
        %2813 = vmatpush.msra.mxu0 0.0
        %2814 = vmatpush.msra.mxu0 %v2794
        %2815 = vmatmul.f32.gmra.mxu0 %v2797
        %v2816 = vpop.f32.mrf.mxu0
        %v2817 = vadd.f32 0.0, %v2816
        %2818 = vdwg.mxu0
        %v2820 = vsel %vm942, %v2817, 0
        %2822 = vmatpush.msra.mxu0 0.0
        %2823 = vmatpush.msra.mxu0 0.0
        %2824 = vmatpush.msra.mxu0 0.0
        %2825 = vmatpush.msra.mxu0 0.0
        %2826 = vmatpush.msra.mxu0 0.0
        %2827 = vmatpush.msra.mxu0 0.0
        %2828 = vmatpush.msra.mxu0 0.0
        %2829 = vmatpush.msra.mxu0 0.0
        %2830 = vmatpush.msra.mxu0 0.0
        %2831 = vmatpush.msra.mxu0 0.0
        %2832 = vmatpush.msra.mxu0 0.0
        %2833 = vmatpush.msra.mxu0 0.0
        %2834 = vmatpush.msra.mxu0 0.0
        %2835 = vmatpush.msra.mxu0 0.0
        %2836 = vmatpush.msra.mxu0 0.0
        %2837 = vmatpush.msra.mxu0 %v2423
        %2838 = vmatmul.f32.gmra.mxu0 %v2820
        %v2839 = vpop.f32.mrf.mxu0
        %v2840 = vadd.f32 0.0, %v2839
        %2841 = vdwg.mxu0
        %v2842 = vadd.f32 %v2753, %v2840
        %v2843 = vperm.slane %v2412, 0
        %v2844 = vadd.f32 %v2842, %v2843
        %v2845 = vadd.f32 %v2844, 0.0
        %v2846 = vsel %vm855, %v2845, 0.0
        %2847 = vadd.xlane.f32.xlu0 %v2846
        %v2848 = vpop.xlane.xlu0 %2847
        %v2849 = vmul.f32 %v2848, %v1453
        %v2850 = vsub.f32 %v2845, %v2849
        %v2851 = vmul.f32 %v2850, %v2850
        %v2852 = vsel %vm855, %v2851, 0.0
        %2853 = vadd.xlane.f32.xlu0 %v2852
        %v2854 = vpop.xlane.xlu0 %2853
        %v2855 = vmul.f32 %v2854, %v1453
        %v2856 = vadd.f32 %v2855, 1e-05
        %v2857 = vrsqrt.pop %v2856
        %v2858 = vmul.f32 %v2857, %v2856
        %v2859 = vmul.f32 %v2858, %v2857
        %v2860 = vmul.f32 0.5, %v2859
        %v2861 = vsub.f32 1.5, %v2860
        %v2862 = vmul.f32 %v2857, %v2861
        %vm2863 = vweird.f32 %v2856
        %vm2864 = vweird.f32 %v2857
        %vm2865 = vmor %vm2863, %vm2864
        %v2866 = vsel %vm2865, %v2857, %v2862
        %v2867 = vmul.f32 %v2850, %v2866
        %v2868 = vperm.slane %v2412, 3
        %v2869 = vmul.f32 %v2867, %v2868
        %v2870 = vperm.slane %v2412, 4
        %v2871 = vadd.f32 %v2869, %v2870
        %v2872 = vadd.f32 %v2871, %v837
        %v2873 = vadd.f32 %v2407, %v835
        %v2874 = vadd.f32 %v2408, %v836
        %s2875 = scalar_lea.vmem %s11, 32
        %v2876 = vld [vmem:[%s2875] sm:$0xff]
        %v2877 = vld [vmem:[%s2875 + $0x8] sm:$0xff]
        %v2878 = vld [vmem:[%s2875 + $0x10] sm:$0xff]
        %v2879 = vld [vmem:[%s2875 + $0x18] sm:$0xff]
        %s2880 = scalar_lea.vmem %s12, 1
        %v2881 = vld [vmem:[%s2880] sm:$0x1]
        %s2882 = scalar_lea.vmem %s13, 32
        %v2883 = vld [vmem:[%s2882] sm:$0xff]
        %v2884 = vld [vmem:[%s2882 + $0x8] sm:$0xff]
        %v2885 = vld [vmem:[%s2882 + $0x10] sm:$0xff]
        %v2886 = vld [vmem:[%s2882 + $0x18] sm:$0xff]
        %v2888 = vperm.slane %v2881, 0
        %v2891 = vsel %vm855, %v2872, 0
        %2893 = vmatpush.msra.mxu0 0.0
        %2894 = vmatpush.msra.mxu0 0.0
        %2895 = vmatpush.msra.mxu0 0.0
        %2896 = vmatpush.msra.mxu0 0.0
        %2897 = vmatpush.msra.mxu0 0.0
        %2898 = vmatpush.msra.mxu0 0.0
        %2899 = vmatpush.msra.mxu0 0.0
        %2900 = vmatpush.msra.mxu0 0.0
        %2901 = vmatpush.msra.mxu0 0.0
        %2902 = vmatpush.msra.mxu0 0.0
        %2903 = vmatpush.msra.mxu0 0.0
        %2904 = vmatpush.msra.mxu0 0.0
        %2905 = vmatpush.msra.mxu0 %v2879
        %2906 = vmatpush.msra.mxu0 %v2878
        %2907 = vmatpush.msra.mxu0 %v2877
        %2908 = vmatpush.msra.mxu0 %v2876
        %2909 = vmatmul.f32.gmra.mxu0 %v2891
        %v2910 = vpop.f32.mrf.mxu0
        %v2911 = vadd.f32 %v2888, %v2910
        %2912 = vdwg.mxu0
        %2917 = vrot.lane.b32.xlu0 %v2876, 96
        %v2918 = vpop.permute.xlu0 %2917
        %2919 = vrot.lane.b32.xlu0 %v2877, 96
        %v2920 = vpop.permute.xlu0 %2919
        %2921 = vrot.lane.b32.xlu0 %v2878, 96
        %v2922 = vpop.permute.xlu0 %2921
        %2923 = vrot.lane.b32.xlu0 %v2879, 96
        %v2924 = vpop.permute.xlu0 %2923
        %2929 = vrot.lane.b32.xlu0 %v2888, 96
        %v2930 = vpop.permute.xlu0 %2929
        %v2933 = vsel %vm855, %v2873, 0
        %v2936 = vsel %vm855, %v2874, 0
        %2938 = vmatpush.msra.mxu0 0.0
        %2939 = vmatpush.msra.mxu0 0.0
        %2940 = vmatpush.msra.mxu0 0.0
        %2941 = vmatpush.msra.mxu0 0.0
        %2942 = vmatpush.msra.mxu0 0.0
        %2943 = vmatpush.msra.mxu0 0.0
        %2944 = vmatpush.msra.mxu0 0.0
        %2945 = vmatpush.msra.mxu0 0.0
        %2946 = vmatpush.msra.mxu0 0.0
        %2947 = vmatpush.msra.mxu0 0.0
        %2948 = vmatpush.msra.mxu0 0.0
        %2949 = vmatpush.msra.mxu0 0.0
        %2950 = vmatpush.msra.mxu0 %v2924
        %2951 = vmatpush.msra.mxu0 %v2922
        %2952 = vmatpush.msra.mxu0 %v2920
        %2953 = vmatpush.msra.mxu0 %v2918
        %2954 = vmatmul.f32.gmra.mxu0 %v2933
        %v2955 = vpop.f32.mrf.mxu0
        %v2956 = vadd.f32 %v2930, %v2955
        %2957 = vmatmul.f32.gmra.mxu0 %v2936
        %v2958 = vpop.f32.mrf.mxu0
        %v2959 = vadd.f32 %v2930, %v2958
        %2960 = vdwg.mxu0
        %2961 = vrot.lane.b32.xlu0 %v2876, 64
        %v2962 = vpop.permute.xlu0 %2961
        %2963 = vrot.lane.b32.xlu0 %v2877, 64
        %v2964 = vpop.permute.xlu0 %2963
        %2965 = vrot.lane.b32.xlu0 %v2878, 64
        %v2966 = vpop.permute.xlu0 %2965
        %2967 = vrot.lane.b32.xlu0 %v2879, 64
        %v2968 = vpop.permute.xlu0 %2967
        %2973 = vrot.lane.b32.xlu0 %v2888, 64
        %v2974 = vpop.permute.xlu0 %2973
        %v2977 = vsel %vm855, %v2407, 0
        %v2980 = vsel %vm855, %v2408, 0
        %2982 = vmatpush.msra.mxu0 0.0
        %2983 = vmatpush.msra.mxu0 0.0
        %2984 = vmatpush.msra.mxu0 0.0
        %2985 = vmatpush.msra.mxu0 0.0
        %2986 = vmatpush.msra.mxu0 0.0
        %2987 = vmatpush.msra.mxu0 0.0
        %2988 = vmatpush.msra.mxu0 0.0
        %2989 = vmatpush.msra.mxu0 0.0
        %2990 = vmatpush.msra.mxu0 0.0
        %2991 = vmatpush.msra.mxu0 0.0
        %2992 = vmatpush.msra.mxu0 0.0
        %2993 = vmatpush.msra.mxu0 0.0
        %2994 = vmatpush.msra.mxu0 %v2968
        %2995 = vmatpush.msra.mxu0 %v2966
        %2996 = vmatpush.msra.mxu0 %v2964
        %2997 = vmatpush.msra.mxu0 %v2962
        %2998 = vmatmul.f32.gmra.mxu0 %v2977
        %v2999 = vpop.f32.mrf.mxu0
        %v3000 = vadd.f32 %v2974, %v2999
        %3001 = vmatmul.f32.gmra.mxu0 %v2980
        %v3002 = vpop.f32.mrf.mxu0
        %v3003 = vadd.f32 %v2974, %v3002
        %3004 = vdwg.mxu0
        %v3006 = vsel %vm942, %v2911, 0
        %v3009 = vsel %vm942, %v2956, 0
        %v3012 = vsel %vm942, %v2959, 0
        %3014 = vmatpush.xpose.msra.mxu0 0.0
        %3015 = vmatpush.xpose.msra.mxu0 0.0
        %3016 = vmatpush.xpose.msra.mxu0 0.0
        %3017 = vmatpush.xpose.msra.mxu0 0.0
        %3018 = vmatpush.xpose.msra.mxu0 0.0
        %3019 = vmatpush.xpose.msra.mxu0 0.0
        %3020 = vmatpush.xpose.msra.mxu0 0.0
        %3021 = vmatpush.xpose.msra.mxu0 0.0
        %3022 = vmatpush.xpose.msra.mxu0 0.0
        %3023 = vmatpush.xpose.msra.mxu0 0.0
        %3024 = vmatpush.xpose.msra.mxu0 0.0
        %3025 = vmatpush.xpose.msra.mxu0 0.0
        %3026 = vmatpush.xpose.msra.mxu0 0.0
        %3027 = vmatpush.xpose.msra.mxu0 0.0
        %3028 = vmatpush.xpose.msra.mxu0 %v3012
        %3029 = vmatpush.xpose.msra.mxu0 %v3009
        %3030 = vmatmul.f32.gmra.mxu0 %v3006
        %v3031 = vpop.f32.mrf.mxu0
        %v3032 = vadd.f32 %v934, %v3031
        %3033 = vdwg.mxu0
        %v3034 = vsel %vm974, %v3032, -inf
        %3035 = vmax.xlane.f32.xlu0 %v3034
        %v3036 = vpop.xlane.xlu0 %3035
        %v3037 = vsub.f32 %v3032, %v3036
        %v3038 = vmul.f32 %v3037, 1.442695
        %v3039 = vpow.pop %v3038
        %v3040 = vsel %vm974, %v3039, 0.0
        %3041 = vadd.xlane.f32.xlu0 %v3040
        %v3042 = vpop.xlane.xlu0 %3041
        %v3043 = vrcp.pop %v3042
        %v3044 = vmul.f32 %v3039, %v3043
        %v3046 = vsel %vm974, %v3044, 0
        %3048 = vmatpush.msra.mxu0 0.0
        %3049 = vmatpush.msra.mxu0 0.0
        %3050 = vmatpush.msra.mxu0 0.0
        %3051 = vmatpush.msra.mxu0 0.0
        %3052 = vmatpush.msra.mxu0 0.0
        %3053 = vmatpush.msra.mxu0 0.0
        %3054 = vmatpush.msra.mxu0 0.0
        %3055 = vmatpush.msra.mxu0 0.0
        %3056 = vmatpush.msra.mxu0 0.0
        %3057 = vmatpush.msra.mxu0 0.0
        %3058 = vmatpush.msra.mxu0 0.0
        %3059 = vmatpush.msra.mxu0 0.0
        %3060 = vmatpush.msra.mxu0 0.0
        %3061 = vmatpush.msra.mxu0 0.0
        %3062 = vmatpush.msra.mxu0 %v3003
        %3063 = vmatpush.msra.mxu0 %v3000
        %3064 = vmatmul.f32.gmra.mxu0 %v3046
        %v3065 = vpop.f32.mrf.mxu0
        %v3066 = vadd.f32 0.0, %v3065
        %3067 = vdwg.mxu0
        %3068 = vrot.lane.b32.xlu0 %v2911, 120
        %v3069 = vpop.permute.xlu0 %3068
        %3070 = vrot.lane.b32.xlu0 %v2956, 120
        %v3071 = vpop.permute.xlu0 %3070
        %3072 = vrot.lane.b32.xlu0 %v2959, 120
        %v3073 = vpop.permute.xlu0 %3072
        %v3074 = vsel %vm942, %v3069, 0
        %v3076 = vsel %vm942, %v3071, 0
        %v3078 = vsel %vm942, %v3073, 0
        %3080 = vmatpush.xpose.msra.mxu0 0.0
        %3081 = vmatpush.xpose.msra.mxu0 0.0
        %3082 = vmatpush.xpose.msra.mxu0 0.0
        %3083 = vmatpush.xpose.msra.mxu0 0.0
        %3084 = vmatpush.xpose.msra.mxu0 0.0
        %3085 = vmatpush.xpose.msra.mxu0 0.0
        %3086 = vmatpush.xpose.msra.mxu0 0.0
        %3087 = vmatpush.xpose.msra.mxu0 0.0
        %3088 = vmatpush.xpose.msra.mxu0 0.0
        %3089 = vmatpush.xpose.msra.mxu0 0.0
        %3090 = vmatpush.xpose.msra.mxu0 0.0
        %3091 = vmatpush.xpose.msra.mxu0 0.0
        %3092 = vmatpush.xpose.msra.mxu0 0.0
        %3093 = vmatpush.xpose.msra.mxu0 0.0
        %3094 = vmatpush.xpose.msra.mxu0 %v3078
        %3095 = vmatpush.xpose.msra.mxu0 %v3076
        %3096 = vmatmul.f32.gmra.mxu0 %v3074
        %v3097 = vpop.f32.mrf.mxu0
        %v3098 = vadd.f32 %v934, %v3097
        %3099 = vdwg.mxu0
        %v3100 = vsel %vm974, %v3098, -inf
        %3101 = vmax.xlane.f32.xlu0 %v3100
        %v3102 = vpop.xlane.xlu0 %3101
        %v3103 = vsub.f32 %v3098, %v3102
        %v3104 = vmul.f32 %v3103, 1.442695
        %v3105 = vpow.pop %v3104
        %v3106 = vsel %vm974, %v3105, 0.0
        %3107 = vadd.xlane.f32.xlu0 %v3106
        %v3108 = vpop.xlane.xlu0 %3107
        %v3109 = vrcp.pop %v3108
        %v3110 = vmul.f32 %v3105, %v3109
        %3113 = vrot.lane.b32.xlu0 %v3000, 120
        %v3114 = vpop.permute.xlu0 %3113
        %3115 = vrot.lane.b32.xlu0 %v3003, 120
        %v3116 = vpop.permute.xlu0 %3115
        %v3120 = vsel %vm974, %v3110, 0
        %3122 = vmatpush.msra.mxu0 0.0
        %3123 = vmatpush.msra.mxu0 0.0
        %3124 = vmatpush.msra.mxu0 0.0
        %3125 = vmatpush.msra.mxu0 0.0
        %3126 = vmatpush.msra.mxu0 0.0
        %3127 = vmatpush.msra.mxu0 0.0
        %3128 = vmatpush.msra.mxu0 0.0
        %3129 = vmatpush.msra.mxu0 0.0
        %3130 = vmatpush.msra.mxu0 0.0
        %3131 = vmatpush.msra.mxu0 0.0
        %3132 = vmatpush.msra.mxu0 0.0
        %3133 = vmatpush.msra.mxu0 0.0
        %3134 = vmatpush.msra.mxu0 0.0
        %3135 = vmatpush.msra.mxu0 0.0
        %3136 = vmatpush.msra.mxu0 %v3116
        %3137 = vmatpush.msra.mxu0 %v3114
        %3138 = vmatmul.f32.gmra.mxu0 %v3120
        %v3139 = vpop.f32.mrf.mxu0
        %v3140 = vadd.f32 0.0, %v3139
        %3141 = vdwg.mxu0
        %v3143 = vsel %vm942, %v3140, 0
        %3145 = vmatpush.msra.mxu0 0.0
        %3146 = vmatpush.msra.mxu0 0.0
        %3147 = vmatpush.msra.mxu0 0.0
        %3148 = vmatpush.msra.mxu0 0.0
        %3149 = vmatpush.msra.mxu0 0.0
        %3150 = vmatpush.msra.mxu0 0.0
        %3151 = vmatpush.msra.mxu0 0.0
        %3152 = vmatpush.msra.mxu0 0.0
        %3153 = vmatpush.msra.mxu0 0.0
        %3154 = vmatpush.msra.mxu0 0.0
        %3155 = vmatpush.msra.mxu0 0.0
        %3156 = vmatpush.msra.mxu0 0.0
        %3157 = vmatpush.msra.mxu0 0.0
        %3158 = vmatpush.msra.mxu0 0.0
        %3159 = vmatpush.msra.mxu0 0.0
        %3160 = vmatpush.msra.mxu0 %v2884
        %3161 = vmatmul.f32.gmra.mxu0 %v3143
        %v3162 = vpop.f32.mrf.mxu0
        %v3163 = vadd.f32 0.0, %v3162
        %3164 = vdwg.mxu0
        %v3166 = vsel %vm942, %v3066, 0
        %3168 = vmatpush.msra.mxu0 0.0
        %3169 = vmatpush.msra.mxu0 0.0
        %3170 = vmatpush.msra.mxu0 0.0
        %3171 = vmatpush.msra.mxu0 0.0
        %3172 = vmatpush.msra.mxu0 0.0
        %3173 = vmatpush.msra.mxu0 0.0
        %3174 = vmatpush.msra.mxu0 0.0
        %3175 = vmatpush.msra.mxu0 0.0
        %3176 = vmatpush.msra.mxu0 0.0
        %3177 = vmatpush.msra.mxu0 0.0
        %3178 = vmatpush.msra.mxu0 0.0
        %3179 = vmatpush.msra.mxu0 0.0
        %3180 = vmatpush.msra.mxu0 0.0
        %3181 = vmatpush.msra.mxu0 0.0
        %3182 = vmatpush.msra.mxu0 0.0
        %3183 = vmatpush.msra.mxu0 %v2883
        %3184 = vmatmul.f32.gmra.mxu0 %v3166
        %v3185 = vpop.f32.mrf.mxu0
        %v3186 = vadd.f32 %v3163, %v3185
        %3187 = vdwg.mxu0
        %3188 = vrot.lane.b32.xlu0 %v2911, 112
        %v3189 = vpop.permute.xlu0 %3188
        %3190 = vrot.lane.b32.xlu0 %v2956, 112
        %v3191 = vpop.permute.xlu0 %3190
        %3192 = vrot.lane.b32.xlu0 %v2959, 112
        %v3193 = vpop.permute.xlu0 %3192
        %v3194 = vsel %vm942, %v3189, 0
        %v3196 = vsel %vm942, %v3191, 0
        %v3198 = vsel %vm942, %v3193, 0
        %3200 = vmatpush.xpose.msra.mxu0 0.0
        %3201 = vmatpush.xpose.msra.mxu0 0.0
        %3202 = vmatpush.xpose.msra.mxu0 0.0
        %3203 = vmatpush.xpose.msra.mxu0 0.0
        %3204 = vmatpush.xpose.msra.mxu0 0.0
        %3205 = vmatpush.xpose.msra.mxu0 0.0
        %3206 = vmatpush.xpose.msra.mxu0 0.0
        %3207 = vmatpush.xpose.msra.mxu0 0.0
        %3208 = vmatpush.xpose.msra.mxu0 0.0
        %3209 = vmatpush.xpose.msra.mxu0 0.0
        %3210 = vmatpush.xpose.msra.mxu0 0.0
        %3211 = vmatpush.xpose.msra.mxu0 0.0
        %3212 = vmatpush.xpose.msra.mxu0 0.0
        %3213 = vmatpush.xpose.msra.mxu0 0.0
        %3214 = vmatpush.xpose.msra.mxu0 %v3198
        %3215 = vmatpush.xpose.msra.mxu0 %v3196
        %3216 = vmatmul.f32.gmra.mxu0 %v3194
        %v3217 = vpop.f32.mrf.mxu0
        %v3218 = vadd.f32 %v934, %v3217
        %3219 = vdwg.mxu0
        %v3220 = vsel %vm974, %v3218, -inf
        %3221 = vmax.xlane.f32.xlu0 %v3220
        %v3222 = vpop.xlane.xlu0 %3221
        %v3223 = vsub.f32 %v3218, %v3222
        %v3224 = vmul.f32 %v3223, 1.442695
        %v3225 = vpow.pop %v3224
        %v3226 = vsel %vm974, %v3225, 0.0
        %3227 = vadd.xlane.f32.xlu0 %v3226
        %v3228 = vpop.xlane.xlu0 %3227
        %v3229 = vrcp.pop %v3228
        %v3230 = vmul.f32 %v3225, %v3229
        %3231 = vrot.lane.b32.xlu0 %v3000, 112
        %v3232 = vpop.permute.xlu0 %3231
        %3233 = vrot.lane.b32.xlu0 %v3003, 112
        %v3234 = vpop.permute.xlu0 %3233
        %v3238 = vsel %vm974, %v3230, 0
        %3240 = vmatpush.msra.mxu0 0.0
        %3241 = vmatpush.msra.mxu0 0.0
        %3242 = vmatpush.msra.mxu0 0.0
        %3243 = vmatpush.msra.mxu0 0.0
        %3244 = vmatpush.msra.mxu0 0.0
        %3245 = vmatpush.msra.mxu0 0.0
        %3246 = vmatpush.msra.mxu0 0.0
        %3247 = vmatpush.msra.mxu0 0.0
        %3248 = vmatpush.msra.mxu0 0.0
        %3249 = vmatpush.msra.mxu0 0.0
        %3250 = vmatpush.msra.mxu0 0.0
        %3251 = vmatpush.msra.mxu0 0.0
        %3252 = vmatpush.msra.mxu0 0.0
        %3253 = vmatpush.msra.mxu0 0.0
        %3254 = vmatpush.msra.mxu0 %v3234
        %3255 = vmatpush.msra.mxu0 %v3232
        %3256 = vmatmul.f32.gmra.mxu0 %v3238
        %v3257 = vpop.f32.mrf.mxu0
        %v3258 = vadd.f32 0.0, %v3257
        %3259 = vdwg.mxu0
        %v3261 = vsel %vm942, %v3258, 0
        %3263 = vmatpush.msra.mxu0 0.0
        %3264 = vmatpush.msra.mxu0 0.0
        %3265 = vmatpush.msra.mxu0 0.0
        %3266 = vmatpush.msra.mxu0 0.0
        %3267 = vmatpush.msra.mxu0 0.0
        %3268 = vmatpush.msra.mxu0 0.0
        %3269 = vmatpush.msra.mxu0 0.0
        %3270 = vmatpush.msra.mxu0 0.0
        %3271 = vmatpush.msra.mxu0 0.0
        %3272 = vmatpush.msra.mxu0 0.0
        %3273 = vmatpush.msra.mxu0 0.0
        %3274 = vmatpush.msra.mxu0 0.0
        %3275 = vmatpush.msra.mxu0 0.0
        %3276 = vmatpush.msra.mxu0 0.0
        %3277 = vmatpush.msra.mxu0 0.0
        %3278 = vmatpush.msra.mxu0 %v2885
        %3279 = vmatmul.f32.gmra.mxu0 %v3261
        %v3280 = vpop.f32.mrf.mxu0
        %v3281 = vadd.f32 0.0, %v3280
        %3282 = vdwg.mxu0
        %v3283 = vadd.f32 %v3186, %v3281
        %3284 = vrot.lane.b32.xlu0 %v2911, 104
        %v3285 = vpop.permute.xlu0 %3284
        %3286 = vrot.lane.b32.xlu0 %v2956, 104
        %v3287 = vpop.permute.xlu0 %3286
        %3288 = vrot.lane.b32.xlu0 %v2959, 104
        %v3289 = vpop.permute.xlu0 %3288
        %v3290 = vsel %vm942, %v3285, 0
        %v3292 = vsel %vm942, %v3287, 0
        %v3294 = vsel %vm942, %v3289, 0
        %3296 = vmatpush.xpose.msra.mxu0 0.0
        %3297 = vmatpush.xpose.msra.mxu0 0.0
        %3298 = vmatpush.xpose.msra.mxu0 0.0
        %3299 = vmatpush.xpose.msra.mxu0 0.0
        %3300 = vmatpush.xpose.msra.mxu0 0.0
        %3301 = vmatpush.xpose.msra.mxu0 0.0
        %3302 = vmatpush.xpose.msra.mxu0 0.0
        %3303 = vmatpush.xpose.msra.mxu0 0.0
        %3304 = vmatpush.xpose.msra.mxu0 0.0
        %3305 = vmatpush.xpose.msra.mxu0 0.0
        %3306 = vmatpush.xpose.msra.mxu0 0.0
        %3307 = vmatpush.xpose.msra.mxu0 0.0
        %3308 = vmatpush.xpose.msra.mxu0 0.0
        %3309 = vmatpush.xpose.msra.mxu0 0.0
        %3310 = vmatpush.xpose.msra.mxu0 %v3294
        %3311 = vmatpush.xpose.msra.mxu0 %v3292
        %3312 = vmatmul.f32.gmra.mxu0 %v3290
        %v3313 = vpop.f32.mrf.mxu0
        %v3314 = vadd.f32 %v934, %v3313
        %3315 = vdwg.mxu0
        %v3316 = vsel %vm974, %v3314, -inf
        %3317 = vmax.xlane.f32.xlu0 %v3316
        %v3318 = vpop.xlane.xlu0 %3317
        %v3319 = vsub.f32 %v3314, %v3318
        %v3320 = vmul.f32 %v3319, 1.442695
        %v3321 = vpow.pop %v3320
        %v3322 = vsel %vm974, %v3321, 0.0
        %3323 = vadd.xlane.f32.xlu0 %v3322
        %v3324 = vpop.xlane.xlu0 %3323
        %v3325 = vrcp.pop %v3324
        %v3326 = vmul.f32 %v3321, %v3325
        %3327 = vrot.lane.b32.xlu0 %v3000, 104
        %v3328 = vpop.permute.xlu0 %3327
        %3329 = vrot.lane.b32.xlu0 %v3003, 104
        %v3330 = vpop.permute.xlu0 %3329
        %v3334 = vsel %vm974, %v3326, 0
        %3336 = vmatpush.msra.mxu0 0.0
        %3337 = vmatpush.msra.mxu0 0.0
        %3338 = vmatpush.msra.mxu0 0.0
        %3339 = vmatpush.msra.mxu0 0.0
        %3340 = vmatpush.msra.mxu0 0.0
        %3341 = vmatpush.msra.mxu0 0.0
        %3342 = vmatpush.msra.mxu0 0.0
        %3343 = vmatpush.msra.mxu0 0.0
        %3344 = vmatpush.msra.mxu0 0.0
        %3345 = vmatpush.msra.mxu0 0.0
        %3346 = vmatpush.msra.mxu0 0.0
        %3347 = vmatpush.msra.mxu0 0.0
        %3348 = vmatpush.msra.mxu0 0.0
        %3349 = vmatpush.msra.mxu0 0.0
        %3350 = vmatpush.msra.mxu0 %v3330
        %3351 = vmatpush.msra.mxu0 %v3328
        %3352 = vmatmul.f32.gmra.mxu0 %v3334
        %v3353 = vpop.f32.mrf.mxu0
        %v3354 = vadd.f32 0.0, %v3353
        %3355 = vdwg.mxu0
        %v3357 = vsel %vm942, %v3354, 0
        %3359 = vmatpush.msra.mxu0 0.0
        %3360 = vmatpush.msra.mxu0 0.0
        %3361 = vmatpush.msra.mxu0 0.0
        %3362 = vmatpush.msra.mxu0 0.0
        %3363 = vmatpush.msra.mxu0 0.0
        %3364 = vmatpush.msra.mxu0 0.0
        %3365 = vmatpush.msra.mxu0 0.0
        %3366 = vmatpush.msra.mxu0 0.0
        %3367 = vmatpush.msra.mxu0 0.0
        %3368 = vmatpush.msra.mxu0 0.0
        %3369 = vmatpush.msra.mxu0 0.0
        %3370 = vmatpush.msra.mxu0 0.0
        %3371 = vmatpush.msra.mxu0 0.0
        %3372 = vmatpush.msra.mxu0 0.0
        %3373 = vmatpush.msra.mxu0 0.0
        %3374 = vmatpush.msra.mxu0 %v2886
        %3375 = vmatmul.f32.gmra.mxu0 %v3357
        %v3376 = vpop.f32.mrf.mxu0
        %v3377 = vadd.f32 0.0, %v3376
        %3378 = vdwg.mxu0
        %v3379 = vadd.f32 %v3283, %v3377
        %v3380 = vperm.slane %v2412, 1
        %v3381 = vadd.f32 %v3379, %v3380
        %v3382 = vadd.f32 %v2871, %v3381
        %v3383 = vsel %vm855, %v3382, 0.0
        %3384 = vadd.xlane.f32.xlu0 %v3383
        %v3385 = vpop.xlane.xlu0 %3384
        %v3386 = vmul.f32 %v3385, %v1453
        %v3387 = vsub.f32 %v3382, %v3386
        %v3388 = vmul.f32 %v3387, %v3387
        %v3389 = vsel %vm855, %v3388, 0.0
        %3390 = vadd.xlane.f32.xlu0 %v3389
        %v3391 = vpop.xlane.xlu0 %3390
        %v3392 = vmul.f32 %v3391, %v1453
        %v3393 = vadd.f32 %v3392, 1e-05
        %v3394 = vrsqrt.pop %v3393
        %v3395 = vmul.f32 %v3394, %v3393
        %v3396 = vmul.f32 %v3395, %v3394
        %v3397 = vmul.f32 0.5, %v3396
        %v3398 = vsub.f32 1.5, %v3397
        %v3399 = vmul.f32 %v3394, %v3398
        %vm3400 = vweird.f32 %v3393
        %vm3401 = vweird.f32 %v3394
        %vm3402 = vmor %vm3400, %vm3401
        %v3403 = vsel %vm3402, %v3394, %v3399
        %v3404 = vmul.f32 %v3387, %v3403
        %v3405 = vperm.slane %v2412, 5
        %v3406 = vmul.f32 %v3404, %v3405
        %v3407 = vperm.slane %v2412, 6
        %v3408 = vadd.f32 %v3406, %v3407
        %v3409 = vld [vmem:[#allocation16] sm:$0xff]
        %v3410 = vld [vmem:[#allocation16 + $0x8] sm:$0xff]
        %v3411 = vld [vmem:[#allocation16 + $0x10] sm:$0xff]
        %v3412 = vld [vmem:[#allocation16 + $0x18] sm:$0xff]
        %v3413 = vld [vmem:[%s15] sm:$0x1]
        %v3415 = vperm.slane %v3413, 0
        %v3418 = vsel %vm855, %v3408, 0
        %3420 = vmatpush.msra.mxu0 0.0
        %3421 = vmatpush.msra.mxu0 0.0
        %3422 = vmatpush.msra.mxu0 0.0
        %3423 = vmatpush.msra.mxu0 0.0
        %3424 = vmatpush.msra.mxu0 0.0
        %3425 = vmatpush.msra.mxu0 0.0
        %3426 = vmatpush.msra.mxu0 0.0
        %3427 = vmatpush.msra.mxu0 0.0
        %3428 = vmatpush.msra.mxu0 0.0
        %3429 = vmatpush.msra.mxu0 0.0
        %3430 = vmatpush.msra.mxu0 0.0
        %3431 = vmatpush.msra.mxu0 0.0
        %3432 = vmatpush.msra.mxu0 %v3412
        %3433 = vmatpush.msra.mxu0 %v3411
        %3434 = vmatpush.msra.mxu0 %v3410
        %3435 = vmatpush.msra.mxu0 %v3409
        %3436 = vmatmul.f32.gmra.mxu0 %v3418
        %v3437 = vpop.f32.mrf.mxu0
        %v3438 = vadd.f32 %v3415, %v3437
        %3439 = vdwg.mxu0
        %v3440 = vmax.f32 %v3438, 0.0
        %v3441 = vld [vmem:[%s16] sm:$0xff]
        %v3442 = vld [vmem:[%s16 + $0x8] sm:$0xff]
        %v3443 = vld [vmem:[%s16 + $0x10] sm:$0xff]
        %v3444 = vld [vmem:[%s16 + $0x18] sm:$0xff]
        %v3445 = vld [vmem:[%s16 + $0x20] sm:$0xff]
        %v3446 = vld [vmem:[%s16 + $0x28] sm:$0xff]
        %v3447 = vld [vmem:[%s16 + $0x30] sm:$0xff]
        %v3448 = vld [vmem:[%s16 + $0x38] sm:$0xff]
        %v3449 = vperm.slane %v2412, 2
        %v3451 = vsel %vm1546, %v3440, 0
        %3453 = vmatpush.msra.mxu0 0.0
        %3454 = vmatpush.msra.mxu0 0.0
        %3455 = vmatpush.msra.mxu0 0.0
        %3456 = vmatpush.msra.mxu0 0.0
        %3457 = vmatpush.msra.mxu0 0.0
        %3458 = vmatpush.msra.mxu0 0.0
        %3459 = vmatpush.msra.mxu0 0.0
        %3460 = vmatpush.msra.mxu0 0.0
        %3461 = vmatpush.msra.mxu0 %v3448
        %3462 = vmatpush.msra.mxu0 %v3447
        %3463 = vmatpush.msra.mxu0 %v3446
        %3464 = vmatpush.msra.mxu0 %v3445
        %3465 = vmatpush.msra.mxu0 %v3444
        %3466 = vmatpush.msra.mxu0 %v3443
        %3467 = vmatpush.msra.mxu0 %v3442
        %3468 = vmatpush.msra.mxu0 %v3441
        %3469 = vmatmul.f32.gmra.mxu0 %v3451
        %v3470 = vpop.f32.mrf.mxu0
        %v3471 = vadd.f32 %v3449, %v3470
        %3472 = vdwg.mxu0
        %v3473 = vadd.f32 %v3408, %v3471
        %v3474 = vsel %vm855, %v3473, 0.0
        %3475 = vadd.xlane.f32.xlu0 %v3474
        %v3476 = vpop.xlane.xlu0 %3475
        %v3477 = vmul.f32 %v3476, %v1453
        %v3478 = vsub.f32 %v3473, %v3477
        %v3479 = vmul.f32 %v3478, %v3478
        %v3480 = vsel %vm855, %v3479, 0.0
        %3481 = vadd.xlane.f32.xlu0 %v3480
        %v3482 = vpop.xlane.xlu0 %3481
        %v3483 = vmul.f32 %v3482, %v1453
        %v3484 = vadd.f32 %v3483, 1e-05
        %v3485 = vrsqrt.pop %v3484
        %v3486 = vmul.f32 %v3485, %v3484
        %v3487 = vmul.f32 %v3486, %v3485
        %v3488 = vmul.f32 0.5, %v3487
        %v3489 = vsub.f32 1.5, %v3488
        %v3490 = vmul.f32 %v3485, %v3489
        %vm3491 = vweird.f32 %v3484
        %vm3492 = vweird.f32 %v3485
        %vm3493 = vmor %vm3491, %vm3492
        %v3494 = vsel %vm3493, %v3485, %v3490
        %v3495 = vmul.f32 %v3478, %v3494
        %v3496 = vperm.slane %v2412, 7
        %v3497 = vmul.f32 %v3495, %v3496
        %v3498 = vperm.slane %v2413, 0
        %v3499 = vadd.f32 %v3497, %v3498
        %v3500 = vsel %vm855, %v3499, 0.0
        %3501 = vadd.xlane.f32.xlu0 %v3500
        %v3502 = vpop.xlane.xlu0 %3501
        %v3503 = vmul.f32 %v3502, %v1453
        %v3504 = vsub.f32 %v3499, %v3503
        %v3505 = vmul.f32 %v3504, %v3504
        %v3506 = vsel %vm855, %v3505, 0.0
        %3507 = vadd.xlane.f32.xlu0 %v3506
        %v3508 = vpop.xlane.xlu0 %3507
        %v3509 = vmul.f32 %v3508, %v1453
        %v3510 = vadd.f32 %v3509, 1e-05
        %v3511 = vrsqrt.pop %v3510
        %v3512 = vmul.f32 %v3511, %v3510
        %v3513 = vmul.f32 %v3512, %v3511
        %v3514 = vmul.f32 0.5, %v3513
        %v3515 = vsub.f32 1.5, %v3514
        %v3516 = vmul.f32 %v3511, %v3515
        %vm3517 = vweird.f32 %v3510
        %vm3518 = vweird.f32 %v3511
        %vm3519 = vmor %vm3517, %vm3518
        %v3520 = vsel %vm3519, %v3511, %v3516
        %v3521 = vmul.f32 %v3504, %v3520
        %v3522 = vperm.slane %v2411, 0
        %v3523 = vmul.f32 %v3521, %v3522
        %v3524 = vperm.slane %v2411, 1
        %v3525 = vadd.f32 %v3523, %v3524
        %3526 = vst.msk [vmem:[%s826] sm:$0xff] %vm855, %v3525
        %s3527 = scalar_lea.vmem %s17, 16
        %v3528 = vld [vmem:[%s3527] sm:$0xff]
        %v3529 = vld [vmem:[%s3527 + $0x8] sm:$0x1]
        %v3530 = vadd.f32 %v3499, %v837
        %s3531 = scalar_lea.vmem %s11, 64
        %v3532 = vld [vmem:[%s3531] sm:$0xff]
        %v3533 = vld [vmem:[%s3531 + $0x8] sm:$0xff]
        %v3534 = vld [vmem:[%s3531 + $0x10] sm:$0xff]
        %v3535 = vld [vmem:[%s3531 + $0x18] sm:$0xff]
        %s3536 = scalar_lea.vmem %s12, 2
        %v3537 = vld [vmem:[%s3536] sm:$0x1]
        %s3538 = scalar_lea.vmem %s13, 64
        %v3539 = vld [vmem:[%s3538] sm:$0xff]
        %v3540 = vld [vmem:[%s3538 + $0x8] sm:$0xff]
        %v3541 = vld [vmem:[%s3538 + $0x10] sm:$0xff]
        %v3542 = vld [vmem:[%s3538 + $0x18] sm:$0xff]
        %v3544 = vperm.slane %v3537, 0
        %v3547 = vsel %vm855, %v3530, 0
        %3549 = vmatpush.msra.mxu0 0.0
        %3550 = vmatpush.msra.mxu0 0.0
        %3551 = vmatpush.msra.mxu0 0.0
        %3552 = vmatpush.msra.mxu0 0.0
        %3553 = vmatpush.msra.mxu0 0.0
        %3554 = vmatpush.msra.mxu0 0.0
        %3555 = vmatpush.msra.mxu0 0.0
        %3556 = vmatpush.msra.mxu0 0.0
        %3557 = vmatpush.msra.mxu0 0.0
        %3558 = vmatpush.msra.mxu0 0.0
        %3559 = vmatpush.msra.mxu0 0.0
        %3560 = vmatpush.msra.mxu0 0.0
        %3561 = vmatpush.msra.mxu0 %v3535
        %3562 = vmatpush.msra.mxu0 %v3534
        %3563 = vmatpush.msra.mxu0 %v3533
        %3564 = vmatpush.msra.mxu0 %v3532
        %3565 = vmatmul.f32.gmra.mxu0 %v3547
        %v3566 = vpop.f32.mrf.mxu0
        %v3567 = vadd.f32 %v3544, %v3566
        %3568 = vdwg.mxu0
        %3573 = vrot.lane.b32.xlu0 %v3532, 64
        %v3574 = vpop.permute.xlu0 %3573
        %3575 = vrot.lane.b32.xlu0 %v3533, 64
        %v3576 = vpop.permute.xlu0 %3575
        %3577 = vrot.lane.b32.xlu0 %v3534, 64
        %v3578 = vpop.permute.xlu0 %3577
        %3579 = vrot.lane.b32.xlu0 %v3535, 64
        %v3580 = vpop.permute.xlu0 %3579
        %3585 = vrot.lane.b32.xlu0 %v3544, 64
        %v3586 = vpop.permute.xlu0 %3585
        %v3589 = vsel %vm855, %v3499, 0
        %3591 = vmatpush.msra.mxu0 0.0
        %3592 = vmatpush.msra.mxu0 0.0
        %3593 = vmatpush.msra.mxu0 0.0
        %3594 = vmatpush.msra.mxu0 0.0
        %3595 = vmatpush.msra.mxu0 0.0
        %3596 = vmatpush.msra.mxu0 0.0
        %3597 = vmatpush.msra.mxu0 0.0
        %3598 = vmatpush.msra.mxu0 0.0
        %3599 = vmatpush.msra.mxu0 0.0
        %3600 = vmatpush.msra.mxu0 0.0
        %3601 = vmatpush.msra.mxu0 0.0
        %3602 = vmatpush.msra.mxu0 0.0
        %3603 = vmatpush.msra.mxu0 %v3580
        %3604 = vmatpush.msra.mxu0 %v3578
        %3605 = vmatpush.msra.mxu0 %v3576
        %3606 = vmatpush.msra.mxu0 %v3574
        %3607 = vmatmul.f32.gmra.mxu0 %v3589
        %v3608 = vpop.f32.mrf.mxu0
        %v3609 = vadd.f32 %v3586, %v3608
        %3610 = vdwg.mxu0
        %3612 = vrot.lane.b32.xlu0 %v3567, 96
        %v3613 = vpop.permute.xlu0 %3612
        %v3614 = vsel %vm942, %v3567, 0
        %v3616 = vsel %vm942, %v3613, 0
        %3618 = vmatpush.xpose.msra.mxu0 0.0
        %3619 = vmatpush.xpose.msra.mxu0 0.0
        %3620 = vmatpush.xpose.msra.mxu0 0.0
        %3621 = vmatpush.xpose.msra.mxu0 0.0
        %3622 = vmatpush.xpose.msra.mxu0 0.0
        %3623 = vmatpush.xpose.msra.mxu0 0.0
        %3624 = vmatpush.xpose.msra.mxu0 0.0
        %3625 = vmatpush.xpose.msra.mxu0 0.0
        %3626 = vmatpush.xpose.msra.mxu0 0.0
        %3627 = vmatpush.xpose.msra.mxu0 0.0
        %3628 = vmatpush.xpose.msra.mxu0 0.0
        %3629 = vmatpush.xpose.msra.mxu0 0.0
        %3630 = vmatpush.xpose.msra.mxu0 0.0
        %3631 = vmatpush.xpose.msra.mxu0 0.0
        %3632 = vmatpush.xpose.msra.mxu0 0.0
        %3633 = vmatpush.xpose.msra.mxu0 %v3616
        %3634 = vmatmul.f32.gmra.mxu0 %v3614
        %v3635 = vpop.f32.mrf.mxu0
        %v3636 = vadd.f32 0.0, %v3635
        %3637 = vdwg.mxu0
        %v3638 = vsel %vm942, %v3636, -inf
        %3639 = vmax.xlane.f32.xlu0 %v3638
        %v3640 = vpop.xlane.xlu0 %3639
        %v3641 = vsub.f32 %v3636, %v3640
        %v3642 = vmul.f32 %v3641, 1.442695
        %v3643 = vpow.pop %v3642
        %v3644 = vsel %vm942, %v3643, 0.0
        %3645 = vadd.xlane.f32.xlu0 %v3644
        %v3646 = vpop.xlane.xlu0 %3645
        %v3647 = vrcp.pop %v3646
        %v3648 = vmul.f32 %v3643, %v3647
        %v3650 = vsel %vm942, %v3648, 0
        %3652 = vmatpush.msra.mxu0 0.0
        %3653 = vmatpush.msra.mxu0 0.0
        %3654 = vmatpush.msra.mxu0 0.0
        %3655 = vmatpush.msra.mxu0 0.0
        %3656 = vmatpush.msra.mxu0 0.0
        %3657 = vmatpush.msra.mxu0 0.0
        %3658 = vmatpush.msra.mxu0 0.0
        %3659 = vmatpush.msra.mxu0 0.0
        %3660 = vmatpush.msra.mxu0 0.0
        %3661 = vmatpush.msra.mxu0 0.0
        %3662 = vmatpush.msra.mxu0 0.0
        %3663 = vmatpush.msra.mxu0 0.0
        %3664 = vmatpush.msra.mxu0 0.0
        %3665 = vmatpush.msra.mxu0 0.0
        %3666 = vmatpush.msra.mxu0 0.0
        %3667 = vmatpush.msra.mxu0 %v3609
        %3668 = vmatmul.f32.gmra.mxu0 %v3650
        %v3669 = vpop.f32.mrf.mxu0
        %v3670 = vadd.f32 0.0, %v3669
        %3671 = vdwg.mxu0
        %3672 = vrot.lane.b32.xlu0 %v3567, 120
        %v3673 = vpop.permute.xlu0 %3672
        %3674 = vrot.lane.b32.xlu0 %v3567, 88
        %v3675 = vpop.permute.xlu0 %3674
        %v3676 = vsel %vm942, %v3673, 0
        %v3678 = vsel %vm942, %v3675, 0
        %3680 = vmatpush.xpose.msra.mxu0 0.0
        %3681 = vmatpush.xpose.msra.mxu0 0.0
        %3682 = vmatpush.xpose.msra.mxu0 0.0
        %3683 = vmatpush.xpose.msra.mxu0 0.0
        %3684 = vmatpush.xpose.msra.mxu0 0.0
        %3685 = vmatpush.xpose.msra.mxu0 0.0
        %3686 = vmatpush.xpose.msra.mxu0 0.0
        %3687 = vmatpush.xpose.msra.mxu0 0.0
        %3688 = vmatpush.xpose.msra.mxu0 0.0
        %3689 = vmatpush.xpose.msra.mxu0 0.0
        %3690 = vmatpush.xpose.msra.mxu0 0.0
        %3691 = vmatpush.xpose.msra.mxu0 0.0
        %3692 = vmatpush.xpose.msra.mxu0 0.0
        %3693 = vmatpush.xpose.msra.mxu0 0.0
        %3694 = vmatpush.xpose.msra.mxu0 0.0
        %3695 = vmatpush.xpose.msra.mxu0 %v3678
        %3696 = vmatmul.f32.gmra.mxu0 %v3676
        %v3697 = vpop.f32.mrf.mxu0
        %v3698 = vadd.f32 0.0, %v3697
        %3699 = vdwg.mxu0
        %v3700 = vsel %vm942, %v3698, -inf
        %3701 = vmax.xlane.f32.xlu0 %v3700
        %v3702 = vpop.xlane.xlu0 %3701
        %v3703 = vsub.f32 %v3698, %v3702
        %v3704 = vmul.f32 %v3703, 1.442695
        %v3705 = vpow.pop %v3704
        %v3706 = vsel %vm942, %v3705, 0.0
        %3707 = vadd.xlane.f32.xlu0 %v3706
        %v3708 = vpop.xlane.xlu0 %3707
        %v3709 = vrcp.pop %v3708
        %v3710 = vmul.f32 %v3705, %v3709
        %3712 = vrot.lane.b32.xlu0 %v3609, 120
        %v3713 = vpop.permute.xlu0 %3712
        %v3716 = vsel %vm942, %v3710, 0
        %3718 = vmatpush.msra.mxu0 0.0
        %3719 = vmatpush.msra.mxu0 0.0
        %3720 = vmatpush.msra.mxu0 0.0
        %3721 = vmatpush.msra.mxu0 0.0
        %3722 = vmatpush.msra.mxu0 0.0
        %3723 = vmatpush.msra.mxu0 0.0
        %3724 = vmatpush.msra.mxu0 0.0
        %3725 = vmatpush.msra.mxu0 0.0
        %3726 = vmatpush.msra.mxu0 0.0
        %3727 = vmatpush.msra.mxu0 0.0
        %3728 = vmatpush.msra.mxu0 0.0
        %3729 = vmatpush.msra.mxu0 0.0
        %3730 = vmatpush.msra.mxu0 0.0
        %3731 = vmatpush.msra.mxu0 0.0
        %3732 = vmatpush.msra.mxu0 0.0
        %3733 = vmatpush.msra.mxu0 %v3713
        %3734 = vmatmul.f32.gmra.mxu0 %v3716
        %v3735 = vpop.f32.mrf.mxu0
        %v3736 = vadd.f32 0.0, %v3735
        %3737 = vdwg.mxu0
        %v3739 = vsel %vm942, %v3736, 0
        %3741 = vmatpush.msra.mxu0 0.0
        %3742 = vmatpush.msra.mxu0 0.0
        %3743 = vmatpush.msra.mxu0 0.0
        %3744 = vmatpush.msra.mxu0 0.0
        %3745 = vmatpush.msra.mxu0 0.0
        %3746 = vmatpush.msra.mxu0 0.0
        %3747 = vmatpush.msra.mxu0 0.0
        %3748 = vmatpush.msra.mxu0 0.0
        %3749 = vmatpush.msra.mxu0 0.0
        %3750 = vmatpush.msra.mxu0 0.0
        %3751 = vmatpush.msra.mxu0 0.0
        %3752 = vmatpush.msra.mxu0 0.0
        %3753 = vmatpush.msra.mxu0 0.0
        %3754 = vmatpush.msra.mxu0 0.0
        %3755 = vmatpush.msra.mxu0 0.0
        %3756 = vmatpush.msra.mxu0 %v3540
        %3757 = vmatmul.f32.gmra.mxu0 %v3739
        %v3758 = vpop.f32.mrf.mxu0
        %v3759 = vadd.f32 0.0, %v3758
        %3760 = vdwg.mxu0
        %v3762 = vsel %vm942, %v3670, 0
        %3764 = vmatpush.msra.mxu0 0.0
        %3765 = vmatpush.msra.mxu0 0.0
        %3766 = vmatpush.msra.mxu0 0.0
        %3767 = vmatpush.msra.mxu0 0.0
        %3768 = vmatpush.msra.mxu0 0.0
        %3769 = vmatpush.msra.mxu0 0.0
        %3770 = vmatpush.msra.mxu0 0.0
        %3771 = vmatpush.msra.mxu0 0.0
        %3772 = vmatpush.msra.mxu0 0.0
        %3773 = vmatpush.msra.mxu0 0.0
        %3774 = vmatpush.msra.mxu0 0.0
        %3775 = vmatpush.msra.mxu0 0.0
        %3776 = vmatpush.msra.mxu0 0.0
        %3777 = vmatpush.msra.mxu0 0.0
        %3778 = vmatpush.msra.mxu0 0.0
        %3779 = vmatpush.msra.mxu0 %v3539
        %3780 = vmatmul.f32.gmra.mxu0 %v3762
        %v3781 = vpop.f32.mrf.mxu0
        %v3782 = vadd.f32 %v3759, %v3781
        %3783 = vdwg.mxu0
        %3784 = vrot.lane.b32.xlu0 %v3567, 112
        %v3785 = vpop.permute.xlu0 %3784
        %3786 = vrot.lane.b32.xlu0 %v3567, 80
        %v3787 = vpop.permute.xlu0 %3786
        %v3788 = vsel %vm942, %v3785, 0
        %v3790 = vsel %vm942, %v3787, 0
        %3792 = vmatpush.xpose.msra.mxu0 0.0
        %3793 = vmatpush.xpose.msra.mxu0 0.0
        %3794 = vmatpush.xpose.msra.mxu0 0.0
        %3795 = vmatpush.xpose.msra.mxu0 0.0
        %3796 = vmatpush.xpose.msra.mxu0 0.0
        %3797 = vmatpush.xpose.msra.mxu0 0.0
        %3798 = vmatpush.xpose.msra.mxu0 0.0
        %3799 = vmatpush.xpose.msra.mxu0 0.0
        %3800 = vmatpush.xpose.msra.mxu0 0.0
        %3801 = vmatpush.xpose.msra.mxu0 0.0
        %3802 = vmatpush.xpose.msra.mxu0 0.0
        %3803 = vmatpush.xpose.msra.mxu0 0.0
        %3804 = vmatpush.xpose.msra.mxu0 0.0
        %3805 = vmatpush.xpose.msra.mxu0 0.0
        %3806 = vmatpush.xpose.msra.mxu0 0.0
        %3807 = vmatpush.xpose.msra.mxu0 %v3790
        %3808 = vmatmul.f32.gmra.mxu0 %v3788
        %v3809 = vpop.f32.mrf.mxu0
        %v3810 = vadd.f32 0.0, %v3809
        %3811 = vdwg.mxu0
        %v3812 = vsel %vm942, %v3810, -inf
        %3813 = vmax.xlane.f32.xlu0 %v3812
        %v3814 = vpop.xlane.xlu0 %3813
        %v3815 = vsub.f32 %v3810, %v3814
        %v3816 = vmul.f32 %v3815, 1.442695
        %v3817 = vpow.pop %v3816
        %v3818 = vsel %vm942, %v3817, 0.0
        %3819 = vadd.xlane.f32.xlu0 %v3818
        %v3820 = vpop.xlane.xlu0 %3819
        %v3821 = vrcp.pop %v3820
        %v3822 = vmul.f32 %v3817, %v3821
        %3823 = vrot.lane.b32.xlu0 %v3609, 112
        %v3824 = vpop.permute.xlu0 %3823
        %v3827 = vsel %vm942, %v3822, 0
        %3829 = vmatpush.msra.mxu0 0.0
        %3830 = vmatpush.msra.mxu0 0.0
        %3831 = vmatpush.msra.mxu0 0.0
        %3832 = vmatpush.msra.mxu0 0.0
        %3833 = vmatpush.msra.mxu0 0.0
        %3834 = vmatpush.msra.mxu0 0.0
        %3835 = vmatpush.msra.mxu0 0.0
        %3836 = vmatpush.msra.mxu0 0.0
        %3837 = vmatpush.msra.mxu0 0.0
        %3838 = vmatpush.msra.mxu0 0.0
        %3839 = vmatpush.msra.mxu0 0.0
        %3840 = vmatpush.msra.mxu0 0.0
        %3841 = vmatpush.msra.mxu0 0.0
        %3842 = vmatpush.msra.mxu0 0.0
        %3843 = vmatpush.msra.mxu0 0.0
        %3844 = vmatpush.msra.mxu0 %v3824
        %3845 = vmatmul.f32.gmra.mxu0 %v3827
        %v3846 = vpop.f32.mrf.mxu0
        %v3847 = vadd.f32 0.0, %v3846
        %3848 = vdwg.mxu0
        %v3850 = vsel %vm942, %v3847, 0
        %3852 = vmatpush.msra.mxu0 0.0
        %3853 = vmatpush.msra.mxu0 0.0
        %3854 = vmatpush.msra.mxu0 0.0
        %3855 = vmatpush.msra.mxu0 0.0
        %3856 = vmatpush.msra.mxu0 0.0
        %3857 = vmatpush.msra.mxu0 0.0
        %3858 = vmatpush.msra.mxu0 0.0
        %3859 = vmatpush.msra.mxu0 0.0
        %3860 = vmatpush.msra.mxu0 0.0
        %3861 = vmatpush.msra.mxu0 0.0
        %3862 = vmatpush.msra.mxu0 0.0
        %3863 = vmatpush.msra.mxu0 0.0
        %3864 = vmatpush.msra.mxu0 0.0
        %3865 = vmatpush.msra.mxu0 0.0
        %3866 = vmatpush.msra.mxu0 0.0
        %3867 = vmatpush.msra.mxu0 %v3541
        %3868 = vmatmul.f32.gmra.mxu0 %v3850
        %v3869 = vpop.f32.mrf.mxu0
        %v3870 = vadd.f32 0.0, %v3869
        %3871 = vdwg.mxu0
        %v3872 = vadd.f32 %v3782, %v3870
        %3873 = vrot.lane.b32.xlu0 %v3567, 104
        %v3874 = vpop.permute.xlu0 %3873
        %3875 = vrot.lane.b32.xlu0 %v3567, 72
        %v3876 = vpop.permute.xlu0 %3875
        %v3877 = vsel %vm942, %v3874, 0
        %v3879 = vsel %vm942, %v3876, 0
        %3881 = vmatpush.xpose.msra.mxu0 0.0
        %3882 = vmatpush.xpose.msra.mxu0 0.0
        %3883 = vmatpush.xpose.msra.mxu0 0.0
        %3884 = vmatpush.xpose.msra.mxu0 0.0
        %3885 = vmatpush.xpose.msra.mxu0 0.0
        %3886 = vmatpush.xpose.msra.mxu0 0.0
        %3887 = vmatpush.xpose.msra.mxu0 0.0
        %3888 = vmatpush.xpose.msra.mxu0 0.0
        %3889 = vmatpush.xpose.msra.mxu0 0.0
        %3890 = vmatpush.xpose.msra.mxu0 0.0
        %3891 = vmatpush.xpose.msra.mxu0 0.0
        %3892 = vmatpush.xpose.msra.mxu0 0.0
        %3893 = vmatpush.xpose.msra.mxu0 0.0
        %3894 = vmatpush.xpose.msra.mxu0 0.0
        %3895 = vmatpush.xpose.msra.mxu0 0.0
        %3896 = vmatpush.xpose.msra.mxu0 %v3879
        %3897 = vmatmul.f32.gmra.mxu0 %v3877
        %v3898 = vpop.f32.mrf.mxu0
        %v3899 = vadd.f32 0.0, %v3898
        %3900 = vdwg.mxu0
        %v3901 = vsel %vm942, %v3899, -inf
        %3902 = vmax.xlane.f32.xlu0 %v3901
        %v3903 = vpop.xlane.xlu0 %3902
        %v3904 = vsub.f32 %v3899, %v3903
        %v3905 = vmul.f32 %v3904, 1.442695
        %v3906 = vpow.pop %v3905
        %v3907 = vsel %vm942, %v3906, 0.0
        %3908 = vadd.xlane.f32.xlu0 %v3907
        %v3909 = vpop.xlane.xlu0 %3908
        %v3910 = vrcp.pop %v3909
        %v3911 = vmul.f32 %v3906, %v3910
        %3912 = vrot.lane.b32.xlu0 %v3609, 104
        %v3913 = vpop.permute.xlu0 %3912
        %v3916 = vsel %vm942, %v3911, 0
        %3918 = vmatpush.msra.mxu0 0.0
        %3919 = vmatpush.msra.mxu0 0.0
        %3920 = vmatpush.msra.mxu0 0.0
        %3921 = vmatpush.msra.mxu0 0.0
        %3922 = vmatpush.msra.mxu0 0.0
        %3923 = vmatpush.msra.mxu0 0.0
        %3924 = vmatpush.msra.mxu0 0.0
        %3925 = vmatpush.msra.mxu0 0.0
        %3926 = vmatpush.msra.mxu0 0.0
        %3927 = vmatpush.msra.mxu0 0.0
        %3928 = vmatpush.msra.mxu0 0.0
        %3929 = vmatpush.msra.mxu0 0.0
        %3930 = vmatpush.msra.mxu0 0.0
        %3931 = vmatpush.msra.mxu0 0.0
        %3932 = vmatpush.msra.mxu0 0.0
        %3933 = vmatpush.msra.mxu0 %v3913
        %3934 = vmatmul.f32.gmra.mxu0 %v3916
        %v3935 = vpop.f32.mrf.mxu0
        %v3936 = vadd.f32 0.0, %v3935
        %3937 = vdwg.mxu0
        %v3939 = vsel %vm942, %v3936, 0
        %3941 = vmatpush.msra.mxu0 0.0
        %3942 = vmatpush.msra.mxu0 0.0
        %3943 = vmatpush.msra.mxu0 0.0
        %3944 = vmatpush.msra.mxu0 0.0
        %3945 = vmatpush.msra.mxu0 0.0
        %3946 = vmatpush.msra.mxu0 0.0
        %3947 = vmatpush.msra.mxu0 0.0
        %3948 = vmatpush.msra.mxu0 0.0
        %3949 = vmatpush.msra.mxu0 0.0
        %3950 = vmatpush.msra.mxu0 0.0
        %3951 = vmatpush.msra.mxu0 0.0
        %3952 = vmatpush.msra.mxu0 0.0
        %3953 = vmatpush.msra.mxu0 0.0
        %3954 = vmatpush.msra.mxu0 0.0
        %3955 = vmatpush.msra.mxu0 0.0
        %3956 = vmatpush.msra.mxu0 %v3542
        %3957 = vmatmul.f32.gmra.mxu0 %v3939
        %v3958 = vpop.f32.mrf.mxu0
        %v3959 = vadd.f32 0.0, %v3958
        %3960 = vdwg.mxu0
        %v3961 = vadd.f32 %v3872, %v3959
        %v3962 = vperm.slane %v3528, 0
        %v3963 = vadd.f32 %v3961, %v3962
        %v3964 = vadd.f32 %v3499, %v3963
        %v3965 = vsel %vm855, %v3964, 0.0
        %3966 = vadd.xlane.f32.xlu0 %v3965
        %v3967 = vpop.xlane.xlu0 %3966
        %v3968 = vmul.f32 %v3967, %v1453
        %v3969 = vsub.f32 %v3964, %v3968
        %v3970 = vmul.f32 %v3969, %v3969
        %v3971 = vsel %vm855, %v3970, 0.0
        %3972 = vadd.xlane.f32.xlu0 %v3971
        %v3973 = vpop.xlane.xlu0 %3972
        %v3974 = vmul.f32 %v3973, %v1453
        %v3975 = vadd.f32 %v3974, 1e-05
        %v3976 = vrsqrt.pop %v3975
        %v3977 = vmul.f32 %v3976, %v3975
        %v3978 = vmul.f32 %v3977, %v3976
        %v3979 = vmul.f32 0.5, %v3978
        %v3980 = vsub.f32 1.5, %v3979
        %v3981 = vmul.f32 %v3976, %v3980
        %vm3982 = vweird.f32 %v3975
        %vm3983 = vweird.f32 %v3976
        %vm3984 = vmor %vm3982, %vm3983
        %v3985 = vsel %vm3984, %v3976, %v3981
        %v3986 = vmul.f32 %v3969, %v3985
        %v3987 = vperm.slane %v3528, 3
        %v3988 = vmul.f32 %v3986, %v3987
        %v3989 = vperm.slane %v3528, 4
        %v3990 = vadd.f32 %v3988, %v3989
        %v3991 = vadd.f32 %v3990, %v837
        %s3992 = scalar_lea.vmem %s11, 96
        %v3993 = vld [vmem:[%s3992] sm:$0xff]
        %v3994 = vld [vmem:[%s3992 + $0x8] sm:$0xff]
        %v3995 = vld [vmem:[%s3992 + $0x10] sm:$0xff]
        %v3996 = vld [vmem:[%s3992 + $0x18] sm:$0xff]
        %s3997 = scalar_lea.vmem %s12, 3
        %v3998 = vld [vmem:[%s3997] sm:$0x1]
        %s3999 = scalar_lea.vmem %s13, 96
        %v4000 = vld [vmem:[%s3999] sm:$0xff]
        %v4001 = vld [vmem:[%s3999 + $0x8] sm:$0xff]
        %v4002 = vld [vmem:[%s3999 + $0x10] sm:$0xff]
        %v4003 = vld [vmem:[%s3999 + $0x18] sm:$0xff]
        %v4005 = vperm.slane %v3998, 0
        %v4008 = vsel %vm855, %v3991, 0
        %4010 = vmatpush.msra.mxu0 0.0
        %4011 = vmatpush.msra.mxu0 0.0
        %4012 = vmatpush.msra.mxu0 0.0
        %4013 = vmatpush.msra.mxu0 0.0
        %4014 = vmatpush.msra.mxu0 0.0
        %4015 = vmatpush.msra.mxu0 0.0
        %4016 = vmatpush.msra.mxu0 0.0
        %4017 = vmatpush.msra.mxu0 0.0
        %4018 = vmatpush.msra.mxu0 0.0
        %4019 = vmatpush.msra.mxu0 0.0
        %4020 = vmatpush.msra.mxu0 0.0
        %4021 = vmatpush.msra.mxu0 0.0
        %4022 = vmatpush.msra.mxu0 %v3996
        %4023 = vmatpush.msra.mxu0 %v3995
        %4024 = vmatpush.msra.mxu0 %v3994
        %4025 = vmatpush.msra.mxu0 %v3993
        %4026 = vmatmul.f32.gmra.mxu0 %v4008
        %v4027 = vpop.f32.mrf.mxu0
        %v4028 = vadd.f32 %v4005, %v4027
        %4029 = vdwg.mxu0
        %4034 = vrot.lane.b32.xlu0 %v3993, 96
        %v4035 = vpop.permute.xlu0 %4034
        %4036 = vrot.lane.b32.xlu0 %v3994, 96
        %v4037 = vpop.permute.xlu0 %4036
        %4038 = vrot.lane.b32.xlu0 %v3995, 96
        %v4039 = vpop.permute.xlu0 %4038
        %4040 = vrot.lane.b32.xlu0 %v3996, 96
        %v4041 = vpop.permute.xlu0 %4040
        %4046 = vrot.lane.b32.xlu0 %v4005, 96
        %v4047 = vpop.permute.xlu0 %4046
        %4049 = vmatpush.msra.mxu0 0.0
        %4050 = vmatpush.msra.mxu0 0.0
        %4051 = vmatpush.msra.mxu0 0.0
        %4052 = vmatpush.msra.mxu0 0.0
        %4053 = vmatpush.msra.mxu0 0.0
        %4054 = vmatpush.msra.mxu0 0.0
        %4055 = vmatpush.msra.mxu0 0.0
        %4056 = vmatpush.msra.mxu0 0.0
        %4057 = vmatpush.msra.mxu0 0.0
        %4058 = vmatpush.msra.mxu0 0.0
        %4059 = vmatpush.msra.mxu0 0.0
        %4060 = vmatpush.msra.mxu0 0.0
        %4061 = vmatpush.msra.mxu0 %v4041
        %4062 = vmatpush.msra.mxu0 %v4039
        %4063 = vmatpush.msra.mxu0 %v4037
        %4064 = vmatpush.msra.mxu0 %v4035
        %4065 = vmatmul.f32.gmra.mxu0 %v2933
        %v4066 = vpop.f32.mrf.mxu0
        %v4067 = vadd.f32 %v4047, %v4066
        %4068 = vmatmul.f32.gmra.mxu0 %v2936
        %v4069 = vpop.f32.mrf.mxu0
        %v4070 = vadd.f32 %v4047, %v4069
        %4071 = vdwg.mxu0
        %4072 = vrot.lane.b32.xlu0 %v3993, 64
        %v4073 = vpop.permute.xlu0 %4072
        %4074 = vrot.lane.b32.xlu0 %v3994, 64
        %v4075 = vpop.permute.xlu0 %4074
        %4076 = vrot.lane.b32.xlu0 %v3995, 64
        %v4077 = vpop.permute.xlu0 %4076
        %4078 = vrot.lane.b32.xlu0 %v3996, 64
        %v4079 = vpop.permute.xlu0 %4078
        %4084 = vrot.lane.b32.xlu0 %v4005, 64
        %v4085 = vpop.permute.xlu0 %4084
        %4087 = vmatpush.msra.mxu0 0.0
        %4088 = vmatpush.msra.mxu0 0.0
        %4089 = vmatpush.msra.mxu0 0.0
        %4090 = vmatpush.msra.mxu0 0.0
        %4091 = vmatpush.msra.mxu0 0.0
        %4092 = vmatpush.msra.mxu0 0.0
        %4093 = vmatpush.msra.mxu0 0.0
        %4094 = vmatpush.msra.mxu0 0.0
        %4095 = vmatpush.msra.mxu0 0.0
        %4096 = vmatpush.msra.mxu0 0.0
        %4097 = vmatpush.msra.mxu0 0.0
        %4098 = vmatpush.msra.mxu0 0.0
        %4099 = vmatpush.msra.mxu0 %v4079
        %4100 = vmatpush.msra.mxu0 %v4077
        %4101 = vmatpush.msra.mxu0 %v4075
        %4102 = vmatpush.msra.mxu0 %v4073
        %4103 = vmatmul.f32.gmra.mxu0 %v2977
        %v4104 = vpop.f32.mrf.mxu0
        %v4105 = vadd.f32 %v4085, %v4104
        %4106 = vmatmul.f32.gmra.mxu0 %v2980
        %v4107 = vpop.f32.mrf.mxu0
        %v4108 = vadd.f32 %v4085, %v4107
        %4109 = vdwg.mxu0
        %v4111 = vsel %vm942, %v4028, 0
        %v4114 = vsel %vm942, %v4067, 0
        %v4117 = vsel %vm942, %v4070, 0
        %4119 = vmatpush.xpose.msra.mxu0 0.0
        %4120 = vmatpush.xpose.msra.mxu0 0.0
        %4121 = vmatpush.xpose.msra.mxu0 0.0
        %4122 = vmatpush.xpose.msra.mxu0 0.0
        %4123 = vmatpush.xpose.msra.mxu0 0.0
        %4124 = vmatpush.xpose.msra.mxu0 0.0
        %4125 = vmatpush.xpose.msra.mxu0 0.0
        %4126 = vmatpush.xpose.msra.mxu0 0.0
        %4127 = vmatpush.xpose.msra.mxu0 0.0
        %4128 = vmatpush.xpose.msra.mxu0 0.0
        %4129 = vmatpush.xpose.msra.mxu0 0.0
        %4130 = vmatpush.xpose.msra.mxu0 0.0
        %4131 = vmatpush.xpose.msra.mxu0 0.0
        %4132 = vmatpush.xpose.msra.mxu0 0.0
        %4133 = vmatpush.xpose.msra.mxu0 %v4117
        %4134 = vmatpush.xpose.msra.mxu0 %v4114
        %4135 = vmatmul.f32.gmra.mxu0 %v4111
        %v4136 = vpop.f32.mrf.mxu0
        %v4137 = vadd.f32 %v934, %v4136
        %4138 = vdwg.mxu0
        %v4139 = vsel %vm974, %v4137, -inf
        %4140 = vmax.xlane.f32.xlu0 %v4139
        %v4141 = vpop.xlane.xlu0 %4140
        %v4142 = vsub.f32 %v4137, %v4141
        %v4143 = vmul.f32 %v4142, 1.442695
        %v4144 = vpow.pop %v4143
        %v4145 = vsel %vm974, %v4144, 0.0
        %4146 = vadd.xlane.f32.xlu0 %v4145
        %v4147 = vpop.xlane.xlu0 %4146
        %v4148 = vrcp.pop %v4147
        %v4149 = vmul.f32 %v4144, %v4148
        %v4151 = vsel %vm974, %v4149, 0
        %4153 = vmatpush.msra.mxu0 0.0
        %4154 = vmatpush.msra.mxu0 0.0
        %4155 = vmatpush.msra.mxu0 0.0
        %4156 = vmatpush.msra.mxu0 0.0
        %4157 = vmatpush.msra.mxu0 0.0
        %4158 = vmatpush.msra.mxu0 0.0
        %4159 = vmatpush.msra.mxu0 0.0
        %4160 = vmatpush.msra.mxu0 0.0
        %4161 = vmatpush.msra.mxu0 0.0
        %4162 = vmatpush.msra.mxu0 0.0
        %4163 = vmatpush.msra.mxu0 0.0
        %4164 = vmatpush.msra.mxu0 0.0
        %4165 = vmatpush.msra.mxu0 0.0
        %4166 = vmatpush.msra.mxu0 0.0
        %4167 = vmatpush.msra.mxu0 %v4108
        %4168 = vmatpush.msra.mxu0 %v4105
        %4169 = vmatmul.f32.gmra.mxu0 %v4151
        %v4170 = vpop.f32.mrf.mxu0
        %v4171 = vadd.f32 0.0, %v4170
        %4172 = vdwg.mxu0
        %4173 = vrot.lane.b32.xlu0 %v4028, 120
        %v4174 = vpop.permute.xlu0 %4173
        %4175 = vrot.lane.b32.xlu0 %v4067, 120
        %v4176 = vpop.permute.xlu0 %4175
        %4177 = vrot.lane.b32.xlu0 %v4070, 120
        %v4178 = vpop.permute.xlu0 %4177
        %v4179 = vsel %vm942, %v4174, 0
        %v4181 = vsel %vm942, %v4176, 0
        %v4183 = vsel %vm942, %v4178, 0
        %4185 = vmatpush.xpose.msra.mxu0 0.0
        %4186 = vmatpush.xpose.msra.mxu0 0.0
        %4187 = vmatpush.xpose.msra.mxu0 0.0
        %4188 = vmatpush.xpose.msra.mxu0 0.0
        %4189 = vmatpush.xpose.msra.mxu0 0.0
        %4190 = vmatpush.xpose.msra.mxu0 0.0
        %4191 = vmatpush.xpose.msra.mxu0 0.0
        %4192 = vmatpush.xpose.msra.mxu0 0.0
        %4193 = vmatpush.xpose.msra.mxu0 0.0
        %4194 = vmatpush.xpose.msra.mxu0 0.0
        %4195 = vmatpush.xpose.msra.mxu0 0.0
        %4196 = vmatpush.xpose.msra.mxu0 0.0
        %4197 = vmatpush.xpose.msra.mxu0 0.0
        %4198 = vmatpush.xpose.msra.mxu0 0.0
        %4199 = vmatpush.xpose.msra.mxu0 %v4183
        %4200 = vmatpush.xpose.msra.mxu0 %v4181
        %4201 = vmatmul.f32.gmra.mxu0 %v4179
        %v4202 = vpop.f32.mrf.mxu0
        %v4203 = vadd.f32 %v934, %v4202
        %4204 = vdwg.mxu0
        %v4205 = vsel %vm974, %v4203, -inf
        %4206 = vmax.xlane.f32.xlu0 %v4205
        %v4207 = vpop.xlane.xlu0 %4206
        %v4208 = vsub.f32 %v4203, %v4207
        %v4209 = vmul.f32 %v4208, 1.442695
        %v4210 = vpow.pop %v4209
        %v4211 = vsel %vm974, %v4210, 0.0
        %4212 = vadd.xlane.f32.xlu0 %v4211
        %v4213 = vpop.xlane.xlu0 %4212
        %v4214 = vrcp.pop %v4213
        %v4215 = vmul.f32 %v4210, %v4214
        %4218 = vrot.lane.b32.xlu0 %v4105, 120
        %v4219 = vpop.permute.xlu0 %4218
        %4220 = vrot.lane.b32.xlu0 %v4108, 120
        %v4221 = vpop.permute.xlu0 %4220
        %v4225 = vsel %vm974, %v4215, 0
        %4227 = vmatpush.msra.mxu0 0.0
        %4228 = vmatpush.msra.mxu0 0.0
        %4229 = vmatpush.msra.mxu0 0.0
        %4230 = vmatpush.msra.mxu0 0.0
        %4231 = vmatpush.msra.mxu0 0.0
        %4232 = vmatpush.msra.mxu0 0.0
        %4233 = vmatpush.msra.mxu0 0.0
        %4234 = vmatpush.msra.mxu0 0.0
        %4235 = vmatpush.msra.mxu0 0.0
        %4236 = vmatpush.msra.mxu0 0.0
        %4237 = vmatpush.msra.mxu0 0.0
        %4238 = vmatpush.msra.mxu0 0.0
        %4239 = vmatpush.msra.mxu0 0.0
        %4240 = vmatpush.msra.mxu0 0.0
        %4241 = vmatpush.msra.mxu0 %v4221
        %4242 = vmatpush.msra.mxu0 %v4219
        %4243 = vmatmul.f32.gmra.mxu0 %v4225
        %v4244 = vpop.f32.mrf.mxu0
        %v4245 = vadd.f32 0.0, %v4244
        %4246 = vdwg.mxu0
        %v4248 = vsel %vm942, %v4245, 0
        %4250 = vmatpush.msra.mxu0 0.0
        %4251 = vmatpush.msra.mxu0 0.0
        %4252 = vmatpush.msra.mxu0 0.0
        %4253 = vmatpush.msra.mxu0 0.0
        %4254 = vmatpush.msra.mxu0 0.0
        %4255 = vmatpush.msra.mxu0 0.0
        %4256 = vmatpush.msra.mxu0 0.0
        %4257 = vmatpush.msra.mxu0 0.0
        %4258 = vmatpush.msra.mxu0 0.0
        %4259 = vmatpush.msra.mxu0 0.0
        %4260 = vmatpush.msra.mxu0 0.0
        %4261 = vmatpush.msra.mxu0 0.0
        %4262 = vmatpush.msra.mxu0 0.0
        %4263 = vmatpush.msra.mxu0 0.0
        %4264 = vmatpush.msra.mxu0 0.0
        %4265 = vmatpush.msra.mxu0 %v4001
        %4266 = vmatmul.f32.gmra.mxu0 %v4248
        %v4267 = vpop.f32.mrf.mxu0
        %v4268 = vadd.f32 0.0, %v4267
        %4269 = vdwg.mxu0
        %v4271 = vsel %vm942, %v4171, 0
        %4273 = vmatpush.msra.mxu0 0.0
        %4274 = vmatpush.msra.mxu0 0.0
        %4275 = vmatpush.msra.mxu0 0.0
        %4276 = vmatpush.msra.mxu0 0.0
        %4277 = vmatpush.msra.mxu0 0.0
        %4278 = vmatpush.msra.mxu0 0.0
        %4279 = vmatpush.msra.mxu0 0.0
        %4280 = vmatpush.msra.mxu0 0.0
        %4281 = vmatpush.msra.mxu0 0.0
        %4282 = vmatpush.msra.mxu0 0.0
        %4283 = vmatpush.msra.mxu0 0.0
        %4284 = vmatpush.msra.mxu0 0.0
        %4285 = vmatpush.msra.mxu0 0.0
        %4286 = vmatpush.msra.mxu0 0.0
        %4287 = vmatpush.msra.mxu0 0.0
        %4288 = vmatpush.msra.mxu0 %v4000
        %4289 = vmatmul.f32.gmra.mxu0 %v4271
        %v4290 = vpop.f32.mrf.mxu0
        %v4291 = vadd.f32 %v4268, %v4290
        %4292 = vdwg.mxu0
        %4293 = vrot.lane.b32.xlu0 %v4028, 112
        %v4294 = vpop.permute.xlu0 %4293
        %4295 = vrot.lane.b32.xlu0 %v4067, 112
        %v4296 = vpop.permute.xlu0 %4295
        %4297 = vrot.lane.b32.xlu0 %v4070, 112
        %v4298 = vpop.permute.xlu0 %4297
        %v4299 = vsel %vm942, %v4294, 0
        %v4301 = vsel %vm942, %v4296, 0
        %v4303 = vsel %vm942, %v4298, 0
        %4305 = vmatpush.xpose.msra.mxu0 0.0
        %4306 = vmatpush.xpose.msra.mxu0 0.0
        %4307 = vmatpush.xpose.msra.mxu0 0.0
        %4308 = vmatpush.xpose.msra.mxu0 0.0
        %4309 = vmatpush.xpose.msra.mxu0 0.0
        %4310 = vmatpush.xpose.msra.mxu0 0.0
        %4311 = vmatpush.xpose.msra.mxu0 0.0
        %4312 = vmatpush.xpose.msra.mxu0 0.0
        %4313 = vmatpush.xpose.msra.mxu0 0.0
        %4314 = vmatpush.xpose.msra.mxu0 0.0
        %4315 = vmatpush.xpose.msra.mxu0 0.0
        %4316 = vmatpush.xpose.msra.mxu0 0.0
        %4317 = vmatpush.xpose.msra.mxu0 0.0
        %4318 = vmatpush.xpose.msra.mxu0 0.0
        %4319 = vmatpush.xpose.msra.mxu0 %v4303
        %4320 = vmatpush.xpose.msra.mxu0 %v4301
        %4321 = vmatmul.f32.gmra.mxu0 %v4299
        %v4322 = vpop.f32.mrf.mxu0
        %v4323 = vadd.f32 %v934, %v4322
        %4324 = vdwg.mxu0
        %v4325 = vsel %vm974, %v4323, -inf
        %4326 = vmax.xlane.f32.xlu0 %v4325
        %v4327 = vpop.xlane.xlu0 %4326
        %v4328 = vsub.f32 %v4323, %v4327
        %v4329 = vmul.f32 %v4328, 1.442695
        %v4330 = vpow.pop %v4329
        %v4331 = vsel %vm974, %v4330, 0.0
        %4332 = vadd.xlane.f32.xlu0 %v4331
        %v4333 = vpop.xlane.xlu0 %4332
        %v4334 = vrcp.pop %v4333
        %v4335 = vmul.f32 %v4330, %v4334
        %4336 = vrot.lane.b32.xlu0 %v4105, 112
        %v4337 = vpop.permute.xlu0 %4336
        %4338 = vrot.lane.b32.xlu0 %v4108, 112
        %v4339 = vpop.permute.xlu0 %4338
        %v4343 = vsel %vm974, %v4335, 0
        %4345 = vmatpush.msra.mxu0 0.0
        %4346 = vmatpush.msra.mxu0 0.0
        %4347 = vmatpush.msra.mxu0 0.0
        %4348 = vmatpush.msra.mxu0 0.0
        %4349 = vmatpush.msra.mxu0 0.0
        %4350 = vmatpush.msra.mxu0 0.0
        %4351 = vmatpush.msra.mxu0 0.0
        %4352 = vmatpush.msra.mxu0 0.0
        %4353 = vmatpush.msra.mxu0 0.0
        %4354 = vmatpush.msra.mxu0 0.0
        %4355 = vmatpush.msra.mxu0 0.0
        %4356 = vmatpush.msra.mxu0 0.0
        %4357 = vmatpush.msra.mxu0 0.0
        %4358 = vmatpush.msra.mxu0 0.0
        %4359 = vmatpush.msra.mxu0 %v4339
        %4360 = vmatpush.msra.mxu0 %v4337
        %4361 = vmatmul.f32.gmra.mxu0 %v4343
        %v4362 = vpop.f32.mrf.mxu0
        %v4363 = vadd.f32 0.0, %v4362
        %4364 = vdwg.mxu0
        %v4366 = vsel %vm942, %v4363, 0
        %4368 = vmatpush.msra.mxu0 0.0
        %4369 = vmatpush.msra.mxu0 0.0
        %4370 = vmatpush.msra.mxu0 0.0
        %4371 = vmatpush.msra.mxu0 0.0
        %4372 = vmatpush.msra.mxu0 0.0
        %4373 = vmatpush.msra.mxu0 0.0
        %4374 = vmatpush.msra.mxu0 0.0
        %4375 = vmatpush.msra.mxu0 0.0
        %4376 = vmatpush.msra.mxu0 0.0
        %4377 = vmatpush.msra.mxu0 0.0
        %4378 = vmatpush.msra.mxu0 0.0
        %4379 = vmatpush.msra.mxu0 0.0
        %4380 = vmatpush.msra.mxu0 0.0
        %4381 = vmatpush.msra.mxu0 0.0
        %4382 = vmatpush.msra.mxu0 0.0
        %4383 = vmatpush.msra.mxu0 %v4002
        %4384 = vmatmul.f32.gmra.mxu0 %v4366
        %v4385 = vpop.f32.mrf.mxu0
        %v4386 = vadd.f32 0.0, %v4385
        %4387 = vdwg.mxu0
        %v4388 = vadd.f32 %v4291, %v4386
        %4389 = vrot.lane.b32.xlu0 %v4028, 104
        %v4390 = vpop.permute.xlu0 %4389
        %4391 = vrot.lane.b32.xlu0 %v4067, 104
        %v4392 = vpop.permute.xlu0 %4391
        %4393 = vrot.lane.b32.xlu0 %v4070, 104
        %v4394 = vpop.permute.xlu0 %4393
        %v4395 = vsel %vm942, %v4390, 0
        %v4397 = vsel %vm942, %v4392, 0
        %v4399 = vsel %vm942, %v4394, 0
        %4401 = vmatpush.xpose.msra.mxu0 0.0
        %4402 = vmatpush.xpose.msra.mxu0 0.0
        %4403 = vmatpush.xpose.msra.mxu0 0.0
        %4404 = vmatpush.xpose.msra.mxu0 0.0
        %4405 = vmatpush.xpose.msra.mxu0 0.0
        %4406 = vmatpush.xpose.msra.mxu0 0.0
        %4407 = vmatpush.xpose.msra.mxu0 0.0
        %4408 = vmatpush.xpose.msra.mxu0 0.0
        %4409 = vmatpush.xpose.msra.mxu0 0.0
        %4410 = vmatpush.xpose.msra.mxu0 0.0
        %4411 = vmatpush.xpose.msra.mxu0 0.0
        %4412 = vmatpush.xpose.msra.mxu0 0.0
        %4413 = vmatpush.xpose.msra.mxu0 0.0
        %4414 = vmatpush.xpose.msra.mxu0 0.0
        %4415 = vmatpush.xpose.msra.mxu0 %v4399
        %4416 = vmatpush.xpose.msra.mxu0 %v4397
        %4417 = vmatmul.f32.gmra.mxu0 %v4395
        %v4418 = vpop.f32.mrf.mxu0
        %v4419 = vadd.f32 %v934, %v4418
        %4420 = vdwg.mxu0
        %v4421 = vsel %vm974, %v4419, -inf
        %4422 = vmax.xlane.f32.xlu0 %v4421
        %v4423 = vpop.xlane.xlu0 %4422
        %v4424 = vsub.f32 %v4419, %v4423
        %v4425 = vmul.f32 %v4424, 1.442695
        %v4426 = vpow.pop %v4425
        %v4427 = vsel %vm974, %v4426, 0.0
        %4428 = vadd.xlane.f32.xlu0 %v4427
        %v4429 = vpop.xlane.xlu0 %4428
        %v4430 = vrcp.pop %v4429
        %v4431 = vmul.f32 %v4426, %v4430
        %4432 = vrot.lane.b32.xlu0 %v4105, 104
        %v4433 = vpop.permute.xlu0 %4432
        %4434 = vrot.lane.b32.xlu0 %v4108, 104
        %v4435 = vpop.permute.xlu0 %4434
        %v4439 = vsel %vm974, %v4431, 0
        %4441 = vmatpush.msra.mxu0 0.0
        %4442 = vmatpush.msra.mxu0 0.0
        %4443 = vmatpush.msra.mxu0 0.0
        %4444 = vmatpush.msra.mxu0 0.0
        %4445 = vmatpush.msra.mxu0 0.0
        %4446 = vmatpush.msra.mxu0 0.0
        %4447 = vmatpush.msra.mxu0 0.0
        %4448 = vmatpush.msra.mxu0 0.0
        %4449 = vmatpush.msra.mxu0 0.0
        %4450 = vmatpush.msra.mxu0 0.0
        %4451 = vmatpush.msra.mxu0 0.0
        %4452 = vmatpush.msra.mxu0 0.0
        %4453 = vmatpush.msra.mxu0 0.0
        %4454 = vmatpush.msra.mxu0 0.0
        %4455 = vmatpush.msra.mxu0 %v4435
        %4456 = vmatpush.msra.mxu0 %v4433
        %4457 = vmatmul.f32.gmra.mxu0 %v4439
        %v4458 = vpop.f32.mrf.mxu0
        %v4459 = vadd.f32 0.0, %v4458
        %4460 = vdwg.mxu0
        %v4462 = vsel %vm942, %v4459, 0
        %4464 = vmatpush.msra.mxu0 0.0
        %4465 = vmatpush.msra.mxu0 0.0
        %4466 = vmatpush.msra.mxu0 0.0
        %4467 = vmatpush.msra.mxu0 0.0
        %4468 = vmatpush.msra.mxu0 0.0
        %4469 = vmatpush.msra.mxu0 0.0
        %4470 = vmatpush.msra.mxu0 0.0
        %4471 = vmatpush.msra.mxu0 0.0
        %4472 = vmatpush.msra.mxu0 0.0
        %4473 = vmatpush.msra.mxu0 0.0
        %4474 = vmatpush.msra.mxu0 0.0
        %4475 = vmatpush.msra.mxu0 0.0
        %4476 = vmatpush.msra.mxu0 0.0
        %4477 = vmatpush.msra.mxu0 0.0
        %4478 = vmatpush.msra.mxu0 0.0
        %4479 = vmatpush.msra.mxu0 %v4003
        %4480 = vmatmul.f32.gmra.mxu0 %v4462
        %v4481 = vpop.f32.mrf.mxu0
        %v4482 = vadd.f32 0.0, %v4481
        %4483 = vdwg.mxu0
        %v4484 = vadd.f32 %v4388, %v4482
        %v4485 = vperm.slane %v3528, 1
        %v4486 = vadd.f32 %v4484, %v4485
        %v4487 = vadd.f32 %v3990, %v4486
        %v4488 = vsel %vm855, %v4487, 0.0
        %4489 = vadd.xlane.f32.xlu0 %v4488
        %v4490 = vpop.xlane.xlu0 %4489
        %v4491 = vmul.f32 %v4490, %v1453
        %v4492 = vsub.f32 %v4487, %v4491
        %v4493 = vmul.f32 %v4492, %v4492
        %v4494 = vsel %vm855, %v4493, 0.0
        %4495 = vadd.xlane.f32.xlu0 %v4494
        %v4496 = vpop.xlane.xlu0 %4495
        %v4497 = vmul.f32 %v4496, %v1453
        %v4498 = vadd.f32 %v4497, 1e-05
        %v4499 = vrsqrt.pop %v4498
        %v4500 = vmul.f32 %v4499, %v4498
        %v4501 = vmul.f32 %v4500, %v4499
        %v4502 = vmul.f32 0.5, %v4501
        %v4503 = vsub.f32 1.5, %v4502
        %v4504 = vmul.f32 %v4499, %v4503
        %vm4505 = vweird.f32 %v4498
        %vm4506 = vweird.f32 %v4499
        %vm4507 = vmor %vm4505, %vm4506
        %v4508 = vsel %vm4507, %v4499, %v4504
        %v4509 = vmul.f32 %v4492, %v4508
        %v4510 = vperm.slane %v3528, 5
        %v4511 = vmul.f32 %v4509, %v4510
        %v4512 = vperm.slane %v3528, 6
        %v4513 = vadd.f32 %v4511, %v4512
        %s4514 = scalar_lea.vmem [#allocation16], 32
        %v4515 = vld [vmem:[%s4514] sm:$0xff]
        %v4516 = vld [vmem:[%s4514 + $0x8] sm:$0xff]
        %v4517 = vld [vmem:[%s4514 + $0x10] sm:$0xff]
        %v4518 = vld [vmem:[%s4514 + $0x18] sm:$0xff]
        %s4519 = scalar_lea.vmem %s15, 1
        %v4520 = vld [vmem:[%s4519] sm:$0x1]
        %v4522 = vperm.slane %v4520, 0
        %v4525 = vsel %vm855, %v4513, 0
        %4527 = vmatpush.msra.mxu0 0.0
        %4528 = vmatpush.msra.mxu0 0.0
        %4529 = vmatpush.msra.mxu0 0.0
        %4530 = vmatpush.msra.mxu0 0.0
        %4531 = vmatpush.msra.mxu0 0.0
        %4532 = vmatpush.msra.mxu0 0.0
        %4533 = vmatpush.msra.mxu0 0.0
        %4534 = vmatpush.msra.mxu0 0.0
        %4535 = vmatpush.msra.mxu0 0.0
        %4536 = vmatpush.msra.mxu0 0.0
        %4537 = vmatpush.msra.mxu0 0.0
        %4538 = vmatpush.msra.mxu0 0.0
        %4539 = vmatpush.msra.mxu0 %v4518
        %4540 = vmatpush.msra.mxu0 %v4517
        %4541 = vmatpush.msra.mxu0 %v4516
        %4542 = vmatpush.msra.mxu0 %v4515
        %4543 = vmatmul.f32.gmra.mxu0 %v4525
        %v4544 = vpop.f32.mrf.mxu0
        %v4545 = vadd.f32 %v4522, %v4544
        %4546 = vdwg.mxu0
        %v4547 = vmax.f32 %v4545, 0.0
        %s4548 = scalar_lea.vmem %s16, 64
        %v4549 = vld [vmem:[%s4548] sm:$0xff]
        %v4550 = vld [vmem:[%s4548 + $0x8] sm:$0xff]
        %v4551 = vld [vmem:[%s4548 + $0x10] sm:$0xff]
        %v4552 = vld [vmem:[%s4548 + $0x18] sm:$0xff]
        %v4553 = vld [vmem:[%s4548 + $0x20] sm:$0xff]
        %v4554 = vld [vmem:[%s4548 + $0x28] sm:$0xff]
        %v4555 = vld [vmem:[%s4548 + $0x30] sm:$0xff]
        %v4556 = vld [vmem:[%s4548 + $0x38] sm:$0xff]
        %v4557 = vperm.slane %v3528, 2
        %v4559 = vsel %vm1546, %v4547, 0
        %4561 = vmatpush.msra.mxu0 0.0
        %4562 = vmatpush.msra.mxu0 0.0
        %4563 = vmatpush.msra.mxu0 0.0
        %4564 = vmatpush.msra.mxu0 0.0
        %4565 = vmatpush.msra.mxu0 0.0
        %4566 = vmatpush.msra.mxu0 0.0
        %4567 = vmatpush.msra.mxu0 0.0
        %4568 = vmatpush.msra.mxu0 0.0
        %4569 = vmatpush.msra.mxu0 %v4556
        %4570 = vmatpush.msra.mxu0 %v4555
        %4571 = vmatpush.msra.mxu0 %v4554
        %4572 = vmatpush.msra.mxu0 %v4553
        %4573 = vmatpush.msra.mxu0 %v4552
        %4574 = vmatpush.msra.mxu0 %v4551
        %4575 = vmatpush.msra.mxu0 %v4550
        %4576 = vmatpush.msra.mxu0 %v4549
        %4577 = vmatmul.f32.gmra.mxu0 %v4559
        %v4578 = vpop.f32.mrf.mxu0
        %v4579 = vadd.f32 %v4557, %v4578
        %4580 = vdwg.mxu0
        %v4581 = vadd.f32 %v4513, %v4579
        %v4582 = vsel %vm855, %v4581, 0.0
        %4583 = vadd.xlane.f32.xlu0 %v4582
        %v4584 = vpop.xlane.xlu0 %4583
        %v4585 = vmul.f32 %v4584, %v1453
        %v4586 = vsub.f32 %v4581, %v4585
        %v4587 = vmul.f32 %v4586, %v4586
        %v4588 = vsel %vm855, %v4587, 0.0
        %4589 = vadd.xlane.f32.xlu0 %v4588
        %v4590 = vpop.xlane.xlu0 %4589
        %v4591 = vmul.f32 %v4590, %v1453
        %v4592 = vadd.f32 %v4591, 1e-05
        %v4593 = vrsqrt.pop %v4592
        %v4594 = vmul.f32 %v4593, %v4592
        %v4595 = vmul.f32 %v4594, %v4593
        %v4596 = vmul.f32 0.5, %v4595
        %v4597 = vsub.f32 1.5, %v4596
        %v4598 = vmul.f32 %v4593, %v4597
        %vm4599 = vweird.f32 %v4592
        %vm4600 = vweird.f32 %v4593
        %vm4601 = vmor %vm4599, %vm4600
        %v4602 = vsel %vm4601, %v4593, %v4598
        %v4603 = vmul.f32 %v4586, %v4602
        %v4604 = vperm.slane %v3528, 7
        %v4605 = vmul.f32 %v4603, %v4604
        %v4606 = vperm.slane %v3529, 0
        %v4607 = vadd.f32 %v4605, %v4606
        %v4608 = vsel %vm855, %v4607, 0.0
        %4609 = vadd.xlane.f32.xlu0 %v4608
        %v4610 = vpop.xlane.xlu0 %4609
        %v4611 = vmul.f32 %v4610, %v1453
        %v4612 = vsub.f32 %v4607, %v4611
        %v4613 = vmul.f32 %v4612, %v4612
        %v4614 = vsel %vm855, %v4613, 0.0
        %4615 = vadd.xlane.f32.xlu0 %v4614
        %v4616 = vpop.xlane.xlu0 %4615
        %v4617 = vmul.f32 %v4616, %v1453
        %v4618 = vadd.f32 %v4617, 1e-05
        %v4619 = vrsqrt.pop %v4618
        %v4620 = vmul.f32 %v4619, %v4618
        %v4621 = vmul.f32 %v4620, %v4619
        %v4622 = vmul.f32 0.5, %v4621
        %v4623 = vsub.f32 1.5, %v4622
        %v4624 = vmul.f32 %v4619, %v4623
        %vm4625 = vweird.f32 %v4618
        %vm4626 = vweird.f32 %v4619
        %vm4627 = vmor %vm4625, %vm4626
        %v4628 = vsel %vm4627, %v4619, %v4624
        %v4629 = vmul.f32 %v4612, %v4628
        %v4630 = vmul.f32 %v4629, %v3522
        %v4631 = vadd.f32 %v4630, %v3524
        %s4632 = scalar_lea.vmem %s826, 8 [#allocation17]
        %4633 = vst.msk [vmem:[%s4632] sm:$0xff] %vm855, %v4631
        %s4634 = sand.u32 %s471, 1
        %s4635 = scalar_lea.sflag [#allocation4], %s4634
        %s4636 = sand.u32 %s471, 1
        %s4637 = smul.addr %s4636, 16
        %s4638 = scalar_lea.vmem [#allocation17], %s4637
        %s4639 = sand.u32 %s497, 1
        %s4640 = scalar_lea.sflag [#allocation19], %s4639
        %s4641 = sand.u32 %s497, 1
        %s4642 = smul.addr %s4641, 16
        %s4643 = scalar_lea.vmem [#allocation18], %s4642
        // Predicated region
        $region133: #{tpu_custom_call.1} parent=95 // pred_check
          %p4644 = pneg %p481
        $region134: #{tpu_custom_call.1} parent=95 // pred_check_branch
          %4646 = sbr.rel (%p4644) target = $region136
        $region135: #{tpu_custom_call.1} parent=95 // pred_region
          %4648 = vsyncadd %s4635, 0
          %s4649 = smul.addr %s49, 8
          %s4650 = scalar_lea.hbm %s19, %s4649
          %s4651 = sshll.u32 %s4638, 4
          %s4652 = int_to_ptr.vmem [resolvable:$true] %s4651
          %s4653 = sshll.u32 %s4650, 4
          %s4654 = int_to_ptr.hbm [resolvable:$true] %s4653
          %4659 = dma.vmem_to_hbm [thread:$0]  %s4652, 256, %s4654, %s4635, 128, 256, 8
        $region136: #{tpu_custom_call.1} parent=95 // pred_fallthru
          _
        // Predicated region
        $region137: #{tpu_custom_call.1} parent=95 // pred_check
          %p4660 = pneg %p507
        $region138: #{tpu_custom_call.1} parent=95 // pred_check_branch
          %4662 = sbr.rel (%p4660) target = $region140
        $region139: #{tpu_custom_call.1} parent=95 // pred_region
          %4664 = vsyncadd %s4640, 0
          %s4665 = smul.addr %s49, 2
          %s4666 = smul.addr %s4665, 8
          %s4667 = scalar_lea.hbm %s20, %s4666
          %s4668 = sshll.u32 %s4643, 4
          %s4669 = int_to_ptr.vmem [resolvable:$true] %s4668
          %s4670 = sshll.u32 %s4667, 4
          %s4671 = int_to_ptr.hbm [resolvable:$true] %s4670
          %4676 = dma.vmem_to_hbm [thread:$0]  %s4669, 256, %s4671, %s4640, 128, 128, 8
        $region140: #{tpu_custom_call.1} parent=95 // pred_fallthru
          _
      $region96: #{tpu_custom_call.1} parent=5 // pred_fallthru
        _
      %p4677 = scmp.le.s32.totalorder 2, %s44
      // Predicated region
      $region141: #{tpu_custom_call.1} parent=5 // pred_check
        %p4678 = pneg %p4677
      $region142: #{tpu_custom_call.1} parent=5 // pred_check_branch
        %4680 = sbr.rel (%p4678) target = $region144
      $region143: #{tpu_custom_call.1} parent=5 // pred_region
        %s4681 = ssub.s32 %s44, 2
        // Predicated region
        $region145: #{tpu_custom_call.1} parent=143 // pred_check
          %p4682 = pneg %p487
        $region146: #{tpu_custom_call.1} parent=143 // pred_check_branch
          %4684 = sbr.rel (%p4682) target = $region148
        $region147: #{tpu_custom_call.1} parent=143 // pred_region
          %s4685 = sand.u32 %s472, 1
          %s4686 = scalar_lea.sflag [#allocation4], %s4685
          %s4687 = sand.u32 %s472, 1
          %s4688 = smul.addr %s4687, 16
          %s4689 = scalar_lea.vmem [#allocation17], %s4688
          %4691 = dma.done %s4686, 256
        $region148: #{tpu_custom_call.1} parent=143 // pred_fallthru
          _
        // Predicated region
        $region149: #{tpu_custom_call.1} parent=143 // pred_check
          %p4692 = pneg %p513
        $region150: #{tpu_custom_call.1} parent=143 // pred_check_branch
          %4694 = sbr.rel (%p4692) target = $region152
        $region151: #{tpu_custom_call.1} parent=143 // pred_region
          %s4695 = sand.u32 %s498, 1
          %s4696 = scalar_lea.sflag [#allocation19], %s4695
          %s4697 = sand.u32 %s498, 1
          %s4698 = smul.addr %s4697, 16
          %s4699 = scalar_lea.vmem [#allocation18], %s4698
          %4701 = dma.done %s4696, 256
        $region152: #{tpu_custom_call.1} parent=143 // pred_fallthru
          _
      $region144: #{tpu_custom_call.1} parent=5 // pred_fallthru
        _
    $region6: #{tpu_custom_call.1} parent=1 // loop_footer
      %s48 = sadd.s32 1, %s44
    $region7: #{tpu_custom_call.1} parent=1 // loop_footer_branch
      %43 = sbr.rel target = $region3
    $region8: #{tpu_custom_call.1} parent=1 // loop_exit
      _
    %4702 = vsyncpa [#allocation3], 1
    %s4703 = scalar_lea.sflag [#allocation3], 1
    %4704 = vsyncpa %s4703, 1
    %4705 = vsyncpa [#allocation6], 1
    %s4706 = scalar_lea.sflag [#allocation6], 1
    %4707 = vsyncpa %s4706, 1
    %4708 = vsyncpa [#allocation9], 1
    %s4709 = scalar_lea.sflag [#allocation9], 1
    %4710 = vsyncpa %s4709, 1
    %4711 = vsyncpa [#allocation12], 1
    %4712 = vsyncpa [#allocation15], 1
    %4713 = vsyncpa [#allocation4], 1
    %s4714 = scalar_lea.sflag [#allocation4], 1
    %4715 = vsyncpa %s4714, 1
    %4716 = vsyncpa [#allocation19], 1
    %s4717 = scalar_lea.sflag [#allocation19], 1
    %4718 = vsyncpa %s4717, 1

</llo_original>
